<compile_context>
chip_gen: v5e
topology: v5e:2x2
jax: 0.10.0
libtpu: 0.0.40
codegen_flags: <defaults>
</compile_context>

<pallas_src>
import functools

import jax
import jax.numpy as jnp
from jax.experimental import pallas as pl
from jax.experimental.pallas import tpu as pltpu


def _round_up(x, m):
    return (x + m - 1) // m * m


# ---------------------------------------------------------------------------
# Generation-aware VMEM planning
# ---------------------------------------------------------------------------
@functools.lru_cache(maxsize=None)
def _vmem_plan():
    cap = 64 * 1024 * 1024                           # conservative default (v7x)
    try:
        info = pltpu.get_tpu_info()
        q = int(getattr(info, "vmem_capacity_bytes", 0))
        if q > 0:
            cap = q
    except Exception:
        pass
    # Leave >=16 MiB headroom; cap the request at 100 MiB even on 128 MiB parts.
    limit = max(32 * 1024 * 1024, min(cap - 16 * 1024 * 1024, 100 * 1024 * 1024))
    budget = limit - 4 * 1024 * 1024
    return limit, budget


def _vmem_limit():
    return _vmem_plan()[0]


def _vmem_budget():
    return _vmem_plan()[1]


# ---------------------------------------------------------------------------
# Fused [pre-act -> bf16 MXU matmul(s) -> bias -> post-act (-> BN stats)] kernel
# ---------------------------------------------------------------------------
def _matmul_act_kernel(*refs, n_ops, pre_act, post_act, has_bias, bn, m_total, tm):
    a_refs = refs[:n_ops]
    b_refs = refs[n_ops:2 * n_ops]
    bias_ref = refs[2 * n_ops]
    o_ref = refs[2 * n_ops + 1]

    acc = None
    for a_ref, b_ref in zip(a_refs, b_refs):
        a = a_ref[...]                               # (TM, K_i) bf16
        if pre_act == "leaky":                       # LeakyReLU(0.2) on conv input
            a = jnp.where(a >= 0, a, a * 0.2)
        elif pre_act == "relu":                      # ReLU on conv-transpose input
            a = jnp.maximum(a, 0)
        d = jnp.dot(a, b_ref[...], preferred_element_type=jnp.float32)
        acc = d if acc is None else acc + d
    if has_bias:
        acc = acc + bias_ref[...]

    if bn:
        # Fused BatchNorm statistics (resident accumulators over the M grid).
        s1_ref = refs[2 * n_ops + 2]
        s2_ref = refs[2 * n_ops + 3]

        @pl.when(pl.program_id(0) == 0)
        def _():
            s1_ref[...] = jnp.zeros_like(s1_ref)
            s2_ref[...] = jnp.zeros_like(s2_ref)

        # Edge M tiles read garbage rows past the end of A; those rows MUST be
        # masked out of the reduction (their output stores are masked by Pallas).
        rows = jax.lax.broadcasted_iota(jnp.int32, acc.shape, 0) + pl.program_id(0) * tm
        masked = jnp.where(rows < m_total, acc, 0.0)
        s1_ref[...] += jnp.sum(masked, axis=0, keepdims=True)
        s2_ref[...] += jnp.sum(masked * masked, axis=0, keepdims=True)

    if post_act == "tanh":                           # outermost block's Tanh
        acc = jnp.tanh(acc)
    o_ref[...] = acc.astype(o_ref.dtype)


def _pick_tm(m, k_total, n_pad):
    """Largest M-tile (<=512 rows) whose working set fits the VMEM budget.

    Resident weight/bias blocks are budgeted as DOUBLE-buffered (constant-index
    BlockSpec inputs are still double-buffered by default)."""
    if m <= 512:
        return m
    fixed = 2 * (k_total * n_pad * 2 + n_pad * 4)    # 2x (bf16 weights + f32 bias)
    avail = max(_vmem_budget() - fixed, 2 * 1024 * 1024)
    per_row = 4 * k_total + 8 * n_pad + 4 * n_pad    # 2x bf16 A, 2x bf16 out, f32 acc
    cap = avail // per_row
    return max(8, min(512, (cap // 8) * 8))


def matmul_act(operands, bias=None, pre_act=None, post_act=None, bn=False):
    """out = post_act(pre_act(A_0) @ B_0 + ... + bias), all A in bf16, out bf16.

    operands: list of (a_i (M, K_i), b_i (K_i, N)) pairs (K-split accumulation,
    used to fuse the UNet skip concat into the consuming conv-transpose).
    If bn=True also returns the per-column sum and sum-of-squares (f32)."""
    m = operands[0][0].shape[0]
    n = operands[0][1].shape[1]
    n_pad = _round_up(n, 128)                        # lane-dense stores

    a_list, b_list = [], []
    for a, b in operands:
        a_list.append(a.astype(jnp.bfloat16))
        bp = b.astype(jnp.bfloat16)
        if n_pad != n:
            bp = jnp.pad(bp, ((0, 0), (0, n_pad - n)))
        b_list.append(bp)

    has_bias = bias is not None
    if has_bias:
        bias_p = jnp.pad(bias.astype(jnp.float32), (0, n_pad - n)).reshape(1, n_pad)
    else:
        bias_p = jnp.zeros((1, n_pad), jnp.float32)

    k_total = sum(a.shape[1] for a in a_list)
    tm = _pick_tm(m, k_total, n_pad)
    grid_m = pl.cdiv(m, tm)

    kern = functools.partial(_matmul_act_kernel, n_ops=len(a_list),
                             pre_act=pre_act, post_act=post_act,
                             has_bias=has_bias, bn=bn, m_total=m, tm=tm)

    in_specs = ([pl.BlockSpec((tm, a.shape[1]), lambda i: (i, 0)) for a in a_list]
                + [pl.BlockSpec((b.shape[0], n_pad), lambda i: (0, 0)) for b in b_list]
                + [pl.BlockSpec((1, n_pad), lambda i: (0, 0))])

    if bn:
        out_shape = (jax.ShapeDtypeStruct((m, n_pad), jnp.bfloat16),
                     jax.ShapeDtypeStruct((1, n_pad), jnp.float32),
                     jax.ShapeDtypeStruct((1, n_pad), jnp.float32))
        out_specs = (pl.BlockSpec((tm, n_pad), lambda i: (i, 0)),
                     pl.BlockSpec((1, n_pad), lambda i: (0, 0)),
                     pl.BlockSpec((1, n_pad), lambda i: (0, 0)))
        # Resident stat accumulators -> the M axis must be "arbitrary".
        # TODO(synk): on v7x this serializes the two TensorCores; a leading
        #             size-2 core-parallel axis with per-core partial sums
        #             (reduced in JAX) would recover the second core.
        sem = ("arbitrary",)
    else:
        out_shape = jax.ShapeDtypeStruct((m, n_pad), jnp.bfloat16)
        out_specs = pl.BlockSpec((tm, n_pad), lambda i: (i, 0))
        sem = ("parallel",)

    return pl.pallas_call(
        kern,
        out_shape=out_shape,
        grid=(grid_m,),
        in_specs=in_specs,
        out_specs=out_specs,
        compiler_params=pltpu.CompilerParams(
            dimension_semantics=sem, vmem_limit_bytes=_vmem_limit()),
    )(*a_list, *b_list, bias_p)


# ---------------------------------------------------------------------------
# BatchNorm2d (train mode): finalize scale/shift + fused per-channel apply
# ---------------------------------------------------------------------------
def _bn_scale_shift(s1, s2, count, gamma, beta, eps=1e-5):
    n_pad = s1.shape[1]
    mean = s1 / count
    var = jnp.maximum(s2 / count - mean * mean, 0.0)   # biased variance (train mode)
    g = jnp.pad(gamma, (0, n_pad - gamma.shape[0])).reshape(1, n_pad)
    b = jnp.pad(beta, (0, n_pad - beta.shape[0])).reshape(1, n_pad)
    scale = g * jax.lax.rsqrt(var + eps)               # padded cols: g=0 -> scale=0
    shift = b - mean * scale
    return scale.astype(jnp.float32), shift.astype(jnp.float32)


def _affine_kernel(x_ref, scale_ref, shift_ref, o_ref):
    x = x_ref[...].astype(jnp.float32)
    o_ref[...] = (x * scale_ref[...] + shift_ref[...]).astype(o_ref.dtype)


def apply_affine(xflat, scale, shift):
    """y = x * scale + shift, per channel; x: (M, Cpad) bf16, lane-dense."""
    m, n_pad = xflat.shape
    tm = m if m <= 1024 else 1024
    return pl.pallas_call(
        _affine_kernel,
        out_shape=jax.ShapeDtypeStruct((m, n_pad), jnp.bfloat16),
        grid=(pl.cdiv(m, tm),),
        in_specs=[pl.BlockSpec((tm, n_pad), lambda i: (i, 0)),
                  pl.BlockSpec((1, n_pad), lambda i: (0, 0)),
                  pl.BlockSpec((1, n_pad), lambda i: (0, 0))],
        out_specs=pl.BlockSpec((tm, n_pad), lambda i: (i, 0)),
        compiler_params=pltpu.CompilerParams(
            dimension_semantics=("parallel",), vmem_limit_bytes=_vmem_limit()),
    )(xflat, scale, shift)


# ---------------------------------------------------------------------------
# Conv lowering glue (bf16 strided-slice im2col in XLA; matmuls run in Pallas)
# ---------------------------------------------------------------------------
# TODO(synk): the im2col A is still HBM-materialized; fusing the tap gather into
#             the matmul grid (per-tap reduction axis over pre-split parity planes)
#             would remove that intermediate entirely for the large-spatial layers.
def conv2d_k4s2p1(x, c, w, bias=None, pre_act=None, bn=None):
    """Conv2d(k=4, s=2, p=1). x: NHWC bf16 (channel-padded), c: true channels,
    w: (Cout, Cin=c, 4, 4). Returns (NHWC bf16 channel-padded, Cout)."""
    n, h, wd, _ = x.shape
    cout = w.shape[0]
    ho, wo = h // 2, wd // 2
    xp = jnp.pad(x[..., :c], ((0, 0), (1, 1), (1, 1), (0, 0)))   # drop pad in the gather
    cols = [xp[:, kh:kh + 2 * ho:2, kw:kw + 2 * wo:2, :]
            for kh in range(4) for kw in range(4)]
    a = jnp.stack(cols, axis=3).reshape(n * ho * wo, 16 * c)     # K = (kh, kw, c), bf16
    bm = jnp.transpose(w, (2, 3, 1, 0)).reshape(16 * c, cout)    # (kh, kw, cin) -> cout
    res = matmul_act([(a, bm)], bias=bias, pre_act=pre_act, bn=bn is not None)
    if bn is None:
        out = res
    else:
        out, s1, s2 = res
        gamma, beta = bn
        scale, shift = _bn_scale_shift(s1, s2, n * ho * wo, gamma, beta)
        out = apply_affine(out, scale, shift)
    n_pad = out.shape[1]
    return out.reshape(n, ho, wo, n_pad), cout


def conv_transpose_k4s2p1(parts, w, bias=None, pre_act=None, post_act=None, bn=None):
    """ConvTranspose2d(k=4, s=2, p=1), parity-decomposed + fused skip concat.

    parts: list of (x NHWC bf16 channel-padded, true_channels) whose channel
    concatenation is the layer input (order matches torch.cat([x_origin, y], 1)).
    w: (Cin_total, Cout, 4, 4) with Cin_total = sum of true channel counts.
    Output pixel (2j+py, 2i+px) only touches kernel taps ky = 3-py-2*dy,
    kx = 3-px-2*dx with input (j-1+py+dy, i-1+px+dx): 4 dense (M, 4*Cin) matmuls."""
    n, h, wd, _ = parts[0][0].shape
    cout = w.shape[1]
    offs, off = [], 0
    for _, c in parts:
        offs.append((off, c))
        off += c
    assert off == w.shape[0]

    xps = [jnp.pad(x[..., :c], ((0, 0), (1, 1), (1, 1), (0, 0))) for x, c in parts]

    parity_outs = []
    s1_tot, s2_tot = None, None
    for py in range(2):
        for px in range(2):
            ops = []
            for xp, (o, c) in zip(xps, offs):
                cols = [xp[:, py + dy:py + dy + h, px + dx:px + dx + wd, :]
                        for dy in range(2) for dx in range(2)]
                a = jnp.stack(cols, axis=3).reshape(n * h * wd, 4 * c)   # K=(dy,dx,c)
                wsub = w[o:o + c, :, 3 - py::-2, 3 - px::-2]             # (c,cout,dy,dx)
                bm = jnp.transpose(wsub, (2, 3, 0, 1)).reshape(4 * c, cout)
                ops.append((a, bm))
            res = matmul_act(ops, bias=bias, pre_act=pre_act, post_act=post_act,
                             bn=bn is not None)
            if bn is None:
                y = res
            else:
                y, s1, s2 = res
                s1_tot = s1 if s1_tot is None else s1_tot + s1
                s2_tot = s2 if s2_tot is None else s2_tot + s2
            parity_outs.append(y)

    n_pad = parity_outs[0].shape[1]
    ys = jnp.stack(parity_outs, axis=0).reshape(2, 2, n, h, wd, n_pad)
    out = jnp.transpose(ys, (2, 3, 0, 4, 1, 5)).reshape(n, 2 * h, 2 * wd, n_pad)
    if bn is not None:
        gamma, beta = bn
        scale, shift = _bn_scale_shift(s1_tot, s2_tot, 4 * n * h * wd, gamma, beta)
        out = apply_affine(out.reshape(4 * n * h * wd, n_pad), scale, shift)
        out = out.reshape(n, 2 * h, 2 * wd, n_pad)
    return out, cout


# ---------------------------------------------------------------------------
# UnetSkipConnectionBlock / UnetGenerator forward (norm_layer = BatchNorm2d)
# ---------------------------------------------------------------------------
def block_forward(x, c, p):
    """x: NHWC bf16 (channel-padded), c: true channels.
    Non-outermost blocks return the un-materialized concat as [(x, c), (y, cy)]."""
    if p["outermost"]:
        x1, c1 = conv2d_k4s2p1(x, c, p["down_w"])                 # down = [downconv]
        parts = block_forward(x1, c1, p["sub"])
        return conv_transpose_k4s2p1(                             # up = [relu, upconv, tanh]
            parts, p["up_w"], bias=p["up_b"], pre_act="relu", post_act="tanh")
    elif p["innermost"]:
        x1, c1 = conv2d_k4s2p1(x, c, p["down_w"], pre_act="leaky")  # down = [lrelu, conv]
        y, cy = conv_transpose_k4s2p1([(x1, c1)], p["up_w"],        # up = [relu, convT, norm]
                                      pre_act="relu", bn=(p["up_g"], p["up_bb"]))
        return [(x, c), (y, cy)]                                    # fused skip concat
    else:
        x1, c1 = conv2d_k4s2p1(x, c, p["down_w"], pre_act="leaky",  # down = [lrelu, conv, norm]
                               bn=(p["down_g"], p["down_bb"]))
        parts = block_forward(x1, c1, p["sub"])
        y, cy = conv_transpose_k4s2p1(parts, p["up_w"],             # up = [relu, convT, norm]
                                      pre_act="relu", bn=(p["up_g"], p["up_bb"]))
        return [(x, c), (y, cy)]                                    # fused skip concat


def unet_generator_forward(x_nchw, params):
    x = jnp.transpose(x_nchw, (0, 2, 3, 1)).astype(jnp.bfloat16)   # NCHW -> NHWC bf16
    y, cy = block_forward(x, x.shape[-1], params)
    y = y[..., :cy]                                                # drop channel padding once
    return jnp.transpose(y, (0, 3, 1, 2)).astype(jnp.float32)      # NHWC -> NCHW f32


# ---------------------------------------------------------------------------
# Deterministic parameter construction (mirrors the PyTorch __init__ shapes)
# ---------------------------------------------------------------------------
def make_block_params(key, outer_nc, inner_nc, input_nc=None, sub=None,
                      outermost=False, innermost=False):
    if input_nc is None:
        input_nc = outer_nc
    k = jax.random.split(key, 8)
    p = {"outermost": outermost, "innermost": innermost, "sub": sub}
    # Conv2d(input_nc, inner_nc, 4, stride=2, padding=1, bias=False)  (BatchNorm => no bias)
    p["down_w"] = 0.05 * jax.random.normal(k[0], (inner_nc, input_nc, 4, 4), jnp.float32)
    up_in = inner_nc if innermost else inner_nc * 2
    # ConvTranspose2d(up_in, outer_nc, 4, stride=2, padding=1)
    p["up_w"] = 0.05 * jax.random.normal(k[1], (up_in, outer_nc, 4, 4), jnp.float32)
    if outermost:
        p["up_b"] = 0.05 * jax.random.normal(k[2], (outer_nc,), jnp.float32)  # bias=True
    else:
        p["up_g"] = 1.0 + 0.05 * jax.random.normal(k[3], (outer_nc,), jnp.float32)
        p["up_bb"] = 0.05 * jax.random.normal(k[4], (outer_nc,), jnp.float32)
        if not innermost:
            p["down_g"] = 1.0 + 0.05 * jax.random.normal(k[5], (inner_nc,), jnp.float32)
            p["down_bb"] = 0.05 * jax.random.normal(k[6], (inner_nc,), jnp.float32)
    return p


def make_unet_params(key, input_nc, output_nc, num_downs, ngf):
    keys = iter(jax.random.split(key, num_downs + 1))
    block = make_block_params(next(keys), ngf * 8, ngf * 8, innermost=True)
    for _ in range(num_downs - 5):
        block = make_block_params(next(keys), ngf * 8, ngf * 8, sub=block)
    block = make_block_params(next(keys), ngf * 4, ngf * 8, sub=block)
    block = make_block_params(next(keys), ngf * 2, ngf * 4, sub=block)
    block = make_block_params(next(keys), ngf, ngf * 2, sub=block)
    block = make_block_params(next(keys), output_nc, ngf, input_nc=input_nc,
                              sub=block, outermost=True)
    return block


# TODO(synk): use_dropout path omitted (UnetGenerator default use_dropout=False and
#             dropout is not part of the Sequentials built in the reference module).
# TODO(synk): BatchNorm is training-mode (batch stats, biased variance), matching the
#             module's default train() behavior; eval-mode running stats not modeled.

if __name__ == "__main__":
    key = jax.random.PRNGKey(0)
    pkey, xkey = jax.random.split(key)

    # UnetGenerator(input_nc=3, output_nc=3, num_downs=5, ngf=8); 32x32 -> 1x1 bottleneck.
    params = make_unet_params(pkey, input_nc=3, output_nc=3, num_downs=5, ngf=8)
    x = jax.random.normal(xkey, (2, 3, 32, 32), jnp.float32)   # NCHW, like PyTorch

    fwd = jax.jit(lambda inp: unet_generator_forward(inp, params))
    y = fwd(x)
    jax.block_until_ready(y)
    assert y.shape == (2, 3, 32, 32) and y.dtype == jnp.float32
    assert bool(jnp.all(jnp.isfinite(y)))
    print("KERNEL_OK")
</pallas_src>

<mosaic_0001>
module attributes {stable_mosaic.version = 11 : i64} {
  func.func @_matmul_act_kernel(%arg0: i32, %arg1: memref<512x48xbf16, #tpu.memory_space<vmem>>, %arg2: memref<48x128xbf16, #tpu.memory_space<vmem>>, %arg3: memref<1x128xf32, #tpu.memory_space<vmem>>, %arg4: memref<512x128xbf16, #tpu.memory_space<vmem>>) attributes {dimension_semantics = [#tpu.dimension_semantics<parallel>], iteration_bounds = array<i64: 1>, scalar_prefetch = 0 : i64, scratch_operands = 0 : i64, tpu.core_type = #tpu.core_type<tc>, window_params = [{transform_indices = @transform_0, window_bounds = array<i64: 512, 48>}, {pipeline_mode = #tpu.pipeline_mode<synchronous>, transform_indices = @transform_1, window_bounds = array<i64: 48, 128>}, {pipeline_mode = #tpu.pipeline_mode<synchronous>, transform_indices = @transform_2, window_bounds = array<i64: 1, 128>}, {transform_indices = @transform_3, window_bounds = array<i64: 512, 128>}]} {
    %c0 = arith.constant 0 : index
    %c0_0 = arith.constant 0 : index
    %0 = vector.load %arg1[%c0, %c0_0] : memref<512x48xbf16, #tpu.memory_space<vmem>>, vector<512x48xbf16>
    %c0_1 = arith.constant 0 : index
    %c0_2 = arith.constant 0 : index
    %1 = vector.load %arg2[%c0_1, %c0_2] : memref<48x128xbf16, #tpu.memory_space<vmem>>, vector<48x128xbf16>
    %cst = arith.constant dense<0.000000e+00> : vector<512x128xf32>
    %2 = tpu.matmul %0, %1, %cst {dimension_numbers = #tpu.dot_dimension_numbers<[1], [0], [0], [1], [0, 0, 1, 1], [], []>} : vector<512x48xbf16>, vector<48x128xbf16>, vector<512x128xf32> -> vector<512x128xf32>
    %3 = arith.truncf %2 : vector<512x128xf32> to vector<512x128xbf16>
    %c0_3 = arith.constant 0 : index
    %c0_4 = arith.constant 0 : index
    %4 = vector.load %arg4[%c0_3, %c0_4] : memref<512x128xbf16, #tpu.memory_space<vmem>>, vector<512x128xbf16>
    tpu.vector_store %arg4[%c0_3, %c0_4], %3 {strides = array<i32>} : memref<512x128xbf16, #tpu.memory_space<vmem>>, vector<512x128xbf16>,
    return
  }
  func.func @transform_0(%arg0: i32) -> (i32, i32) {
    %c0_i32 = arith.constant 0 : i32
    %c0_i32_0 = arith.constant 0 : i32
    return %arg0, %c0_i32 : i32, i32
  }
  func.func @transform_1(%arg0: i32) -> (i32, i32) {
    %c0_i32 = arith.constant 0 : i32
    %c0_i32_0 = arith.constant 0 : i32
    %c0_i32_1 = arith.constant 0 : i32
    return %c0_i32, %c0_i32_0 : i32, i32
  }
  func.func @transform_2(%arg0: i32) -> (i32, i32) {
    %c0_i32 = arith.constant 0 : i32
    %c0_i32_0 = arith.constant 0 : i32
    %c0_i32_1 = arith.constant 0 : i32
    return %c0_i32, %c0_i32_0 : i32, i32
  }
  func.func @transform_3(%arg0: i32) -> (i32, i32) {
    %c0_i32 = arith.constant 0 : i32
    %c0_i32_0 = arith.constant 0 : i32
    return %arg0, %c0_i32 : i32, i32
  }
}

module attributes {stable_mosaic.version = 11 : i64} {
  func.func @_matmul_act_kernel(%arg0: i32, %arg1: memref<128x128xbf16, #tpu.memory_space<vmem>>, %arg2: memref<128x128xbf16, #tpu.memory_space<vmem>>, %arg3: memref<1x128xf32, #tpu.memory_space<vmem>>, %arg4: memref<128x128xbf16, #tpu.memory_space<vmem>>, %arg5: memref<1x128xf32, #tpu.memory_space<vmem>>, %arg6: memref<1x128xf32, #tpu.memory_space<vmem>>) attributes {dimension_semantics = [#tpu.dimension_semantics<arbitrary>], iteration_bounds = array<i64: 1>, scalar_prefetch = 0 : i64, scratch_operands = 0 : i64, tpu.core_type = #tpu.core_type<tc>, window_params = [{transform_indices = @transform_0, window_bounds = array<i64: 128, 128>}, {pipeline_mode = #tpu.pipeline_mode<synchronous>, transform_indices = @transform_1, window_bounds = array<i64: 128, 128>}, {pipeline_mode = #tpu.pipeline_mode<synchronous>, transform_indices = @transform_2, window_bounds = array<i64: 1, 128>}, {transform_indices = @transform_3, window_bounds = array<i64: 128, 128>}, {pipeline_mode = #tpu.pipeline_mode<synchronous>, transform_indices = @transform_4, window_bounds = array<i64: 1, 128>}, {pipeline_mode = #tpu.pipeline_mode<synchronous>, transform_indices = @transform_5, window_bounds = array<i64: 1, 128>}]} {
    %c0 = arith.constant 0 : index
    %c0_0 = arith.constant 0 : index
    %0 = vector.load %arg1[%c0, %c0_0] : memref<128x128xbf16, #tpu.memory_space<vmem>>, vector<128x128xbf16>
    %cst = arith.constant 0.000000e+00 : bf16
    %1 = vector.broadcast %cst : bf16 to vector<128x128xbf16>
    %2 = arith.cmpf oge, %0, %1 : vector<128x128xbf16>
    %cst_1 = arith.constant 2.001950e-01 : bf16
    %3 = vector.broadcast %cst_1 : bf16 to vector<128x128xbf16>
    %4 = arith.mulf %0, %3 : vector<128x128xbf16>
    %5 = arith.select %2, %0, %4 : vector<128x128xi1>, vector<128x128xbf16>
    %c0_2 = arith.constant 0 : index
    %c0_3 = arith.constant 0 : index
    %6 = vector.load %arg2[%c0_2, %c0_3] : memref<128x128xbf16, #tpu.memory_space<vmem>>, vector<128x128xbf16>
    %cst_4 = arith.constant dense<0.000000e+00> : vector<128x128xf32>
    %7 = tpu.matmul %5, %6, %cst_4 {dimension_numbers = #tpu.dot_dimension_numbers<[1], [0], [0], [1], [0, 0, 1, 1], [], []>} : vector<128x128xbf16>, vector<128x128xbf16>, vector<128x128xf32> -> vector<128x128xf32>
    %c0_i32 = arith.constant 0 : i32
    %8 = arith.cmpi eq, %arg0, %c0_i32 : i32
    %9 = arith.extui %8 : i1 to i32
    %c0_i32_5 = arith.constant 0 : i32
    %10 = arith.cmpi ne, %9, %c0_i32_5 : i32
    scf.if %10 {
      %cst_20 = arith.constant 0.000000e+00 : f32
      %32 = vector.broadcast %cst_20 : f32 to vector<1x128xf32>
      %c0_21 = arith.constant 0 : index
      %c0_22 = arith.constant 0 : index
      %33 = vector.load %arg5[%c0_21, %c0_22] : memref<1x128xf32, #tpu.memory_space<vmem>>, vector<1x128xf32>
      tpu.vector_store %arg5[%c0_21, %c0_22], %32 {strides = array<i32>} : memref<1x128xf32, #tpu.memory_space<vmem>>, vector<1x128xf32>,
      %cst_23 = arith.constant 0.000000e+00 : f32
      %34 = vector.broadcast %cst_23 : f32 to vector<1x128xf32>
      %c0_24 = arith.constant 0 : index
      %c0_25 = arith.constant 0 : index
      %35 = vector.load %arg6[%c0_24, %c0_25] : memref<1x128xf32, #tpu.memory_space<vmem>>, vector<1x128xf32>
      tpu.vector_store %arg6[%c0_24, %c0_25], %34 {strides = array<i32>} : memref<1x128xf32, #tpu.memory_space<vmem>>, vector<1x128xf32>,
    } else {
    }
    %11 = tpu.iota {dimensions = array<i32: 0>} : vector<128x128xi32>
    %c128_i32 = arith.constant 128 : i32
    %12 = arith.muli %arg0, %c128_i32 : i32
    %13 = vector.broadcast %12 : i32 to vector<128x128xi32>
    %14 = arith.addi %11, %13 : vector<128x128xi32>
    %c128_i32_6 = arith.constant 128 : i32
    %15 = vector.broadcast %c128_i32_6 : i32 to vector<128x128xi32>
    %16 = arith.cmpi slt, %14, %15 : vector<128x128xi32>
    %cst_7 = arith.constant 0.000000e+00 : f32
    %17 = vector.broadcast %cst_7 : f32 to vector<128x128xf32>
    %18 = arith.select %16, %7, %17 : vector<128x128xi1>, vector<128x128xf32>
    %c0_8 = arith.constant 0 : index
    %c0_9 = arith.constant 0 : index
    %19 = vector.load %arg5[%c0_8, %c0_9] : memref<1x128xf32, #tpu.memory_space<vmem>>, vector<1x128xf32>
    %cst_10 = arith.constant dense<0.000000e+00> : vector<128xf32>
    %20 = vector.multi_reduction <add>, %18, %cst_10 [0] : vector<128x128xf32> to vector<128xf32>
    %21 = vector.shape_cast %20 : vector<128xf32> to vector<1x128xf32>
    %22 = arith.addf %19, %21 : vector<1x128xf32>
    %c0_11 = arith.constant 0 : index
    %c0_12 = arith.constant 0 : index
    %23 = vector.load %arg5[%c0_11, %c0_12] : memref<1x128xf32, #tpu.memory_space<vmem>>, vector<1x128xf32>
    tpu.vector_store %arg5[%c0_11, %c0_12], %22 {strides = array<i32>} : memref<1x128xf32, #tpu.memory_space<vmem>>, vector<1x128xf32>,
    %c0_13 = arith.constant 0 : index
    %c0_14 = arith.constant 0 : index
    %24 = vector.load %arg6[%c0_13, %c0_14] : memref<1x128xf32, #tpu.memory_space<vmem>>, vector<1x128xf32>
    %25 = arith.mulf %18, %18 : vector<128x128xf32>
    %cst_15 = arith.constant dense<0.000000e+00> : vector<128xf32>
    %26 = vector.multi_reduction <add>, %25, %cst_15 [0] : vector<128x128xf32> to vector<128xf32>
    %27 = vector.shape_cast %26 : vector<128xf32> to vector<1x128xf32>
    %28 = arith.addf %24, %27 : vector<1x128xf32>
    %c0_16 = arith.constant 0 : index
    %c0_17 = arith.constant 0 : index
    %29 = vector.load %arg6[%c0_16, %c0_17] : memref<1x128xf32, #tpu.memory_space<vmem>>, vector<1x128xf32>
    tpu.vector_store %arg6[%c0_16, %c0_17], %28 {strides = array<i32>} : memref<1x128xf32, #tpu.memory_space<vmem>>, vector<1x128xf32>,
    %30 = arith.truncf %7 : vector<128x128xf32> to vector<128x128xbf16>
    %c0_18 = arith.constant 0 : index
    %c0_19 = arith.constant 0 : index
    %31 = vector.load %arg4[%c0_18, %c0_19] : memref<128x128xbf16, #tpu.memory_space<vmem>>, vector<128x128xbf16>
    tpu.vector_store %arg4[%c0_18, %c0_19], %30 {strides = array<i32>} : memref<128x128xbf16, #tpu.memory_space<vmem>>, vector<128x128xbf16>,
    return
  }
  func.func @transform_0(%arg0: i32) -> (i32, i32) {
    %c0_i32 = arith.constant 0 : i32
    %c0_i32_0 = arith.constant 0 : i32
    return %arg0, %c0_i32 : i32, i32
  }
  func.func @transform_1(%arg0: i32) -> (i32, i32) {
    %c0_i32 = arith.constant 0 : i32
    %c0_i32_0 = arith.constant 0 : i32
    %c0_i32_1 = arith.constant 0 : i32
    return %c0_i32, %c0_i32_0 : i32, i32
  }
  func.func @transform_2(%arg0: i32) -> (i32, i32) {
    %c0_i32 = arith.constant 0 : i32
    %c0_i32_0 = arith.constant 0 : i32
    %c0_i32_1 = arith.constant 0 : i32
    return %c0_i32, %c0_i32_0 : i32, i32
  }
  func.func @transform_3(%arg0: i32) -> (i32, i32) {
    %c0_i32 = arith.constant 0 : i32
    %c0_i32_0 = arith.constant 0 : i32
    return %arg0, %c0_i32 : i32, i32
  }
  func.func @transform_4(%arg0: i32) -> (i32, i32) {
    %c0_i32 = arith.constant 0 : i32
    %c0_i32_0 = arith.constant 0 : i32
    %c0_i32_1 = arith.constant 0 : i32
    return %c0_i32, %c0_i32_0 : i32, i32
  }
  func.func @transform_5(%arg0: i32) -> (i32, i32) {
    %c0_i32 = arith.constant 0 : i32
    %c0_i32_0 = arith.constant 0 : i32
    %c0_i32_1 = arith.constant 0 : i32
    return %c0_i32, %c0_i32_0 : i32, i32
  }
}

module attributes {stable_mosaic.version = 11 : i64} {
  func.func @_affine_kernel(%arg0: i32, %arg1: memref<128x128xbf16, #tpu.memory_space<vmem>>, %arg2: memref<1x128xf32, #tpu.memory_space<vmem>>, %arg3: memref<1x128xf32, #tpu.memory_space<vmem>>, %arg4: memref<128x128xbf16, #tpu.memory_space<vmem>>) attributes {dimension_semantics = [#tpu.dimension_semantics<parallel>], iteration_bounds = array<i64: 1>, scalar_prefetch = 0 : i64, scratch_operands = 0 : i64, tpu.core_type = #tpu.core_type<tc>, window_params = [{transform_indices = @transform_0, window_bounds = array<i64: 128, 128>}, {pipeline_mode = #tpu.pipeline_mode<synchronous>, transform_indices = @transform_1, window_bounds = array<i64: 1, 128>}, {pipeline_mode = #tpu.pipeline_mode<synchronous>, transform_indices = @transform_2, window_bounds = array<i64: 1, 128>}, {transform_indices = @transform_3, window_bounds = array<i64: 128, 128>}]} {
    %c0 = arith.constant 0 : index
    %c0_0 = arith.constant 0 : index
    %0 = vector.load %arg1[%c0, %c0_0] : memref<128x128xbf16, #tpu.memory_space<vmem>>, vector<128x128xbf16>
    %1 = arith.extf %0 : vector<128x128xbf16> to vector<128x128xf32>
    %c0_1 = arith.constant 0 : index
    %c0_2 = arith.constant 0 : index
    %2 = vector.load %arg2[%c0_1, %c0_2] : memref<1x128xf32, #tpu.memory_space<vmem>>, vector<1x128xf32>
    %3 = vector.broadcast %2 : vector<1x128xf32> to vector<128x128xf32>
    %4 = arith.mulf %1, %3 : vector<128x128xf32>
    %c0_3 = arith.constant 0 : index
    %c0_4 = arith.constant 0 : index
    %5 = vector.load %arg3[%c0_3, %c0_4] : memref<1x128xf32, #tpu.memory_space<vmem>>, vector<1x128xf32>
    %6 = vector.broadcast %5 : vector<1x128xf32> to vector<128x128xf32>
    %7 = arith.addf %4, %6 : vector<128x128xf32>
    %8 = arith.truncf %7 : vector<128x128xf32> to vector<128x128xbf16>
    %c0_5 = arith.constant 0 : index
    %c0_6 = arith.constant 0 : index
    %9 = vector.load %arg4[%c0_5, %c0_6] : memref<128x128xbf16, #tpu.memory_space<vmem>>, vector<128x128xbf16>
    tpu.vector_store %arg4[%c0_5, %c0_6], %8 {strides = array<i32>} : memref<128x128xbf16, #tpu.memory_space<vmem>>, vector<128x128xbf16>,
    return
  }
  func.func @transform_0(%arg0: i32) -> (i32, i32) {
    %c0_i32 = arith.constant 0 : i32
    %c0_i32_0 = arith.constant 0 : i32
    return %arg0, %c0_i32 : i32, i32
  }
  func.func @transform_1(%arg0: i32) -> (i32, i32) {
    %c0_i32 = arith.constant 0 : i32
    %c0_i32_0 = arith.constant 0 : i32
    %c0_i32_1 = arith.constant 0 : i32
    return %c0_i32, %c0_i32_0 : i32, i32
  }
  func.func @transform_2(%arg0: i32) -> (i32, i32) {
    %c0_i32 = arith.constant 0 : i32
    %c0_i32_0 = arith.constant 0 : i32
    %c0_i32_1 = arith.constant 0 : i32
    return %c0_i32, %c0_i32_0 : i32, i32
  }
  func.func @transform_3(%arg0: i32) -> (i32, i32) {
    %c0_i32 = arith.constant 0 : i32
    %c0_i32_0 = arith.constant 0 : i32
    return %arg0, %c0_i32 : i32, i32
  }
}

module attributes {stable_mosaic.version = 11 : i64} {
  func.func @_matmul_act_kernel(%arg0: i32, %arg1: memref<32x256xbf16, #tpu.memory_space<vmem>>, %arg2: memref<256x128xbf16, #tpu.memory_space<vmem>>, %arg3: memref<1x128xf32, #tpu.memory_space<vmem>>, %arg4: memref<32x128xbf16, #tpu.memory_space<vmem>>, %arg5: memref<1x128xf32, #tpu.memory_space<vmem>>, %arg6: memref<1x128xf32, #tpu.memory_space<vmem>>) attributes {dimension_semantics = [#tpu.dimension_semantics<arbitrary>], iteration_bounds = array<i64: 1>, scalar_prefetch = 0 : i64, scratch_operands = 0 : i64, tpu.core_type = #tpu.core_type<tc>, window_params = [{transform_indices = @transform_0, window_bounds = array<i64: 32, 256>}, {pipeline_mode = #tpu.pipeline_mode<synchronous>, transform_indices = @transform_1, window_bounds = array<i64: 256, 128>}, {pipeline_mode = #tpu.pipeline_mode<synchronous>, transform_indices = @transform_2, window_bounds = array<i64: 1, 128>}, {transform_indices = @transform_3, window_bounds = array<i64: 32, 128>}, {pipeline_mode = #tpu.pipeline_mode<synchronous>, transform_indices = @transform_4, window_bounds = array<i64: 1, 128>}, {pipeline_mode = #tpu.pipeline_mode<synchronous>, transform_indices = @transform_5, window_bounds = array<i64: 1, 128>}]} {
    %c0 = arith.constant 0 : index
    %c0_0 = arith.constant 0 : index
    %0 = vector.load %arg1[%c0, %c0_0] : memref<32x256xbf16, #tpu.memory_space<vmem>>, vector<32x256xbf16>
    %cst = arith.constant 0.000000e+00 : bf16
    %1 = vector.broadcast %cst : bf16 to vector<32x256xbf16>
    %2 = arith.cmpf oge, %0, %1 : vector<32x256xbf16>
    %cst_1 = arith.constant 2.001950e-01 : bf16
    %3 = vector.broadcast %cst_1 : bf16 to vector<32x256xbf16>
    %4 = arith.mulf %0, %3 : vector<32x256xbf16>
    %5 = arith.select %2, %0, %4 : vector<32x256xi1>, vector<32x256xbf16>
    %c0_2 = arith.constant 0 : index
    %c0_3 = arith.constant 0 : index
    %6 = vector.load %arg2[%c0_2, %c0_3] : memref<256x128xbf16, #tpu.memory_space<vmem>>, vector<256x128xbf16>
    %cst_4 = arith.constant dense<0.000000e+00> : vector<32x128xf32>
    %7 = tpu.matmul %5, %6, %cst_4 {dimension_numbers = #tpu.dot_dimension_numbers<[1], [0], [0], [1], [0, 0, 1, 1], [], []>} : vector<32x256xbf16>, vector<256x128xbf16>, vector<32x128xf32> -> vector<32x128xf32>
    %c0_i32 = arith.constant 0 : i32
    %8 = arith.cmpi eq, %arg0, %c0_i32 : i32
    %9 = arith.extui %8 : i1 to i32
    %c0_i32_5 = arith.constant 0 : i32
    %10 = arith.cmpi ne, %9, %c0_i32_5 : i32
    scf.if %10 {
      %cst_20 = arith.constant 0.000000e+00 : f32
      %32 = vector.broadcast %cst_20 : f32 to vector<1x128xf32>
      %c0_21 = arith.constant 0 : index
      %c0_22 = arith.constant 0 : index
      %33 = vector.load %arg5[%c0_21, %c0_22] : memref<1x128xf32, #tpu.memory_space<vmem>>, vector<1x128xf32>
      tpu.vector_store %arg5[%c0_21, %c0_22], %32 {strides = array<i32>} : memref<1x128xf32, #tpu.memory_space<vmem>>, vector<1x128xf32>,
      %cst_23 = arith.constant 0.000000e+00 : f32
      %34 = vector.broadcast %cst_23 : f32 to vector<1x128xf32>
      %c0_24 = arith.constant 0 : index
      %c0_25 = arith.constant 0 : index
      %35 = vector.load %arg6[%c0_24, %c0_25] : memref<1x128xf32, #tpu.memory_space<vmem>>, vector<1x128xf32>
      tpu.vector_store %arg6[%c0_24, %c0_25], %34 {strides = array<i32>} : memref<1x128xf32, #tpu.memory_space<vmem>>, vector<1x128xf32>,
    } else {
    }
    %11 = tpu.iota {dimensions = array<i32: 0>} : vector<32x128xi32>
    %c32_i32 = arith.constant 32 : i32
    %12 = arith.muli %arg0, %c32_i32 : i32
    %13 = vector.broadcast %12 : i32 to vector<32x128xi32>
    %14 = arith.addi %11, %13 : vector<32x128xi32>
    %c32_i32_6 = arith.constant 32 : i32
    %15 = vector.broadcast %c32_i32_6 : i32 to vector<32x128xi32>
    %16 = arith.cmpi slt, %14, %15 : vector<32x128xi32>
    %cst_7 = arith.constant 0.000000e+00 : f32
    %17 = vector.broadcast %cst_7 : f32 to vector<32x128xf32>
    %18 = arith.select %16, %7, %17 : vector<32x128xi1>, vector<32x128xf32>
    %c0_8 = arith.constant 0 : index
    %c0_9 = arith.constant 0 : index
    %19 = vector.load %arg5[%c0_8, %c0_9] : memref<1x128xf32, #tpu.memory_space<vmem>>, vector<1x128xf32>
    %cst_10 = arith.constant dense<0.000000e+00> : vector<128xf32>
    %20 = vector.multi_reduction <add>, %18, %cst_10 [0] : vector<32x128xf32> to vector<128xf32>
    %21 = vector.shape_cast %20 : vector<128xf32> to vector<1x128xf32>
    %22 = arith.addf %19, %21 : vector<1x128xf32>
    %c0_11 = arith.constant 0 : index
    %c0_12 = arith.constant 0 : index
    %23 = vector.load %arg5[%c0_11, %c0_12] : memref<1x128xf32, #tpu.memory_space<vmem>>, vector<1x128xf32>
    tpu.vector_store %arg5[%c0_11, %c0_12], %22 {strides = array<i32>} : memref<1x128xf32, #tpu.memory_space<vmem>>, vector<1x128xf32>,
    %c0_13 = arith.constant 0 : index
    %c0_14 = arith.constant 0 : index
    %24 = vector.load %arg6[%c0_13, %c0_14] : memref<1x128xf32, #tpu.memory_space<vmem>>, vector<1x128xf32>
    %25 = arith.mulf %18, %18 : vector<32x128xf32>
    %cst_15 = arith.constant dense<0.000000e+00> : vector<128xf32>
    %26 = vector.multi_reduction <add>, %25, %cst_15 [0] : vector<32x128xf32> to vector<128xf32>
    %27 = vector.shape_cast %26 : vector<128xf32> to vector<1x128xf32>
    %28 = arith.addf %24, %27 : vector<1x128xf32>
    %c0_16 = arith.constant 0 : index
    %c0_17 = arith.constant 0 : index
    %29 = vector.load %arg6[%c0_16, %c0_17] : memref<1x128xf32, #tpu.memory_space<vmem>>, vector<1x128xf32>
    tpu.vector_store %arg6[%c0_16, %c0_17], %28 {strides = array<i32>} : memref<1x128xf32, #tpu.memory_space<vmem>>, vector<1x128xf32>,
    %30 = arith.truncf %7 : vector<32x128xf32> to vector<32x128xbf16>
    %c0_18 = arith.constant 0 : index
    %c0_19 = arith.constant 0 : index
    %31 = vector.load %arg4[%c0_18, %c0_19] : memref<32x128xbf16, #tpu.memory_space<vmem>>, vector<32x128xbf16>
    tpu.vector_store %arg4[%c0_18, %c0_19], %30 {strides = array<i32>} : memref<32x128xbf16, #tpu.memory_space<vmem>>, vector<32x128xbf16>,
    return
  }
  func.func @transform_0(%arg0: i32) -> (i32, i32) {
    %c0_i32 = arith.constant 0 : i32
    %c0_i32_0 = arith.constant 0 : i32
    return %arg0, %c0_i32 : i32, i32
  }
  func.func @transform_1(%arg0: i32) -> (i32, i32) {
    %c0_i32 = arith.constant 0 : i32
    %c0_i32_0 = arith.constant 0 : i32
    %c0_i32_1 = arith.constant 0 : i32
    return %c0_i32, %c0_i32_0 : i32, i32
  }
  func.func @transform_2(%arg0: i32) -> (i32, i32) {
    %c0_i32 = arith.constant 0 : i32
    %c0_i32_0 = arith.constant 0 : i32
    %c0_i32_1 = arith.constant 0 : i32
    return %c0_i32, %c0_i32_0 : i32, i32
  }
  func.func @transform_3(%arg0: i32) -> (i32, i32) {
    %c0_i32 = arith.constant 0 : i32
    %c0_i32_0 = arith.constant 0 : i32
    return %arg0, %c0_i32 : i32, i32
  }
  func.func @transform_4(%arg0: i32) -> (i32, i32) {
    %c0_i32 = arith.constant 0 : i32
    %c0_i32_0 = arith.constant 0 : i32
    %c0_i32_1 = arith.constant 0 : i32
    return %c0_i32, %c0_i32_0 : i32, i32
  }
  func.func @transform_5(%arg0: i32) -> (i32, i32) {
    %c0_i32 = arith.constant 0 : i32
    %c0_i32_0 = arith.constant 0 : i32
    %c0_i32_1 = arith.constant 0 : i32
    return %c0_i32, %c0_i32_0 : i32, i32
  }
}

module attributes {stable_mosaic.version = 11 : i64} {
  func.func @_affine_kernel(%arg0: i32, %arg1: memref<32x128xbf16, #tpu.memory_space<vmem>>, %arg2: memref<1x128xf32, #tpu.memory_space<vmem>>, %arg3: memref<1x128xf32, #tpu.memory_space<vmem>>, %arg4: memref<32x128xbf16, #tpu.memory_space<vmem>>) attributes {dimension_semantics = [#tpu.dimension_semantics<parallel>], iteration_bounds = array<i64: 1>, scalar_prefetch = 0 : i64, scratch_operands = 0 : i64, tpu.core_type = #tpu.core_type<tc>, window_params = [{transform_indices = @transform_0, window_bounds = array<i64: 32, 128>}, {pipeline_mode = #tpu.pipeline_mode<synchronous>, transform_indices = @transform_1, window_bounds = array<i64: 1, 128>}, {pipeline_mode = #tpu.pipeline_mode<synchronous>, transform_indices = @transform_2, window_bounds = array<i64: 1, 128>}, {transform_indices = @transform_3, window_bounds = array<i64: 32, 128>}]} {
    %c0 = arith.constant 0 : index
    %c0_0 = arith.constant 0 : index
    %0 = vector.load %arg1[%c0, %c0_0] : memref<32x128xbf16, #tpu.memory_space<vmem>>, vector<32x128xbf16>
    %1 = arith.extf %0 : vector<32x128xbf16> to vector<32x128xf32>
    %c0_1 = arith.constant 0 : index
    %c0_2 = arith.constant 0 : index
    %2 = vector.load %arg2[%c0_1, %c0_2] : memref<1x128xf32, #tpu.memory_space<vmem>>, vector<1x128xf32>
    %3 = vector.broadcast %2 : vector<1x128xf32> to vector<32x128xf32>
    %4 = arith.mulf %1, %3 : vector<32x128xf32>
    %c0_3 = arith.constant 0 : index
    %c0_4 = arith.constant 0 : index
    %5 = vector.load %arg3[%c0_3, %c0_4] : memref<1x128xf32, #tpu.memory_space<vmem>>, vector<1x128xf32>
    %6 = vector.broadcast %5 : vector<1x128xf32> to vector<32x128xf32>
    %7 = arith.addf %4, %6 : vector<32x128xf32>
    %8 = arith.truncf %7 : vector<32x128xf32> to vector<32x128xbf16>
    %c0_5 = arith.constant 0 : index
    %c0_6 = arith.constant 0 : index
    %9 = vector.load %arg4[%c0_5, %c0_6] : memref<32x128xbf16, #tpu.memory_space<vmem>>, vector<32x128xbf16>
    tpu.vector_store %arg4[%c0_5, %c0_6], %8 {strides = array<i32>} : memref<32x128xbf16, #tpu.memory_space<vmem>>, vector<32x128xbf16>,
    return
  }
  func.func @transform_0(%arg0: i32) -> (i32, i32) {
    %c0_i32 = arith.constant 0 : i32
    %c0_i32_0 = arith.constant 0 : i32
    return %arg0, %c0_i32 : i32, i32
  }
  func.func @transform_1(%arg0: i32) -> (i32, i32) {
    %c0_i32 = arith.constant 0 : i32
    %c0_i32_0 = arith.constant 0 : i32
    %c0_i32_1 = arith.constant 0 : i32
    return %c0_i32, %c0_i32_0 : i32, i32
  }
  func.func @transform_2(%arg0: i32) -> (i32, i32) {
    %c0_i32 = arith.constant 0 : i32
    %c0_i32_0 = arith.constant 0 : i32
    %c0_i32_1 = arith.constant 0 : i32
    return %c0_i32, %c0_i32_0 : i32, i32
  }
  func.func @transform_3(%arg0: i32) -> (i32, i32) {
    %c0_i32 = arith.constant 0 : i32
    %c0_i32_0 = arith.constant 0 : i32
    return %arg0, %c0_i32 : i32, i32
  }
}

module attributes {stable_mosaic.version = 11 : i64} {
  func.func @_matmul_act_kernel(%arg0: i32, %arg1: memref<8x512xbf16, #tpu.memory_space<vmem>>, %arg2: memref<512x128xbf16, #tpu.memory_space<vmem>>, %arg3: memref<1x128xf32, #tpu.memory_space<vmem>>, %arg4: memref<8x128xbf16, #tpu.memory_space<vmem>>, %arg5: memref<1x128xf32, #tpu.memory_space<vmem>>, %arg6: memref<1x128xf32, #tpu.memory_space<vmem>>) attributes {dimension_semantics = [#tpu.dimension_semantics<arbitrary>], iteration_bounds = array<i64: 1>, scalar_prefetch = 0 : i64, scratch_operands = 0 : i64, tpu.core_type = #tpu.core_type<tc>, window_params = [{transform_indices = @transform_0, window_bounds = array<i64: 8, 512>}, {pipeline_mode = #tpu.pipeline_mode<synchronous>, transform_indices = @transform_1, window_bounds = array<i64: 512, 128>}, {pipeline_mode = #tpu.pipeline_mode<synchronous>, transform_indices = @transform_2, window_bounds = array<i64: 1, 128>}, {transform_indices = @transform_3, window_bounds = array<i64: 8, 128>}, {pipeline_mode = #tpu.pipeline_mode<synchronous>, transform_indices = @transform_4, window_bounds = array<i64: 1, 128>}, {pipeline_mode = #tpu.pipeline_mode<synchronous>, transform_indices = @transform_5, window_bounds = array<i64: 1, 128>}]} {
    %c0 = arith.constant 0 : index
    %c0_0 = arith.constant 0 : index
    %0 = vector.load %arg1[%c0, %c0_0] : memref<8x512xbf16, #tpu.memory_space<vmem>>, vector<8x512xbf16>
    %cst = arith.constant 0.000000e+00 : bf16
    %1 = vector.broadcast %cst : bf16 to vector<8x512xbf16>
    %2 = arith.cmpf oge, %0, %1 : vector<8x512xbf16>
    %cst_1 = arith.constant 2.001950e-01 : bf16
    %3 = vector.broadcast %cst_1 : bf16 to vector<8x512xbf16>
    %4 = arith.mulf %0, %3 : vector<8x512xbf16>
    %5 = arith.select %2, %0, %4 : vector<8x512xi1>, vector<8x512xbf16>
    %c0_2 = arith.constant 0 : index
    %c0_3 = arith.constant 0 : index
    %6 = vector.load %arg2[%c0_2, %c0_3] : memref<512x128xbf16, #tpu.memory_space<vmem>>, vector<512x128xbf16>
    %cst_4 = arith.constant dense<0.000000e+00> : vector<8x128xf32>
    %7 = tpu.matmul %5, %6, %cst_4 {dimension_numbers = #tpu.dot_dimension_numbers<[1], [0], [0], [1], [0, 0, 1, 1], [], []>} : vector<8x512xbf16>, vector<512x128xbf16>, vector<8x128xf32> -> vector<8x128xf32>
    %c0_i32 = arith.constant 0 : i32
    %8 = arith.cmpi eq, %arg0, %c0_i32 : i32
    %9 = arith.extui %8 : i1 to i32
    %c0_i32_5 = arith.constant 0 : i32
    %10 = arith.cmpi ne, %9, %c0_i32_5 : i32
    scf.if %10 {
      %cst_20 = arith.constant 0.000000e+00 : f32
      %32 = vector.broadcast %cst_20 : f32 to vector<1x128xf32>
      %c0_21 = arith.constant 0 : index
      %c0_22 = arith.constant 0 : index
      %33 = vector.load %arg5[%c0_21, %c0_22] : memref<1x128xf32, #tpu.memory_space<vmem>>, vector<1x128xf32>
      tpu.vector_store %arg5[%c0_21, %c0_22], %32 {strides = array<i32>} : memref<1x128xf32, #tpu.memory_space<vmem>>, vector<1x128xf32>,
      %cst_23 = arith.constant 0.000000e+00 : f32
      %34 = vector.broadcast %cst_23 : f32 to vector<1x128xf32>
      %c0_24 = arith.constant 0 : index
      %c0_25 = arith.constant 0 : index
      %35 = vector.load %arg6[%c0_24, %c0_25] : memref<1x128xf32, #tpu.memory_space<vmem>>, vector<1x128xf32>
      tpu.vector_store %arg6[%c0_24, %c0_25], %34 {strides = array<i32>} : memref<1x128xf32, #tpu.memory_space<vmem>>, vector<1x128xf32>,
    } else {
    }
    %11 = tpu.iota {dimensions = array<i32: 0>} : vector<8x128xi32>
    %c8_i32 = arith.constant 8 : i32
    %12 = arith.muli %arg0, %c8_i32 : i32
    %13 = vector.broadcast %12 : i32 to vector<8x128xi32>
    %14 = arith.addi %11, %13 : vector<8x128xi32>
    %c8_i32_6 = arith.constant 8 : i32
    %15 = vector.broadcast %c8_i32_6 : i32 to vector<8x128xi32>
    %16 = arith.cmpi slt, %14, %15 : vector<8x128xi32>
    %cst_7 = arith.constant 0.000000e+00 : f32
    %17 = vector.broadcast %cst_7 : f32 to vector<8x128xf32>
    %18 = arith.select %16, %7, %17 : vector<8x128xi1>, vector<8x128xf32>
    %c0_8 = arith.constant 0 : index
    %c0_9 = arith.constant 0 : index
    %19 = vector.load %arg5[%c0_8, %c0_9] : memref<1x128xf32, #tpu.memory_space<vmem>>, vector<1x128xf32>
    %cst_10 = arith.constant dense<0.000000e+00> : vector<128xf32>
    %20 = vector.multi_reduction <add>, %18, %cst_10 [0] : vector<8x128xf32> to vector<128xf32>
    %21 = vector.shape_cast %20 : vector<128xf32> to vector<1x128xf32>
    %22 = arith.addf %19, %21 : vector<1x128xf32>
    %c0_11 = arith.constant 0 : index
    %c0_12 = arith.constant 0 : index
    %23 = vector.load %arg5[%c0_11, %c0_12] : memref<1x128xf32, #tpu.memory_space<vmem>>, vector<1x128xf32>
    tpu.vector_store %arg5[%c0_11, %c0_12], %22 {strides = array<i32>} : memref<1x128xf32, #tpu.memory_space<vmem>>, vector<1x128xf32>,
    %c0_13 = arith.constant 0 : index
    %c0_14 = arith.constant 0 : index
    %24 = vector.load %arg6[%c0_13, %c0_14] : memref<1x128xf32, #tpu.memory_space<vmem>>, vector<1x128xf32>
    %25 = arith.mulf %18, %18 : vector<8x128xf32>
    %cst_15 = arith.constant dense<0.000000e+00> : vector<128xf32>
    %26 = vector.multi_reduction <add>, %25, %cst_15 [0] : vector<8x128xf32> to vector<128xf32>
    %27 = vector.shape_cast %26 : vector<128xf32> to vector<1x128xf32>
    %28 = arith.addf %24, %27 : vector<1x128xf32>
    %c0_16 = arith.constant 0 : index
    %c0_17 = arith.constant 0 : index
    %29 = vector.load %arg6[%c0_16, %c0_17] : memref<1x128xf32, #tpu.memory_space<vmem>>, vector<1x128xf32>
    tpu.vector_store %arg6[%c0_16, %c0_17], %28 {strides = array<i32>} : memref<1x128xf32, #tpu.memory_space<vmem>>, vector<1x128xf32>,
    %30 = arith.truncf %7 : vector<8x128xf32> to vector<8x128xbf16>
    %c0_18 = arith.constant 0 : index
    %c0_19 = arith.constant 0 : index
    %31 = vector.load %arg4[%c0_18, %c0_19] : memref<8x128xbf16, #tpu.memory_space<vmem>>, vector<8x128xbf16>
    tpu.vector_store %arg4[%c0_18, %c0_19], %30 {strides = array<i32>} : memref<8x128xbf16, #tpu.memory_space<vmem>>, vector<8x128xbf16>,
    return
  }
  func.func @transform_0(%arg0: i32) -> (i32, i32) {
    %c0_i32 = arith.constant 0 : i32
    %c0_i32_0 = arith.constant 0 : i32
    return %arg0, %c0_i32 : i32, i32
  }
  func.func @transform_1(%arg0: i32) -> (i32, i32) {
    %c0_i32 = arith.constant 0 : i32
    %c0_i32_0 = arith.constant 0 : i32
    %c0_i32_1 = arith.constant 0 : i32
    return %c0_i32, %c0_i32_0 : i32, i32
  }
  func.func @transform_2(%arg0: i32) -> (i32, i32) {
    %c0_i32 = arith.constant 0 : i32
    %c0_i32_0 = arith.constant 0 : i32
    %c0_i32_1 = arith.constant 0 : i32
    return %c0_i32, %c0_i32_0 : i32, i32
  }
  func.func @transform_3(%arg0: i32) -> (i32, i32) {
    %c0_i32 = arith.constant 0 : i32
    %c0_i32_0 = arith.constant 0 : i32
    return %arg0, %c0_i32 : i32, i32
  }
  func.func @transform_4(%arg0: i32) -> (i32, i32) {
    %c0_i32 = arith.constant 0 : i32
    %c0_i32_0 = arith.constant 0 : i32
    %c0_i32_1 = arith.constant 0 : i32
    return %c0_i32, %c0_i32_0 : i32, i32
  }
  func.func @transform_5(%arg0: i32) -> (i32, i32) {
    %c0_i32 = arith.constant 0 : i32
    %c0_i32_0 = arith.constant 0 : i32
    %c0_i32_1 = arith.constant 0 : i32
    return %c0_i32, %c0_i32_0 : i32, i32
  }
}

module attributes {stable_mosaic.version = 11 : i64} {
  func.func @_affine_kernel(%arg0: i32, %arg1: memref<8x128xbf16, #tpu.memory_space<vmem>>, %arg2: memref<1x128xf32, #tpu.memory_space<vmem>>, %arg3: memref<1x128xf32, #tpu.memory_space<vmem>>, %arg4: memref<8x128xbf16, #tpu.memory_space<vmem>>) attributes {dimension_semantics = [#tpu.dimension_semantics<parallel>], iteration_bounds = array<i64: 1>, scalar_prefetch = 0 : i64, scratch_operands = 0 : i64, tpu.core_type = #tpu.core_type<tc>, window_params = [{transform_indices = @transform_0, window_bounds = array<i64: 8, 128>}, {pipeline_mode = #tpu.pipeline_mode<synchronous>, transform_indices = @transform_1, window_bounds = array<i64: 1, 128>}, {pipeline_mode = #tpu.pipeline_mode<synchronous>, transform_indices = @transform_2, window_bounds = array<i64: 1, 128>}, {transform_indices = @transform_3, window_bounds = array<i64: 8, 128>}]} {
    %c0 = arith.constant 0 : index
    %c0_0 = arith.constant 0 : index
    %0 = vector.load %arg1[%c0, %c0_0] : memref<8x128xbf16, #tpu.memory_space<vmem>>, vector<8x128xbf16>
    %1 = arith.extf %0 : vector<8x128xbf16> to vector<8x128xf32>
    %c0_1 = arith.constant 0 : index
    %c0_2 = arith.constant 0 : index
    %2 = vector.load %arg2[%c0_1, %c0_2] : memref<1x128xf32, #tpu.memory_space<vmem>>, vector<1x128xf32>
    %3 = vector.broadcast %2 : vector<1x128xf32> to vector<8x128xf32>
    %4 = arith.mulf %1, %3 : vector<8x128xf32>
    %c0_3 = arith.constant 0 : index
    %c0_4 = arith.constant 0 : index
    %5 = vector.load %arg3[%c0_3, %c0_4] : memref<1x128xf32, #tpu.memory_space<vmem>>, vector<1x128xf32>
    %6 = vector.broadcast %5 : vector<1x128xf32> to vector<8x128xf32>
    %7 = arith.addf %4, %6 : vector<8x128xf32>
    %8 = arith.truncf %7 : vector<8x128xf32> to vector<8x128xbf16>
    %c0_5 = arith.constant 0 : index
    %c0_6 = arith.constant 0 : index
    %9 = vector.load %arg4[%c0_5, %c0_6] : memref<8x128xbf16, #tpu.memory_space<vmem>>, vector<8x128xbf16>
    tpu.vector_store %arg4[%c0_5, %c0_6], %8 {strides = array<i32>} : memref<8x128xbf16, #tpu.memory_space<vmem>>, vector<8x128xbf16>,
    return
  }
  func.func @transform_0(%arg0: i32) -> (i32, i32) {
    %c0_i32 = arith.constant 0 : i32
    %c0_i32_0 = arith.constant 0 : i32
    return %arg0, %c0_i32 : i32, i32
  }
  func.func @transform_1(%arg0: i32) -> (i32, i32) {
    %c0_i32 = arith.constant 0 : i32
    %c0_i32_0 = arith.constant 0 : i32
    %c0_i32_1 = arith.constant 0 : i32
    return %c0_i32, %c0_i32_0 : i32, i32
  }
  func.func @transform_2(%arg0: i32) -> (i32, i32) {
    %c0_i32 = arith.constant 0 : i32
    %c0_i32_0 = arith.constant 0 : i32
    %c0_i32_1 = arith.constant 0 : i32
    return %c0_i32, %c0_i32_0 : i32, i32
  }
  func.func @transform_3(%arg0: i32) -> (i32, i32) {
    %c0_i32 = arith.constant 0 : i32
    %c0_i32_0 = arith.constant 0 : i32
    return %arg0, %c0_i32 : i32, i32
  }
}

module attributes {stable_mosaic.version = 11 : i64} {
  func.func @_matmul_act_kernel(%arg0: i32, %arg1: memref<2x1024xbf16, #tpu.memory_space<vmem>>, %arg2: memref<1024x128xbf16, #tpu.memory_space<vmem>>, %arg3: memref<1x128xf32, #tpu.memory_space<vmem>>, %arg4: memref<2x128xbf16, #tpu.memory_space<vmem>>) attributes {dimension_semantics = [#tpu.dimension_semantics<parallel>], iteration_bounds = array<i64: 1>, scalar_prefetch = 0 : i64, scratch_operands = 0 : i64, tpu.core_type = #tpu.core_type<tc>, window_params = [{transform_indices = @transform_0, window_bounds = array<i64: 2, 1024>}, {pipeline_mode = #tpu.pipeline_mode<synchronous>, transform_indices = @transform_1, window_bounds = array<i64: 1024, 128>}, {pipeline_mode = #tpu.pipeline_mode<synchronous>, transform_indices = @transform_2, window_bounds = array<i64: 1, 128>}, {transform_indices = @transform_3, window_bounds = array<i64: 2, 128>}]} {
    %c0 = arith.constant 0 : index
    %c0_0 = arith.constant 0 : index
    %0 = vector.load %arg1[%c0, %c0_0] : memref<2x1024xbf16, #tpu.memory_space<vmem>>, vector<2x1024xbf16>
    %cst = arith.constant 0.000000e+00 : bf16
    %1 = vector.broadcast %cst : bf16 to vector<2x1024xbf16>
    %2 = arith.cmpf oge, %0, %1 : vector<2x1024xbf16>
    %cst_1 = arith.constant 2.001950e-01 : bf16
    %3 = vector.broadcast %cst_1 : bf16 to vector<2x1024xbf16>
    %4 = arith.mulf %0, %3 : vector<2x1024xbf16>
    %5 = arith.select %2, %0, %4 : vector<2x1024xi1>, vector<2x1024xbf16>
    %c0_2 = arith.constant 0 : index
    %c0_3 = arith.constant 0 : index
    %6 = vector.load %arg2[%c0_2, %c0_3] : memref<1024x128xbf16, #tpu.memory_space<vmem>>, vector<1024x128xbf16>
    %cst_4 = arith.constant dense<0.000000e+00> : vector<2x128xf32>
    %7 = tpu.matmul %5, %6, %cst_4 {dimension_numbers = #tpu.dot_dimension_numbers<[1], [0], [0], [1], [0, 0, 1, 1], [], []>} : vector<2x1024xbf16>, vector<1024x128xbf16>, vector<2x128xf32> -> vector<2x128xf32>
    %8 = arith.truncf %7 : vector<2x128xf32> to vector<2x128xbf16>
    %c0_5 = arith.constant 0 : index
    %c0_6 = arith.constant 0 : index
    %9 = vector.load %arg4[%c0_5, %c0_6] : memref<2x128xbf16, #tpu.memory_space<vmem>>, vector<2x128xbf16>
    tpu.vector_store %arg4[%c0_5, %c0_6], %8 {strides = array<i32>} : memref<2x128xbf16, #tpu.memory_space<vmem>>, vector<2x128xbf16>,
    return
  }
  func.func @transform_0(%arg0: i32) -> (i32, i32) {
    %c0_i32 = arith.constant 0 : i32
    %c0_i32_0 = arith.constant 0 : i32
    return %arg0, %c0_i32 : i32, i32
  }
  func.func @transform_1(%arg0: i32) -> (i32, i32) {
    %c0_i32 = arith.constant 0 : i32
    %c0_i32_0 = arith.constant 0 : i32
    %c0_i32_1 = arith.constant 0 : i32
    return %c0_i32, %c0_i32_0 : i32, i32
  }
  func.func @transform_2(%arg0: i32) -> (i32, i32) {
    %c0_i32 = arith.constant 0 : i32
    %c0_i32_0 = arith.constant 0 : i32
    %c0_i32_1 = arith.constant 0 : i32
    return %c0_i32, %c0_i32_0 : i32, i32
  }
  func.func @transform_3(%arg0: i32) -> (i32, i32) {
    %c0_i32 = arith.constant 0 : i32
    %c0_i32_0 = arith.constant 0 : i32
    return %arg0, %c0_i32 : i32, i32
  }
}

module attributes {stable_mosaic.version = 11 : i64} {
  func.func @_matmul_act_kernel(%arg0: i32, %arg1: memref<2x256xbf16, #tpu.memory_space<vmem>>, %arg2: memref<256x128xbf16, #tpu.memory_space<vmem>>, %arg3: memref<1x128xf32, #tpu.memory_space<vmem>>, %arg4: memref<2x128xbf16, #tpu.memory_space<vmem>>, %arg5: memref<1x128xf32, #tpu.memory_space<vmem>>, %arg6: memref<1x128xf32, #tpu.memory_space<vmem>>) attributes {dimension_semantics = [#tpu.dimension_semantics<arbitrary>], iteration_bounds = array<i64: 1>, scalar_prefetch = 0 : i64, scratch_operands = 0 : i64, tpu.core_type = #tpu.core_type<tc>, window_params = [{transform_indices = @transform_0, window_bounds = array<i64: 2, 256>}, {pipeline_mode = #tpu.pipeline_mode<synchronous>, transform_indices = @transform_1, window_bounds = array<i64: 256, 128>}, {pipeline_mode = #tpu.pipeline_mode<synchronous>, transform_indices = @transform_2, window_bounds = array<i64: 1, 128>}, {transform_indices = @transform_3, window_bounds = array<i64: 2, 128>}, {pipeline_mode = #tpu.pipeline_mode<synchronous>, transform_indices = @transform_4, window_bounds = array<i64: 1, 128>}, {pipeline_mode = #tpu.pipeline_mode<synchronous>, transform_indices = @transform_5, window_bounds = array<i64: 1, 128>}]} {
    %c0 = arith.constant 0 : index
    %c0_0 = arith.constant 0 : index
    %0 = vector.load %arg1[%c0, %c0_0] : memref<2x256xbf16, #tpu.memory_space<vmem>>, vector<2x256xbf16>
    %cst = arith.constant 0.000000e+00 : bf16
    %1 = vector.broadcast %cst : bf16 to vector<2x256xbf16>
    %2 = arith.maximumf %0, %1 : vector<2x256xbf16>
    %c0_1 = arith.constant 0 : index
    %c0_2 = arith.constant 0 : index
    %3 = vector.load %arg2[%c0_1, %c0_2] : memref<256x128xbf16, #tpu.memory_space<vmem>>, vector<256x128xbf16>
    %cst_3 = arith.constant dense<0.000000e+00> : vector<2x128xf32>
    %4 = tpu.matmul %2, %3, %cst_3 {dimension_numbers = #tpu.dot_dimension_numbers<[1], [0], [0], [1], [0, 0, 1, 1], [], []>} : vector<2x256xbf16>, vector<256x128xbf16>, vector<2x128xf32> -> vector<2x128xf32>
    %c0_i32 = arith.constant 0 : i32
    %5 = arith.cmpi eq, %arg0, %c0_i32 : i32
    %6 = arith.extui %5 : i1 to i32
    %c0_i32_4 = arith.constant 0 : i32
    %7 = arith.cmpi ne, %6, %c0_i32_4 : i32
    scf.if %7 {
      %cst_19 = arith.constant 0.000000e+00 : f32
      %29 = vector.broadcast %cst_19 : f32 to vector<1x128xf32>
      %c0_20 = arith.constant 0 : index
      %c0_21 = arith.constant 0 : index
      %30 = vector.load %arg5[%c0_20, %c0_21] : memref<1x128xf32, #tpu.memory_space<vmem>>, vector<1x128xf32>
      tpu.vector_store %arg5[%c0_20, %c0_21], %29 {strides = array<i32>} : memref<1x128xf32, #tpu.memory_space<vmem>>, vector<1x128xf32>,
      %cst_22 = arith.constant 0.000000e+00 : f32
      %31 = vector.broadcast %cst_22 : f32 to vector<1x128xf32>
      %c0_23 = arith.constant 0 : index
      %c0_24 = arith.constant 0 : index
      %32 = vector.load %arg6[%c0_23, %c0_24] : memref<1x128xf32, #tpu.memory_space<vmem>>, vector<1x128xf32>
      tpu.vector_store %arg6[%c0_23, %c0_24], %31 {strides = array<i32>} : memref<1x128xf32, #tpu.memory_space<vmem>>, vector<1x128xf32>,
    } else {
    }
    %8 = tpu.iota {dimensions = array<i32: 0>} : vector<2x128xi32>
    %c2_i32 = arith.constant 2 : i32
    %9 = arith.muli %arg0, %c2_i32 : i32
    %10 = vector.broadcast %9 : i32 to vector<2x128xi32>
    %11 = arith.addi %8, %10 : vector<2x128xi32>
    %c2_i32_5 = arith.constant 2 : i32
    %12 = vector.broadcast %c2_i32_5 : i32 to vector<2x128xi32>
    %13 = arith.cmpi slt, %11, %12 : vector<2x128xi32>
    %cst_6 = arith.constant 0.000000e+00 : f32
    %14 = vector.broadcast %cst_6 : f32 to vector<2x128xf32>
    %15 = arith.select %13, %4, %14 : vector<2x128xi1>, vector<2x128xf32>
    %c0_7 = arith.constant 0 : index
    %c0_8 = arith.constant 0 : index
    %16 = vector.load %arg5[%c0_7, %c0_8] : memref<1x128xf32, #tpu.memory_space<vmem>>, vector<1x128xf32>
    %cst_9 = arith.constant dense<0.000000e+00> : vector<128xf32>
    %17 = vector.multi_reduction <add>, %15, %cst_9 [0] : vector<2x128xf32> to vector<128xf32>
    %18 = vector.shape_cast %17 : vector<128xf32> to vector<1x128xf32>
    %19 = arith.addf %16, %18 : vector<1x128xf32>
    %c0_10 = arith.constant 0 : index
    %c0_11 = arith.constant 0 : index
    %20 = vector.load %arg5[%c0_10, %c0_11] : memref<1x128xf32, #tpu.memory_space<vmem>>, vector<1x128xf32>
    tpu.vector_store %arg5[%c0_10, %c0_11], %19 {strides = array<i32>} : memref<1x128xf32, #tpu.memory_space<vmem>>, vector<1x128xf32>,
    %c0_12 = arith.constant 0 : index
    %c0_13 = arith.constant 0 : index
    %21 = vector.load %arg6[%c0_12, %c0_13] : memref<1x128xf32, #tpu.memory_space<vmem>>, vector<1x128xf32>
    %22 = arith.mulf %15, %15 : vector<2x128xf32>
    %cst_14 = arith.constant dense<0.000000e+00> : vector<128xf32>
    %23 = vector.multi_reduction <add>, %22, %cst_14 [0] : vector<2x128xf32> to vector<128xf32>
    %24 = vector.shape_cast %23 : vector<128xf32> to vector<1x128xf32>
    %25 = arith.addf %21, %24 : vector<1x128xf32>
    %c0_15 = arith.constant 0 : index
    %c0_16 = arith.constant 0 : index
    %26 = vector.load %arg6[%c0_15, %c0_16] : memref<1x128xf32, #tpu.memory_space<vmem>>, vector<1x128xf32>
    tpu.vector_store %arg6[%c0_15, %c0_16], %25 {strides = array<i32>} : memref<1x128xf32, #tpu.memory_space<vmem>>, vector<1x128xf32>,
    %27 = arith.truncf %4 : vector<2x128xf32> to vector<2x128xbf16>
    %c0_17 = arith.constant 0 : index
    %c0_18 = arith.constant 0 : index
    %28 = vector.load %arg4[%c0_17, %c0_18] : memref<2x128xbf16, #tpu.memory_space<vmem>>, vector<2x128xbf16>
    tpu.vector_store %arg4[%c0_17, %c0_18], %27 {strides = array<i32>} : memref<2x128xbf16, #tpu.memory_space<vmem>>, vector<2x128xbf16>,
    return
  }
  func.func @transform_0(%arg0: i32) -> (i32, i32) {
    %c0_i32 = arith.constant 0 : i32
    %c0_i32_0 = arith.constant 0 : i32
    return %arg0, %c0_i32 : i32, i32
  }
  func.func @transform_1(%arg0: i32) -> (i32, i32) {
    %c0_i32 = arith.constant 0 : i32
    %c0_i32_0 = arith.constant 0 : i32
    %c0_i32_1 = arith.constant 0 : i32
    return %c0_i32, %c0_i32_0 : i32, i32
  }
  func.func @transform_2(%arg0: i32) -> (i32, i32) {
    %c0_i32 = arith.constant 0 : i32
    %c0_i32_0 = arith.constant 0 : i32
    %c0_i32_1 = arith.constant 0 : i32
    return %c0_i32, %c0_i32_0 : i32, i32
  }
  func.func @transform_3(%arg0: i32) -> (i32, i32) {
    %c0_i32 = arith.constant 0 : i32
    %c0_i32_0 = arith.constant 0 : i32
    return %arg0, %c0_i32 : i32, i32
  }
  func.func @transform_4(%arg0: i32) -> (i32, i32) {
    %c0_i32 = arith.constant 0 : i32
    %c0_i32_0 = arith.constant 0 : i32
    %c0_i32_1 = arith.constant 0 : i32
    return %c0_i32, %c0_i32_0 : i32, i32
  }
  func.func @transform_5(%arg0: i32) -> (i32, i32) {
    %c0_i32 = arith.constant 0 : i32
    %c0_i32_0 = arith.constant 0 : i32
    %c0_i32_1 = arith.constant 0 : i32
    return %c0_i32, %c0_i32_0 : i32, i32
  }
}

module attributes {stable_mosaic.version = 11 : i64} {
  func.func @_matmul_act_kernel(%arg0: i32, %arg1: memref<8x256xbf16, #tpu.memory_space<vmem>>, %arg2: memref<8x256xbf16, #tpu.memory_space<vmem>>, %arg3: memref<256x128xbf16, #tpu.memory_space<vmem>>, %arg4: memref<256x128xbf16, #tpu.memory_space<vmem>>, %arg5: memref<1x128xf32, #tpu.memory_space<vmem>>, %arg6: memref<8x128xbf16, #tpu.memory_space<vmem>>, %arg7: memref<1x128xf32, #tpu.memory_space<vmem>>, %arg8: memref<1x128xf32, #tpu.memory_space<vmem>>) attributes {dimension_semantics = [#tpu.dimension_semantics<arbitrary>], iteration_bounds = array<i64: 1>, scalar_prefetch = 0 : i64, scratch_operands = 0 : i64, tpu.core_type = #tpu.core_type<tc>, window_params = [{transform_indices = @transform_0, window_bounds = array<i64: 8, 256>}, {transform_indices = @transform_1, window_bounds = array<i64: 8, 256>}, {pipeline_mode = #tpu.pipeline_mode<synchronous>, transform_indices = @transform_2, window_bounds = array<i64: 256, 128>}, {pipeline_mode = #tpu.pipeline_mode<synchronous>, transform_indices = @transform_3, window_bounds = array<i64: 256, 128>}, {pipeline_mode = #tpu.pipeline_mode<synchronous>, transform_indices = @transform_4, window_bounds = array<i64: 1, 128>}, {transform_indices = @transform_5, window_bounds = array<i64: 8, 128>}, {pipeline_mode = #tpu.pipeline_mode<synchronous>, transform_indices = @transform_6, window_bounds = array<i64: 1, 128>}, {pipeline_mode = #tpu.pipeline_mode<synchronous>, transform_indices = @transform_7, window_bounds = array<i64: 1, 128>}]} {
    %c0 = arith.constant 0 : index
    %c0_0 = arith.constant 0 : index
    %0 = vector.load %arg1[%c0, %c0_0] : memref<8x256xbf16, #tpu.memory_space<vmem>>, vector<8x256xbf16>
    %cst = arith.constant 0.000000e+00 : bf16
    %1 = vector.broadcast %cst : bf16 to vector<8x256xbf16>
    %2 = arith.maximumf %0, %1 : vector<8x256xbf16>
    %c0_1 = arith.constant 0 : index
    %c0_2 = arith.constant 0 : index
    %3 = vector.load %arg3[%c0_1, %c0_2] : memref<256x128xbf16, #tpu.memory_space<vmem>>, vector<256x128xbf16>
    %cst_3 = arith.constant dense<0.000000e+00> : vector<8x128xf32>
    %4 = tpu.matmul %2, %3, %cst_3 {dimension_numbers = #tpu.dot_dimension_numbers<[1], [0], [0], [1], [0, 0, 1, 1], [], []>} : vector<8x256xbf16>, vector<256x128xbf16>, vector<8x128xf32> -> vector<8x128xf32>
    %c0_4 = arith.constant 0 : index
    %c0_5 = arith.constant 0 : index
    %5 = vector.load %arg2[%c0_4, %c0_5] : memref<8x256xbf16, #tpu.memory_space<vmem>>, vector<8x256xbf16>
    %cst_6 = arith.constant 0.000000e+00 : bf16
    %6 = vector.broadcast %cst_6 : bf16 to vector<8x256xbf16>
    %7 = arith.maximumf %5, %6 : vector<8x256xbf16>
    %c0_7 = arith.constant 0 : index
    %c0_8 = arith.constant 0 : index
    %8 = vector.load %arg4[%c0_7, %c0_8] : memref<256x128xbf16, #tpu.memory_space<vmem>>, vector<256x128xbf16>
    %cst_9 = arith.constant dense<0.000000e+00> : vector<8x128xf32>
    %9 = tpu.matmul %7, %8, %cst_9 {dimension_numbers = #tpu.dot_dimension_numbers<[1], [0], [0], [1], [0, 0, 1, 1], [], []>} : vector<8x256xbf16>, vector<256x128xbf16>, vector<8x128xf32> -> vector<8x128xf32>
    %10 = arith.addf %4, %9 : vector<8x128xf32>
    %c0_i32 = arith.constant 0 : i32
    %11 = arith.cmpi eq, %arg0, %c0_i32 : i32
    %12 = arith.extui %11 : i1 to i32
    %c0_i32_10 = arith.constant 0 : i32
    %13 = arith.cmpi ne, %12, %c0_i32_10 : i32
    scf.if %13 {
      %cst_25 = arith.constant 0.000000e+00 : f32
      %35 = vector.broadcast %cst_25 : f32 to vector<1x128xf32>
      %c0_26 = arith.constant 0 : index
      %c0_27 = arith.constant 0 : index
      %36 = vector.load %arg7[%c0_26, %c0_27] : memref<1x128xf32, #tpu.memory_space<vmem>>, vector<1x128xf32>
      tpu.vector_store %arg7[%c0_26, %c0_27], %35 {strides = array<i32>} : memref<1x128xf32, #tpu.memory_space<vmem>>, vector<1x128xf32>,
      %cst_28 = arith.constant 0.000000e+00 : f32
      %37 = vector.broadcast %cst_28 : f32 to vector<1x128xf32>
      %c0_29 = arith.constant 0 : index
      %c0_30 = arith.constant 0 : index
      %38 = vector.load %arg8[%c0_29, %c0_30] : memref<1x128xf32, #tpu.memory_space<vmem>>, vector<1x128xf32>
      tpu.vector_store %arg8[%c0_29, %c0_30], %37 {strides = array<i32>} : memref<1x128xf32, #tpu.memory_space<vmem>>, vector<1x128xf32>,
    } else {
    }
    %14 = tpu.iota {dimensions = array<i32: 0>} : vector<8x128xi32>
    %c8_i32 = arith.constant 8 : i32
    %15 = arith.muli %arg0, %c8_i32 : i32
    %16 = vector.broadcast %15 : i32 to vector<8x128xi32>
    %17 = arith.addi %14, %16 : vector<8x128xi32>
    %c8_i32_11 = arith.constant 8 : i32
    %18 = vector.broadcast %c8_i32_11 : i32 to vector<8x128xi32>
    %19 = arith.cmpi slt, %17, %18 : vector<8x128xi32>
    %cst_12 = arith.constant 0.000000e+00 : f32
    %20 = vector.broadcast %cst_12 : f32 to vector<8x128xf32>
    %21 = arith.select %19, %10, %20 : vector<8x128xi1>, vector<8x128xf32>
    %c0_13 = arith.constant 0 : index
    %c0_14 = arith.constant 0 : index
    %22 = vector.load %arg7[%c0_13, %c0_14] : memref<1x128xf32, #tpu.memory_space<vmem>>, vector<1x128xf32>
    %cst_15 = arith.constant dense<0.000000e+00> : vector<128xf32>
    %23 = vector.multi_reduction <add>, %21, %cst_15 [0] : vector<8x128xf32> to vector<128xf32>
    %24 = vector.shape_cast %23 : vector<128xf32> to vector<1x128xf32>
    %25 = arith.addf %22, %24 : vector<1x128xf32>
    %c0_16 = arith.constant 0 : index
    %c0_17 = arith.constant 0 : index
    %26 = vector.load %arg7[%c0_16, %c0_17] : memref<1x128xf32, #tpu.memory_space<vmem>>, vector<1x128xf32>
    tpu.vector_store %arg7[%c0_16, %c0_17], %25 {strides = array<i32>} : memref<1x128xf32, #tpu.memory_space<vmem>>, vector<1x128xf32>,
    %c0_18 = arith.constant 0 : index
    %c0_19 = arith.constant 0 : index
    %27 = vector.load %arg8[%c0_18, %c0_19] : memref<1x128xf32, #tpu.memory_space<vmem>>, vector<1x128xf32>
    %28 = arith.mulf %21, %21 : vector<8x128xf32>
    %cst_20 = arith.constant dense<0.000000e+00> : vector<128xf32>
    %29 = vector.multi_reduction <add>, %28, %cst_20 [0] : vector<8x128xf32> to vector<128xf32>
    %30 = vector.shape_cast %29 : vector<128xf32> to vector<1x128xf32>
    %31 = arith.addf %27, %30 : vector<1x128xf32>
    %c0_21 = arith.constant 0 : index
    %c0_22 = arith.constant 0 : index
    %32 = vector.load %arg8[%c0_21, %c0_22] : memref<1x128xf32, #tpu.memory_space<vmem>>, vector<1x128xf32>
    tpu.vector_store %arg8[%c0_21, %c0_22], %31 {strides = array<i32>} : memref<1x128xf32, #tpu.memory_space<vmem>>, vector<1x128xf32>,
    %33 = arith.truncf %10 : vector<8x128xf32> to vector<8x128xbf16>
    %c0_23 = arith.constant 0 : index
    %c0_24 = arith.constant 0 : index
    %34 = vector.load %arg6[%c0_23, %c0_24] : memref<8x128xbf16, #tpu.memory_space<vmem>>, vector<8x128xbf16>
    tpu.vector_store %arg6[%c0_23, %c0_24], %33 {strides = array<i32>} : memref<8x128xbf16, #tpu.memory_space<vmem>>, vector<8x128xbf16>,
    return
  }
  func.func @transform_0(%arg0: i32) -> (i32, i32) {
    %c0_i32 = arith.constant 0 : i32
    %c0_i32_0 = arith.constant 0 : i32
    return %arg0, %c0_i32 : i32, i32
  }
  func.func @transform_1(%arg0: i32) -> (i32, i32) {
    %c0_i32 = arith.constant 0 : i32
    %c0_i32_0 = arith.constant 0 : i32
    return %arg0, %c0_i32 : i32, i32
  }
  func.func @transform_2(%arg0: i32) -> (i32, i32) {
    %c0_i32 = arith.constant 0 : i32
    %c0_i32_0 = arith.constant 0 : i32
    %c0_i32_1 = arith.constant 0 : i32
    return %c0_i32, %c0_i32_0 : i32, i32
  }
  func.func @transform_3(%arg0: i32) -> (i32, i32) {
    %c0_i32 = arith.constant 0 : i32
    %c0_i32_0 = arith.constant 0 : i32
    %c0_i32_1 = arith.constant 0 : i32
    return %c0_i32, %c0_i32_0 : i32, i32
  }
  func.func @transform_4(%arg0: i32) -> (i32, i32) {
    %c0_i32 = arith.constant 0 : i32
    %c0_i32_0 = arith.constant 0 : i32
    %c0_i32_1 = arith.constant 0 : i32
    return %c0_i32, %c0_i32_0 : i32, i32
  }
  func.func @transform_5(%arg0: i32) -> (i32, i32) {
    %c0_i32 = arith.constant 0 : i32
    %c0_i32_0 = arith.constant 0 : i32
    return %arg0, %c0_i32 : i32, i32
  }
  func.func @transform_6(%arg0: i32) -> (i32, i32) {
    %c0_i32 = arith.constant 0 : i32
    %c0_i32_0 = arith.constant 0 : i32
    %c0_i32_1 = arith.constant 0 : i32
    return %c0_i32, %c0_i32_0 : i32, i32
  }
  func.func @transform_7(%arg0: i32) -> (i32, i32) {
    %c0_i32 = arith.constant 0 : i32
    %c0_i32_0 = arith.constant 0 : i32
    %c0_i32_1 = arith.constant 0 : i32
    return %c0_i32, %c0_i32_0 : i32, i32
  }
}

module attributes {stable_mosaic.version = 11 : i64} {
  func.func @_matmul_act_kernel(%arg0: i32, %arg1: memref<32x128xbf16, #tpu.memory_space<vmem>>, %arg2: memref<32x128xbf16, #tpu.memory_space<vmem>>, %arg3: memref<128x128xbf16, #tpu.memory_space<vmem>>, %arg4: memref<128x128xbf16, #tpu.memory_space<vmem>>, %arg5: memref<1x128xf32, #tpu.memory_space<vmem>>, %arg6: memref<32x128xbf16, #tpu.memory_space<vmem>>, %arg7: memref<1x128xf32, #tpu.memory_space<vmem>>, %arg8: memref<1x128xf32, #tpu.memory_space<vmem>>) attributes {dimension_semantics = [#tpu.dimension_semantics<arbitrary>], iteration_bounds = array<i64: 1>, scalar_prefetch = 0 : i64, scratch_operands = 0 : i64, tpu.core_type = #tpu.core_type<tc>, window_params = [{transform_indices = @transform_0, window_bounds = array<i64: 32, 128>}, {transform_indices = @transform_1, window_bounds = array<i64: 32, 128>}, {pipeline_mode = #tpu.pipeline_mode<synchronous>, transform_indices = @transform_2, window_bounds = array<i64: 128, 128>}, {pipeline_mode = #tpu.pipeline_mode<synchronous>, transform_indices = @transform_3, window_bounds = array<i64: 128, 128>}, {pipeline_mode = #tpu.pipeline_mode<synchronous>, transform_indices = @transform_4, window_bounds = array<i64: 1, 128>}, {transform_indices = @transform_5, window_bounds = array<i64: 32, 128>}, {pipeline_mode = #tpu.pipeline_mode<synchronous>, transform_indices = @transform_6, window_bounds = array<i64: 1, 128>}, {pipeline_mode = #tpu.pipeline_mode<synchronous>, transform_indices = @transform_7, window_bounds = array<i64: 1, 128>}]} {
    %c0 = arith.constant 0 : index
    %c0_0 = arith.constant 0 : index
    %0 = vector.load %arg1[%c0, %c0_0] : memref<32x128xbf16, #tpu.memory_space<vmem>>, vector<32x128xbf16>
    %cst = arith.constant 0.000000e+00 : bf16
    %1 = vector.broadcast %cst : bf16 to vector<32x128xbf16>
    %2 = arith.maximumf %0, %1 : vector<32x128xbf16>
    %c0_1 = arith.constant 0 : index
    %c0_2 = arith.constant 0 : index
    %3 = vector.load %arg3[%c0_1, %c0_2] : memref<128x128xbf16, #tpu.memory_space<vmem>>, vector<128x128xbf16>
    %cst_3 = arith.constant dense<0.000000e+00> : vector<32x128xf32>
    %4 = tpu.matmul %2, %3, %cst_3 {dimension_numbers = #tpu.dot_dimension_numbers<[1], [0], [0], [1], [0, 0, 1, 1], [], []>} : vector<32x128xbf16>, vector<128x128xbf16>, vector<32x128xf32> -> vector<32x128xf32>
    %c0_4 = arith.constant 0 : index
    %c0_5 = arith.constant 0 : index
    %5 = vector.load %arg2[%c0_4, %c0_5] : memref<32x128xbf16, #tpu.memory_space<vmem>>, vector<32x128xbf16>
    %cst_6 = arith.constant 0.000000e+00 : bf16
    %6 = vector.broadcast %cst_6 : bf16 to vector<32x128xbf16>
    %7 = arith.maximumf %5, %6 : vector<32x128xbf16>
    %c0_7 = arith.constant 0 : index
    %c0_8 = arith.constant 0 : index
    %8 = vector.load %arg4[%c0_7, %c0_8] : memref<128x128xbf16, #tpu.memory_space<vmem>>, vector<128x128xbf16>
    %cst_9 = arith.constant dense<0.000000e+00> : vector<32x128xf32>
    %9 = tpu.matmul %7, %8, %cst_9 {dimension_numbers = #tpu.dot_dimension_numbers<[1], [0], [0], [1], [0, 0, 1, 1], [], []>} : vector<32x128xbf16>, vector<128x128xbf16>, vector<32x128xf32> -> vector<32x128xf32>
    %10 = arith.addf %4, %9 : vector<32x128xf32>
    %c0_i32 = arith.constant 0 : i32
    %11 = arith.cmpi eq, %arg0, %c0_i32 : i32
    %12 = arith.extui %11 : i1 to i32
    %c0_i32_10 = arith.constant 0 : i32
    %13 = arith.cmpi ne, %12, %c0_i32_10 : i32
    scf.if %13 {
      %cst_25 = arith.constant 0.000000e+00 : f32
      %35 = vector.broadcast %cst_25 : f32 to vector<1x128xf32>
      %c0_26 = arith.constant 0 : index
      %c0_27 = arith.constant 0 : index
      %36 = vector.load %arg7[%c0_26, %c0_27] : memref<1x128xf32, #tpu.memory_space<vmem>>, vector<1x128xf32>
      tpu.vector_store %arg7[%c0_26, %c0_27], %35 {strides = array<i32>} : memref<1x128xf32, #tpu.memory_space<vmem>>, vector<1x128xf32>,
      %cst_28 = arith.constant 0.000000e+00 : f32
      %37 = vector.broadcast %cst_28 : f32 to vector<1x128xf32>
      %c0_29 = arith.constant 0 : index
      %c0_30 = arith.constant 0 : index
      %38 = vector.load %arg8[%c0_29, %c0_30] : memref<1x128xf32, #tpu.memory_space<vmem>>, vector<1x128xf32>
      tpu.vector_store %arg8[%c0_29, %c0_30], %37 {strides = array<i32>} : memref<1x128xf32, #tpu.memory_space<vmem>>, vector<1x128xf32>,
    } else {
    }
    %14 = tpu.iota {dimensions = array<i32: 0>} : vector<32x128xi32>
    %c32_i32 = arith.constant 32 : i32
    %15 = arith.muli %arg0, %c32_i32 : i32
    %16 = vector.broadcast %15 : i32 to vector<32x128xi32>
    %17 = arith.addi %14, %16 : vector<32x128xi32>
    %c32_i32_11 = arith.constant 32 : i32
    %18 = vector.broadcast %c32_i32_11 : i32 to vector<32x128xi32>
    %19 = arith.cmpi slt, %17, %18 : vector<32x128xi32>
    %cst_12 = arith.constant 0.000000e+00 : f32
    %20 = vector.broadcast %cst_12 : f32 to vector<32x128xf32>
    %21 = arith.select %19, %10, %20 : vector<32x128xi1>, vector<32x128xf32>
    %c0_13 = arith.constant 0 : index
    %c0_14 = arith.constant 0 : index
    %22 = vector.load %arg7[%c0_13, %c0_14] : memref<1x128xf32, #tpu.memory_space<vmem>>, vector<1x128xf32>
    %cst_15 = arith.constant dense<0.000000e+00> : vector<128xf32>
    %23 = vector.multi_reduction <add>, %21, %cst_15 [0] : vector<32x128xf32> to vector<128xf32>
    %24 = vector.shape_cast %23 : vector<128xf32> to vector<1x128xf32>
    %25 = arith.addf %22, %24 : vector<1x128xf32>
    %c0_16 = arith.constant 0 : index
    %c0_17 = arith.constant 0 : index
    %26 = vector.load %arg7[%c0_16, %c0_17] : memref<1x128xf32, #tpu.memory_space<vmem>>, vector<1x128xf32>
    tpu.vector_store %arg7[%c0_16, %c0_17], %25 {strides = array<i32>} : memref<1x128xf32, #tpu.memory_space<vmem>>, vector<1x128xf32>,
    %c0_18 = arith.constant 0 : index
    %c0_19 = arith.constant 0 : index
    %27 = vector.load %arg8[%c0_18, %c0_19] : memref<1x128xf32, #tpu.memory_space<vmem>>, vector<1x128xf32>
    %28 = arith.mulf %21, %21 : vector<32x128xf32>
    %cst_20 = arith.constant dense<0.000000e+00> : vector<128xf32>
    %29 = vector.multi_reduction <add>, %28, %cst_20 [0] : vector<32x128xf32> to vector<128xf32>
    %30 = vector.shape_cast %29 : vector<128xf32> to vector<1x128xf32>
    %31 = arith.addf %27, %30 : vector<1x128xf32>
    %c0_21 = arith.constant 0 : index
    %c0_22 = arith.constant 0 : index
    %32 = vector.load %arg8[%c0_21, %c0_22] : memref<1x128xf32, #tpu.memory_space<vmem>>, vector<1x128xf32>
    tpu.vector_store %arg8[%c0_21, %c0_22], %31 {strides = array<i32>} : memref<1x128xf32, #tpu.memory_space<vmem>>, vector<1x128xf32>,
    %33 = arith.truncf %10 : vector<32x128xf32> to vector<32x128xbf16>
    %c0_23 = arith.constant 0 : index
    %c0_24 = arith.constant 0 : index
    %34 = vector.load %arg6[%c0_23, %c0_24] : memref<32x128xbf16, #tpu.memory_space<vmem>>, vector<32x128xbf16>
    tpu.vector_store %arg6[%c0_23, %c0_24], %33 {strides = array<i32>} : memref<32x128xbf16, #tpu.memory_space<vmem>>, vector<32x128xbf16>,
    return
  }
  func.func @transform_0(%arg0: i32) -> (i32, i32) {
    %c0_i32 = arith.constant 0 : i32
    %c0_i32_0 = arith.constant 0 : i32
    return %arg0, %c0_i32 : i32, i32
  }
  func.func @transform_1(%arg0: i32) -> (i32, i32) {
    %c0_i32 = arith.constant 0 : i32
    %c0_i32_0 = arith.constant 0 : i32
    return %arg0, %c0_i32 : i32, i32
  }
  func.func @transform_2(%arg0: i32) -> (i32, i32) {
    %c0_i32 = arith.constant 0 : i32
    %c0_i32_0 = arith.constant 0 : i32
    %c0_i32_1 = arith.constant 0 : i32
    return %c0_i32, %c0_i32_0 : i32, i32
  }
  func.func @transform_3(%arg0: i32) -> (i32, i32) {
    %c0_i32 = arith.constant 0 : i32
    %c0_i32_0 = arith.constant 0 : i32
    %c0_i32_1 = arith.constant 0 : i32
    return %c0_i32, %c0_i32_0 : i32, i32
  }
  func.func @transform_4(%arg0: i32) -> (i32, i32) {
    %c0_i32 = arith.constant 0 : i32
    %c0_i32_0 = arith.constant 0 : i32
    %c0_i32_1 = arith.constant 0 : i32
    return %c0_i32, %c0_i32_0 : i32, i32
  }
  func.func @transform_5(%arg0: i32) -> (i32, i32) {
    %c0_i32 = arith.constant 0 : i32
    %c0_i32_0 = arith.constant 0 : i32
    return %arg0, %c0_i32 : i32, i32
  }
  func.func @transform_6(%arg0: i32) -> (i32, i32) {
    %c0_i32 = arith.constant 0 : i32
    %c0_i32_0 = arith.constant 0 : i32
    %c0_i32_1 = arith.constant 0 : i32
    return %c0_i32, %c0_i32_0 : i32, i32
  }
  func.func @transform_7(%arg0: i32) -> (i32, i32) {
    %c0_i32 = arith.constant 0 : i32
    %c0_i32_0 = arith.constant 0 : i32
    %c0_i32_1 = arith.constant 0 : i32
    return %c0_i32, %c0_i32_0 : i32, i32
  }
}

module attributes {stable_mosaic.version = 11 : i64} {
  func.func @_matmul_act_kernel(%arg0: i32, %arg1: memref<128x64xbf16, #tpu.memory_space<vmem>>, %arg2: memref<128x64xbf16, #tpu.memory_space<vmem>>, %arg3: memref<64x128xbf16, #tpu.memory_space<vmem>>, %arg4: memref<64x128xbf16, #tpu.memory_space<vmem>>, %arg5: memref<1x128xf32, #tpu.memory_space<vmem>>, %arg6: memref<128x128xbf16, #tpu.memory_space<vmem>>, %arg7: memref<1x128xf32, #tpu.memory_space<vmem>>, %arg8: memref<1x128xf32, #tpu.memory_space<vmem>>) attributes {dimension_semantics = [#tpu.dimension_semantics<arbitrary>], iteration_bounds = array<i64: 1>, scalar_prefetch = 0 : i64, scratch_operands = 0 : i64, tpu.core_type = #tpu.core_type<tc>, window_params = [{transform_indices = @transform_0, window_bounds = array<i64: 128, 64>}, {transform_indices = @transform_1, window_bounds = array<i64: 128, 64>}, {pipeline_mode = #tpu.pipeline_mode<synchronous>, transform_indices = @transform_2, window_bounds = array<i64: 64, 128>}, {pipeline_mode = #tpu.pipeline_mode<synchronous>, transform_indices = @transform_3, window_bounds = array<i64: 64, 128>}, {pipeline_mode = #tpu.pipeline_mode<synchronous>, transform_indices = @transform_4, window_bounds = array<i64: 1, 128>}, {transform_indices = @transform_5, window_bounds = array<i64: 128, 128>}, {pipeline_mode = #tpu.pipeline_mode<synchronous>, transform_indices = @transform_6, window_bounds = array<i64: 1, 128>}, {pipeline_mode = #tpu.pipeline_mode<synchronous>, transform_indices = @transform_7, window_bounds = array<i64: 1, 128>}]} {
    %c0 = arith.constant 0 : index
    %c0_0 = arith.constant 0 : index
    %0 = vector.load %arg1[%c0, %c0_0] : memref<128x64xbf16, #tpu.memory_space<vmem>>, vector<128x64xbf16>
    %cst = arith.constant 0.000000e+00 : bf16
    %1 = vector.broadcast %cst : bf16 to vector<128x64xbf16>
    %2 = arith.maximumf %0, %1 : vector<128x64xbf16>
    %c0_1 = arith.constant 0 : index
    %c0_2 = arith.constant 0 : index
    %3 = vector.load %arg3[%c0_1, %c0_2] : memref<64x128xbf16, #tpu.memory_space<vmem>>, vector<64x128xbf16>
    %cst_3 = arith.constant dense<0.000000e+00> : vector<128x128xf32>
    %4 = tpu.matmul %2, %3, %cst_3 {dimension_numbers = #tpu.dot_dimension_numbers<[1], [0], [0], [1], [0, 0, 1, 1], [], []>} : vector<128x64xbf16>, vector<64x128xbf16>, vector<128x128xf32> -> vector<128x128xf32>
    %c0_4 = arith.constant 0 : index
    %c0_5 = arith.constant 0 : index
    %5 = vector.load %arg2[%c0_4, %c0_5] : memref<128x64xbf16, #tpu.memory_space<vmem>>, vector<128x64xbf16>
    %cst_6 = arith.constant 0.000000e+00 : bf16
    %6 = vector.broadcast %cst_6 : bf16 to vector<128x64xbf16>
    %7 = arith.maximumf %5, %6 : vector<128x64xbf16>
    %c0_7 = arith.constant 0 : index
    %c0_8 = arith.constant 0 : index
    %8 = vector.load %arg4[%c0_7, %c0_8] : memref<64x128xbf16, #tpu.memory_space<vmem>>, vector<64x128xbf16>
    %cst_9 = arith.constant dense<0.000000e+00> : vector<128x128xf32>
    %9 = tpu.matmul %7, %8, %cst_9 {dimension_numbers = #tpu.dot_dimension_numbers<[1], [0], [0], [1], [0, 0, 1, 1], [], []>} : vector<128x64xbf16>, vector<64x128xbf16>, vector<128x128xf32> -> vector<128x128xf32>
    %10 = arith.addf %4, %9 : vector<128x128xf32>
    %c0_i32 = arith.constant 0 : i32
    %11 = arith.cmpi eq, %arg0, %c0_i32 : i32
    %12 = arith.extui %11 : i1 to i32
    %c0_i32_10 = arith.constant 0 : i32
    %13 = arith.cmpi ne, %12, %c0_i32_10 : i32
    scf.if %13 {
      %cst_25 = arith.constant 0.000000e+00 : f32
      %35 = vector.broadcast %cst_25 : f32 to vector<1x128xf32>
      %c0_26 = arith.constant 0 : index
      %c0_27 = arith.constant 0 : index
      %36 = vector.load %arg7[%c0_26, %c0_27] : memref<1x128xf32, #tpu.memory_space<vmem>>, vector<1x128xf32>
      tpu.vector_store %arg7[%c0_26, %c0_27], %35 {strides = array<i32>} : memref<1x128xf32, #tpu.memory_space<vmem>>, vector<1x128xf32>,
      %cst_28 = arith.constant 0.000000e+00 : f32
      %37 = vector.broadcast %cst_28 : f32 to vector<1x128xf32>
      %c0_29 = arith.constant 0 : index
      %c0_30 = arith.constant 0 : index
      %38 = vector.load %arg8[%c0_29, %c0_30] : memref<1x128xf32, #tpu.memory_space<vmem>>, vector<1x128xf32>
      tpu.vector_store %arg8[%c0_29, %c0_30], %37 {strides = array<i32>} : memref<1x128xf32, #tpu.memory_space<vmem>>, vector<1x128xf32>,
    } else {
    }
    %14 = tpu.iota {dimensions = array<i32: 0>} : vector<128x128xi32>
    %c128_i32 = arith.constant 128 : i32
    %15 = arith.muli %arg0, %c128_i32 : i32
    %16 = vector.broadcast %15 : i32 to vector<128x128xi32>
    %17 = arith.addi %14, %16 : vector<128x128xi32>
    %c128_i32_11 = arith.constant 128 : i32
    %18 = vector.broadcast %c128_i32_11 : i32 to vector<128x128xi32>
    %19 = arith.cmpi slt, %17, %18 : vector<128x128xi32>
    %cst_12 = arith.constant 0.000000e+00 : f32
    %20 = vector.broadcast %cst_12 : f32 to vector<128x128xf32>
    %21 = arith.select %19, %10, %20 : vector<128x128xi1>, vector<128x128xf32>
    %c0_13 = arith.constant 0 : index
    %c0_14 = arith.constant 0 : index
    %22 = vector.load %arg7[%c0_13, %c0_14] : memref<1x128xf32, #tpu.memory_space<vmem>>, vector<1x128xf32>
    %cst_15 = arith.constant dense<0.000000e+00> : vector<128xf32>
    %23 = vector.multi_reduction <add>, %21, %cst_15 [0] : vector<128x128xf32> to vector<128xf32>
    %24 = vector.shape_cast %23 : vector<128xf32> to vector<1x128xf32>
    %25 = arith.addf %22, %24 : vector<1x128xf32>
    %c0_16 = arith.constant 0 : index
    %c0_17 = arith.constant 0 : index
    %26 = vector.load %arg7[%c0_16, %c0_17] : memref<1x128xf32, #tpu.memory_space<vmem>>, vector<1x128xf32>
    tpu.vector_store %arg7[%c0_16, %c0_17], %25 {strides = array<i32>} : memref<1x128xf32, #tpu.memory_space<vmem>>, vector<1x128xf32>,
    %c0_18 = arith.constant 0 : index
    %c0_19 = arith.constant 0 : index
    %27 = vector.load %arg8[%c0_18, %c0_19] : memref<1x128xf32, #tpu.memory_space<vmem>>, vector<1x128xf32>
    %28 = arith.mulf %21, %21 : vector<128x128xf32>
    %cst_20 = arith.constant dense<0.000000e+00> : vector<128xf32>
    %29 = vector.multi_reduction <add>, %28, %cst_20 [0] : vector<128x128xf32> to vector<128xf32>
    %30 = vector.shape_cast %29 : vector<128xf32> to vector<1x128xf32>
    %31 = arith.addf %27, %30 : vector<1x128xf32>
    %c0_21 = arith.constant 0 : index
    %c0_22 = arith.constant 0 : index
    %32 = vector.load %arg8[%c0_21, %c0_22] : memref<1x128xf32, #tpu.memory_space<vmem>>, vector<1x128xf32>
    tpu.vector_store %arg8[%c0_21, %c0_22], %31 {strides = array<i32>} : memref<1x128xf32, #tpu.memory_space<vmem>>, vector<1x128xf32>,
    %33 = arith.truncf %10 : vector<128x128xf32> to vector<128x128xbf16>
    %c0_23 = arith.constant 0 : index
    %c0_24 = arith.constant 0 : index
    %34 = vector.load %arg6[%c0_23, %c0_24] : memref<128x128xbf16, #tpu.memory_space<vmem>>, vector<128x128xbf16>
    tpu.vector_store %arg6[%c0_23, %c0_24], %33 {strides = array<i32>} : memref<128x128xbf16, #tpu.memory_space<vmem>>, vector<128x128xbf16>,
    return
  }
  func.func @transform_0(%arg0: i32) -> (i32, i32) {
    %c0_i32 = arith.constant 0 : i32
    %c0_i32_0 = arith.constant 0 : i32
    return %arg0, %c0_i32 : i32, i32
  }
  func.func @transform_1(%arg0: i32) -> (i32, i32) {
    %c0_i32 = arith.constant 0 : i32
    %c0_i32_0 = arith.constant 0 : i32
    return %arg0, %c0_i32 : i32, i32
  }
  func.func @transform_2(%arg0: i32) -> (i32, i32) {
    %c0_i32 = arith.constant 0 : i32
    %c0_i32_0 = arith.constant 0 : i32
    %c0_i32_1 = arith.constant 0 : i32
    return %c0_i32, %c0_i32_0 : i32, i32
  }
  func.func @transform_3(%arg0: i32) -> (i32, i32) {
    %c0_i32 = arith.constant 0 : i32
    %c0_i32_0 = arith.constant 0 : i32
    %c0_i32_1 = arith.constant 0 : i32
    return %c0_i32, %c0_i32_0 : i32, i32
  }
  func.func @transform_4(%arg0: i32) -> (i32, i32) {
    %c0_i32 = arith.constant 0 : i32
    %c0_i32_0 = arith.constant 0 : i32
    %c0_i32_1 = arith.constant 0 : i32
    return %c0_i32, %c0_i32_0 : i32, i32
  }
  func.func @transform_5(%arg0: i32) -> (i32, i32) {
    %c0_i32 = arith.constant 0 : i32
    %c0_i32_0 = arith.constant 0 : i32
    return %arg0, %c0_i32 : i32, i32
  }
  func.func @transform_6(%arg0: i32) -> (i32, i32) {
    %c0_i32 = arith.constant 0 : i32
    %c0_i32_0 = arith.constant 0 : i32
    %c0_i32_1 = arith.constant 0 : i32
    return %c0_i32, %c0_i32_0 : i32, i32
  }
  func.func @transform_7(%arg0: i32) -> (i32, i32) {
    %c0_i32 = arith.constant 0 : i32
    %c0_i32_0 = arith.constant 0 : i32
    %c0_i32_1 = arith.constant 0 : i32
    return %c0_i32, %c0_i32_0 : i32, i32
  }
}

module attributes {stable_mosaic.version = 11 : i64} {
  func.func @_affine_kernel(%arg0: i32, %arg1: memref<512x128xbf16, #tpu.memory_space<vmem>>, %arg2: memref<1x128xf32, #tpu.memory_space<vmem>>, %arg3: memref<1x128xf32, #tpu.memory_space<vmem>>, %arg4: memref<512x128xbf16, #tpu.memory_space<vmem>>) attributes {dimension_semantics = [#tpu.dimension_semantics<parallel>], iteration_bounds = array<i64: 1>, scalar_prefetch = 0 : i64, scratch_operands = 0 : i64, tpu.core_type = #tpu.core_type<tc>, window_params = [{transform_indices = @transform_0, window_bounds = array<i64: 512, 128>}, {pipeline_mode = #tpu.pipeline_mode<synchronous>, transform_indices = @transform_1, window_bounds = array<i64: 1, 128>}, {pipeline_mode = #tpu.pipeline_mode<synchronous>, transform_indices = @transform_2, window_bounds = array<i64: 1, 128>}, {transform_indices = @transform_3, window_bounds = array<i64: 512, 128>}]} {
    %c0 = arith.constant 0 : index
    %c0_0 = arith.constant 0 : index
    %0 = vector.load %arg1[%c0, %c0_0] : memref<512x128xbf16, #tpu.memory_space<vmem>>, vector<512x128xbf16>
    %1 = arith.extf %0 : vector<512x128xbf16> to vector<512x128xf32>
    %c0_1 = arith.constant 0 : index
    %c0_2 = arith.constant 0 : index
    %2 = vector.load %arg2[%c0_1, %c0_2] : memref<1x128xf32, #tpu.memory_space<vmem>>, vector<1x128xf32>
    %3 = vector.broadcast %2 : vector<1x128xf32> to vector<512x128xf32>
    %4 = arith.mulf %1, %3 : vector<512x128xf32>
    %c0_3 = arith.constant 0 : index
    %c0_4 = arith.constant 0 : index
    %5 = vector.load %arg3[%c0_3, %c0_4] : memref<1x128xf32, #tpu.memory_space<vmem>>, vector<1x128xf32>
    %6 = vector.broadcast %5 : vector<1x128xf32> to vector<512x128xf32>
    %7 = arith.addf %4, %6 : vector<512x128xf32>
    %8 = arith.truncf %7 : vector<512x128xf32> to vector<512x128xbf16>
    %c0_5 = arith.constant 0 : index
    %c0_6 = arith.constant 0 : index
    %9 = vector.load %arg4[%c0_5, %c0_6] : memref<512x128xbf16, #tpu.memory_space<vmem>>, vector<512x128xbf16>
    tpu.vector_store %arg4[%c0_5, %c0_6], %8 {strides = array<i32>} : memref<512x128xbf16, #tpu.memory_space<vmem>>, vector<512x128xbf16>,
    return
  }
  func.func @transform_0(%arg0: i32) -> (i32, i32) {
    %c0_i32 = arith.constant 0 : i32
    %c0_i32_0 = arith.constant 0 : i32
    return %arg0, %c0_i32 : i32, i32
  }
  func.func @transform_1(%arg0: i32) -> (i32, i32) {
    %c0_i32 = arith.constant 0 : i32
    %c0_i32_0 = arith.constant 0 : i32
    %c0_i32_1 = arith.constant 0 : i32
    return %c0_i32, %c0_i32_0 : i32, i32
  }
  func.func @transform_2(%arg0: i32) -> (i32, i32) {
    %c0_i32 = arith.constant 0 : i32
    %c0_i32_0 = arith.constant 0 : i32
    %c0_i32_1 = arith.constant 0 : i32
    return %c0_i32, %c0_i32_0 : i32, i32
  }
  func.func @transform_3(%arg0: i32) -> (i32, i32) {
    %c0_i32 = arith.constant 0 : i32
    %c0_i32_0 = arith.constant 0 : i32
    return %arg0, %c0_i32 : i32, i32
  }
}

module attributes {stable_mosaic.version = 11 : i64} {
  func.func @_matmul_act_kernel(%arg0: i32, %arg1: memref<512x32xbf16, #tpu.memory_space<vmem>>, %arg2: memref<512x32xbf16, #tpu.memory_space<vmem>>, %arg3: memref<32x128xbf16, #tpu.memory_space<vmem>>, %arg4: memref<32x128xbf16, #tpu.memory_space<vmem>>, %arg5: memref<1x128xf32, #tpu.memory_space<vmem>>, %arg6: memref<512x128xbf16, #tpu.memory_space<vmem>>) attributes {dimension_semantics = [#tpu.dimension_semantics<parallel>], iteration_bounds = array<i64: 1>, scalar_prefetch = 0 : i64, scratch_operands = 0 : i64, tpu.core_type = #tpu.core_type<tc>, window_params = [{transform_indices = @transform_0, window_bounds = array<i64: 512, 32>}, {transform_indices = @transform_1, window_bounds = array<i64: 512, 32>}, {pipeline_mode = #tpu.pipeline_mode<synchronous>, transform_indices = @transform_2, window_bounds = array<i64: 32, 128>}, {pipeline_mode = #tpu.pipeline_mode<synchronous>, transform_indices = @transform_3, window_bounds = array<i64: 32, 128>}, {pipeline_mode = #tpu.pipeline_mode<synchronous>, transform_indices = @transform_4, window_bounds = array<i64: 1, 128>}, {transform_indices = @transform_5, window_bounds = array<i64: 512, 128>}]} {
    %c0 = arith.constant 0 : index
    %c0_0 = arith.constant 0 : index
    %0 = vector.load %arg1[%c0, %c0_0] : memref<512x32xbf16, #tpu.memory_space<vmem>>, vector<512x32xbf16>
    %cst = arith.constant 0.000000e+00 : bf16
    %1 = vector.broadcast %cst : bf16 to vector<512x32xbf16>
    %2 = arith.maximumf %0, %1 : vector<512x32xbf16>
    %c0_1 = arith.constant 0 : index
    %c0_2 = arith.constant 0 : index
    %3 = vector.load %arg3[%c0_1, %c0_2] : memref<32x128xbf16, #tpu.memory_space<vmem>>, vector<32x128xbf16>
    %cst_3 = arith.constant dense<0.000000e+00> : vector<512x128xf32>
    %4 = tpu.matmul %2, %3, %cst_3 {dimension_numbers = #tpu.dot_dimension_numbers<[1], [0], [0], [1], [0, 0, 1, 1], [], []>} : vector<512x32xbf16>, vector<32x128xbf16>, vector<512x128xf32> -> vector<512x128xf32>
    %c0_4 = arith.constant 0 : index
    %c0_5 = arith.constant 0 : index
    %5 = vector.load %arg2[%c0_4, %c0_5] : memref<512x32xbf16, #tpu.memory_space<vmem>>, vector<512x32xbf16>
    %cst_6 = arith.constant 0.000000e+00 : bf16
    %6 = vector.broadcast %cst_6 : bf16 to vector<512x32xbf16>
    %7 = arith.maximumf %5, %6 : vector<512x32xbf16>
    %c0_7 = arith.constant 0 : index
    %c0_8 = arith.constant 0 : index
    %8 = vector.load %arg4[%c0_7, %c0_8] : memref<32x128xbf16, #tpu.memory_space<vmem>>, vector<32x128xbf16>
    %cst_9 = arith.constant dense<0.000000e+00> : vector<512x128xf32>
    %9 = tpu.matmul %7, %8, %cst_9 {dimension_numbers = #tpu.dot_dimension_numbers<[1], [0], [0], [1], [0, 0, 1, 1], [], []>} : vector<512x32xbf16>, vector<32x128xbf16>, vector<512x128xf32> -> vector<512x128xf32>
    %10 = arith.addf %4, %9 : vector<512x128xf32>
    %c0_10 = arith.constant 0 : index
    %c0_11 = arith.constant 0 : index
    %11 = vector.load %arg5[%c0_10, %c0_11] : memref<1x128xf32, #tpu.memory_space<vmem>>, vector<1x128xf32>
    %12 = vector.broadcast %11 : vector<1x128xf32> to vector<512x128xf32>
    %13 = arith.addf %10, %12 : vector<512x128xf32>
    %14 = math.tanh %13 : vector<512x128xf32>
    %15 = arith.truncf %14 : vector<512x128xf32> to vector<512x128xbf16>
    %c0_12 = arith.constant 0 : index
    %c0_13 = arith.constant 0 : index
    %16 = vector.load %arg6[%c0_12, %c0_13] : memref<512x128xbf16, #tpu.memory_space<vmem>>, vector<512x128xbf16>
    tpu.vector_store %arg6[%c0_12, %c0_13], %15 {strides = array<i32>} : memref<512x128xbf16, #tpu.memory_space<vmem>>, vector<512x128xbf16>,
    return
  }
  func.func @transform_0(%arg0: i32) -> (i32, i32) {
    %c0_i32 = arith.constant 0 : i32
    %c0_i32_0 = arith.constant 0 : i32
    return %arg0, %c0_i32 : i32, i32
  }
  func.func @transform_1(%arg0: i32) -> (i32, i32) {
    %c0_i32 = arith.constant 0 : i32
    %c0_i32_0 = arith.constant 0 : i32
    return %arg0, %c0_i32 : i32, i32
  }
  func.func @transform_2(%arg0: i32) -> (i32, i32) {
    %c0_i32 = arith.constant 0 : i32
    %c0_i32_0 = arith.constant 0 : i32
    %c0_i32_1 = arith.constant 0 : i32
    return %c0_i32, %c0_i32_0 : i32, i32
  }
  func.func @transform_3(%arg0: i32) -> (i32, i32) {
    %c0_i32 = arith.constant 0 : i32
    %c0_i32_0 = arith.constant 0 : i32
    %c0_i32_1 = arith.constant 0 : i32
    return %c0_i32, %c0_i32_0 : i32, i32
  }
  func.func @transform_4(%arg0: i32) -> (i32, i32) {
    %c0_i32 = arith.constant 0 : i32
    %c0_i32_0 = arith.constant 0 : i32
    %c0_i32_1 = arith.constant 0 : i32
    return %c0_i32, %c0_i32_0 : i32, i32
  }
  func.func @transform_5(%arg0: i32) -> (i32, i32) {
    %c0_i32 = arith.constant 0 : i32
    %c0_i32_0 = arith.constant 0 : i32
    return %arg0, %c0_i32 : i32, i32
  }
}

</mosaic_0001>

<llo_original>
// kernel: _lambda_.32
$region0: #{_lambda_.32}
  #allocation0 [shape = 'u32[]', space=smem, size = 0x4, offset = 0x4, fixed_abs, tag = 'smem constant byte address 0x4 - core index']
  #allocation1 [shape = 'u32[72,128]{1,0:T(1,128)}', space=vmem, size = 0x9000, scoped, tag = 'internal scratch']
  %s0 = inlined_call_operand.vmem [shape: bf16[512,48], index: 0, kind: input, shape index: {}]
  %s1 = inlined_call_operand.vmem [shape: bf16[48,128], index: 1, kind: input, shape index: {}]
  %s2 = inlined_call_operand.vmem [shape: f32[1,128], index: 2, kind: input, shape index: {}]
  %s3 = inlined_call_operand.vmem [shape: bf16[512,128], index: 3, kind: output, shape index: {}]
  %s4 = sld [smem:[#allocation0]]
  $region22: #{_lambda_.32} parent=0
    _
  %s6 = ssub.s32 1, %s4
  %s7 = scalar_select 0, %s6, %s4
  // Predicated region
  $region2: #{_lambda_.32} parent=0 // pred_check
    _
  $region3: #{_lambda_.32} parent=0 // pred_check_branch
    %9 = sbr.rel (0) target = $region5
  $region4: #{_lambda_.32} parent=0 // pred_region
    _
  $region5: #{_lambda_.32} parent=0 // pred_fallthru
    _
  // Predicated region
  $region6: #{_lambda_.32} parent=0 // pred_check
    _
  $region7: #{_lambda_.32} parent=0 // pred_check_branch
    %11 = sbr.rel (0) target = $region9
  $region8: #{_lambda_.32} parent=0 // pred_region
    _
  $region9: #{_lambda_.32} parent=0 // pred_fallthru
    _
  // Predicated region
  $region10: #{_lambda_.32} parent=0 // pred_check
    _
  $region11: #{_lambda_.32} parent=0 // pred_check_branch
    %13 = sbr.rel (0) target = $region13
  $region12: #{_lambda_.32} parent=0 // pred_region
    _
  $region13: #{_lambda_.32} parent=0 // pred_fallthru
    _
  %v15 = vld [vmem:[%s0] sm:$0xf]
  %v16 = vld [vmem:[%s0 + $0x4] sm:$0xf]
  %v17 = vld [vmem:[%s0 + $0x8] sm:$0xf]
  %v18 = vld [vmem:[%s0 + $0xc] sm:$0xf]
  %v19 = vld [vmem:[%s0 + $0x10] sm:$0xf]
  %v20 = vld [vmem:[%s0 + $0x14] sm:$0xf]
  %v21 = vld [vmem:[%s0 + $0x18] sm:$0xf]
  %v22 = vld [vmem:[%s0 + $0x1c] sm:$0xf]
  %v23 = vld [vmem:[%s0 + $0x20] sm:$0xf]
  %v24 = vld [vmem:[%s0 + $0x24] sm:$0xf]
  %v25 = vld [vmem:[%s0 + $0x28] sm:$0xf]
  %v26 = vld [vmem:[%s0 + $0x2c] sm:$0xf]
  %v27 = vld [vmem:[%s0 + $0x30] sm:$0xf]
  %v28 = vld [vmem:[%s0 + $0x34] sm:$0xf]
  %v29 = vld [vmem:[%s0 + $0x38] sm:$0xf]
  %v30 = vld [vmem:[%s0 + $0x3c] sm:$0xf]
  %v31 = vld [vmem:[%s0 + $0x40] sm:$0xf]
  %v32 = vld [vmem:[%s0 + $0x44] sm:$0xf]
  %v33 = vld [vmem:[%s0 + $0x48] sm:$0xf]
  %v34 = vld [vmem:[%s0 + $0x4c] sm:$0xf]
  %v35 = vld [vmem:[%s0 + $0x50] sm:$0xf]
  %v36 = vld [vmem:[%s0 + $0x54] sm:$0xf]
  %v37 = vld [vmem:[%s0 + $0x58] sm:$0xf]
  %v38 = vld [vmem:[%s0 + $0x5c] sm:$0xf]
  %v39 = vld [vmem:[%s0 + $0x60] sm:$0xf]
  %v40 = vld [vmem:[%s0 + $0x64] sm:$0xf]
  %v41 = vld [vmem:[%s0 + $0x68] sm:$0xf]
  %v42 = vld [vmem:[%s0 + $0x6c] sm:$0xf]
  %v43 = vld [vmem:[%s0 + $0x70] sm:$0xf]
  %v44 = vld [vmem:[%s0 + $0x74] sm:$0xf]
  %v45 = vld [vmem:[%s0 + $0x78] sm:$0xf]
  %v46 = vld [vmem:[%s0 + $0x7c] sm:$0xf]
  %v47 = vld [vmem:[%s0 + $0x80] sm:$0xf]
  %v48 = vld [vmem:[%s0 + $0x84] sm:$0xf]
  %v49 = vld [vmem:[%s0 + $0x88] sm:$0xf]
  %v50 = vld [vmem:[%s0 + $0x8c] sm:$0xf]
  %v51 = vld [vmem:[%s0 + $0x90] sm:$0xf]
  %v52 = vld [vmem:[%s0 + $0x94] sm:$0xf]
  %v53 = vld [vmem:[%s0 + $0x98] sm:$0xf]
  %v54 = vld [vmem:[%s0 + $0x9c] sm:$0xf]
  %v55 = vld [vmem:[%s0 + $0xa0] sm:$0xf]
  %v56 = vld [vmem:[%s0 + $0xa4] sm:$0xf]
  %v57 = vld [vmem:[%s0 + $0xa8] sm:$0xf]
  %v58 = vld [vmem:[%s0 + $0xac] sm:$0xf]
  %v59 = vld [vmem:[%s0 + $0xb0] sm:$0xf]
  %v60 = vld [vmem:[%s0 + $0xb4] sm:$0xf]
  %v61 = vld [vmem:[%s0 + $0xb8] sm:$0xf]
  %v62 = vld [vmem:[%s0 + $0xbc] sm:$0xf]
  %v63 = vld [vmem:[%s0 + $0xc0] sm:$0xf]
  %v64 = vld [vmem:[%s0 + $0xc4] sm:$0xf]
  %v65 = vld [vmem:[%s0 + $0xc8] sm:$0xf]
  %v66 = vld [vmem:[%s0 + $0xcc] sm:$0xf]
  %v67 = vld [vmem:[%s0 + $0xd0] sm:$0xf]
  %v68 = vld [vmem:[%s0 + $0xd4] sm:$0xf]
  %v69 = vld [vmem:[%s0 + $0xd8] sm:$0xf]
  %v70 = vld [vmem:[%s0 + $0xdc] sm:$0xf]
  %v71 = vld [vmem:[%s0 + $0xe0] sm:$0xf]
  %v72 = vld [vmem:[%s0 + $0xe4] sm:$0xf]
  %v73 = vld [vmem:[%s0 + $0xe8] sm:$0xf]
  %v74 = vld [vmem:[%s0 + $0xec] sm:$0xf]
  %v75 = vld [vmem:[%s0 + $0xf0] sm:$0xf]
  %v76 = vld [vmem:[%s0 + $0xf4] sm:$0xf]
  %v77 = vld [vmem:[%s0 + $0xf8] sm:$0xf]
  %v78 = vld [vmem:[%s0 + $0xfc] sm:$0xf]
  %v79 = vld [vmem:[%s1] sm:$0xf]
  %v80 = vld [vmem:[%s1 + $0x4] sm:$0xf]
  %v81 = vld [vmem:[%s1 + $0x8] sm:$0xf]
  %v82 = vld [vmem:[%s1 + $0xc] sm:$0xf]
  %v83 = vld [vmem:[%s1 + $0x10] sm:$0xf]
  %v84 = vld [vmem:[%s1 + $0x14] sm:$0xf]
  %v149 = vunpack.c.l.b16 %v15
  %v150 = vunpack.c.l.b16 %v16
  %v151 = vunpack.c.l.b16 %v17
  %v152 = vunpack.c.l.b16 %v18
  %v153 = vunpack.c.l.b16 %v19
  %v154 = vunpack.c.l.b16 %v20
  %v155 = vunpack.c.l.b16 %v21
  %v156 = vunpack.c.l.b16 %v22
  %v157 = vunpack.c.l.b16 %v23
  %v158 = vunpack.c.l.b16 %v24
  %v159 = vunpack.c.l.b16 %v25
  %v160 = vunpack.c.l.b16 %v26
  %v161 = vunpack.c.l.b16 %v27
  %v162 = vunpack.c.l.b16 %v28
  %v163 = vunpack.c.l.b16 %v29
  %v164 = vunpack.c.l.b16 %v30
  %v165 = vunpack.c.l.b16 %v31
  %v166 = vunpack.c.l.b16 %v32
  %v167 = vunpack.c.l.b16 %v33
  %v168 = vunpack.c.l.b16 %v34
  %v169 = vunpack.c.l.b16 %v35
  %v170 = vunpack.c.l.b16 %v36
  %v171 = vunpack.c.l.b16 %v37
  %v172 = vunpack.c.l.b16 %v38
  %v173 = vunpack.c.l.b16 %v39
  %v174 = vunpack.c.l.b16 %v40
  %v175 = vunpack.c.l.b16 %v41
  %v176 = vunpack.c.l.b16 %v42
  %v177 = vunpack.c.l.b16 %v43
  %v178 = vunpack.c.l.b16 %v44
  %v179 = vunpack.c.l.b16 %v45
  %v180 = vunpack.c.l.b16 %v46
  %v181 = vunpack.c.l.b16 %v47
  %v182 = vunpack.c.l.b16 %v48
  %v183 = vunpack.c.l.b16 %v49
  %v184 = vunpack.c.l.b16 %v50
  %v185 = vunpack.c.l.b16 %v51
  %v186 = vunpack.c.l.b16 %v52
  %v187 = vunpack.c.l.b16 %v53
  %v188 = vunpack.c.l.b16 %v54
  %v189 = vunpack.c.l.b16 %v55
  %v190 = vunpack.c.l.b16 %v56
  %v191 = vunpack.c.l.b16 %v57
  %v192 = vunpack.c.l.b16 %v58
  %v193 = vunpack.c.l.b16 %v59
  %v194 = vunpack.c.l.b16 %v60
  %v195 = vunpack.c.l.b16 %v61
  %v196 = vunpack.c.l.b16 %v62
  %v197 = vunpack.c.l.b16 %v63
  %v198 = vunpack.c.l.b16 %v64
  %v199 = vunpack.c.l.b16 %v65
  %v200 = vunpack.c.l.b16 %v66
  %v201 = vunpack.c.l.b16 %v67
  %v202 = vunpack.c.l.b16 %v68
  %v203 = vunpack.c.l.b16 %v69
  %v204 = vunpack.c.l.b16 %v70
  %v205 = vunpack.c.l.b16 %v71
  %v206 = vunpack.c.l.b16 %v72
  %v207 = vunpack.c.l.b16 %v73
  %v208 = vunpack.c.l.b16 %v74
  %v209 = vunpack.c.l.b16 %v75
  %v210 = vunpack.c.l.b16 %v76
  %v211 = vunpack.c.l.b16 %v77
  %v212 = vunpack.c.l.b16 %v78
  %v213 = vpack.c.b16 %v150, %v149
  %v214 = vpack.c.b16 %v152, %v151
  %v215 = vpack.c.b16 %v154, %v153
  %v216 = vpack.c.b16 %v156, %v155
  %v217 = vpack.c.b16 %v158, %v157
  %v218 = vpack.c.b16 %v160, %v159
  %v219 = vpack.c.b16 %v162, %v161
  %v220 = vpack.c.b16 %v164, %v163
  %v221 = vpack.c.b16 %v166, %v165
  %v222 = vpack.c.b16 %v168, %v167
  %v223 = vpack.c.b16 %v170, %v169
  %v224 = vpack.c.b16 %v172, %v171
  %v225 = vpack.c.b16 %v174, %v173
  %v226 = vpack.c.b16 %v176, %v175
  %v227 = vpack.c.b16 %v178, %v177
  %v228 = vpack.c.b16 %v180, %v179
  %v229 = vpack.c.b16 %v182, %v181
  %v230 = vpack.c.b16 %v184, %v183
  %v231 = vpack.c.b16 %v186, %v185
  %v232 = vpack.c.b16 %v188, %v187
  %v233 = vpack.c.b16 %v190, %v189
  %v234 = vpack.c.b16 %v192, %v191
  %v235 = vpack.c.b16 %v194, %v193
  %v236 = vpack.c.b16 %v196, %v195
  %v237 = vpack.c.b16 %v198, %v197
  %v238 = vpack.c.b16 %v200, %v199
  %v239 = vpack.c.b16 %v202, %v201
  %v240 = vpack.c.b16 %v204, %v203
  %v241 = vpack.c.b16 %v206, %v205
  %v242 = vpack.c.b16 %v208, %v207
  %v243 = vpack.c.b16 %v210, %v209
  %v244 = vpack.c.b16 %v212, %v211
  %v251 = vunpack.c.l.b16 %v79
  %v252 = vunpack.c.l.b16 %v80
  %v253 = vunpack.c.l.b16 %v81
  %v254 = vunpack.c.l.b16 %v82
  %v255 = vunpack.c.l.b16 %v83
  %v256 = vunpack.c.l.b16 %v84
  %v257 = vpack.c.b16 %v252, %v251
  %v258 = vpack.c.b16 %v254, %v253
  %v259 = vpack.c.b16 %v256, %v255
  %vm263 = vcmask 392192
  %v265 = vsel %vm263, %v213, 0
  %v268 = vsel %vm263, %v214, 0
  %v271 = vsel %vm263, %v215, 0
  %v274 = vsel %vm263, %v216, 0
  %v277 = vsel %vm263, %v217, 0
  %v280 = vsel %vm263, %v218, 0
  %v283 = vsel %vm263, %v219, 0
  %v286 = vsel %vm263, %v220, 0
  %v289 = vsel %vm263, %v221, 0
  %v292 = vsel %vm263, %v222, 0
  %v295 = vsel %vm263, %v223, 0
  %v298 = vsel %vm263, %v224, 0
  %v301 = vsel %vm263, %v225, 0
  %v304 = vsel %vm263, %v226, 0
  %v307 = vsel %vm263, %v227, 0
  %v310 = vsel %vm263, %v228, 0
  %v313 = vsel %vm263, %v229, 0
  %v316 = vsel %vm263, %v230, 0
  %v319 = vsel %vm263, %v231, 0
  %v322 = vsel %vm263, %v232, 0
  %v325 = vsel %vm263, %v233, 0
  %v328 = vsel %vm263, %v234, 0
  %v331 = vsel %vm263, %v235, 0
  %v334 = vsel %vm263, %v236, 0
  %v337 = vsel %vm263, %v237, 0
  %v340 = vsel %vm263, %v238, 0
  %v343 = vsel %vm263, %v239, 0
  %v346 = vsel %vm263, %v240, 0
  %v349 = vsel %vm263, %v241, 0
  %v352 = vsel %vm263, %v242, 0
  %v355 = vsel %vm263, %v243, 0
  %v358 = vsel %vm263, %v244, 0
  %360 = vmatpush.bf16.msra.mxu0 0
  %361 = vmatpush.bf16.msra.mxu0 0
  %362 = vmatpush.bf16.msra.mxu0 0
  %363 = vmatpush.bf16.msra.mxu0 0
  %364 = vmatpush.bf16.msra.mxu0 0
  %365 = vmatpush.bf16.msra.mxu0 %v259
  %366 = vmatpush.bf16.msra.mxu0 %v258
  %367 = vmatpush.bf16.msra.mxu0 %v257
  %368 = vmatmul.bf16.gmra.mxu0 %v265
  %v369 = vpop.f32.mrf.mxu0
  %v370 = vadd.f32 0.0, %v369
  %v371 = vpop.f32.mrf.mxu0
  %v372 = vadd.f32 0.0, %v371
  %373 = vmatmul.bf16.gmra.mxu0 %v268
  %v374 = vpop.f32.mrf.mxu0
  %v375 = vadd.f32 0.0, %v374
  %v376 = vpop.f32.mrf.mxu0
  %v377 = vadd.f32 0.0, %v376
  %378 = vmatmul.bf16.gmra.mxu0 %v271
  %v379 = vpop.f32.mrf.mxu0
  %v380 = vadd.f32 0.0, %v379
  %v381 = vpop.f32.mrf.mxu0
  %v382 = vadd.f32 0.0, %v381
  %383 = vmatmul.bf16.gmra.mxu0 %v274
  %v384 = vpop.f32.mrf.mxu0
  %v385 = vadd.f32 0.0, %v384
  %v386 = vpop.f32.mrf.mxu0
  %v387 = vadd.f32 0.0, %v386
  %388 = vmatmul.bf16.gmra.mxu0 %v277
  %v389 = vpop.f32.mrf.mxu0
  %v390 = vadd.f32 0.0, %v389
  %v391 = vpop.f32.mrf.mxu0
  %v392 = vadd.f32 0.0, %v391
  %393 = vmatmul.bf16.gmra.mxu0 %v280
  %v394 = vpop.f32.mrf.mxu0
  %v395 = vadd.f32 0.0, %v394
  %v396 = vpop.f32.mrf.mxu0
  %v397 = vadd.f32 0.0, %v396
  %398 = vmatmul.bf16.gmra.mxu0 %v283
  %v399 = vpop.f32.mrf.mxu0
  %v400 = vadd.f32 0.0, %v399
  %v401 = vpop.f32.mrf.mxu0
  %v402 = vadd.f32 0.0, %v401
  %403 = vmatmul.bf16.gmra.mxu0 %v286
  %v404 = vpop.f32.mrf.mxu0
  %v405 = vadd.f32 0.0, %v404
  %v406 = vpop.f32.mrf.mxu0
  %v407 = vadd.f32 0.0, %v406
  %408 = vmatmul.bf16.gmra.mxu0 %v289
  %v409 = vpop.f32.mrf.mxu0
  %v410 = vadd.f32 0.0, %v409
  %v411 = vpop.f32.mrf.mxu0
  %v412 = vadd.f32 0.0, %v411
  %413 = vmatmul.bf16.gmra.mxu0 %v292
  %v414 = vpop.f32.mrf.mxu0
  %v415 = vadd.f32 0.0, %v414
  %v416 = vpop.f32.mrf.mxu0
  %v417 = vadd.f32 0.0, %v416
  %418 = vmatmul.bf16.gmra.mxu0 %v295
  %v419 = vpop.f32.mrf.mxu0
  %v420 = vadd.f32 0.0, %v419
  %v421 = vpop.f32.mrf.mxu0
  %v422 = vadd.f32 0.0, %v421
  %423 = vmatmul.bf16.gmra.mxu0 %v298
  %v424 = vpop.f32.mrf.mxu0
  %v425 = vadd.f32 0.0, %v424
  %v426 = vpop.f32.mrf.mxu0
  %v427 = vadd.f32 0.0, %v426
  %428 = vmatmul.bf16.gmra.mxu0 %v301
  %v429 = vpop.f32.mrf.mxu0
  %v430 = vadd.f32 0.0, %v429
  %v431 = vpop.f32.mrf.mxu0
  %v432 = vadd.f32 0.0, %v431
  %433 = vmatmul.bf16.gmra.mxu0 %v304
  %v434 = vpop.f32.mrf.mxu0
  %v435 = vadd.f32 0.0, %v434
  %v436 = vpop.f32.mrf.mxu0
  %v437 = vadd.f32 0.0, %v436
  %438 = vmatmul.bf16.gmra.mxu0 %v307
  %v439 = vpop.f32.mrf.mxu0
  %v440 = vadd.f32 0.0, %v439
  %v441 = vpop.f32.mrf.mxu0
  %v442 = vadd.f32 0.0, %v441
  %443 = vmatmul.bf16.gmra.mxu0 %v310
  %v444 = vpop.f32.mrf.mxu0
  %v445 = vadd.f32 0.0, %v444
  %v446 = vpop.f32.mrf.mxu0
  %v447 = vadd.f32 0.0, %v446
  %448 = vmatmul.bf16.gmra.mxu0 %v313
  %v449 = vpop.f32.mrf.mxu0
  %v450 = vadd.f32 0.0, %v449
  %v451 = vpop.f32.mrf.mxu0
  %v452 = vadd.f32 0.0, %v451
  %453 = vmatmul.bf16.gmra.mxu0 %v316
  %v454 = vpop.f32.mrf.mxu0
  %v455 = vadd.f32 0.0, %v454
  %v456 = vpop.f32.mrf.mxu0
  %v457 = vadd.f32 0.0, %v456
  %458 = vmatmul.bf16.gmra.mxu0 %v319
  %v459 = vpop.f32.mrf.mxu0
  %v460 = vadd.f32 0.0, %v459
  %v461 = vpop.f32.mrf.mxu0
  %v462 = vadd.f32 0.0, %v461
  %463 = vmatmul.bf16.gmra.mxu0 %v322
  %v464 = vpop.f32.mrf.mxu0
  %v465 = vadd.f32 0.0, %v464
  %v466 = vpop.f32.mrf.mxu0
  %v467 = vadd.f32 0.0, %v466
  %468 = vmatmul.bf16.gmra.mxu0 %v325
  %v469 = vpop.f32.mrf.mxu0
  %v470 = vadd.f32 0.0, %v469
  %v471 = vpop.f32.mrf.mxu0
  %v472 = vadd.f32 0.0, %v471
  %473 = vmatmul.bf16.gmra.mxu0 %v328
  %v474 = vpop.f32.mrf.mxu0
  %v475 = vadd.f32 0.0, %v474
  %v476 = vpop.f32.mrf.mxu0
  %v477 = vadd.f32 0.0, %v476
  %478 = vmatmul.bf16.gmra.mxu0 %v331
  %v479 = vpop.f32.mrf.mxu0
  %v480 = vadd.f32 0.0, %v479
  %v481 = vpop.f32.mrf.mxu0
  %v482 = vadd.f32 0.0, %v481
  %483 = vmatmul.bf16.gmra.mxu0 %v334
  %v484 = vpop.f32.mrf.mxu0
  %v485 = vadd.f32 0.0, %v484
  %v486 = vpop.f32.mrf.mxu0
  %v487 = vadd.f32 0.0, %v486
  %488 = vmatmul.bf16.gmra.mxu0 %v337
  %v489 = vpop.f32.mrf.mxu0
  %v490 = vadd.f32 0.0, %v489
  %v491 = vpop.f32.mrf.mxu0
  %v492 = vadd.f32 0.0, %v491
  %493 = vmatmul.bf16.gmra.mxu0 %v340
  %v494 = vpop.f32.mrf.mxu0
  %v495 = vadd.f32 0.0, %v494
  %v496 = vpop.f32.mrf.mxu0
  %v497 = vadd.f32 0.0, %v496
  %498 = vmatmul.bf16.gmra.mxu0 %v343
  %v499 = vpop.f32.mrf.mxu0
  %v500 = vadd.f32 0.0, %v499
  %v501 = vpop.f32.mrf.mxu0
  %v502 = vadd.f32 0.0, %v501
  %503 = vmatmul.bf16.gmra.mxu0 %v346
  %v504 = vpop.f32.mrf.mxu0
  %v505 = vadd.f32 0.0, %v504
  %v506 = vpop.f32.mrf.mxu0
  %v507 = vadd.f32 0.0, %v506
  %508 = vmatmul.bf16.gmra.mxu0 %v349
  %v509 = vpop.f32.mrf.mxu0
  %v510 = vadd.f32 0.0, %v509
  %v511 = vpop.f32.mrf.mxu0
  %v512 = vadd.f32 0.0, %v511
  %513 = vmatmul.bf16.gmra.mxu0 %v352
  %v514 = vpop.f32.mrf.mxu0
  %v515 = vadd.f32 0.0, %v514
  %v516 = vpop.f32.mrf.mxu0
  %v517 = vadd.f32 0.0, %v516
  %518 = vmatmul.bf16.gmra.mxu0 %v355
  %v519 = vpop.f32.mrf.mxu0
  %v520 = vadd.f32 0.0, %v519
  %v521 = vpop.f32.mrf.mxu0
  %v522 = vadd.f32 0.0, %v521
  %523 = vmatmul.bf16.gmra.mxu0 %v358
  %v524 = vpop.f32.mrf.mxu0
  %v525 = vadd.f32 0.0, %v524
  %v526 = vpop.f32.mrf.mxu0
  %v527 = vadd.f32 0.0, %v526
  %528 = vdwg.mxu0
  %v529 = vpack.c.bf16 %v370, %v370
  %v530 = vpack.c.bf16 %v372, %v372
  %v531 = vpack.c.bf16 %v375, %v375
  %v532 = vpack.c.bf16 %v377, %v377
  %v533 = vpack.c.bf16 %v380, %v380
  %v534 = vpack.c.bf16 %v382, %v382
  %v535 = vpack.c.bf16 %v385, %v385
  %v536 = vpack.c.bf16 %v387, %v387
  %v537 = vpack.c.bf16 %v390, %v390
  %v538 = vpack.c.bf16 %v392, %v392
  %v539 = vpack.c.bf16 %v395, %v395
  %v540 = vpack.c.bf16 %v397, %v397
  %v541 = vpack.c.bf16 %v400, %v400
  %v542 = vpack.c.bf16 %v402, %v402
  %v543 = vpack.c.bf16 %v405, %v405
  %v544 = vpack.c.bf16 %v407, %v407
  %v545 = vpack.c.bf16 %v410, %v410
  %v546 = vpack.c.bf16 %v412, %v412
  %v547 = vpack.c.bf16 %v415, %v415
  %v548 = vpack.c.bf16 %v417, %v417
  %v549 = vpack.c.bf16 %v420, %v420
  %v550 = vpack.c.bf16 %v422, %v422
  %v551 = vpack.c.bf16 %v425, %v425
  %v552 = vpack.c.bf16 %v427, %v427
  %v553 = vpack.c.bf16 %v430, %v430
  %v554 = vpack.c.bf16 %v432, %v432
  %v555 = vpack.c.bf16 %v435, %v435
  %v556 = vpack.c.bf16 %v437, %v437
  %v557 = vpack.c.bf16 %v440, %v440
  %v558 = vpack.c.bf16 %v442, %v442
  %v559 = vpack.c.bf16 %v445, %v445
  %v560 = vpack.c.bf16 %v447, %v447
  %v561 = vpack.c.bf16 %v450, %v450
  %v562 = vpack.c.bf16 %v452, %v452
  %v563 = vpack.c.bf16 %v455, %v455
  %v564 = vpack.c.bf16 %v457, %v457
  %v565 = vpack.c.bf16 %v460, %v460
  %v566 = vpack.c.bf16 %v462, %v462
  %v567 = vpack.c.bf16 %v465, %v465
  %v568 = vpack.c.bf16 %v467, %v467
  %v569 = vpack.c.bf16 %v470, %v470
  %v570 = vpack.c.bf16 %v472, %v472
  %v571 = vpack.c.bf16 %v475, %v475
  %v572 = vpack.c.bf16 %v477, %v477
  %v573 = vpack.c.bf16 %v480, %v480
  %v574 = vpack.c.bf16 %v482, %v482
  %v575 = vpack.c.bf16 %v485, %v485
  %v576 = vpack.c.bf16 %v487, %v487
  %v577 = vpack.c.bf16 %v490, %v490
  %v578 = vpack.c.bf16 %v492, %v492
  %v579 = vpack.c.bf16 %v495, %v495
  %v580 = vpack.c.bf16 %v497, %v497
  %v581 = vpack.c.bf16 %v500, %v500
  %v582 = vpack.c.bf16 %v502, %v502
  %v583 = vpack.c.bf16 %v505, %v505
  %v584 = vpack.c.bf16 %v507, %v507
  %v585 = vpack.c.bf16 %v510, %v510
  %v586 = vpack.c.bf16 %v512, %v512
  %v587 = vpack.c.bf16 %v515, %v515
  %v588 = vpack.c.bf16 %v517, %v517
  %v589 = vpack.c.bf16 %v520, %v520
  %v590 = vpack.c.bf16 %v522, %v522
  %v591 = vpack.c.bf16 %v525, %v525
  %v592 = vpack.c.bf16 %v527, %v527
  %593 = vst [vmem:[%s3] sm:$0xf] %v529
  %594 = vst [vmem:[%s3 + $0x4] sm:$0xf] %v530
  %595 = vst [vmem:[%s3 + $0x8] sm:$0xf] %v531
  %596 = vst [vmem:[%s3 + $0xc] sm:$0xf] %v532
  %597 = vst [vmem:[%s3 + $0x10] sm:$0xf] %v533
  %598 = vst [vmem:[%s3 + $0x14] sm:$0xf] %v534
  %599 = vst [vmem:[%s3 + $0x18] sm:$0xf] %v535
  %600 = vst [vmem:[%s3 + $0x1c] sm:$0xf] %v536
  %601 = vst [vmem:[%s3 + $0x20] sm:$0xf] %v537
  %602 = vst [vmem:[%s3 + $0x24] sm:$0xf] %v538
  %603 = vst [vmem:[%s3 + $0x28] sm:$0xf] %v539
  %604 = vst [vmem:[%s3 + $0x2c] sm:$0xf] %v540
  %605 = vst [vmem:[%s3 + $0x30] sm:$0xf] %v541
  %606 = vst [vmem:[%s3 + $0x34] sm:$0xf] %v542
  %607 = vst [vmem:[%s3 + $0x38] sm:$0xf] %v543
  %608 = vst [vmem:[%s3 + $0x3c] sm:$0xf] %v544
  %609 = vst [vmem:[%s3 + $0x40] sm:$0xf] %v545
  %610 = vst [vmem:[%s3 + $0x44] sm:$0xf] %v546
  %611 = vst [vmem:[%s3 + $0x48] sm:$0xf] %v547
  %612 = vst [vmem:[%s3 + $0x4c] sm:$0xf] %v548
  %613 = vst [vmem:[%s3 + $0x50] sm:$0xf] %v549
  %614 = vst [vmem:[%s3 + $0x54] sm:$0xf] %v550
  %615 = vst [vmem:[%s3 + $0x58] sm:$0xf] %v551
  %616 = vst [vmem:[%s3 + $0x5c] sm:$0xf] %v552
  %617 = vst [vmem:[%s3 + $0x60] sm:$0xf] %v553
  %618 = vst [vmem:[%s3 + $0x64] sm:$0xf] %v554
  %619 = vst [vmem:[%s3 + $0x68] sm:$0xf] %v555
  %620 = vst [vmem:[%s3 + $0x6c] sm:$0xf] %v556
  %621 = vst [vmem:[%s3 + $0x70] sm:$0xf] %v557
  %622 = vst [vmem:[%s3 + $0x74] sm:$0xf] %v558
  %623 = vst [vmem:[%s3 + $0x78] sm:$0xf] %v559
  %624 = vst [vmem:[%s3 + $0x7c] sm:$0xf] %v560
  %625 = vst [vmem:[%s3 + $0x80] sm:$0xf] %v561
  %626 = vst [vmem:[%s3 + $0x84] sm:$0xf] %v562
  %627 = vst [vmem:[%s3 + $0x88] sm:$0xf] %v563
  %628 = vst [vmem:[%s3 + $0x8c] sm:$0xf] %v564
  %629 = vst [vmem:[%s3 + $0x90] sm:$0xf] %v565
  %630 = vst [vmem:[%s3 + $0x94] sm:$0xf] %v566
  %631 = vst [vmem:[%s3 + $0x98] sm:$0xf] %v567
  %632 = vst [vmem:[%s3 + $0x9c] sm:$0xf] %v568
  %633 = vst [vmem:[%s3 + $0xa0] sm:$0xf] %v569
  %634 = vst [vmem:[%s3 + $0xa4] sm:$0xf] %v570
  %635 = vst [vmem:[%s3 + $0xa8] sm:$0xf] %v571
  %636 = vst [vmem:[%s3 + $0xac] sm:$0xf] %v572
  %637 = vst [vmem:[%s3 + $0xb0] sm:$0xf] %v573
  %638 = vst [vmem:[%s3 + $0xb4] sm:$0xf] %v574
  %639 = vst [vmem:[%s3 + $0xb8] sm:$0xf] %v575
  %640 = vst [vmem:[%s3 + $0xbc] sm:$0xf] %v576
  %641 = vst [vmem:[%s3 + $0xc0] sm:$0xf] %v577
  %642 = vst [vmem:[%s3 + $0xc4] sm:$0xf] %v578
  %643 = vst [vmem:[%s3 + $0xc8] sm:$0xf] %v579
  %644 = vst [vmem:[%s3 + $0xcc] sm:$0xf] %v580
  %645 = vst [vmem:[%s3 + $0xd0] sm:$0xf] %v581
  %646 = vst [vmem:[%s3 + $0xd4] sm:$0xf] %v582
  %647 = vst [vmem:[%s3 + $0xd8] sm:$0xf] %v583
  %648 = vst [vmem:[%s3 + $0xdc] sm:$0xf] %v584
  %649 = vst [vmem:[%s3 + $0xe0] sm:$0xf] %v585
  %650 = vst [vmem:[%s3 + $0xe4] sm:$0xf] %v586
  %651 = vst [vmem:[%s3 + $0xe8] sm:$0xf] %v587
  %652 = vst [vmem:[%s3 + $0xec] sm:$0xf] %v588
  %653 = vst [vmem:[%s3 + $0xf0] sm:$0xf] %v589
  %654 = vst [vmem:[%s3 + $0xf4] sm:$0xf] %v590
  %655 = vst [vmem:[%s3 + $0xf8] sm:$0xf] %v591
  %656 = vst [vmem:[%s3 + $0xfc] sm:$0xf] %v592
  // Predicated region
  $region14: #{_lambda_.32} parent=0 // pred_check
    _
  $region15: #{_lambda_.32} parent=0 // pred_check_branch
    %658 = sbr.rel (0) target = $region17
  $region16: #{_lambda_.32} parent=0 // pred_region
    _
  $region17: #{_lambda_.32} parent=0 // pred_fallthru
    _
  // Predicated region
  $region18: #{_lambda_.32} parent=0 // pred_check
    _
  $region19: #{_lambda_.32} parent=0 // pred_check_branch
    %660 = sbr.rel (0) target = $region21
  $region20: #{_lambda_.32} parent=0 // pred_region
    _
  $region21: #{_lambda_.32} parent=0 // pred_fallthru
    _

// kernel: _lambda_.33
$region0: #{_lambda_.33}
  #allocation0 [shape = 'u32[]', space=smem, size = 0x4, offset = 0x4, fixed_abs, tag = 'smem constant byte address 0x4 - core index']
  #allocation1 [shape = 'u32[72,128]{1,0:T(1,128)}', space=vmem, size = 0x9000, scoped, tag = 'internal scratch']
  %s0 = inlined_call_operand.vmem [shape: bf16[128,128], index: 0, kind: input, shape index: {}]
  %s1 = inlined_call_operand.vmem [shape: bf16[128,128], index: 1, kind: input, shape index: {}]
  %s2 = inlined_call_operand.vmem [shape: f32[1,128], index: 2, kind: input, shape index: {}]
  %s3 = inlined_call_operand.vmem [shape: bf16[128,128], index: 3, kind: output, shape index: {0}]
  %s4 = inlined_call_operand.vmem [shape: f32[1,128], index: 4, kind: output, shape index: {1}]
  %s5 = inlined_call_operand.vmem [shape: f32[1,128], index: 5, kind: output, shape index: {2}]
  %6 = xla_tuple %s3, %s4, %s5
  %s7 = sld [smem:[#allocation0]]
  $region42: #{_lambda_.33} parent=0
    _
  %s9 = ssub.s32 1, %s7
  %s10 = scalar_select 0, %s9, %s7
  // Predicated region
  $region2: #{_lambda_.33} parent=0 // pred_check
    _
  $region3: #{_lambda_.33} parent=0 // pred_check_branch
    %12 = sbr.rel (0) target = $region5
  $region4: #{_lambda_.33} parent=0 // pred_region
    _
  $region5: #{_lambda_.33} parent=0 // pred_fallthru
    _
  // Predicated region
  $region6: #{_lambda_.33} parent=0 // pred_check
    _
  $region7: #{_lambda_.33} parent=0 // pred_check_branch
    %14 = sbr.rel (0) target = $region9
  $region8: #{_lambda_.33} parent=0 // pred_region
    _
  $region9: #{_lambda_.33} parent=0 // pred_fallthru
    _
  // Predicated region
  $region10: #{_lambda_.33} parent=0 // pred_check
    _
  $region11: #{_lambda_.33} parent=0 // pred_check_branch
    %16 = sbr.rel (0) target = $region13
  $region12: #{_lambda_.33} parent=0 // pred_region
    _
  $region13: #{_lambda_.33} parent=0 // pred_fallthru
    _
  %v17 = vld [vmem:[%s0] sm:$0xf]
  %v18 = vld [vmem:[%s0 + $0x4] sm:$0xf]
  %v19 = vld [vmem:[%s0 + $0x8] sm:$0xf]
  %v20 = vld [vmem:[%s0 + $0xc] sm:$0xf]
  %v21 = vld [vmem:[%s0 + $0x10] sm:$0xf]
  %v22 = vld [vmem:[%s0 + $0x14] sm:$0xf]
  %v23 = vld [vmem:[%s0 + $0x18] sm:$0xf]
  %v24 = vld [vmem:[%s0 + $0x1c] sm:$0xf]
  %v25 = vld [vmem:[%s0 + $0x20] sm:$0xf]
  %v26 = vld [vmem:[%s0 + $0x24] sm:$0xf]
  %v27 = vld [vmem:[%s0 + $0x28] sm:$0xf]
  %v28 = vld [vmem:[%s0 + $0x2c] sm:$0xf]
  %v29 = vld [vmem:[%s0 + $0x30] sm:$0xf]
  %v30 = vld [vmem:[%s0 + $0x34] sm:$0xf]
  %v31 = vld [vmem:[%s0 + $0x38] sm:$0xf]
  %v32 = vld [vmem:[%s0 + $0x3c] sm:$0xf]
  %v33 = vunpack.c.l.bf16 %v17
  %v34 = vunpack.c.l.bf16 %v18
  %v35 = vunpack.c.l.bf16 %v19
  %v36 = vunpack.c.l.bf16 %v20
  %v37 = vunpack.c.l.bf16 %v21
  %v38 = vunpack.c.l.bf16 %v22
  %v39 = vunpack.c.l.bf16 %v23
  %v40 = vunpack.c.l.bf16 %v24
  %v41 = vunpack.c.l.bf16 %v25
  %v42 = vunpack.c.l.bf16 %v26
  %v43 = vunpack.c.l.bf16 %v27
  %v44 = vunpack.c.l.bf16 %v28
  %v45 = vunpack.c.l.bf16 %v29
  %v46 = vunpack.c.l.bf16 %v30
  %v47 = vunpack.c.l.bf16 %v31
  %v48 = vunpack.c.l.bf16 %v32
  %vm49 = vcmp.ge.f32.partialorder %v33, 0.0
  %vm50 = vcmp.ge.f32.partialorder %v34, 0.0
  %vm51 = vcmp.ge.f32.partialorder %v35, 0.0
  %vm52 = vcmp.ge.f32.partialorder %v36, 0.0
  %vm53 = vcmp.ge.f32.partialorder %v37, 0.0
  %vm54 = vcmp.ge.f32.partialorder %v38, 0.0
  %vm55 = vcmp.ge.f32.partialorder %v39, 0.0
  %vm56 = vcmp.ge.f32.partialorder %v40, 0.0
  %vm57 = vcmp.ge.f32.partialorder %v41, 0.0
  %vm58 = vcmp.ge.f32.partialorder %v42, 0.0
  %vm59 = vcmp.ge.f32.partialorder %v43, 0.0
  %vm60 = vcmp.ge.f32.partialorder %v44, 0.0
  %vm61 = vcmp.ge.f32.partialorder %v45, 0.0
  %vm62 = vcmp.ge.f32.partialorder %v46, 0.0
  %vm63 = vcmp.ge.f32.partialorder %v47, 0.0
  %vm64 = vcmp.ge.f32.partialorder %v48, 0.0
  %v65 = vmul.f32 %v33, 0.20019531
  %v66 = vmul.f32 %v34, 0.20019531
  %v67 = vmul.f32 %v35, 0.20019531
  %v68 = vmul.f32 %v36, 0.20019531
  %v69 = vmul.f32 %v37, 0.20019531
  %v70 = vmul.f32 %v38, 0.20019531
  %v71 = vmul.f32 %v39, 0.20019531
  %v72 = vmul.f32 %v40, 0.20019531
  %v73 = vmul.f32 %v41, 0.20019531
  %v74 = vmul.f32 %v42, 0.20019531
  %v75 = vmul.f32 %v43, 0.20019531
  %v76 = vmul.f32 %v44, 0.20019531
  %v77 = vmul.f32 %v45, 0.20019531
  %v78 = vmul.f32 %v46, 0.20019531
  %v79 = vmul.f32 %v47, 0.20019531
  %v80 = vmul.f32 %v48, 0.20019531
  %v81 = vpack.c.bf16 %v65, %v65
  %v82 = vpack.c.bf16 %v66, %v66
  %v83 = vpack.c.bf16 %v67, %v67
  %v84 = vpack.c.bf16 %v68, %v68
  %v85 = vpack.c.bf16 %v69, %v69
  %v86 = vpack.c.bf16 %v70, %v70
  %v87 = vpack.c.bf16 %v71, %v71
  %v88 = vpack.c.bf16 %v72, %v72
  %v89 = vpack.c.bf16 %v73, %v73
  %v90 = vpack.c.bf16 %v74, %v74
  %v91 = vpack.c.bf16 %v75, %v75
  %v92 = vpack.c.bf16 %v76, %v76
  %v93 = vpack.c.bf16 %v77, %v77
  %v94 = vpack.c.bf16 %v78, %v78
  %v95 = vpack.c.bf16 %v79, %v79
  %v96 = vpack.c.bf16 %v80, %v80
  %vm97 = vmpackc.low %vm49, %vm49
  %vm98 = vmpackc.low %vm50, %vm50
  %vm99 = vmpackc.low %vm51, %vm51
  %vm100 = vmpackc.low %vm52, %vm52
  %vm101 = vmpackc.low %vm53, %vm53
  %vm102 = vmpackc.low %vm54, %vm54
  %vm103 = vmpackc.low %vm55, %vm55
  %vm104 = vmpackc.low %vm56, %vm56
  %vm105 = vmpackc.low %vm57, %vm57
  %vm106 = vmpackc.low %vm58, %vm58
  %vm107 = vmpackc.low %vm59, %vm59
  %vm108 = vmpackc.low %vm60, %vm60
  %vm109 = vmpackc.low %vm61, %vm61
  %vm110 = vmpackc.low %vm62, %vm62
  %vm111 = vmpackc.low %vm63, %vm63
  %vm112 = vmpackc.low %vm64, %vm64
  %v113 = vsel %vm97, %v17, %v81
  %v114 = vsel %vm98, %v18, %v82
  %v115 = vsel %vm99, %v19, %v83
  %v116 = vsel %vm100, %v20, %v84
  %v117 = vsel %vm101, %v21, %v85
  %v118 = vsel %vm102, %v22, %v86
  %v119 = vsel %vm103, %v23, %v87
  %v120 = vsel %vm104, %v24, %v88
  %v121 = vsel %vm105, %v25, %v89
  %v122 = vsel %vm106, %v26, %v90
  %v123 = vsel %vm107, %v27, %v91
  %v124 = vsel %vm108, %v28, %v92
  %v125 = vsel %vm109, %v29, %v93
  %v126 = vsel %vm110, %v30, %v94
  %v127 = vsel %vm111, %v31, %v95
  %v128 = vsel %vm112, %v32, %v96
  %v129 = vld [vmem:[%s1] sm:$0xf]
  %v130 = vld [vmem:[%s1 + $0x4] sm:$0xf]
  %v131 = vld [vmem:[%s1 + $0x8] sm:$0xf]
  %v132 = vld [vmem:[%s1 + $0xc] sm:$0xf]
  %v133 = vld [vmem:[%s1 + $0x10] sm:$0xf]
  %v134 = vld [vmem:[%s1 + $0x14] sm:$0xf]
  %v135 = vld [vmem:[%s1 + $0x18] sm:$0xf]
  %v136 = vld [vmem:[%s1 + $0x1c] sm:$0xf]
  %v137 = vld [vmem:[%s1 + $0x20] sm:$0xf]
  %v138 = vld [vmem:[%s1 + $0x24] sm:$0xf]
  %v139 = vld [vmem:[%s1 + $0x28] sm:$0xf]
  %v140 = vld [vmem:[%s1 + $0x2c] sm:$0xf]
  %v141 = vld [vmem:[%s1 + $0x30] sm:$0xf]
  %v142 = vld [vmem:[%s1 + $0x34] sm:$0xf]
  %v143 = vld [vmem:[%s1 + $0x38] sm:$0xf]
  %v144 = vld [vmem:[%s1 + $0x3c] sm:$0xf]
  %v161 = vunpack.c.l.b16 %v113
  %v162 = vunpack.c.l.b16 %v114
  %v163 = vunpack.c.l.b16 %v115
  %v164 = vunpack.c.l.b16 %v116
  %v165 = vunpack.c.l.b16 %v117
  %v166 = vunpack.c.l.b16 %v118
  %v167 = vunpack.c.l.b16 %v119
  %v168 = vunpack.c.l.b16 %v120
  %v169 = vunpack.c.l.b16 %v121
  %v170 = vunpack.c.l.b16 %v122
  %v171 = vunpack.c.l.b16 %v123
  %v172 = vunpack.c.l.b16 %v124
  %v173 = vunpack.c.l.b16 %v125
  %v174 = vunpack.c.l.b16 %v126
  %v175 = vunpack.c.l.b16 %v127
  %v176 = vunpack.c.l.b16 %v128
  %v177 = vpack.c.b16 %v162, %v161
  %v178 = vpack.c.b16 %v164, %v163
  %v179 = vpack.c.b16 %v166, %v165
  %v180 = vpack.c.b16 %v168, %v167
  %v181 = vpack.c.b16 %v170, %v169
  %v182 = vpack.c.b16 %v172, %v171
  %v183 = vpack.c.b16 %v174, %v173
  %v184 = vpack.c.b16 %v176, %v175
  %v209 = vunpack.c.l.b16 %v129
  %v210 = vunpack.c.l.b16 %v130
  %v211 = vunpack.c.l.b16 %v131
  %v212 = vunpack.c.l.b16 %v132
  %v213 = vunpack.c.l.b16 %v133
  %v214 = vunpack.c.l.b16 %v134
  %v215 = vunpack.c.l.b16 %v135
  %v216 = vunpack.c.l.b16 %v136
  %v217 = vunpack.c.l.b16 %v137
  %v218 = vunpack.c.l.b16 %v138
  %v219 = vunpack.c.l.b16 %v139
  %v220 = vunpack.c.l.b16 %v140
  %v221 = vunpack.c.l.b16 %v141
  %v222 = vunpack.c.l.b16 %v142
  %v223 = vunpack.c.l.b16 %v143
  %v224 = vunpack.c.l.b16 %v144
  %v225 = vpack.c.b16 %v210, %v209
  %v226 = vpack.c.b16 %v212, %v211
  %v227 = vpack.c.b16 %v214, %v213
  %v228 = vpack.c.b16 %v216, %v215
  %v229 = vpack.c.b16 %v218, %v217
  %v230 = vpack.c.b16 %v220, %v219
  %v231 = vpack.c.b16 %v222, %v221
  %v232 = vpack.c.b16 %v224, %v223
  %241 = vmatpush.bf16.msra.mxu0 %v232
  %242 = vmatpush.bf16.msra.mxu0 %v231
  %243 = vmatpush.bf16.msra.mxu0 %v230
  %244 = vmatpush.bf16.msra.mxu0 %v229
  %245 = vmatpush.bf16.msra.mxu0 %v228
  %246 = vmatpush.bf16.msra.mxu0 %v227
  %247 = vmatpush.bf16.msra.mxu0 %v226
  %248 = vmatpush.bf16.msra.mxu0 %v225
  %249 = vmatmul.bf16.gmra.mxu0 %v177
  %v250 = vpop.f32.mrf.mxu0
  %v251 = vadd.f32 0.0, %v250
  %v252 = vpop.f32.mrf.mxu0
  %v253 = vadd.f32 0.0, %v252
  %254 = vmatmul.bf16.gmra.mxu0 %v178
  %v255 = vpop.f32.mrf.mxu0
  %v256 = vadd.f32 0.0, %v255
  %v257 = vpop.f32.mrf.mxu0
  %v258 = vadd.f32 0.0, %v257
  %259 = vmatmul.bf16.gmra.mxu0 %v179
  %v260 = vpop.f32.mrf.mxu0
  %v261 = vadd.f32 0.0, %v260
  %v262 = vpop.f32.mrf.mxu0
  %v263 = vadd.f32 0.0, %v262
  %264 = vmatmul.bf16.gmra.mxu0 %v180
  %v265 = vpop.f32.mrf.mxu0
  %v266 = vadd.f32 0.0, %v265
  %v267 = vpop.f32.mrf.mxu0
  %v268 = vadd.f32 0.0, %v267
  %269 = vmatmul.bf16.gmra.mxu0 %v181
  %v270 = vpop.f32.mrf.mxu0
  %v271 = vadd.f32 0.0, %v270
  %v272 = vpop.f32.mrf.mxu0
  %v273 = vadd.f32 0.0, %v272
  %274 = vmatmul.bf16.gmra.mxu0 %v182
  %v275 = vpop.f32.mrf.mxu0
  %v276 = vadd.f32 0.0, %v275
  %v277 = vpop.f32.mrf.mxu0
  %v278 = vadd.f32 0.0, %v277
  %279 = vmatmul.bf16.gmra.mxu0 %v183
  %v280 = vpop.f32.mrf.mxu0
  %v281 = vadd.f32 0.0, %v280
  %v282 = vpop.f32.mrf.mxu0
  %v283 = vadd.f32 0.0, %v282
  %284 = vmatmul.bf16.gmra.mxu0 %v184
  %v285 = vpop.f32.mrf.mxu0
  %v286 = vadd.f32 0.0, %v285
  %v287 = vpop.f32.mrf.mxu0
  %v288 = vadd.f32 0.0, %v287
  %289 = vdwg.mxu0
  %p290 = scmp.eq.s32.totalorder 0, 0
  // Predicated region
  $region14: #{_lambda_.33} parent=0 // pred_check
    %p291 = pneg %p290
  $region15: #{_lambda_.33} parent=0 // pred_check_branch
    %293 = sbr.rel (%p291) target = $region17
  $region16: #{_lambda_.33} parent=0 // pred_region
    %294 = vst [vmem:[%s4] sm:$0x1] 0.0
    %295 = vst [vmem:[%s5] sm:$0x1] 0.0
  $region17: #{_lambda_.33} parent=0 // pred_fallthru
    _
  %v296 = vlaneseq
  %v297 = vshrl.u32 %v296, 7
  %v298 = vadd.s32 %v297, 8
  %v299 = vadd.s32 %v297, 16
  %v300 = vadd.s32 %v297, 24
  %v301 = vadd.s32 %v297, 32
  %v302 = vadd.s32 %v297, 40
  %v303 = vadd.s32 %v297, 48
  %v304 = vadd.s32 %v297, 56
  %v305 = vadd.s32 %v297, 64
  %v306 = vadd.s32 %v297, 72
  %v307 = vadd.s32 %v297, 80
  %v308 = vadd.s32 %v297, 88
  %v309 = vadd.s32 %v297, 96
  %v310 = vadd.s32 %v297, 104
  %v311 = vadd.s32 %v297, 112
  %v312 = vadd.s32 %v297, 120
  %s313 = smul.u32 0, 128
  %v314 = vstv %s313
  %v315 = vadd.s32 %v297, %v314
  %v316 = vadd.s32 %v298, %v314
  %v317 = vadd.s32 %v299, %v314
  %v318 = vadd.s32 %v300, %v314
  %v319 = vadd.s32 %v301, %v314
  %v320 = vadd.s32 %v302, %v314
  %v321 = vadd.s32 %v303, %v314
  %v322 = vadd.s32 %v304, %v314
  %v323 = vadd.s32 %v305, %v314
  %v324 = vadd.s32 %v306, %v314
  %v325 = vadd.s32 %v307, %v314
  %v326 = vadd.s32 %v308, %v314
  %v327 = vadd.s32 %v309, %v314
  %v328 = vadd.s32 %v310, %v314
  %v329 = vadd.s32 %v311, %v314
  %v330 = vadd.s32 %v312, %v314
  %vm331 = vcmp.lt.s32.totalorder %v315, 128
  %vm332 = vcmp.lt.s32.totalorder %v316, 128
  %vm333 = vcmp.lt.s32.totalorder %v317, 128
  %vm334 = vcmp.lt.s32.totalorder %v318, 128
  %vm335 = vcmp.lt.s32.totalorder %v319, 128
  %vm336 = vcmp.lt.s32.totalorder %v320, 128
  %vm337 = vcmp.lt.s32.totalorder %v321, 128
  %vm338 = vcmp.lt.s32.totalorder %v322, 128
  %vm339 = vcmp.lt.s32.totalorder %v323, 128
  %vm340 = vcmp.lt.s32.totalorder %v324, 128
  %vm341 = vcmp.lt.s32.totalorder %v325, 128
  %vm342 = vcmp.lt.s32.totalorder %v326, 128
  %vm343 = vcmp.lt.s32.totalorder %v327, 128
  %vm344 = vcmp.lt.s32.totalorder %v328, 128
  %vm345 = vcmp.lt.s32.totalorder %v329, 128
  %vm346 = vcmp.lt.s32.totalorder %v330, 128
  %v347 = vsel %vm331, %v251, 0.0
  %v348 = vsel %vm332, %v253, 0.0
  %v349 = vsel %vm333, %v256, 0.0
  %v350 = vsel %vm334, %v258, 0.0
  %v351 = vsel %vm335, %v261, 0.0
  %v352 = vsel %vm336, %v263, 0.0
  %v353 = vsel %vm337, %v266, 0.0
  %v354 = vsel %vm338, %v268, 0.0
  %v355 = vsel %vm339, %v271, 0.0
  %v356 = vsel %vm340, %v273, 0.0
  %v357 = vsel %vm341, %v276, 0.0
  %v358 = vsel %vm342, %v278, 0.0
  %v359 = vsel %vm343, %v281, 0.0
  %v360 = vsel %vm344, %v283, 0.0
  %v361 = vsel %vm345, %v286, 0.0
  %v362 = vsel %vm346, %v288, 0.0
  %v363 = vld [vmem:[%s4] sm:$0x1]
  %v364 = vadd.f32 %v347, %v348
  %v365 = vadd.f32 %v364, %v349
  %v366 = vadd.f32 %v365, %v350
  %v367 = vadd.f32 %v366, %v351
  %v368 = vadd.f32 %v367, %v352
  %v369 = vadd.f32 %v368, %v353
  %v370 = vadd.f32 %v369, %v354
  %v371 = vadd.f32 %v370, %v355
  %v372 = vadd.f32 %v371, %v356
  %v373 = vadd.f32 %v372, %v357
  %v374 = vadd.f32 %v373, %v358
  %v375 = vadd.f32 %v374, %v359
  %v376 = vadd.f32 %v375, %v360
  %v377 = vadd.f32 %v376, %v361
  %v378 = vadd.f32 %v377, %v362
  %v379 = vrot.slane %v378, 4
  %v380 = vadd.f32 %v378, %v379
  %v381 = vrot.slane %v380, 2
  %v382 = vadd.f32 %v380, %v381
  %v383 = vrot.slane %v382, 1
  %v384 = vadd.f32 %v382, %v383
  %v385 = vadd.f32 %v363, %v384
  %386 = vst [vmem:[%s4] sm:$0x1] %v385
  %v387 = vld [vmem:[%s5] sm:$0x1]
  %v388 = vmul.f32 %v347, %v347
  %v389 = vmul.f32 %v348, %v348
  %v390 = vmul.f32 %v349, %v349
  %v391 = vmul.f32 %v350, %v350
  %v392 = vmul.f32 %v351, %v351
  %v393 = vmul.f32 %v352, %v352
  %v394 = vmul.f32 %v353, %v353
  %v395 = vmul.f32 %v354, %v354
  %v396 = vmul.f32 %v355, %v355
  %v397 = vmul.f32 %v356, %v356
  %v398 = vmul.f32 %v357, %v357
  %v399 = vmul.f32 %v358, %v358
  %v400 = vmul.f32 %v359, %v359
  %v401 = vmul.f32 %v360, %v360
  %v402 = vmul.f32 %v361, %v361
  %v403 = vmul.f32 %v362, %v362
  %v404 = vadd.f32 %v388, %v389
  %v405 = vadd.f32 %v404, %v390
  %v406 = vadd.f32 %v405, %v391
  %v407 = vadd.f32 %v406, %v392
  %v408 = vadd.f32 %v407, %v393
  %v409 = vadd.f32 %v408, %v394
  %v410 = vadd.f32 %v409, %v395
  %v411 = vadd.f32 %v410, %v396
  %v412 = vadd.f32 %v411, %v397
  %v413 = vadd.f32 %v412, %v398
  %v414 = vadd.f32 %v413, %v399
  %v415 = vadd.f32 %v414, %v400
  %v416 = vadd.f32 %v415, %v401
  %v417 = vadd.f32 %v416, %v402
  %v418 = vadd.f32 %v417, %v403
  %v419 = vrot.slane %v418, 4
  %v420 = vadd.f32 %v418, %v419
  %v421 = vrot.slane %v420, 2
  %v422 = vadd.f32 %v420, %v421
  %v423 = vrot.slane %v422, 1
  %v424 = vadd.f32 %v422, %v423
  %v425 = vadd.f32 %v387, %v424
  %426 = vst [vmem:[%s5] sm:$0x1] %v425
  %v427 = vpack.c.bf16 %v251, %v251
  %v428 = vpack.c.bf16 %v253, %v253
  %v429 = vpack.c.bf16 %v256, %v256
  %v430 = vpack.c.bf16 %v258, %v258
  %v431 = vpack.c.bf16 %v261, %v261
  %v432 = vpack.c.bf16 %v263, %v263
  %v433 = vpack.c.bf16 %v266, %v266
  %v434 = vpack.c.bf16 %v268, %v268
  %v435 = vpack.c.bf16 %v271, %v271
  %v436 = vpack.c.bf16 %v273, %v273
  %v437 = vpack.c.bf16 %v276, %v276
  %v438 = vpack.c.bf16 %v278, %v278
  %v439 = vpack.c.bf16 %v281, %v281
  %v440 = vpack.c.bf16 %v283, %v283
  %v441 = vpack.c.bf16 %v286, %v286
  %v442 = vpack.c.bf16 %v288, %v288
  %443 = vst [vmem:[%s3] sm:$0xf] %v427
  %444 = vst [vmem:[%s3 + $0x4] sm:$0xf] %v428
  %445 = vst [vmem:[%s3 + $0x8] sm:$0xf] %v429
  %446 = vst [vmem:[%s3 + $0xc] sm:$0xf] %v430
  %447 = vst [vmem:[%s3 + $0x10] sm:$0xf] %v431
  %448 = vst [vmem:[%s3 + $0x14] sm:$0xf] %v432
  %449 = vst [vmem:[%s3 + $0x18] sm:$0xf] %v433
  %450 = vst [vmem:[%s3 + $0x1c] sm:$0xf] %v434
  %451 = vst [vmem:[%s3 + $0x20] sm:$0xf] %v435
  %452 = vst [vmem:[%s3 + $0x24] sm:$0xf] %v436
  %453 = vst [vmem:[%s3 + $0x28] sm:$0xf] %v437
  %454 = vst [vmem:[%s3 + $0x2c] sm:$0xf] %v438
  %455 = vst [vmem:[%s3 + $0x30] sm:$0xf] %v439
  %456 = vst [vmem:[%s3 + $0x34] sm:$0xf] %v440
  %457 = vst [vmem:[%s3 + $0x38] sm:$0xf] %v441
  %458 = vst [vmem:[%s3 + $0x3c] sm:$0xf] %v442
  // Predicated region
  $region18: #{_lambda_.33} parent=0 // pred_check
    _
  $region19: #{_lambda_.33} parent=0 // pred_check_branch
    %460 = sbr.rel (0) target = $region21
  $region20: #{_lambda_.33} parent=0 // pred_region
    _
  $region21: #{_lambda_.33} parent=0 // pred_fallthru
    _
  // Predicated region
  $region22: #{_lambda_.33} parent=0 // pred_check
    _
  $region23: #{_lambda_.33} parent=0 // pred_check_branch
    %462 = sbr.rel (0) target = $region25
  $region24: #{_lambda_.33} parent=0 // pred_region
    _
  $region25: #{_lambda_.33} parent=0 // pred_fallthru
    _
  // Predicated region
  $region26: #{_lambda_.33} parent=0 // pred_check
    _
  $region27: #{_lambda_.33} parent=0 // pred_check_branch
    %464 = sbr.rel (0) target = $region29
  $region28: #{_lambda_.33} parent=0 // pred_region
    _
  $region29: #{_lambda_.33} parent=0 // pred_fallthru
    _
  // Predicated region
  $region30: #{_lambda_.33} parent=0 // pred_check
    _
  $region31: #{_lambda_.33} parent=0 // pred_check_branch
    %466 = sbr.rel (0) target = $region33
  $region32: #{_lambda_.33} parent=0 // pred_region
    _
  $region33: #{_lambda_.33} parent=0 // pred_fallthru
    _
  // Predicated region
  $region34: #{_lambda_.33} parent=0 // pred_check
    _
  $region35: #{_lambda_.33} parent=0 // pred_check_branch
    %468 = sbr.rel (0) target = $region37
  $region36: #{_lambda_.33} parent=0 // pred_region
    _
  $region37: #{_lambda_.33} parent=0 // pred_fallthru
    _
  // Predicated region
  $region38: #{_lambda_.33} parent=0 // pred_check
    _
  $region39: #{_lambda_.33} parent=0 // pred_check_branch
    %470 = sbr.rel (0) target = $region41
  $region40: #{_lambda_.33} parent=0 // pred_region
    _
  $region41: #{_lambda_.33} parent=0 // pred_fallthru
    _

// kernel: _lambda_.34
$region0: #{_lambda_.34}
  #allocation0 [shape = 'u32[]', space=smem, size = 0x4, offset = 0x4, fixed_abs, tag = 'smem constant byte address 0x4 - core index']
  #allocation1 [shape = 'u32[72,128]{1,0:T(1,128)}', space=vmem, size = 0x9000, scoped, tag = 'internal scratch']
  %s0 = inlined_call_operand.vmem [shape: bf16[128,128], index: 0, kind: input, shape index: {}]
  %s1 = inlined_call_operand.vmem [shape: f32[1,128], index: 1, kind: input, shape index: {}]
  %s2 = inlined_call_operand.vmem [shape: f32[1,128], index: 2, kind: input, shape index: {}]
  %s3 = inlined_call_operand.vmem [shape: bf16[128,128], index: 3, kind: output, shape index: {}]
  %s4 = sld [smem:[#allocation0]]
  $region22: #{_lambda_.34} parent=0
    _
  %s6 = ssub.s32 1, %s4
  %s7 = scalar_select 0, %s6, %s4
  // Predicated region
  $region2: #{_lambda_.34} parent=0 // pred_check
    _
  $region3: #{_lambda_.34} parent=0 // pred_check_branch
    %9 = sbr.rel (0) target = $region5
  $region4: #{_lambda_.34} parent=0 // pred_region
    _
  $region5: #{_lambda_.34} parent=0 // pred_fallthru
    _
  // Predicated region
  $region6: #{_lambda_.34} parent=0 // pred_check
    _
  $region7: #{_lambda_.34} parent=0 // pred_check_branch
    %11 = sbr.rel (0) target = $region9
  $region8: #{_lambda_.34} parent=0 // pred_region
    _
  $region9: #{_lambda_.34} parent=0 // pred_fallthru
    _
  // Predicated region
  $region10: #{_lambda_.34} parent=0 // pred_check
    _
  $region11: #{_lambda_.34} parent=0 // pred_check_branch
    %13 = sbr.rel (0) target = $region13
  $region12: #{_lambda_.34} parent=0 // pred_region
    _
  $region13: #{_lambda_.34} parent=0 // pred_fallthru
    _
  %v14 = vld [vmem:[%s0] sm:$0xf]
  %v15 = vld [vmem:[%s0 + $0x4] sm:$0xf]
  %v16 = vld [vmem:[%s0 + $0x8] sm:$0xf]
  %v17 = vld [vmem:[%s0 + $0xc] sm:$0xf]
  %v18 = vld [vmem:[%s0 + $0x10] sm:$0xf]
  %v19 = vld [vmem:[%s0 + $0x14] sm:$0xf]
  %v20 = vld [vmem:[%s0 + $0x18] sm:$0xf]
  %v21 = vld [vmem:[%s0 + $0x1c] sm:$0xf]
  %v22 = vld [vmem:[%s0 + $0x20] sm:$0xf]
  %v23 = vld [vmem:[%s0 + $0x24] sm:$0xf]
  %v24 = vld [vmem:[%s0 + $0x28] sm:$0xf]
  %v25 = vld [vmem:[%s0 + $0x2c] sm:$0xf]
  %v26 = vld [vmem:[%s0 + $0x30] sm:$0xf]
  %v27 = vld [vmem:[%s0 + $0x34] sm:$0xf]
  %v28 = vld [vmem:[%s0 + $0x38] sm:$0xf]
  %v29 = vld [vmem:[%s0 + $0x3c] sm:$0xf]
  %v30 = vunpack.c.l.bf16 %v14
  %v31 = vunpack.c.l.bf16 %v15
  %v32 = vunpack.c.l.bf16 %v16
  %v33 = vunpack.c.l.bf16 %v17
  %v34 = vunpack.c.l.bf16 %v18
  %v35 = vunpack.c.l.bf16 %v19
  %v36 = vunpack.c.l.bf16 %v20
  %v37 = vunpack.c.l.bf16 %v21
  %v38 = vunpack.c.l.bf16 %v22
  %v39 = vunpack.c.l.bf16 %v23
  %v40 = vunpack.c.l.bf16 %v24
  %v41 = vunpack.c.l.bf16 %v25
  %v42 = vunpack.c.l.bf16 %v26
  %v43 = vunpack.c.l.bf16 %v27
  %v44 = vunpack.c.l.bf16 %v28
  %v45 = vunpack.c.l.bf16 %v29
  %v46 = vld [vmem:[%s1] sm:$0x1]
  %v48 = vperm.slane %v46, 0
  %v50 = vmul.f32 %v30, %v48
  %v51 = vmul.f32 %v31, %v48
  %v52 = vmul.f32 %v32, %v48
  %v53 = vmul.f32 %v33, %v48
  %v54 = vmul.f32 %v34, %v48
  %v55 = vmul.f32 %v35, %v48
  %v56 = vmul.f32 %v36, %v48
  %v57 = vmul.f32 %v37, %v48
  %v58 = vmul.f32 %v38, %v48
  %v59 = vmul.f32 %v39, %v48
  %v60 = vmul.f32 %v40, %v48
  %v61 = vmul.f32 %v41, %v48
  %v62 = vmul.f32 %v42, %v48
  %v63 = vmul.f32 %v43, %v48
  %v64 = vmul.f32 %v44, %v48
  %v65 = vmul.f32 %v45, %v48
  %v66 = vld [vmem:[%s2] sm:$0x1]
  %v68 = vperm.slane %v66, 0
  %v70 = vadd.f32 %v50, %v68
  %v71 = vadd.f32 %v51, %v68
  %v72 = vadd.f32 %v52, %v68
  %v73 = vadd.f32 %v53, %v68
  %v74 = vadd.f32 %v54, %v68
  %v75 = vadd.f32 %v55, %v68
  %v76 = vadd.f32 %v56, %v68
  %v77 = vadd.f32 %v57, %v68
  %v78 = vadd.f32 %v58, %v68
  %v79 = vadd.f32 %v59, %v68
  %v80 = vadd.f32 %v60, %v68
  %v81 = vadd.f32 %v61, %v68
  %v82 = vadd.f32 %v62, %v68
  %v83 = vadd.f32 %v63, %v68
  %v84 = vadd.f32 %v64, %v68
  %v85 = vadd.f32 %v65, %v68
  %v86 = vpack.c.bf16 %v70, %v70
  %v87 = vpack.c.bf16 %v71, %v71
  %v88 = vpack.c.bf16 %v72, %v72
  %v89 = vpack.c.bf16 %v73, %v73
  %v90 = vpack.c.bf16 %v74, %v74
  %v91 = vpack.c.bf16 %v75, %v75
  %v92 = vpack.c.bf16 %v76, %v76
  %v93 = vpack.c.bf16 %v77, %v77
  %v94 = vpack.c.bf16 %v78, %v78
  %v95 = vpack.c.bf16 %v79, %v79
  %v96 = vpack.c.bf16 %v80, %v80
  %v97 = vpack.c.bf16 %v81, %v81
  %v98 = vpack.c.bf16 %v82, %v82
  %v99 = vpack.c.bf16 %v83, %v83
  %v100 = vpack.c.bf16 %v84, %v84
  %v101 = vpack.c.bf16 %v85, %v85
  %102 = vst [vmem:[%s3] sm:$0xf] %v86
  %103 = vst [vmem:[%s3 + $0x4] sm:$0xf] %v87
  %104 = vst [vmem:[%s3 + $0x8] sm:$0xf] %v88
  %105 = vst [vmem:[%s3 + $0xc] sm:$0xf] %v89
  %106 = vst [vmem:[%s3 + $0x10] sm:$0xf] %v90
  %107 = vst [vmem:[%s3 + $0x14] sm:$0xf] %v91
  %108 = vst [vmem:[%s3 + $0x18] sm:$0xf] %v92
  %109 = vst [vmem:[%s3 + $0x1c] sm:$0xf] %v93
  %110 = vst [vmem:[%s3 + $0x20] sm:$0xf] %v94
  %111 = vst [vmem:[%s3 + $0x24] sm:$0xf] %v95
  %112 = vst [vmem:[%s3 + $0x28] sm:$0xf] %v96
  %113 = vst [vmem:[%s3 + $0x2c] sm:$0xf] %v97
  %114 = vst [vmem:[%s3 + $0x30] sm:$0xf] %v98
  %115 = vst [vmem:[%s3 + $0x34] sm:$0xf] %v99
  %116 = vst [vmem:[%s3 + $0x38] sm:$0xf] %v100
  %117 = vst [vmem:[%s3 + $0x3c] sm:$0xf] %v101
  // Predicated region
  $region14: #{_lambda_.34} parent=0 // pred_check
    _
  $region15: #{_lambda_.34} parent=0 // pred_check_branch
    %119 = sbr.rel (0) target = $region17
  $region16: #{_lambda_.34} parent=0 // pred_region
    _
  $region17: #{_lambda_.34} parent=0 // pred_fallthru
    _
  // Predicated region
  $region18: #{_lambda_.34} parent=0 // pred_check
    _
  $region19: #{_lambda_.34} parent=0 // pred_check_branch
    %121 = sbr.rel (0) target = $region21
  $region20: #{_lambda_.34} parent=0 // pred_region
    _
  $region21: #{_lambda_.34} parent=0 // pred_fallthru
    _

// kernel: _lambda_.35
$region0: #{_lambda_.35}
  #allocation0 [shape = 'u32[]', space=smem, size = 0x4, offset = 0x4, fixed_abs, tag = 'smem constant byte address 0x4 - core index']
  #allocation1 [shape = 'u32[72,128]{1,0:T(1,128)}', space=vmem, size = 0x9000, scoped, tag = 'internal scratch']
  %s0 = inlined_call_operand.vmem [shape: bf16[32,256], index: 0, kind: input, shape index: {}]
  %s1 = inlined_call_operand.vmem [shape: bf16[256,128], index: 1, kind: input, shape index: {}]
  %s2 = inlined_call_operand.vmem [shape: f32[1,128], index: 2, kind: input, shape index: {}]
  %s3 = inlined_call_operand.vmem [shape: bf16[32,128], index: 3, kind: output, shape index: {0}]
  %s4 = inlined_call_operand.vmem [shape: f32[1,128], index: 4, kind: output, shape index: {1}]
  %s5 = inlined_call_operand.vmem [shape: f32[1,128], index: 5, kind: output, shape index: {2}]
  %6 = xla_tuple %s3, %s4, %s5
  %s7 = sld [smem:[#allocation0]]
  $region42: #{_lambda_.35} parent=0
    _
  %s9 = ssub.s32 1, %s7
  %s10 = scalar_select 0, %s9, %s7
  // Predicated region
  $region2: #{_lambda_.35} parent=0 // pred_check
    _
  $region3: #{_lambda_.35} parent=0 // pred_check_branch
    %12 = sbr.rel (0) target = $region5
  $region4: #{_lambda_.35} parent=0 // pred_region
    _
  $region5: #{_lambda_.35} parent=0 // pred_fallthru
    _
  // Predicated region
  $region6: #{_lambda_.35} parent=0 // pred_check
    _
  $region7: #{_lambda_.35} parent=0 // pred_check_branch
    %14 = sbr.rel (0) target = $region9
  $region8: #{_lambda_.35} parent=0 // pred_region
    _
  $region9: #{_lambda_.35} parent=0 // pred_fallthru
    _
  // Predicated region
  $region10: #{_lambda_.35} parent=0 // pred_check
    _
  $region11: #{_lambda_.35} parent=0 // pred_check_branch
    %16 = sbr.rel (0) target = $region13
  $region12: #{_lambda_.35} parent=0 // pred_region
    _
  $region13: #{_lambda_.35} parent=0 // pred_fallthru
    _
  %v17 = vld [vmem:[%s0] sm:$0xff]
  %v18 = vld [vmem:[%s0 + $0x8] sm:$0xff]
  %v19 = vld [vmem:[%s0 + $0x10] sm:$0xff]
  %v20 = vld [vmem:[%s0 + $0x18] sm:$0xff]
  %v21 = vunpack.c.l.bf16 %v17
  %v22 = vunpack.c.h.bf16 %v17
  %v23 = vunpack.c.l.bf16 %v18
  %v24 = vunpack.c.h.bf16 %v18
  %v25 = vunpack.c.l.bf16 %v19
  %v26 = vunpack.c.h.bf16 %v19
  %v27 = vunpack.c.l.bf16 %v20
  %v28 = vunpack.c.h.bf16 %v20
  %vm29 = vcmp.ge.f32.partialorder %v21, 0.0
  %vm30 = vcmp.ge.f32.partialorder %v22, 0.0
  %vm31 = vcmp.ge.f32.partialorder %v23, 0.0
  %vm32 = vcmp.ge.f32.partialorder %v24, 0.0
  %vm33 = vcmp.ge.f32.partialorder %v25, 0.0
  %vm34 = vcmp.ge.f32.partialorder %v26, 0.0
  %vm35 = vcmp.ge.f32.partialorder %v27, 0.0
  %vm36 = vcmp.ge.f32.partialorder %v28, 0.0
  %v37 = vmul.f32 %v21, 0.20019531
  %v38 = vmul.f32 %v22, 0.20019531
  %v39 = vmul.f32 %v23, 0.20019531
  %v40 = vmul.f32 %v24, 0.20019531
  %v41 = vmul.f32 %v25, 0.20019531
  %v42 = vmul.f32 %v26, 0.20019531
  %v43 = vmul.f32 %v27, 0.20019531
  %v44 = vmul.f32 %v28, 0.20019531
  %v45 = vpack.c.bf16 %v38, %v37
  %v46 = vpack.c.bf16 %v40, %v39
  %v47 = vpack.c.bf16 %v42, %v41
  %v48 = vpack.c.bf16 %v44, %v43
  %vm49 = vmpackc.low %vm30, %vm29
  %vm50 = vmpackc.low %vm32, %vm31
  %vm51 = vmpackc.low %vm34, %vm33
  %vm52 = vmpackc.low %vm36, %vm35
  %v53 = vsel %vm49, %v17, %v45
  %v54 = vsel %vm50, %v18, %v46
  %v55 = vsel %vm51, %v19, %v47
  %v56 = vsel %vm52, %v20, %v48
  %v57 = vld [vmem:[%s1] sm:$0xf]
  %v58 = vld [vmem:[%s1 + $0x4] sm:$0xf]
  %v59 = vld [vmem:[%s1 + $0x8] sm:$0xf]
  %v60 = vld [vmem:[%s1 + $0xc] sm:$0xf]
  %v61 = vld [vmem:[%s1 + $0x10] sm:$0xf]
  %v62 = vld [vmem:[%s1 + $0x14] sm:$0xf]
  %v63 = vld [vmem:[%s1 + $0x18] sm:$0xf]
  %v64 = vld [vmem:[%s1 + $0x1c] sm:$0xf]
  %v65 = vld [vmem:[%s1 + $0x20] sm:$0xf]
  %v66 = vld [vmem:[%s1 + $0x24] sm:$0xf]
  %v67 = vld [vmem:[%s1 + $0x28] sm:$0xf]
  %v68 = vld [vmem:[%s1 + $0x2c] sm:$0xf]
  %v69 = vld [vmem:[%s1 + $0x30] sm:$0xf]
  %v70 = vld [vmem:[%s1 + $0x34] sm:$0xf]
  %v71 = vld [vmem:[%s1 + $0x38] sm:$0xf]
  %v72 = vld [vmem:[%s1 + $0x3c] sm:$0xf]
  %v73 = vld [vmem:[%s1 + $0x40] sm:$0xf]
  %v74 = vld [vmem:[%s1 + $0x44] sm:$0xf]
  %v75 = vld [vmem:[%s1 + $0x48] sm:$0xf]
  %v76 = vld [vmem:[%s1 + $0x4c] sm:$0xf]
  %v77 = vld [vmem:[%s1 + $0x50] sm:$0xf]
  %v78 = vld [vmem:[%s1 + $0x54] sm:$0xf]
  %v79 = vld [vmem:[%s1 + $0x58] sm:$0xf]
  %v80 = vld [vmem:[%s1 + $0x5c] sm:$0xf]
  %v81 = vld [vmem:[%s1 + $0x60] sm:$0xf]
  %v82 = vld [vmem:[%s1 + $0x64] sm:$0xf]
  %v83 = vld [vmem:[%s1 + $0x68] sm:$0xf]
  %v84 = vld [vmem:[%s1 + $0x6c] sm:$0xf]
  %v85 = vld [vmem:[%s1 + $0x70] sm:$0xf]
  %v86 = vld [vmem:[%s1 + $0x74] sm:$0xf]
  %v87 = vld [vmem:[%s1 + $0x78] sm:$0xf]
  %v88 = vld [vmem:[%s1 + $0x7c] sm:$0xf]
  %v93 = vunpack.c.l.b16 %v53
  %v94 = vunpack.c.h.b16 %v53
  %v95 = vunpack.c.l.b16 %v54
  %v96 = vunpack.c.h.b16 %v54
  %v97 = vunpack.c.l.b16 %v55
  %v98 = vunpack.c.h.b16 %v55
  %v99 = vunpack.c.l.b16 %v56
  %v100 = vunpack.c.h.b16 %v56
  %v101 = vpack.c.b16 %v95, %v93
  %v102 = vpack.c.b16 %v96, %v94
  %v103 = vpack.c.b16 %v99, %v97
  %v104 = vpack.c.b16 %v100, %v98
  %v141 = vunpack.c.l.b16 %v57
  %v142 = vunpack.c.l.b16 %v58
  %v143 = vunpack.c.l.b16 %v59
  %v144 = vunpack.c.l.b16 %v60
  %v145 = vunpack.c.l.b16 %v61
  %v146 = vunpack.c.l.b16 %v62
  %v147 = vunpack.c.l.b16 %v63
  %v148 = vunpack.c.l.b16 %v64
  %v149 = vunpack.c.l.b16 %v65
  %v150 = vunpack.c.l.b16 %v66
  %v151 = vunpack.c.l.b16 %v67
  %v152 = vunpack.c.l.b16 %v68
  %v153 = vunpack.c.l.b16 %v69
  %v154 = vunpack.c.l.b16 %v70
  %v155 = vunpack.c.l.b16 %v71
  %v156 = vunpack.c.l.b16 %v72
  %v157 = vunpack.c.l.b16 %v73
  %v158 = vunpack.c.l.b16 %v74
  %v159 = vunpack.c.l.b16 %v75
  %v160 = vunpack.c.l.b16 %v76
  %v161 = vunpack.c.l.b16 %v77
  %v162 = vunpack.c.l.b16 %v78
  %v163 = vunpack.c.l.b16 %v79
  %v164 = vunpack.c.l.b16 %v80
  %v165 = vunpack.c.l.b16 %v81
  %v166 = vunpack.c.l.b16 %v82
  %v167 = vunpack.c.l.b16 %v83
  %v168 = vunpack.c.l.b16 %v84
  %v169 = vunpack.c.l.b16 %v85
  %v170 = vunpack.c.l.b16 %v86
  %v171 = vunpack.c.l.b16 %v87
  %v172 = vunpack.c.l.b16 %v88
  %v173 = vpack.c.b16 %v142, %v141
  %v174 = vpack.c.b16 %v144, %v143
  %v175 = vpack.c.b16 %v146, %v145
  %v176 = vpack.c.b16 %v148, %v147
  %v177 = vpack.c.b16 %v150, %v149
  %v178 = vpack.c.b16 %v152, %v151
  %v179 = vpack.c.b16 %v154, %v153
  %v180 = vpack.c.b16 %v156, %v155
  %v181 = vpack.c.b16 %v158, %v157
  %v182 = vpack.c.b16 %v160, %v159
  %v183 = vpack.c.b16 %v162, %v161
  %v184 = vpack.c.b16 %v164, %v163
  %v185 = vpack.c.b16 %v166, %v165
  %v186 = vpack.c.b16 %v168, %v167
  %v187 = vpack.c.b16 %v170, %v169
  %v188 = vpack.c.b16 %v172, %v171
  %205 = vmatpush.bf16.msra.mxu0 %v180
  %206 = vmatpush.bf16.msra.mxu0 %v179
  %207 = vmatpush.bf16.msra.mxu0 %v178
  %208 = vmatpush.bf16.msra.mxu0 %v177
  %209 = vmatpush.bf16.msra.mxu0 %v176
  %210 = vmatpush.bf16.msra.mxu0 %v175
  %211 = vmatpush.bf16.msra.mxu0 %v174
  %212 = vmatpush.bf16.msra.mxu0 %v173
  %213 = vmatmul.bf16.gmra.mxu0 %v101
  %v214 = vpop.f32.mrf.mxu0
  %v215 = vadd.f32 0.0, %v214
  %v216 = vpop.f32.mrf.mxu0
  %v217 = vadd.f32 0.0, %v216
  %218 = vmatmul.bf16.gmra.mxu0 %v103
  %v219 = vpop.f32.mrf.mxu0
  %v220 = vadd.f32 0.0, %v219
  %v221 = vpop.f32.mrf.mxu0
  %v222 = vadd.f32 0.0, %v221
  %223 = vdwg.mxu0
  %224 = vmatpush.bf16.msra.mxu0 %v188
  %225 = vmatpush.bf16.msra.mxu0 %v187
  %226 = vmatpush.bf16.msra.mxu0 %v186
  %227 = vmatpush.bf16.msra.mxu0 %v185
  %228 = vmatpush.bf16.msra.mxu0 %v184
  %229 = vmatpush.bf16.msra.mxu0 %v183
  %230 = vmatpush.bf16.msra.mxu0 %v182
  %231 = vmatpush.bf16.msra.mxu0 %v181
  %232 = vmatmul.bf16.gmra.mxu0 %v102
  %v233 = vpop.f32.mrf.mxu0
  %v234 = vadd.f32 %v215, %v233
  %v235 = vpop.f32.mrf.mxu0
  %v236 = vadd.f32 %v217, %v235
  %237 = vmatmul.bf16.gmra.mxu0 %v104
  %v238 = vpop.f32.mrf.mxu0
  %v239 = vadd.f32 %v220, %v238
  %v240 = vpop.f32.mrf.mxu0
  %v241 = vadd.f32 %v222, %v240
  %242 = vdwg.mxu0
  %p243 = scmp.eq.s32.totalorder 0, 0
  // Predicated region
  $region14: #{_lambda_.35} parent=0 // pred_check
    %p244 = pneg %p243
  $region15: #{_lambda_.35} parent=0 // pred_check_branch
    %246 = sbr.rel (%p244) target = $region17
  $region16: #{_lambda_.35} parent=0 // pred_region
    %247 = vst [vmem:[%s4] sm:$0x1] 0.0
    %248 = vst [vmem:[%s5] sm:$0x1] 0.0
  $region17: #{_lambda_.35} parent=0 // pred_fallthru
    _
  %v249 = vlaneseq
  %v250 = vshrl.u32 %v249, 7
  %v251 = vadd.s32 %v250, 8
  %v252 = vadd.s32 %v250, 16
  %v253 = vadd.s32 %v250, 24
  %s254 = smul.u32 0, 32
  %v255 = vstv %s254
  %v256 = vadd.s32 %v250, %v255
  %v257 = vadd.s32 %v251, %v255
  %v258 = vadd.s32 %v252, %v255
  %v259 = vadd.s32 %v253, %v255
  %vm260 = vcmp.lt.s32.totalorder %v256, 32
  %vm261 = vcmp.lt.s32.totalorder %v257, 32
  %vm262 = vcmp.lt.s32.totalorder %v258, 32
  %vm263 = vcmp.lt.s32.totalorder %v259, 32
  %v264 = vsel %vm260, %v234, 0.0
  %v265 = vsel %vm261, %v236, 0.0
  %v266 = vsel %vm262, %v239, 0.0
  %v267 = vsel %vm263, %v241, 0.0
  %v268 = vld [vmem:[%s4] sm:$0x1]
  %v269 = vadd.f32 %v264, %v265
  %v270 = vadd.f32 %v269, %v266
  %v271 = vadd.f32 %v270, %v267
  %v272 = vrot.slane %v271, 4
  %v273 = vadd.f32 %v271, %v272
  %v274 = vrot.slane %v273, 2
  %v275 = vadd.f32 %v273, %v274
  %v276 = vrot.slane %v275, 1
  %v277 = vadd.f32 %v275, %v276
  %v278 = vadd.f32 %v268, %v277
  %279 = vst [vmem:[%s4] sm:$0x1] %v278
  %v280 = vld [vmem:[%s5] sm:$0x1]
  %v281 = vmul.f32 %v264, %v264
  %v282 = vmul.f32 %v265, %v265
  %v283 = vmul.f32 %v266, %v266
  %v284 = vmul.f32 %v267, %v267
  %v285 = vadd.f32 %v281, %v282
  %v286 = vadd.f32 %v285, %v283
  %v287 = vadd.f32 %v286, %v284
  %v288 = vrot.slane %v287, 4
  %v289 = vadd.f32 %v287, %v288
  %v290 = vrot.slane %v289, 2
  %v291 = vadd.f32 %v289, %v290
  %v292 = vrot.slane %v291, 1
  %v293 = vadd.f32 %v291, %v292
  %v294 = vadd.f32 %v280, %v293
  %295 = vst [vmem:[%s5] sm:$0x1] %v294
  %v296 = vpack.c.bf16 %v234, %v234
  %v297 = vpack.c.bf16 %v236, %v236
  %v298 = vpack.c.bf16 %v239, %v239
  %v299 = vpack.c.bf16 %v241, %v241
  %300 = vst [vmem:[%s3] sm:$0xf] %v296
  %301 = vst [vmem:[%s3 + $0x4] sm:$0xf] %v297
  %302 = vst [vmem:[%s3 + $0x8] sm:$0xf] %v298
  %303 = vst [vmem:[%s3 + $0xc] sm:$0xf] %v299
  // Predicated region
  $region18: #{_lambda_.35} parent=0 // pred_check
    _
  $region19: #{_lambda_.35} parent=0 // pred_check_branch
    %305 = sbr.rel (0) target = $region21
  $region20: #{_lambda_.35} parent=0 // pred_region
    _
  $region21: #{_lambda_.35} parent=0 // pred_fallthru
    _
  // Predicated region
  $region22: #{_lambda_.35} parent=0 // pred_check
    _
  $region23: #{_lambda_.35} parent=0 // pred_check_branch
    %307 = sbr.rel (0) target = $region25
  $region24: #{_lambda_.35} parent=0 // pred_region
    _
  $region25: #{_lambda_.35} parent=0 // pred_fallthru
    _
  // Predicated region
  $region26: #{_lambda_.35} parent=0 // pred_check
    _
  $region27: #{_lambda_.35} parent=0 // pred_check_branch
    %309 = sbr.rel (0) target = $region29
  $region28: #{_lambda_.35} parent=0 // pred_region
    _
  $region29: #{_lambda_.35} parent=0 // pred_fallthru
    _
  // Predicated region
  $region30: #{_lambda_.35} parent=0 // pred_check
    _
  $region31: #{_lambda_.35} parent=0 // pred_check_branch
    %311 = sbr.rel (0) target = $region33
  $region32: #{_lambda_.35} parent=0 // pred_region
    _
  $region33: #{_lambda_.35} parent=0 // pred_fallthru
    _
  // Predicated region
  $region34: #{_lambda_.35} parent=0 // pred_check
    _
  $region35: #{_lambda_.35} parent=0 // pred_check_branch
    %313 = sbr.rel (0) target = $region37
  $region36: #{_lambda_.35} parent=0 // pred_region
    _
  $region37: #{_lambda_.35} parent=0 // pred_fallthru
    _
  // Predicated region
  $region38: #{_lambda_.35} parent=0 // pred_check
    _
  $region39: #{_lambda_.35} parent=0 // pred_check_branch
    %315 = sbr.rel (0) target = $region41
  $region40: #{_lambda_.35} parent=0 // pred_region
    _
  $region41: #{_lambda_.35} parent=0 // pred_fallthru
    _

// kernel: _lambda_.36
$region0: #{_lambda_.36}
  #allocation0 [shape = 'u32[]', space=smem, size = 0x4, offset = 0x4, fixed_abs, tag = 'smem constant byte address 0x4 - core index']
  #allocation1 [shape = 'u32[72,128]{1,0:T(1,128)}', space=vmem, size = 0x9000, scoped, tag = 'internal scratch']
  %s0 = inlined_call_operand.vmem [shape: bf16[32,128], index: 0, kind: input, shape index: {}]
  %s1 = inlined_call_operand.vmem [shape: f32[1,128], index: 1, kind: input, shape index: {}]
  %s2 = inlined_call_operand.vmem [shape: f32[1,128], index: 2, kind: input, shape index: {}]
  %s3 = inlined_call_operand.vmem [shape: bf16[32,128], index: 3, kind: output, shape index: {}]
  %s4 = sld [smem:[#allocation0]]
  $region22: #{_lambda_.36} parent=0
    _
  %s6 = ssub.s32 1, %s4
  %s7 = scalar_select 0, %s6, %s4
  // Predicated region
  $region2: #{_lambda_.36} parent=0 // pred_check
    _
  $region3: #{_lambda_.36} parent=0 // pred_check_branch
    %9 = sbr.rel (0) target = $region5
  $region4: #{_lambda_.36} parent=0 // pred_region
    _
  $region5: #{_lambda_.36} parent=0 // pred_fallthru
    _
  // Predicated region
  $region6: #{_lambda_.36} parent=0 // pred_check
    _
  $region7: #{_lambda_.36} parent=0 // pred_check_branch
    %11 = sbr.rel (0) target = $region9
  $region8: #{_lambda_.36} parent=0 // pred_region
    _
  $region9: #{_lambda_.36} parent=0 // pred_fallthru
    _
  // Predicated region
  $region10: #{_lambda_.36} parent=0 // pred_check
    _
  $region11: #{_lambda_.36} parent=0 // pred_check_branch
    %13 = sbr.rel (0) target = $region13
  $region12: #{_lambda_.36} parent=0 // pred_region
    _
  $region13: #{_lambda_.36} parent=0 // pred_fallthru
    _
  %v14 = vld [vmem:[%s0] sm:$0xf]
  %v15 = vld [vmem:[%s0 + $0x4] sm:$0xf]
  %v16 = vld [vmem:[%s0 + $0x8] sm:$0xf]
  %v17 = vld [vmem:[%s0 + $0xc] sm:$0xf]
  %v18 = vunpack.c.l.bf16 %v14
  %v19 = vunpack.c.l.bf16 %v15
  %v20 = vunpack.c.l.bf16 %v16
  %v21 = vunpack.c.l.bf16 %v17
  %v22 = vld [vmem:[%s1] sm:$0x1]
  %v24 = vperm.slane %v22, 0
  %v26 = vmul.f32 %v18, %v24
  %v27 = vmul.f32 %v19, %v24
  %v28 = vmul.f32 %v20, %v24
  %v29 = vmul.f32 %v21, %v24
  %v30 = vld [vmem:[%s2] sm:$0x1]
  %v32 = vperm.slane %v30, 0
  %v34 = vadd.f32 %v26, %v32
  %v35 = vadd.f32 %v27, %v32
  %v36 = vadd.f32 %v28, %v32
  %v37 = vadd.f32 %v29, %v32
  %v38 = vpack.c.bf16 %v34, %v34
  %v39 = vpack.c.bf16 %v35, %v35
  %v40 = vpack.c.bf16 %v36, %v36
  %v41 = vpack.c.bf16 %v37, %v37
  %42 = vst [vmem:[%s3] sm:$0xf] %v38
  %43 = vst [vmem:[%s3 + $0x4] sm:$0xf] %v39
  %44 = vst [vmem:[%s3 + $0x8] sm:$0xf] %v40
  %45 = vst [vmem:[%s3 + $0xc] sm:$0xf] %v41
  // Predicated region
  $region14: #{_lambda_.36} parent=0 // pred_check
    _
  $region15: #{_lambda_.36} parent=0 // pred_check_branch
    %47 = sbr.rel (0) target = $region17
  $region16: #{_lambda_.36} parent=0 // pred_region
    _
  $region17: #{_lambda_.36} parent=0 // pred_fallthru
    _
  // Predicated region
  $region18: #{_lambda_.36} parent=0 // pred_check
    _
  $region19: #{_lambda_.36} parent=0 // pred_check_branch
    %49 = sbr.rel (0) target = $region21
  $region20: #{_lambda_.36} parent=0 // pred_region
    _
  $region21: #{_lambda_.36} parent=0 // pred_fallthru
    _

// kernel: _lambda_.38
$region0: #{_lambda_.38}
  #allocation0 [shape = 'u32[]', space=smem, size = 0x4, offset = 0x4, fixed_abs, tag = 'smem constant byte address 0x4 - core index']
  #allocation1 [shape = 'u32[72,128]{1,0:T(1,128)}', space=vmem, size = 0x9000, scoped, tag = 'internal scratch']
  %s0 = inlined_call_operand.vmem [shape: bf16[8,128], index: 0, kind: input, shape index: {}]
  %s1 = inlined_call_operand.vmem [shape: f32[1,128], index: 1, kind: input, shape index: {}]
  %s2 = inlined_call_operand.vmem [shape: f32[1,128], index: 2, kind: input, shape index: {}]
  %s3 = inlined_call_operand.vmem [shape: bf16[8,128], index: 3, kind: output, shape index: {}]
  %s4 = sld [smem:[#allocation0]]
  $region22: #{_lambda_.38} parent=0
    _
  %s6 = ssub.s32 1, %s4
  %s7 = scalar_select 0, %s6, %s4
  // Predicated region
  $region2: #{_lambda_.38} parent=0 // pred_check
    _
  $region3: #{_lambda_.38} parent=0 // pred_check_branch
    %9 = sbr.rel (0) target = $region5
  $region4: #{_lambda_.38} parent=0 // pred_region
    _
  $region5: #{_lambda_.38} parent=0 // pred_fallthru
    _
  // Predicated region
  $region6: #{_lambda_.38} parent=0 // pred_check
    _
  $region7: #{_lambda_.38} parent=0 // pred_check_branch
    %11 = sbr.rel (0) target = $region9
  $region8: #{_lambda_.38} parent=0 // pred_region
    _
  $region9: #{_lambda_.38} parent=0 // pred_fallthru
    _
  // Predicated region
  $region10: #{_lambda_.38} parent=0 // pred_check
    _
  $region11: #{_lambda_.38} parent=0 // pred_check_branch
    %13 = sbr.rel (0) target = $region13
  $region12: #{_lambda_.38} parent=0 // pred_region
    _
  $region13: #{_lambda_.38} parent=0 // pred_fallthru
    _
  %v14 = vld [vmem:[%s0] sm:$0xf]
  %v15 = vunpack.c.l.bf16 %v14
  %v16 = vld [vmem:[%s1] sm:$0x1]
  %v18 = vperm.slane %v16, 0
  %v20 = vmul.f32 %v15, %v18
  %v21 = vld [vmem:[%s2] sm:$0x1]
  %v23 = vperm.slane %v21, 0
  %v25 = vadd.f32 %v20, %v23
  %v26 = vpack.c.bf16 %v25, %v25
  %27 = vst [vmem:[%s3] sm:$0xf] %v26
  // Predicated region
  $region14: #{_lambda_.38} parent=0 // pred_check
    _
  $region15: #{_lambda_.38} parent=0 // pred_check_branch
    %29 = sbr.rel (0) target = $region17
  $region16: #{_lambda_.38} parent=0 // pred_region
    _
  $region17: #{_lambda_.38} parent=0 // pred_fallthru
    _
  // Predicated region
  $region18: #{_lambda_.38} parent=0 // pred_check
    _
  $region19: #{_lambda_.38} parent=0 // pred_check_branch
    %31 = sbr.rel (0) target = $region21
  $region20: #{_lambda_.38} parent=0 // pred_region
    _
  $region21: #{_lambda_.38} parent=0 // pred_fallthru
    _

// kernel: _lambda_.37
$region0: #{_lambda_.37}
  #allocation0 [shape = 'u32[]', space=smem, size = 0x4, offset = 0x4, fixed_abs, tag = 'smem constant byte address 0x4 - core index']
  #allocation1 [shape = 'u32[72,128]{1,0:T(1,128)}', space=vmem, size = 0x9000, scoped, tag = 'internal scratch']
  %s0 = inlined_call_operand.vmem [shape: bf16[8,512], index: 0, kind: input, shape index: {}]
  %s1 = inlined_call_operand.vmem [shape: bf16[512,128], index: 1, kind: input, shape index: {}]
  %s2 = inlined_call_operand.vmem [shape: f32[1,128], index: 2, kind: input, shape index: {}]
  %s3 = inlined_call_operand.vmem [shape: bf16[8,128], index: 3, kind: output, shape index: {0}]
  %s4 = inlined_call_operand.vmem [shape: f32[1,128], index: 4, kind: output, shape index: {1}]
  %s5 = inlined_call_operand.vmem [shape: f32[1,128], index: 5, kind: output, shape index: {2}]
  %6 = xla_tuple %s3, %s4, %s5
  %s7 = sld [smem:[#allocation0]]
  $region42: #{_lambda_.37} parent=0
    _
  %s9 = ssub.s32 1, %s7
  %s10 = scalar_select 0, %s9, %s7
  // Predicated region
  $region2: #{_lambda_.37} parent=0 // pred_check
    _
  $region3: #{_lambda_.37} parent=0 // pred_check_branch
    %12 = sbr.rel (0) target = $region5
  $region4: #{_lambda_.37} parent=0 // pred_region
    _
  $region5: #{_lambda_.37} parent=0 // pred_fallthru
    _
  // Predicated region
  $region6: #{_lambda_.37} parent=0 // pred_check
    _
  $region7: #{_lambda_.37} parent=0 // pred_check_branch
    %14 = sbr.rel (0) target = $region9
  $region8: #{_lambda_.37} parent=0 // pred_region
    _
  $region9: #{_lambda_.37} parent=0 // pred_fallthru
    _
  // Predicated region
  $region10: #{_lambda_.37} parent=0 // pred_check
    _
  $region11: #{_lambda_.37} parent=0 // pred_check_branch
    %16 = sbr.rel (0) target = $region13
  $region12: #{_lambda_.37} parent=0 // pred_region
    _
  $region13: #{_lambda_.37} parent=0 // pred_fallthru
    _
  %v17 = vld [vmem:[%s0] sm:$0xff]
  %v18 = vld [vmem:[%s0 + $0x8] sm:$0xff]
  %v19 = vunpack.c.l.bf16 %v17
  %v20 = vunpack.c.h.bf16 %v17
  %v21 = vunpack.c.l.bf16 %v18
  %v22 = vunpack.c.h.bf16 %v18
  %vm23 = vcmp.ge.f32.partialorder %v19, 0.0
  %vm24 = vcmp.ge.f32.partialorder %v20, 0.0
  %vm25 = vcmp.ge.f32.partialorder %v21, 0.0
  %vm26 = vcmp.ge.f32.partialorder %v22, 0.0
  %v27 = vmul.f32 %v19, 0.20019531
  %v28 = vmul.f32 %v20, 0.20019531
  %v29 = vmul.f32 %v21, 0.20019531
  %v30 = vmul.f32 %v22, 0.20019531
  %v31 = vpack.c.bf16 %v28, %v27
  %v32 = vpack.c.bf16 %v30, %v29
  %vm33 = vmpackc.low %vm24, %vm23
  %vm34 = vmpackc.low %vm26, %vm25
  %v35 = vsel %vm33, %v17, %v31
  %v36 = vsel %vm34, %v18, %v32
  %v37 = vld [vmem:[%s1] sm:$0xf]
  %v38 = vld [vmem:[%s1 + $0x4] sm:$0xf]
  %v39 = vld [vmem:[%s1 + $0x8] sm:$0xf]
  %v40 = vld [vmem:[%s1 + $0xc] sm:$0xf]
  %v41 = vld [vmem:[%s1 + $0x10] sm:$0xf]
  %v42 = vld [vmem:[%s1 + $0x14] sm:$0xf]
  %v43 = vld [vmem:[%s1 + $0x18] sm:$0xf]
  %v44 = vld [vmem:[%s1 + $0x1c] sm:$0xf]
  %v45 = vld [vmem:[%s1 + $0x20] sm:$0xf]
  %v46 = vld [vmem:[%s1 + $0x24] sm:$0xf]
  %v47 = vld [vmem:[%s1 + $0x28] sm:$0xf]
  %v48 = vld [vmem:[%s1 + $0x2c] sm:$0xf]
  %v49 = vld [vmem:[%s1 + $0x30] sm:$0xf]
  %v50 = vld [vmem:[%s1 + $0x34] sm:$0xf]
  %v51 = vld [vmem:[%s1 + $0x38] sm:$0xf]
  %v52 = vld [vmem:[%s1 + $0x3c] sm:$0xf]
  %v53 = vld [vmem:[%s1 + $0x40] sm:$0xf]
  %v54 = vld [vmem:[%s1 + $0x44] sm:$0xf]
  %v55 = vld [vmem:[%s1 + $0x48] sm:$0xf]
  %v56 = vld [vmem:[%s1 + $0x4c] sm:$0xf]
  %v57 = vld [vmem:[%s1 + $0x50] sm:$0xf]
  %v58 = vld [vmem:[%s1 + $0x54] sm:$0xf]
  %v59 = vld [vmem:[%s1 + $0x58] sm:$0xf]
  %v60 = vld [vmem:[%s1 + $0x5c] sm:$0xf]
  %v61 = vld [vmem:[%s1 + $0x60] sm:$0xf]
  %v62 = vld [vmem:[%s1 + $0x64] sm:$0xf]
  %v63 = vld [vmem:[%s1 + $0x68] sm:$0xf]
  %v64 = vld [vmem:[%s1 + $0x6c] sm:$0xf]
  %v65 = vld [vmem:[%s1 + $0x70] sm:$0xf]
  %v66 = vld [vmem:[%s1 + $0x74] sm:$0xf]
  %v67 = vld [vmem:[%s1 + $0x78] sm:$0xf]
  %v68 = vld [vmem:[%s1 + $0x7c] sm:$0xf]
  %v69 = vld [vmem:[%s1 + $0x80] sm:$0xf]
  %v70 = vld [vmem:[%s1 + $0x84] sm:$0xf]
  %v71 = vld [vmem:[%s1 + $0x88] sm:$0xf]
  %v72 = vld [vmem:[%s1 + $0x8c] sm:$0xf]
  %v73 = vld [vmem:[%s1 + $0x90] sm:$0xf]
  %v74 = vld [vmem:[%s1 + $0x94] sm:$0xf]
  %v75 = vld [vmem:[%s1 + $0x98] sm:$0xf]
  %v76 = vld [vmem:[%s1 + $0x9c] sm:$0xf]
  %v77 = vld [vmem:[%s1 + $0xa0] sm:$0xf]
  %v78 = vld [vmem:[%s1 + $0xa4] sm:$0xf]
  %v79 = vld [vmem:[%s1 + $0xa8] sm:$0xf]
  %v80 = vld [vmem:[%s1 + $0xac] sm:$0xf]
  %v81 = vld [vmem:[%s1 + $0xb0] sm:$0xf]
  %v82 = vld [vmem:[%s1 + $0xb4] sm:$0xf]
  %v83 = vld [vmem:[%s1 + $0xb8] sm:$0xf]
  %v84 = vld [vmem:[%s1 + $0xbc] sm:$0xf]
  %v85 = vld [vmem:[%s1 + $0xc0] sm:$0xf]
  %v86 = vld [vmem:[%s1 + $0xc4] sm:$0xf]
  %v87 = vld [vmem:[%s1 + $0xc8] sm:$0xf]
  %v88 = vld [vmem:[%s1 + $0xcc] sm:$0xf]
  %v89 = vld [vmem:[%s1 + $0xd0] sm:$0xf]
  %v90 = vld [vmem:[%s1 + $0xd4] sm:$0xf]
  %v91 = vld [vmem:[%s1 + $0xd8] sm:$0xf]
  %v92 = vld [vmem:[%s1 + $0xdc] sm:$0xf]
  %v93 = vld [vmem:[%s1 + $0xe0] sm:$0xf]
  %v94 = vld [vmem:[%s1 + $0xe4] sm:$0xf]
  %v95 = vld [vmem:[%s1 + $0xe8] sm:$0xf]
  %v96 = vld [vmem:[%s1 + $0xec] sm:$0xf]
  %v97 = vld [vmem:[%s1 + $0xf0] sm:$0xf]
  %v98 = vld [vmem:[%s1 + $0xf4] sm:$0xf]
  %v99 = vld [vmem:[%s1 + $0xf8] sm:$0xf]
  %v100 = vld [vmem:[%s1 + $0xfc] sm:$0xf]
  %v103 = vunpack.c.l.b16 %v35
  %v104 = vunpack.c.h.b16 %v35
  %v105 = vunpack.c.l.b16 %v36
  %v106 = vunpack.c.h.b16 %v36
  %v107 = vpack.c.b16 %v103, %v103
  %v108 = vpack.c.b16 %v104, %v104
  %v109 = vpack.c.b16 %v105, %v105
  %v110 = vpack.c.b16 %v106, %v106
  %v179 = vunpack.c.l.b16 %v37
  %v180 = vunpack.c.l.b16 %v38
  %v181 = vunpack.c.l.b16 %v39
  %v182 = vunpack.c.l.b16 %v40
  %v183 = vunpack.c.l.b16 %v41
  %v184 = vunpack.c.l.b16 %v42
  %v185 = vunpack.c.l.b16 %v43
  %v186 = vunpack.c.l.b16 %v44
  %v187 = vunpack.c.l.b16 %v45
  %v188 = vunpack.c.l.b16 %v46
  %v189 = vunpack.c.l.b16 %v47
  %v190 = vunpack.c.l.b16 %v48
  %v191 = vunpack.c.l.b16 %v49
  %v192 = vunpack.c.l.b16 %v50
  %v193 = vunpack.c.l.b16 %v51
  %v194 = vunpack.c.l.b16 %v52
  %v195 = vunpack.c.l.b16 %v53
  %v196 = vunpack.c.l.b16 %v54
  %v197 = vunpack.c.l.b16 %v55
  %v198 = vunpack.c.l.b16 %v56
  %v199 = vunpack.c.l.b16 %v57
  %v200 = vunpack.c.l.b16 %v58
  %v201 = vunpack.c.l.b16 %v59
  %v202 = vunpack.c.l.b16 %v60
  %v203 = vunpack.c.l.b16 %v61
  %v204 = vunpack.c.l.b16 %v62
  %v205 = vunpack.c.l.b16 %v63
  %v206 = vunpack.c.l.b16 %v64
  %v207 = vunpack.c.l.b16 %v65
  %v208 = vunpack.c.l.b16 %v66
  %v209 = vunpack.c.l.b16 %v67
  %v210 = vunpack.c.l.b16 %v68
  %v211 = vunpack.c.l.b16 %v69
  %v212 = vunpack.c.l.b16 %v70
  %v213 = vunpack.c.l.b16 %v71
  %v214 = vunpack.c.l.b16 %v72
  %v215 = vunpack.c.l.b16 %v73
  %v216 = vunpack.c.l.b16 %v74
  %v217 = vunpack.c.l.b16 %v75
  %v218 = vunpack.c.l.b16 %v76
  %v219 = vunpack.c.l.b16 %v77
  %v220 = vunpack.c.l.b16 %v78
  %v221 = vunpack.c.l.b16 %v79
  %v222 = vunpack.c.l.b16 %v80
  %v223 = vunpack.c.l.b16 %v81
  %v224 = vunpack.c.l.b16 %v82
  %v225 = vunpack.c.l.b16 %v83
  %v226 = vunpack.c.l.b16 %v84
  %v227 = vunpack.c.l.b16 %v85
  %v228 = vunpack.c.l.b16 %v86
  %v229 = vunpack.c.l.b16 %v87
  %v230 = vunpack.c.l.b16 %v88
  %v231 = vunpack.c.l.b16 %v89
  %v232 = vunpack.c.l.b16 %v90
  %v233 = vunpack.c.l.b16 %v91
  %v234 = vunpack.c.l.b16 %v92
  %v235 = vunpack.c.l.b16 %v93
  %v236 = vunpack.c.l.b16 %v94
  %v237 = vunpack.c.l.b16 %v95
  %v238 = vunpack.c.l.b16 %v96
  %v239 = vunpack.c.l.b16 %v97
  %v240 = vunpack.c.l.b16 %v98
  %v241 = vunpack.c.l.b16 %v99
  %v242 = vunpack.c.l.b16 %v100
  %v243 = vpack.c.b16 %v180, %v179
  %v244 = vpack.c.b16 %v182, %v181
  %v245 = vpack.c.b16 %v184, %v183
  %v246 = vpack.c.b16 %v186, %v185
  %v247 = vpack.c.b16 %v188, %v187
  %v248 = vpack.c.b16 %v190, %v189
  %v249 = vpack.c.b16 %v192, %v191
  %v250 = vpack.c.b16 %v194, %v193
  %v251 = vpack.c.b16 %v196, %v195
  %v252 = vpack.c.b16 %v198, %v197
  %v253 = vpack.c.b16 %v200, %v199
  %v254 = vpack.c.b16 %v202, %v201
  %v255 = vpack.c.b16 %v204, %v203
  %v256 = vpack.c.b16 %v206, %v205
  %v257 = vpack.c.b16 %v208, %v207
  %v258 = vpack.c.b16 %v210, %v209
  %v259 = vpack.c.b16 %v212, %v211
  %v260 = vpack.c.b16 %v214, %v213
  %v261 = vpack.c.b16 %v216, %v215
  %v262 = vpack.c.b16 %v218, %v217
  %v263 = vpack.c.b16 %v220, %v219
  %v264 = vpack.c.b16 %v222, %v221
  %v265 = vpack.c.b16 %v224, %v223
  %v266 = vpack.c.b16 %v226, %v225
  %v267 = vpack.c.b16 %v228, %v227
  %v268 = vpack.c.b16 %v230, %v229
  %v269 = vpack.c.b16 %v232, %v231
  %v270 = vpack.c.b16 %v234, %v233
  %v271 = vpack.c.b16 %v236, %v235
  %v272 = vpack.c.b16 %v238, %v237
  %v273 = vpack.c.b16 %v240, %v239
  %v274 = vpack.c.b16 %v242, %v241
  %307 = vmatpush.bf16.msra.mxu0 %v250
  %308 = vmatpush.bf16.msra.mxu0 %v249
  %309 = vmatpush.bf16.msra.mxu0 %v248
  %310 = vmatpush.bf16.msra.mxu0 %v247
  %311 = vmatpush.bf16.msra.mxu0 %v246
  %312 = vmatpush.bf16.msra.mxu0 %v245
  %313 = vmatpush.bf16.msra.mxu0 %v244
  %314 = vmatpush.bf16.msra.mxu0 %v243
  %315 = vmatmul.bf16.gmra.mxu0 %v107
  %v316 = vpop.f32.mrf.mxu0
  %v317 = vadd.f32 0.0, %v316
  %v318 = vpop.f32.mrf.mxu0
  %319 = vdwg.mxu0
  %320 = vmatpush.bf16.msra.mxu0 %v258
  %321 = vmatpush.bf16.msra.mxu0 %v257
  %322 = vmatpush.bf16.msra.mxu0 %v256
  %323 = vmatpush.bf16.msra.mxu0 %v255
  %324 = vmatpush.bf16.msra.mxu0 %v254
  %325 = vmatpush.bf16.msra.mxu0 %v253
  %326 = vmatpush.bf16.msra.mxu0 %v252
  %327 = vmatpush.bf16.msra.mxu0 %v251
  %328 = vmatmul.bf16.gmra.mxu0 %v108
  %v329 = vpop.f32.mrf.mxu0
  %v330 = vadd.f32 %v317, %v329
  %v331 = vpop.f32.mrf.mxu0
  %332 = vdwg.mxu0
  %333 = vmatpush.bf16.msra.mxu0 %v266
  %334 = vmatpush.bf16.msra.mxu0 %v265
  %335 = vmatpush.bf16.msra.mxu0 %v264
  %336 = vmatpush.bf16.msra.mxu0 %v263
  %337 = vmatpush.bf16.msra.mxu0 %v262
  %338 = vmatpush.bf16.msra.mxu0 %v261
  %339 = vmatpush.bf16.msra.mxu0 %v260
  %340 = vmatpush.bf16.msra.mxu0 %v259
  %341 = vmatmul.bf16.gmra.mxu0 %v109
  %v342 = vpop.f32.mrf.mxu0
  %v343 = vadd.f32 %v330, %v342
  %v344 = vpop.f32.mrf.mxu0
  %345 = vdwg.mxu0
  %346 = vmatpush.bf16.msra.mxu0 %v274
  %347 = vmatpush.bf16.msra.mxu0 %v273
  %348 = vmatpush.bf16.msra.mxu0 %v272
  %349 = vmatpush.bf16.msra.mxu0 %v271
  %350 = vmatpush.bf16.msra.mxu0 %v270
  %351 = vmatpush.bf16.msra.mxu0 %v269
  %352 = vmatpush.bf16.msra.mxu0 %v268
  %353 = vmatpush.bf16.msra.mxu0 %v267
  %354 = vmatmul.bf16.gmra.mxu0 %v110
  %v355 = vpop.f32.mrf.mxu0
  %v356 = vadd.f32 %v343, %v355
  %v357 = vpop.f32.mrf.mxu0
  %358 = vdwg.mxu0
  %p359 = scmp.eq.s32.totalorder 0, 0
  // Predicated region
  $region14: #{_lambda_.37} parent=0 // pred_check
    %p360 = pneg %p359
  $region15: #{_lambda_.37} parent=0 // pred_check_branch
    %362 = sbr.rel (%p360) target = $region17
  $region16: #{_lambda_.37} parent=0 // pred_region
    %363 = vst [vmem:[%s4] sm:$0x1] 0.0
    %364 = vst [vmem:[%s5] sm:$0x1] 0.0
  $region17: #{_lambda_.37} parent=0 // pred_fallthru
    _
  %v365 = vlaneseq
  %v366 = vshrl.u32 %v365, 7
  %s367 = smul.u32 0, 8
  %v368 = vstv %s367
  %v369 = vadd.s32 %v366, %v368
  %vm370 = vcmp.lt.s32.totalorder %v369, 8
  %v371 = vsel %vm370, %v356, 0.0
  %v372 = vld [vmem:[%s4] sm:$0x1]
  %v373 = vrot.slane %v371, 4
  %v374 = vadd.f32 %v371, %v373
  %v375 = vrot.slane %v374, 2
  %v376 = vadd.f32 %v374, %v375
  %v377 = vrot.slane %v376, 1
  %v378 = vadd.f32 %v376, %v377
  %v379 = vadd.f32 %v372, %v378
  %380 = vst [vmem:[%s4] sm:$0x1] %v379
  %v381 = vld [vmem:[%s5] sm:$0x1]
  %v382 = vmul.f32 %v371, %v371
  %v383 = vrot.slane %v382, 4
  %v384 = vadd.f32 %v382, %v383
  %v385 = vrot.slane %v384, 2
  %v386 = vadd.f32 %v384, %v385
  %v387 = vrot.slane %v386, 1
  %v388 = vadd.f32 %v386, %v387
  %v389 = vadd.f32 %v381, %v388
  %390 = vst [vmem:[%s5] sm:$0x1] %v389
  %v391 = vpack.c.bf16 %v356, %v356
  %392 = vst [vmem:[%s3] sm:$0xf] %v391
  // Predicated region
  $region18: #{_lambda_.37} parent=0 // pred_check
    _
  $region19: #{_lambda_.37} parent=0 // pred_check_branch
    %394 = sbr.rel (0) target = $region21
  $region20: #{_lambda_.37} parent=0 // pred_region
    _
  $region21: #{_lambda_.37} parent=0 // pred_fallthru
    _
  // Predicated region
  $region22: #{_lambda_.37} parent=0 // pred_check
    _
  $region23: #{_lambda_.37} parent=0 // pred_check_branch
    %396 = sbr.rel (0) target = $region25
  $region24: #{_lambda_.37} parent=0 // pred_region
    _
  $region25: #{_lambda_.37} parent=0 // pred_fallthru
    _
  // Predicated region
  $region26: #{_lambda_.37} parent=0 // pred_check
    _
  $region27: #{_lambda_.37} parent=0 // pred_check_branch
    %398 = sbr.rel (0) target = $region29
  $region28: #{_lambda_.37} parent=0 // pred_region
    _
  $region29: #{_lambda_.37} parent=0 // pred_fallthru
    _
  // Predicated region
  $region30: #{_lambda_.37} parent=0 // pred_check
    _
  $region31: #{_lambda_.37} parent=0 // pred_check_branch
    %400 = sbr.rel (0) target = $region33
  $region32: #{_lambda_.37} parent=0 // pred_region
    _
  $region33: #{_lambda_.37} parent=0 // pred_fallthru
    _
  // Predicated region
  $region34: #{_lambda_.37} parent=0 // pred_check
    _
  $region35: #{_lambda_.37} parent=0 // pred_check_branch
    %402 = sbr.rel (0) target = $region37
  $region36: #{_lambda_.37} parent=0 // pred_region
    _
  $region37: #{_lambda_.37} parent=0 // pred_fallthru
    _
  // Predicated region
  $region38: #{_lambda_.37} parent=0 // pred_check
    _
  $region39: #{_lambda_.37} parent=0 // pred_check_branch
    %404 = sbr.rel (0) target = $region41
  $region40: #{_lambda_.37} parent=0 // pred_region
    _
  $region41: #{_lambda_.37} parent=0 // pred_fallthru
    _

// kernel: _lambda_.40
$region0: #{_lambda_.40}
  #allocation0 [shape = 'u32[]', space=smem, size = 0x4, offset = 0x4, fixed_abs, tag = 'smem constant byte address 0x4 - core index']
  #allocation1 [shape = 'u32[72,128]{1,0:T(1,128)}', space=vmem, size = 0x9000, scoped, tag = 'internal scratch']
  %s0 = inlined_call_operand.vmem [shape: bf16[2,256], index: 0, kind: input, shape index: {}]
  %s1 = inlined_call_operand.vmem [shape: bf16[256,128], index: 1, kind: input, shape index: {}]
  %s2 = inlined_call_operand.vmem [shape: f32[1,128], index: 2, kind: input, shape index: {}]
  %s3 = inlined_call_operand.vmem [shape: bf16[2,128], index: 3, kind: output, shape index: {0}]
  %s4 = inlined_call_operand.vmem [shape: f32[1,128], index: 4, kind: output, shape index: {1}]
  %s5 = inlined_call_operand.vmem [shape: f32[1,128], index: 5, kind: output, shape index: {2}]
  %6 = xla_tuple %s3, %s4, %s5
  %s7 = sld [smem:[#allocation0]]
  $region42: #{_lambda_.40} parent=0
    _
  %s9 = ssub.s32 1, %s7
  %s10 = scalar_select 0, %s9, %s7
  // Predicated region
  $region2: #{_lambda_.40} parent=0 // pred_check
    _
  $region3: #{_lambda_.40} parent=0 // pred_check_branch
    %12 = sbr.rel (0) target = $region5
  $region4: #{_lambda_.40} parent=0 // pred_region
    _
  $region5: #{_lambda_.40} parent=0 // pred_fallthru
    _
  // Predicated region
  $region6: #{_lambda_.40} parent=0 // pred_check
    _
  $region7: #{_lambda_.40} parent=0 // pred_check_branch
    %14 = sbr.rel (0) target = $region9
  $region8: #{_lambda_.40} parent=0 // pred_region
    _
  $region9: #{_lambda_.40} parent=0 // pred_fallthru
    _
  // Predicated region
  $region10: #{_lambda_.40} parent=0 // pred_check
    _
  $region11: #{_lambda_.40} parent=0 // pred_check_branch
    %16 = sbr.rel (0) target = $region13
  $region12: #{_lambda_.40} parent=0 // pred_region
    _
  $region13: #{_lambda_.40} parent=0 // pred_fallthru
    _
  %v17 = vld [vmem:[%s0] sm:$0x3]
  %v18 = vunpack.c.l.bf16 %v17
  %v19 = vmax.f32 %v18, 0.0
  %21 = vst [vmem:[#allocation1] ss:$4 sm:$0xff] %v19
  %v22 = vld.sshfl [vmem:[#allocation1] sm:$0xff pattern:$0x73625140]
  %v23 = vld.sshfl [vmem:[#allocation1 + $0x8] sm:$0xff pattern:$0x73625140]
  %v26 = vpack.c.bf16 %v22, %v22
  %v27 = vpack.c.bf16 %v23, %v23
  %v28 = vld [vmem:[%s1] sm:$0xf]
  %v29 = vld [vmem:[%s1 + $0x4] sm:$0xf]
  %v30 = vld [vmem:[%s1 + $0x8] sm:$0xf]
  %v31 = vld [vmem:[%s1 + $0xc] sm:$0xf]
  %v32 = vld [vmem:[%s1 + $0x10] sm:$0xf]
  %v33 = vld [vmem:[%s1 + $0x14] sm:$0xf]
  %v34 = vld [vmem:[%s1 + $0x18] sm:$0xf]
  %v35 = vld [vmem:[%s1 + $0x1c] sm:$0xf]
  %v36 = vld [vmem:[%s1 + $0x20] sm:$0xf]
  %v37 = vld [vmem:[%s1 + $0x24] sm:$0xf]
  %v38 = vld [vmem:[%s1 + $0x28] sm:$0xf]
  %v39 = vld [vmem:[%s1 + $0x2c] sm:$0xf]
  %v40 = vld [vmem:[%s1 + $0x30] sm:$0xf]
  %v41 = vld [vmem:[%s1 + $0x34] sm:$0xf]
  %v42 = vld [vmem:[%s1 + $0x38] sm:$0xf]
  %v43 = vld [vmem:[%s1 + $0x3c] sm:$0xf]
  %v44 = vld [vmem:[%s1 + $0x40] sm:$0xf]
  %v45 = vld [vmem:[%s1 + $0x44] sm:$0xf]
  %v46 = vld [vmem:[%s1 + $0x48] sm:$0xf]
  %v47 = vld [vmem:[%s1 + $0x4c] sm:$0xf]
  %v48 = vld [vmem:[%s1 + $0x50] sm:$0xf]
  %v49 = vld [vmem:[%s1 + $0x54] sm:$0xf]
  %v50 = vld [vmem:[%s1 + $0x58] sm:$0xf]
  %v51 = vld [vmem:[%s1 + $0x5c] sm:$0xf]
  %v52 = vld [vmem:[%s1 + $0x60] sm:$0xf]
  %v53 = vld [vmem:[%s1 + $0x64] sm:$0xf]
  %v54 = vld [vmem:[%s1 + $0x68] sm:$0xf]
  %v55 = vld [vmem:[%s1 + $0x6c] sm:$0xf]
  %v56 = vld [vmem:[%s1 + $0x70] sm:$0xf]
  %v57 = vld [vmem:[%s1 + $0x74] sm:$0xf]
  %v58 = vld [vmem:[%s1 + $0x78] sm:$0xf]
  %v59 = vld [vmem:[%s1 + $0x7c] sm:$0xf]
  %v92 = vunpack.c.l.b16 %v28
  %v93 = vunpack.c.l.b16 %v29
  %v94 = vunpack.c.l.b16 %v30
  %v95 = vunpack.c.l.b16 %v31
  %v96 = vunpack.c.l.b16 %v32
  %v97 = vunpack.c.l.b16 %v33
  %v98 = vunpack.c.l.b16 %v34
  %v99 = vunpack.c.l.b16 %v35
  %v100 = vunpack.c.l.b16 %v36
  %v101 = vunpack.c.l.b16 %v37
  %v102 = vunpack.c.l.b16 %v38
  %v103 = vunpack.c.l.b16 %v39
  %v104 = vunpack.c.l.b16 %v40
  %v105 = vunpack.c.l.b16 %v41
  %v106 = vunpack.c.l.b16 %v42
  %v107 = vunpack.c.l.b16 %v43
  %v108 = vunpack.c.l.b16 %v44
  %v109 = vunpack.c.l.b16 %v45
  %v110 = vunpack.c.l.b16 %v46
  %v111 = vunpack.c.l.b16 %v47
  %v112 = vunpack.c.l.b16 %v48
  %v113 = vunpack.c.l.b16 %v49
  %v114 = vunpack.c.l.b16 %v50
  %v115 = vunpack.c.l.b16 %v51
  %v116 = vunpack.c.l.b16 %v52
  %v117 = vunpack.c.l.b16 %v53
  %v118 = vunpack.c.l.b16 %v54
  %v119 = vunpack.c.l.b16 %v55
  %v120 = vunpack.c.l.b16 %v56
  %v121 = vunpack.c.l.b16 %v57
  %v122 = vunpack.c.l.b16 %v58
  %v123 = vunpack.c.l.b16 %v59
  %v124 = vpack.c.b16 %v93, %v92
  %v125 = vpack.c.b16 %v95, %v94
  %v126 = vpack.c.b16 %v97, %v96
  %v127 = vpack.c.b16 %v99, %v98
  %v128 = vpack.c.b16 %v101, %v100
  %v129 = vpack.c.b16 %v103, %v102
  %v130 = vpack.c.b16 %v105, %v104
  %v131 = vpack.c.b16 %v107, %v106
  %v132 = vpack.c.b16 %v109, %v108
  %v133 = vpack.c.b16 %v111, %v110
  %v134 = vpack.c.b16 %v113, %v112
  %v135 = vpack.c.b16 %v115, %v114
  %v136 = vpack.c.b16 %v117, %v116
  %v137 = vpack.c.b16 %v119, %v118
  %v138 = vpack.c.b16 %v121, %v120
  %v139 = vpack.c.b16 %v123, %v122
  %156 = vmatpush.bf16.msra.mxu0 %v131
  %157 = vmatpush.bf16.msra.mxu0 %v130
  %158 = vmatpush.bf16.msra.mxu0 %v129
  %159 = vmatpush.bf16.msra.mxu0 %v128
  %160 = vmatpush.bf16.msra.mxu0 %v127
  %161 = vmatpush.bf16.msra.mxu0 %v126
  %162 = vmatpush.bf16.msra.mxu0 %v125
  %163 = vmatpush.bf16.msra.mxu0 %v124
  %164 = vmatmul.bf16.gmra.mxu0 %v26
  %v165 = vpop.f32.mrf.mxu0
  %v166 = vadd.f32 0.0, %v165
  %v167 = vpop.f32.mrf.mxu0
  %168 = vdwg.mxu0
  %169 = vmatpush.bf16.msra.mxu0 %v139
  %170 = vmatpush.bf16.msra.mxu0 %v138
  %171 = vmatpush.bf16.msra.mxu0 %v137
  %172 = vmatpush.bf16.msra.mxu0 %v136
  %173 = vmatpush.bf16.msra.mxu0 %v135
  %174 = vmatpush.bf16.msra.mxu0 %v134
  %175 = vmatpush.bf16.msra.mxu0 %v133
  %176 = vmatpush.bf16.msra.mxu0 %v132
  %177 = vmatmul.bf16.gmra.mxu0 %v27
  %v178 = vpop.f32.mrf.mxu0
  %v179 = vadd.f32 %v166, %v178
  %v180 = vpop.f32.mrf.mxu0
  %181 = vdwg.mxu0
  %p182 = scmp.eq.s32.totalorder 0, 0
  // Predicated region
  $region14: #{_lambda_.40} parent=0 // pred_check
    %p183 = pneg %p182
  $region15: #{_lambda_.40} parent=0 // pred_check_branch
    %185 = sbr.rel (%p183) target = $region17
  $region16: #{_lambda_.40} parent=0 // pred_region
    %186 = vst [vmem:[%s4] sm:$0x1] 0.0
    %187 = vst [vmem:[%s5] sm:$0x1] 0.0
  $region17: #{_lambda_.40} parent=0 // pred_fallthru
    _
  %v188 = vlaneseq
  %v189 = vshrl.u32 %v188, 7
  %s190 = smul.u32 0, 2
  %v191 = vstv %s190
  %v192 = vadd.s32 %v189, %v191
  %vm193 = vcmp.lt.s32.totalorder %v192, 2
  %v194 = vsel %vm193, %v179, 0.0
  %v195 = vld [vmem:[%s4] sm:$0x1]
  %vm196 = vcmask 1041408
  %v197 = vsel %vm196, %v194, 0.0
  %v198 = vrot.slane %v197, 4
  %v199 = vadd.f32 %v197, %v198
  %v200 = vrot.slane %v199, 2
  %v201 = vadd.f32 %v199, %v200
  %v202 = vrot.slane %v201, 1
  %v203 = vadd.f32 %v201, %v202
  %v204 = vadd.f32 %v195, %v203
  %205 = vst [vmem:[%s4] sm:$0x1] %v204
  %v206 = vld [vmem:[%s5] sm:$0x1]
  %v207 = vmul.f32 %v194, %v194
  %v208 = vsel %vm196, %v207, 0.0
  %v209 = vrot.slane %v208, 4
  %v210 = vadd.f32 %v208, %v209
  %v211 = vrot.slane %v210, 2
  %v212 = vadd.f32 %v210, %v211
  %v213 = vrot.slane %v212, 1
  %v214 = vadd.f32 %v212, %v213
  %v215 = vadd.f32 %v206, %v214
  %216 = vst [vmem:[%s5] sm:$0x1] %v215
  %v217 = vpack.c.bf16 %v179, %v179
  %218 = vst [vmem:[%s3] sm:$0x1] %v217
  // Predicated region
  $region18: #{_lambda_.40} parent=0 // pred_check
    _
  $region19: #{_lambda_.40} parent=0 // pred_check_branch
    %220 = sbr.rel (0) target = $region21
  $region20: #{_lambda_.40} parent=0 // pred_region
    _
  $region21: #{_lambda_.40} parent=0 // pred_fallthru
    _
  // Predicated region
  $region22: #{_lambda_.40} parent=0 // pred_check
    _
  $region23: #{_lambda_.40} parent=0 // pred_check_branch
    %222 = sbr.rel (0) target = $region25
  $region24: #{_lambda_.40} parent=0 // pred_region
    _
  $region25: #{_lambda_.40} parent=0 // pred_fallthru
    _
  // Predicated region
  $region26: #{_lambda_.40} parent=0 // pred_check
    _
  $region27: #{_lambda_.40} parent=0 // pred_check_branch
    %224 = sbr.rel (0) target = $region29
  $region28: #{_lambda_.40} parent=0 // pred_region
    _
  $region29: #{_lambda_.40} parent=0 // pred_fallthru
    _
  // Predicated region
  $region30: #{_lambda_.40} parent=0 // pred_check
    _
  $region31: #{_lambda_.40} parent=0 // pred_check_branch
    %226 = sbr.rel (0) target = $region33
  $region32: #{_lambda_.40} parent=0 // pred_region
    _
  $region33: #{_lambda_.40} parent=0 // pred_fallthru
    _
  // Predicated region
  $region34: #{_lambda_.40} parent=0 // pred_check
    _
  $region35: #{_lambda_.40} parent=0 // pred_check_branch
    %228 = sbr.rel (0) target = $region37
  $region36: #{_lambda_.40} parent=0 // pred_region
    _
  $region37: #{_lambda_.40} parent=0 // pred_fallthru
    _
  // Predicated region
  $region38: #{_lambda_.40} parent=0 // pred_check
    _
  $region39: #{_lambda_.40} parent=0 // pred_check_branch
    %230 = sbr.rel (0) target = $region41
  $region40: #{_lambda_.40} parent=0 // pred_region
    _
  $region41: #{_lambda_.40} parent=0 // pred_fallthru
    _

// kernel: _lambda_.39
$region0: #{_lambda_.39}
  #allocation0 [shape = 'u32[]', space=smem, size = 0x4, offset = 0x4, fixed_abs, tag = 'smem constant byte address 0x4 - core index']
  #allocation1 [shape = 'u32[72,128]{1,0:T(1,128)}', space=vmem, size = 0x9000, scoped, tag = 'internal scratch']
  %s0 = inlined_call_operand.vmem [shape: bf16[2,1024], index: 0, kind: input, shape index: {}]
  %s1 = inlined_call_operand.vmem [shape: bf16[1024,128], index: 1, kind: input, shape index: {}]
  %s2 = inlined_call_operand.vmem [shape: f32[1,128], index: 2, kind: input, shape index: {}]
  %s3 = inlined_call_operand.vmem [shape: bf16[2,128], index: 3, kind: output, shape index: {}]
  %s4 = sld [smem:[#allocation0]]
  $region22: #{_lambda_.39} parent=0
    _
  %s6 = ssub.s32 1, %s4
  %s7 = scalar_select 0, %s6, %s4
  // Predicated region
  $region2: #{_lambda_.39} parent=0 // pred_check
    _
  $region3: #{_lambda_.39} parent=0 // pred_check_branch
    %9 = sbr.rel (0) target = $region5
  $region4: #{_lambda_.39} parent=0 // pred_region
    _
  $region5: #{_lambda_.39} parent=0 // pred_fallthru
    _
  // Predicated region
  $region6: #{_lambda_.39} parent=0 // pred_check
    _
  $region7: #{_lambda_.39} parent=0 // pred_check_branch
    %11 = sbr.rel (0) target = $region9
  $region8: #{_lambda_.39} parent=0 // pred_region
    _
  $region9: #{_lambda_.39} parent=0 // pred_fallthru
    _
  // Predicated region
  $region10: #{_lambda_.39} parent=0 // pred_check
    _
  $region11: #{_lambda_.39} parent=0 // pred_check_branch
    %13 = sbr.rel (0) target = $region13
  $region12: #{_lambda_.39} parent=0 // pred_region
    _
  $region13: #{_lambda_.39} parent=0 // pred_fallthru
    _
  %v15 = vld [vmem:[%s0] sm:$0xff]
  %v16 = vunpack.c.l.bf16 %v15
  %v17 = vunpack.c.h.bf16 %v15
  %vm18 = vcmp.ge.f32.partialorder %v16, 0.0
  %vm19 = vcmp.ge.f32.partialorder %v17, 0.0
  %v20 = vmul.f32 %v16, 0.20019531
  %v21 = vmul.f32 %v17, 0.20019531
  %24 = vst [vmem:[#allocation1] ss:$4 sm:$0xff] %v20
  %s25 = scalar_lea.vmem [#allocation1], 32
  %26 = vst [vmem:[%s25] ss:$4 sm:$0xff] %v21
  %v27 = vld.sshfl [vmem:[#allocation1] sm:$0xff pattern:$0x73625140]
  %v28 = vld.sshfl [vmem:[#allocation1 + $0x8] sm:$0xff pattern:$0x73625140]
  %v29 = vld.sshfl [vmem:[#allocation1 + $0x10] sm:$0xff pattern:$0x73625140]
  %v30 = vld.sshfl [vmem:[#allocation1 + $0x18] sm:$0xff pattern:$0x73625140]
  %v31 = vld.sshfl [vmem:[#allocation1 + $0x20] sm:$0xff pattern:$0x73625140]
  %v32 = vld.sshfl [vmem:[#allocation1 + $0x28] sm:$0xff pattern:$0x73625140]
  %v33 = vld.sshfl [vmem:[#allocation1 + $0x30] sm:$0xff pattern:$0x73625140]
  %v34 = vld.sshfl [vmem:[#allocation1 + $0x38] sm:$0xff pattern:$0x73625140]
  %v43 = vpack.c.bf16 %v28, %v27
  %v44 = vpack.c.bf16 %v30, %v29
  %v45 = vpack.c.bf16 %v32, %v31
  %v46 = vpack.c.bf16 %v34, %v33
  %v47 = vsel %vm18, 1, 0
  %v48 = vsel %vm19, 1, 0
  %v49 = vpack.c.b16 %v48, %v47
  %v50 = vunpack.c.l.b16 %v49
  %v51 = vunpack.c.h.b16 %v49
  %v52 = vunpack.c.l.b16 0
  %v53 = vunpack.c.h.b16 0
  %vm54 = vcmp.ne.s32.totalorder %v50, %v52
  %vm55 = vcmp.ne.s32.totalorder %v51, %v53
  %vm56 = vmpackc.low %vm55, %vm54
  %v61 = vrot.slane %v43, 3
  %v62 = vrot.slane %v44, 6
  %v63 = vrot.slane %v44, 1
  %v64 = vrot.slane %v45, 4
  %v65 = vrot.slane %v45, 7
  %v66 = vrot.slane %v46, 2
  %v67 = vrot.slane %v46, 5
  %vm68 = vcmask 1040384
  %v71 = vsel %vm68, %v43, %v61
  %vm72 = vcmask 1042434
  %v75 = vsel %vm72, %v62, %v63
  %vm76 = vcmask 1041408
  %v77 = vsel %vm76, %v71, %v75
  %vm78 = vcmask 1044484
  %v81 = vsel %vm78, %v64, %v65
  %vm82 = vcmask 1046534
  %v85 = vsel %vm82, %v66, %v67
  %vm86 = vcmask 1045508
  %v87 = vsel %vm86, %v81, %v85
  %vm88 = vcmask 1043456
  %v89 = vsel %vm88, %v77, %v87
  %v91 = vsel %vm56, %v15, %v89
  %v92 = vld [vmem:[%s1] sm:$0xf]
  %v93 = vld [vmem:[%s1 + $0x4] sm:$0xf]
  %v94 = vld [vmem:[%s1 + $0x8] sm:$0xf]
  %v95 = vld [vmem:[%s1 + $0xc] sm:$0xf]
  %v96 = vld [vmem:[%s1 + $0x10] sm:$0xf]
  %v97 = vld [vmem:[%s1 + $0x14] sm:$0xf]
  %v98 = vld [vmem:[%s1 + $0x18] sm:$0xf]
  %v99 = vld [vmem:[%s1 + $0x1c] sm:$0xf]
  %v100 = vld [vmem:[%s1 + $0x20] sm:$0xf]
  %v101 = vld [vmem:[%s1 + $0x24] sm:$0xf]
  %v102 = vld [vmem:[%s1 + $0x28] sm:$0xf]
  %v103 = vld [vmem:[%s1 + $0x2c] sm:$0xf]
  %v104 = vld [vmem:[%s1 + $0x30] sm:$0xf]
  %v105 = vld [vmem:[%s1 + $0x34] sm:$0xf]
  %v106 = vld [vmem:[%s1 + $0x38] sm:$0xf]
  %v107 = vld [vmem:[%s1 + $0x3c] sm:$0xf]
  %v108 = vld [vmem:[%s1 + $0x40] sm:$0xf]
  %v109 = vld [vmem:[%s1 + $0x44] sm:$0xf]
  %v110 = vld [vmem:[%s1 + $0x48] sm:$0xf]
  %v111 = vld [vmem:[%s1 + $0x4c] sm:$0xf]
  %v112 = vld [vmem:[%s1 + $0x50] sm:$0xf]
  %v113 = vld [vmem:[%s1 + $0x54] sm:$0xf]
  %v114 = vld [vmem:[%s1 + $0x58] sm:$0xf]
  %v115 = vld [vmem:[%s1 + $0x5c] sm:$0xf]
  %v116 = vld [vmem:[%s1 + $0x60] sm:$0xf]
  %v117 = vld [vmem:[%s1 + $0x64] sm:$0xf]
  %v118 = vld [vmem:[%s1 + $0x68] sm:$0xf]
  %v119 = vld [vmem:[%s1 + $0x6c] sm:$0xf]
  %v120 = vld [vmem:[%s1 + $0x70] sm:$0xf]
  %v121 = vld [vmem:[%s1 + $0x74] sm:$0xf]
  %v122 = vld [vmem:[%s1 + $0x78] sm:$0xf]
  %v123 = vld [vmem:[%s1 + $0x7c] sm:$0xf]
  %v124 = vld [vmem:[%s1 + $0x80] sm:$0xf]
  %v125 = vld [vmem:[%s1 + $0x84] sm:$0xf]
  %v126 = vld [vmem:[%s1 + $0x88] sm:$0xf]
  %v127 = vld [vmem:[%s1 + $0x8c] sm:$0xf]
  %v128 = vld [vmem:[%s1 + $0x90] sm:$0xf]
  %v129 = vld [vmem:[%s1 + $0x94] sm:$0xf]
  %v130 = vld [vmem:[%s1 + $0x98] sm:$0xf]
  %v131 = vld [vmem:[%s1 + $0x9c] sm:$0xf]
  %v132 = vld [vmem:[%s1 + $0xa0] sm:$0xf]
  %v133 = vld [vmem:[%s1 + $0xa4] sm:$0xf]
  %v134 = vld [vmem:[%s1 + $0xa8] sm:$0xf]
  %v135 = vld [vmem:[%s1 + $0xac] sm:$0xf]
  %v136 = vld [vmem:[%s1 + $0xb0] sm:$0xf]
  %v137 = vld [vmem:[%s1 + $0xb4] sm:$0xf]
  %v138 = vld [vmem:[%s1 + $0xb8] sm:$0xf]
  %v139 = vld [vmem:[%s1 + $0xbc] sm:$0xf]
  %v140 = vld [vmem:[%s1 + $0xc0] sm:$0xf]
  %v141 = vld [vmem:[%s1 + $0xc4] sm:$0xf]
  %v142 = vld [vmem:[%s1 + $0xc8] sm:$0xf]
  %v143 = vld [vmem:[%s1 + $0xcc] sm:$0xf]
  %v144 = vld [vmem:[%s1 + $0xd0] sm:$0xf]
  %v145 = vld [vmem:[%s1 + $0xd4] sm:$0xf]
  %v146 = vld [vmem:[%s1 + $0xd8] sm:$0xf]
  %v147 = vld [vmem:[%s1 + $0xdc] sm:$0xf]
  %v148 = vld [vmem:[%s1 + $0xe0] sm:$0xf]
  %v149 = vld [vmem:[%s1 + $0xe4] sm:$0xf]
  %v150 = vld [vmem:[%s1 + $0xe8] sm:$0xf]
  %v151 = vld [vmem:[%s1 + $0xec] sm:$0xf]
  %v152 = vld [vmem:[%s1 + $0xf0] sm:$0xf]
  %v153 = vld [vmem:[%s1 + $0xf4] sm:$0xf]
  %v154 = vld [vmem:[%s1 + $0xf8] sm:$0xf]
  %v155 = vld [vmem:[%s1 + $0xfc] sm:$0xf]
  %v156 = vld [vmem:[%s1 + $0x100] sm:$0xf]
  %v157 = vld [vmem:[%s1 + $0x104] sm:$0xf]
  %v158 = vld [vmem:[%s1 + $0x108] sm:$0xf]
  %v159 = vld [vmem:[%s1 + $0x10c] sm:$0xf]
  %v160 = vld [vmem:[%s1 + $0x110] sm:$0xf]
  %v161 = vld [vmem:[%s1 + $0x114] sm:$0xf]
  %v162 = vld [vmem:[%s1 + $0x118] sm:$0xf]
  %v163 = vld [vmem:[%s1 + $0x11c] sm:$0xf]
  %v164 = vld [vmem:[%s1 + $0x120] sm:$0xf]
  %v165 = vld [vmem:[%s1 + $0x124] sm:$0xf]
  %v166 = vld [vmem:[%s1 + $0x128] sm:$0xf]
  %v167 = vld [vmem:[%s1 + $0x12c] sm:$0xf]
  %v168 = vld [vmem:[%s1 + $0x130] sm:$0xf]
  %v169 = vld [vmem:[%s1 + $0x134] sm:$0xf]
  %v170 = vld [vmem:[%s1 + $0x138] sm:$0xf]
  %v171 = vld [vmem:[%s1 + $0x13c] sm:$0xf]
  %v172 = vld [vmem:[%s1 + $0x140] sm:$0xf]
  %v173 = vld [vmem:[%s1 + $0x144] sm:$0xf]
  %v174 = vld [vmem:[%s1 + $0x148] sm:$0xf]
  %v175 = vld [vmem:[%s1 + $0x14c] sm:$0xf]
  %v176 = vld [vmem:[%s1 + $0x150] sm:$0xf]
  %v177 = vld [vmem:[%s1 + $0x154] sm:$0xf]
  %v178 = vld [vmem:[%s1 + $0x158] sm:$0xf]
  %v179 = vld [vmem:[%s1 + $0x15c] sm:$0xf]
  %v180 = vld [vmem:[%s1 + $0x160] sm:$0xf]
  %v181 = vld [vmem:[%s1 + $0x164] sm:$0xf]
  %v182 = vld [vmem:[%s1 + $0x168] sm:$0xf]
  %v183 = vld [vmem:[%s1 + $0x16c] sm:$0xf]
  %v184 = vld [vmem:[%s1 + $0x170] sm:$0xf]
  %v185 = vld [vmem:[%s1 + $0x174] sm:$0xf]
  %v186 = vld [vmem:[%s1 + $0x178] sm:$0xf]
  %v187 = vld [vmem:[%s1 + $0x17c] sm:$0xf]
  %v188 = vld [vmem:[%s1 + $0x180] sm:$0xf]
  %v189 = vld [vmem:[%s1 + $0x184] sm:$0xf]
  %v190 = vld [vmem:[%s1 + $0x188] sm:$0xf]
  %v191 = vld [vmem:[%s1 + $0x18c] sm:$0xf]
  %v192 = vld [vmem:[%s1 + $0x190] sm:$0xf]
  %v193 = vld [vmem:[%s1 + $0x194] sm:$0xf]
  %v194 = vld [vmem:[%s1 + $0x198] sm:$0xf]
  %v195 = vld [vmem:[%s1 + $0x19c] sm:$0xf]
  %v196 = vld [vmem:[%s1 + $0x1a0] sm:$0xf]
  %v197 = vld [vmem:[%s1 + $0x1a4] sm:$0xf]
  %v198 = vld [vmem:[%s1 + $0x1a8] sm:$0xf]
  %v199 = vld [vmem:[%s1 + $0x1ac] sm:$0xf]
  %v200 = vld [vmem:[%s1 + $0x1b0] sm:$0xf]
  %v201 = vld [vmem:[%s1 + $0x1b4] sm:$0xf]
  %v202 = vld [vmem:[%s1 + $0x1b8] sm:$0xf]
  %v203 = vld [vmem:[%s1 + $0x1bc] sm:$0xf]
  %v204 = vld [vmem:[%s1 + $0x1c0] sm:$0xf]
  %v205 = vld [vmem:[%s1 + $0x1c4] sm:$0xf]
  %v206 = vld [vmem:[%s1 + $0x1c8] sm:$0xf]
  %v207 = vld [vmem:[%s1 + $0x1cc] sm:$0xf]
  %v208 = vld [vmem:[%s1 + $0x1d0] sm:$0xf]
  %v209 = vld [vmem:[%s1 + $0x1d4] sm:$0xf]
  %v210 = vld [vmem:[%s1 + $0x1d8] sm:$0xf]
  %v211 = vld [vmem:[%s1 + $0x1dc] sm:$0xf]
  %v212 = vld [vmem:[%s1 + $0x1e0] sm:$0xf]
  %v213 = vld [vmem:[%s1 + $0x1e4] sm:$0xf]
  %v214 = vld [vmem:[%s1 + $0x1e8] sm:$0xf]
  %v215 = vld [vmem:[%s1 + $0x1ec] sm:$0xf]
  %v216 = vld [vmem:[%s1 + $0x1f0] sm:$0xf]
  %v217 = vld [vmem:[%s1 + $0x1f4] sm:$0xf]
  %v218 = vld [vmem:[%s1 + $0x1f8] sm:$0xf]
  %v219 = vld [vmem:[%s1 + $0x1fc] sm:$0xf]
  %221 = vst [vmem:[#allocation1] ss:$9 sm:$0xff] %v91
  %v222 = vld [vmem:[#allocation1] sm:$0xff]
  %v223 = vld [vmem:[#allocation1 + $0x9] sm:$0xff]
  %v224 = vld [vmem:[#allocation1 + $0x12] sm:$0xff]
  %v225 = vld [vmem:[#allocation1 + $0x1b] sm:$0xff]
  %v226 = vld [vmem:[#allocation1 + $0x24] sm:$0xff]
  %v227 = vld [vmem:[#allocation1 + $0x2d] sm:$0xff]
  %v228 = vld [vmem:[#allocation1 + $0x36] sm:$0xff]
  %v229 = vld [vmem:[#allocation1 + $0x3f] sm:$0xff]
  %v366 = vunpack.c.l.b16 %v92
  %v367 = vunpack.c.l.b16 %v93
  %v368 = vunpack.c.l.b16 %v94
  %v369 = vunpack.c.l.b16 %v95
  %v370 = vunpack.c.l.b16 %v96
  %v371 = vunpack.c.l.b16 %v97
  %v372 = vunpack.c.l.b16 %v98
  %v373 = vunpack.c.l.b16 %v99
  %v374 = vunpack.c.l.b16 %v100
  %v375 = vunpack.c.l.b16 %v101
  %v376 = vunpack.c.l.b16 %v102
  %v377 = vunpack.c.l.b16 %v103
  %v378 = vunpack.c.l.b16 %v104
  %v379 = vunpack.c.l.b16 %v105
  %v380 = vunpack.c.l.b16 %v106
  %v381 = vunpack.c.l.b16 %v107
  %v382 = vunpack.c.l.b16 %v108
  %v383 = vunpack.c.l.b16 %v109
  %v384 = vunpack.c.l.b16 %v110
  %v385 = vunpack.c.l.b16 %v111
  %v386 = vunpack.c.l.b16 %v112
  %v387 = vunpack.c.l.b16 %v113
  %v388 = vunpack.c.l.b16 %v114
  %v389 = vunpack.c.l.b16 %v115
  %v390 = vunpack.c.l.b16 %v116
  %v391 = vunpack.c.l.b16 %v117
  %v392 = vunpack.c.l.b16 %v118
  %v393 = vunpack.c.l.b16 %v119
  %v394 = vunpack.c.l.b16 %v120
  %v395 = vunpack.c.l.b16 %v121
  %v396 = vunpack.c.l.b16 %v122
  %v397 = vunpack.c.l.b16 %v123
  %v398 = vunpack.c.l.b16 %v124
  %v399 = vunpack.c.l.b16 %v125
  %v400 = vunpack.c.l.b16 %v126
  %v401 = vunpack.c.l.b16 %v127
  %v402 = vunpack.c.l.b16 %v128
  %v403 = vunpack.c.l.b16 %v129
  %v404 = vunpack.c.l.b16 %v130
  %v405 = vunpack.c.l.b16 %v131
  %v406 = vunpack.c.l.b16 %v132
  %v407 = vunpack.c.l.b16 %v133
  %v408 = vunpack.c.l.b16 %v134
  %v409 = vunpack.c.l.b16 %v135
  %v410 = vunpack.c.l.b16 %v136
  %v411 = vunpack.c.l.b16 %v137
  %v412 = vunpack.c.l.b16 %v138
  %v413 = vunpack.c.l.b16 %v139
  %v414 = vunpack.c.l.b16 %v140
  %v415 = vunpack.c.l.b16 %v141
  %v416 = vunpack.c.l.b16 %v142
  %v417 = vunpack.c.l.b16 %v143
  %v418 = vunpack.c.l.b16 %v144
  %v419 = vunpack.c.l.b16 %v145
  %v420 = vunpack.c.l.b16 %v146
  %v421 = vunpack.c.l.b16 %v147
  %v422 = vunpack.c.l.b16 %v148
  %v423 = vunpack.c.l.b16 %v149
  %v424 = vunpack.c.l.b16 %v150
  %v425 = vunpack.c.l.b16 %v151
  %v426 = vunpack.c.l.b16 %v152
  %v427 = vunpack.c.l.b16 %v153
  %v428 = vunpack.c.l.b16 %v154
  %v429 = vunpack.c.l.b16 %v155
  %v430 = vunpack.c.l.b16 %v156
  %v431 = vunpack.c.l.b16 %v157
  %v432 = vunpack.c.l.b16 %v158
  %v433 = vunpack.c.l.b16 %v159
  %v434 = vunpack.c.l.b16 %v160
  %v435 = vunpack.c.l.b16 %v161
  %v436 = vunpack.c.l.b16 %v162
  %v437 = vunpack.c.l.b16 %v163
  %v438 = vunpack.c.l.b16 %v164
  %v439 = vunpack.c.l.b16 %v165
  %v440 = vunpack.c.l.b16 %v166
  %v441 = vunpack.c.l.b16 %v167
  %v442 = vunpack.c.l.b16 %v168
  %v443 = vunpack.c.l.b16 %v169
  %v444 = vunpack.c.l.b16 %v170
  %v445 = vunpack.c.l.b16 %v171
  %v446 = vunpack.c.l.b16 %v172
  %v447 = vunpack.c.l.b16 %v173
  %v448 = vunpack.c.l.b16 %v174
  %v449 = vunpack.c.l.b16 %v175
  %v450 = vunpack.c.l.b16 %v176
  %v451 = vunpack.c.l.b16 %v177
  %v452 = vunpack.c.l.b16 %v178
  %v453 = vunpack.c.l.b16 %v179
  %v454 = vunpack.c.l.b16 %v180
  %v455 = vunpack.c.l.b16 %v181
  %v456 = vunpack.c.l.b16 %v182
  %v457 = vunpack.c.l.b16 %v183
  %v458 = vunpack.c.l.b16 %v184
  %v459 = vunpack.c.l.b16 %v185
  %v460 = vunpack.c.l.b16 %v186
  %v461 = vunpack.c.l.b16 %v187
  %v462 = vunpack.c.l.b16 %v188
  %v463 = vunpack.c.l.b16 %v189
  %v464 = vunpack.c.l.b16 %v190
  %v465 = vunpack.c.l.b16 %v191
  %v466 = vunpack.c.l.b16 %v192
  %v467 = vunpack.c.l.b16 %v193
  %v468 = vunpack.c.l.b16 %v194
  %v469 = vunpack.c.l.b16 %v195
  %v470 = vunpack.c.l.b16 %v196
  %v471 = vunpack.c.l.b16 %v197
  %v472 = vunpack.c.l.b16 %v198
  %v473 = vunpack.c.l.b16 %v199
  %v474 = vunpack.c.l.b16 %v200
  %v475 = vunpack.c.l.b16 %v201
  %v476 = vunpack.c.l.b16 %v202
  %v477 = vunpack.c.l.b16 %v203
  %v478 = vunpack.c.l.b16 %v204
  %v479 = vunpack.c.l.b16 %v205
  %v480 = vunpack.c.l.b16 %v206
  %v481 = vunpack.c.l.b16 %v207
  %v482 = vunpack.c.l.b16 %v208
  %v483 = vunpack.c.l.b16 %v209
  %v484 = vunpack.c.l.b16 %v210
  %v485 = vunpack.c.l.b16 %v211
  %v486 = vunpack.c.l.b16 %v212
  %v487 = vunpack.c.l.b16 %v213
  %v488 = vunpack.c.l.b16 %v214
  %v489 = vunpack.c.l.b16 %v215
  %v490 = vunpack.c.l.b16 %v216
  %v491 = vunpack.c.l.b16 %v217
  %v492 = vunpack.c.l.b16 %v218
  %v493 = vunpack.c.l.b16 %v219
  %v494 = vpack.c.b16 %v367, %v366
  %v495 = vpack.c.b16 %v369, %v368
  %v496 = vpack.c.b16 %v371, %v370
  %v497 = vpack.c.b16 %v373, %v372
  %v498 = vpack.c.b16 %v375, %v374
  %v499 = vpack.c.b16 %v377, %v376
  %v500 = vpack.c.b16 %v379, %v378
  %v501 = vpack.c.b16 %v381, %v380
  %v502 = vpack.c.b16 %v383, %v382
  %v503 = vpack.c.b16 %v385, %v384
  %v504 = vpack.c.b16 %v387, %v386
  %v505 = vpack.c.b16 %v389, %v388
  %v506 = vpack.c.b16 %v391, %v390
  %v507 = vpack.c.b16 %v393, %v392
  %v508 = vpack.c.b16 %v395, %v394
  %v509 = vpack.c.b16 %v397, %v396
  %v510 = vpack.c.b16 %v399, %v398
  %v511 = vpack.c.b16 %v401, %v400
  %v512 = vpack.c.b16 %v403, %v402
  %v513 = vpack.c.b16 %v405, %v404
  %v514 = vpack.c.b16 %v407, %v406
  %v515 = vpack.c.b16 %v409, %v408
  %v516 = vpack.c.b16 %v411, %v410
  %v517 = vpack.c.b16 %v413, %v412
  %v518 = vpack.c.b16 %v415, %v414
  %v519 = vpack.c.b16 %v417, %v416
  %v520 = vpack.c.b16 %v419, %v418
  %v521 = vpack.c.b16 %v421, %v420
  %v522 = vpack.c.b16 %v423, %v422
  %v523 = vpack.c.b16 %v425, %v424
  %v524 = vpack.c.b16 %v427, %v426
  %v525 = vpack.c.b16 %v429, %v428
  %v526 = vpack.c.b16 %v431, %v430
  %v527 = vpack.c.b16 %v433, %v432
  %v528 = vpack.c.b16 %v435, %v434
  %v529 = vpack.c.b16 %v437, %v436
  %v530 = vpack.c.b16 %v439, %v438
  %v531 = vpack.c.b16 %v441, %v440
  %v532 = vpack.c.b16 %v443, %v442
  %v533 = vpack.c.b16 %v445, %v444
  %v534 = vpack.c.b16 %v447, %v446
  %v535 = vpack.c.b16 %v449, %v448
  %v536 = vpack.c.b16 %v451, %v450
  %v537 = vpack.c.b16 %v453, %v452
  %v538 = vpack.c.b16 %v455, %v454
  %v539 = vpack.c.b16 %v457, %v456
  %v540 = vpack.c.b16 %v459, %v458
  %v541 = vpack.c.b16 %v461, %v460
  %v542 = vpack.c.b16 %v463, %v462
  %v543 = vpack.c.b16 %v465, %v464
  %v544 = vpack.c.b16 %v467, %v466
  %v545 = vpack.c.b16 %v469, %v468
  %v546 = vpack.c.b16 %v471, %v470
  %v547 = vpack.c.b16 %v473, %v472
  %v548 = vpack.c.b16 %v475, %v474
  %v549 = vpack.c.b16 %v477, %v476
  %v550 = vpack.c.b16 %v479, %v478
  %v551 = vpack.c.b16 %v481, %v480
  %v552 = vpack.c.b16 %v483, %v482
  %v553 = vpack.c.b16 %v485, %v484
  %v554 = vpack.c.b16 %v487, %v486
  %v555 = vpack.c.b16 %v489, %v488
  %v556 = vpack.c.b16 %v491, %v490
  %v557 = vpack.c.b16 %v493, %v492
  %622 = vmatpush.bf16.msra.mxu0 %v501
  %623 = vmatpush.bf16.msra.mxu0 %v500
  %624 = vmatpush.bf16.msra.mxu0 %v499
  %625 = vmatpush.bf16.msra.mxu0 %v498
  %626 = vmatpush.bf16.msra.mxu0 %v497
  %627 = vmatpush.bf16.msra.mxu0 %v496
  %628 = vmatpush.bf16.msra.mxu0 %v495
  %629 = vmatpush.bf16.msra.mxu0 %v494
  %630 = vmatmul.bf16.gmra.mxu0 %v222
  %v631 = vpop.f32.mrf.mxu0
  %v632 = vadd.f32 0.0, %v631
  %v633 = vpop.f32.mrf.mxu0
  %634 = vdwg.mxu0
  %635 = vmatpush.bf16.msra.mxu0 %v509
  %636 = vmatpush.bf16.msra.mxu0 %v508
  %637 = vmatpush.bf16.msra.mxu0 %v507
  %638 = vmatpush.bf16.msra.mxu0 %v506
  %639 = vmatpush.bf16.msra.mxu0 %v505
  %640 = vmatpush.bf16.msra.mxu0 %v504
  %641 = vmatpush.bf16.msra.mxu0 %v503
  %642 = vmatpush.bf16.msra.mxu0 %v502
  %643 = vmatmul.bf16.gmra.mxu0 %v223
  %v644 = vpop.f32.mrf.mxu0
  %v645 = vadd.f32 %v632, %v644
  %v646 = vpop.f32.mrf.mxu0
  %647 = vdwg.mxu0
  %648 = vmatpush.bf16.msra.mxu0 %v517
  %649 = vmatpush.bf16.msra.mxu0 %v516
  %650 = vmatpush.bf16.msra.mxu0 %v515
  %651 = vmatpush.bf16.msra.mxu0 %v514
  %652 = vmatpush.bf16.msra.mxu0 %v513
  %653 = vmatpush.bf16.msra.mxu0 %v512
  %654 = vmatpush.bf16.msra.mxu0 %v511
  %655 = vmatpush.bf16.msra.mxu0 %v510
  %656 = vmatmul.bf16.gmra.mxu0 %v224
  %v657 = vpop.f32.mrf.mxu0
  %v658 = vadd.f32 %v645, %v657
  %v659 = vpop.f32.mrf.mxu0
  %660 = vdwg.mxu0
  %661 = vmatpush.bf16.msra.mxu0 %v525
  %662 = vmatpush.bf16.msra.mxu0 %v524
  %663 = vmatpush.bf16.msra.mxu0 %v523
  %664 = vmatpush.bf16.msra.mxu0 %v522
  %665 = vmatpush.bf16.msra.mxu0 %v521
  %666 = vmatpush.bf16.msra.mxu0 %v520
  %667 = vmatpush.bf16.msra.mxu0 %v519
  %668 = vmatpush.bf16.msra.mxu0 %v518
  %669 = vmatmul.bf16.gmra.mxu0 %v225
  %v670 = vpop.f32.mrf.mxu0
  %v671 = vadd.f32 %v658, %v670
  %v672 = vpop.f32.mrf.mxu0
  %673 = vdwg.mxu0
  %674 = vmatpush.bf16.msra.mxu0 %v533
  %675 = vmatpush.bf16.msra.mxu0 %v532
  %676 = vmatpush.bf16.msra.mxu0 %v531
  %677 = vmatpush.bf16.msra.mxu0 %v530
  %678 = vmatpush.bf16.msra.mxu0 %v529
  %679 = vmatpush.bf16.msra.mxu0 %v528
  %680 = vmatpush.bf16.msra.mxu0 %v527
  %681 = vmatpush.bf16.msra.mxu0 %v526
  %682 = vmatmul.bf16.gmra.mxu0 %v226
  %v683 = vpop.f32.mrf.mxu0
  %v684 = vadd.f32 %v671, %v683
  %v685 = vpop.f32.mrf.mxu0
  %686 = vdwg.mxu0
  %687 = vmatpush.bf16.msra.mxu0 %v541
  %688 = vmatpush.bf16.msra.mxu0 %v540
  %689 = vmatpush.bf16.msra.mxu0 %v539
  %690 = vmatpush.bf16.msra.mxu0 %v538
  %691 = vmatpush.bf16.msra.mxu0 %v537
  %692 = vmatpush.bf16.msra.mxu0 %v536
  %693 = vmatpush.bf16.msra.mxu0 %v535
  %694 = vmatpush.bf16.msra.mxu0 %v534
  %695 = vmatmul.bf16.gmra.mxu0 %v227
  %v696 = vpop.f32.mrf.mxu0
  %v697 = vadd.f32 %v684, %v696
  %v698 = vpop.f32.mrf.mxu0
  %699 = vdwg.mxu0
  %700 = vmatpush.bf16.msra.mxu0 %v549
  %701 = vmatpush.bf16.msra.mxu0 %v548
  %702 = vmatpush.bf16.msra.mxu0 %v547
  %703 = vmatpush.bf16.msra.mxu0 %v546
  %704 = vmatpush.bf16.msra.mxu0 %v545
  %705 = vmatpush.bf16.msra.mxu0 %v544
  %706 = vmatpush.bf16.msra.mxu0 %v543
  %707 = vmatpush.bf16.msra.mxu0 %v542
  %708 = vmatmul.bf16.gmra.mxu0 %v228
  %v709 = vpop.f32.mrf.mxu0
  %v710 = vadd.f32 %v697, %v709
  %v711 = vpop.f32.mrf.mxu0
  %712 = vdwg.mxu0
  %713 = vmatpush.bf16.msra.mxu0 %v557
  %714 = vmatpush.bf16.msra.mxu0 %v556
  %715 = vmatpush.bf16.msra.mxu0 %v555
  %716 = vmatpush.bf16.msra.mxu0 %v554
  %717 = vmatpush.bf16.msra.mxu0 %v553
  %718 = vmatpush.bf16.msra.mxu0 %v552
  %719 = vmatpush.bf16.msra.mxu0 %v551
  %720 = vmatpush.bf16.msra.mxu0 %v550
  %721 = vmatmul.bf16.gmra.mxu0 %v229
  %v722 = vpop.f32.mrf.mxu0
  %v723 = vadd.f32 %v710, %v722
  %v724 = vpop.f32.mrf.mxu0
  %725 = vdwg.mxu0
  %v726 = vpack.c.bf16 %v723, %v723
  %727 = vst [vmem:[%s3] sm:$0x1] %v726
  // Predicated region
  $region14: #{_lambda_.39} parent=0 // pred_check
    _
  $region15: #{_lambda_.39} parent=0 // pred_check_branch
    %729 = sbr.rel (0) target = $region17
  $region16: #{_lambda_.39} parent=0 // pred_region
    _
  $region17: #{_lambda_.39} parent=0 // pred_fallthru
    _
  // Predicated region
  $region18: #{_lambda_.39} parent=0 // pred_check
    _
  $region19: #{_lambda_.39} parent=0 // pred_check_branch
    %731 = sbr.rel (0) target = $region21
  $region20: #{_lambda_.39} parent=0 // pred_region
    _
  $region21: #{_lambda_.39} parent=0 // pred_fallthru
    _

// kernel: _lambda_.45
$region0: #{_lambda_.45}
  #allocation0 [shape = 'u32[]', space=smem, size = 0x4, offset = 0x4, fixed_abs, tag = 'smem constant byte address 0x4 - core index']
  #allocation1 [shape = 'u32[72,128]{1,0:T(1,128)}', space=vmem, size = 0x9000, scoped, tag = 'internal scratch']
  %s0 = inlined_call_operand.vmem [shape: bf16[8,256], index: 0, kind: input, shape index: {}]
  %s1 = inlined_call_operand.vmem [shape: bf16[8,256], index: 1, kind: input, shape index: {}]
  %s2 = inlined_call_operand.vmem [shape: bf16[256,128], index: 2, kind: input, shape index: {}]
  %s3 = inlined_call_operand.vmem [shape: bf16[256,128], index: 3, kind: input, shape index: {}]
  %s4 = inlined_call_operand.vmem [shape: f32[1,128], index: 4, kind: input, shape index: {}]
  %s5 = inlined_call_operand.vmem [shape: bf16[8,128], index: 5, kind: output, shape index: {0}]
  %s6 = inlined_call_operand.vmem [shape: f32[1,128], index: 6, kind: output, shape index: {1}]
  %s7 = inlined_call_operand.vmem [shape: f32[1,128], index: 7, kind: output, shape index: {2}]
  %8 = xla_tuple %s5, %s6, %s7
  %s9 = sld [smem:[#allocation0]]
  $region50: #{_lambda_.45} parent=0
    _
  %s11 = ssub.s32 1, %s9
  %s12 = scalar_select 0, %s11, %s9
  // Predicated region
  $region2: #{_lambda_.45} parent=0 // pred_check
    _
  $region3: #{_lambda_.45} parent=0 // pred_check_branch
    %14 = sbr.rel (0) target = $region5
  $region4: #{_lambda_.45} parent=0 // pred_region
    _
  $region5: #{_lambda_.45} parent=0 // pred_fallthru
    _
  // Predicated region
  $region6: #{_lambda_.45} parent=0 // pred_check
    _
  $region7: #{_lambda_.45} parent=0 // pred_check_branch
    %16 = sbr.rel (0) target = $region9
  $region8: #{_lambda_.45} parent=0 // pred_region
    _
  $region9: #{_lambda_.45} parent=0 // pred_fallthru
    _
  // Predicated region
  $region10: #{_lambda_.45} parent=0 // pred_check
    _
  $region11: #{_lambda_.45} parent=0 // pred_check_branch
    %18 = sbr.rel (0) target = $region13
  $region12: #{_lambda_.45} parent=0 // pred_region
    _
  $region13: #{_lambda_.45} parent=0 // pred_fallthru
    _
  // Predicated region
  $region14: #{_lambda_.45} parent=0 // pred_check
    _
  $region15: #{_lambda_.45} parent=0 // pred_check_branch
    %20 = sbr.rel (0) target = $region17
  $region16: #{_lambda_.45} parent=0 // pred_region
    _
  $region17: #{_lambda_.45} parent=0 // pred_fallthru
    _
  // Predicated region
  $region18: #{_lambda_.45} parent=0 // pred_check
    _
  $region19: #{_lambda_.45} parent=0 // pred_check_branch
    %22 = sbr.rel (0) target = $region21
  $region20: #{_lambda_.45} parent=0 // pred_region
    _
  $region21: #{_lambda_.45} parent=0 // pred_fallthru
    _
  %v23 = vld [vmem:[%s0] sm:$0xff]
  %v24 = vunpack.c.l.bf16 %v23
  %v25 = vunpack.c.h.bf16 %v23
  %v26 = vmax.f32 %v24, 0.0
  %v27 = vmax.f32 %v25, 0.0
  %v28 = vpack.c.bf16 %v26, %v26
  %v29 = vpack.c.bf16 %v27, %v27
  %v30 = vld [vmem:[%s2] sm:$0xf]
  %v31 = vld [vmem:[%s2 + $0x4] sm:$0xf]
  %v32 = vld [vmem:[%s2 + $0x8] sm:$0xf]
  %v33 = vld [vmem:[%s2 + $0xc] sm:$0xf]
  %v34 = vld [vmem:[%s2 + $0x10] sm:$0xf]
  %v35 = vld [vmem:[%s2 + $0x14] sm:$0xf]
  %v36 = vld [vmem:[%s2 + $0x18] sm:$0xf]
  %v37 = vld [vmem:[%s2 + $0x1c] sm:$0xf]
  %v38 = vld [vmem:[%s2 + $0x20] sm:$0xf]
  %v39 = vld [vmem:[%s2 + $0x24] sm:$0xf]
  %v40 = vld [vmem:[%s2 + $0x28] sm:$0xf]
  %v41 = vld [vmem:[%s2 + $0x2c] sm:$0xf]
  %v42 = vld [vmem:[%s2 + $0x30] sm:$0xf]
  %v43 = vld [vmem:[%s2 + $0x34] sm:$0xf]
  %v44 = vld [vmem:[%s2 + $0x38] sm:$0xf]
  %v45 = vld [vmem:[%s2 + $0x3c] sm:$0xf]
  %v46 = vld [vmem:[%s2 + $0x40] sm:$0xf]
  %v47 = vld [vmem:[%s2 + $0x44] sm:$0xf]
  %v48 = vld [vmem:[%s2 + $0x48] sm:$0xf]
  %v49 = vld [vmem:[%s2 + $0x4c] sm:$0xf]
  %v50 = vld [vmem:[%s2 + $0x50] sm:$0xf]
  %v51 = vld [vmem:[%s2 + $0x54] sm:$0xf]
  %v52 = vld [vmem:[%s2 + $0x58] sm:$0xf]
  %v53 = vld [vmem:[%s2 + $0x5c] sm:$0xf]
  %v54 = vld [vmem:[%s2 + $0x60] sm:$0xf]
  %v55 = vld [vmem:[%s2 + $0x64] sm:$0xf]
  %v56 = vld [vmem:[%s2 + $0x68] sm:$0xf]
  %v57 = vld [vmem:[%s2 + $0x6c] sm:$0xf]
  %v58 = vld [vmem:[%s2 + $0x70] sm:$0xf]
  %v59 = vld [vmem:[%s2 + $0x74] sm:$0xf]
  %v60 = vld [vmem:[%s2 + $0x78] sm:$0xf]
  %v61 = vld [vmem:[%s2 + $0x7c] sm:$0xf]
  %v62 = vld [vmem:[%s1] sm:$0xff]
  %v63 = vunpack.c.l.bf16 %v62
  %v64 = vunpack.c.h.bf16 %v62
  %v65 = vmax.f32 %v63, 0.0
  %v66 = vmax.f32 %v64, 0.0
  %v67 = vpack.c.bf16 %v65, %v65
  %v68 = vpack.c.bf16 %v66, %v66
  %v69 = vld [vmem:[%s3] sm:$0xf]
  %v70 = vld [vmem:[%s3 + $0x4] sm:$0xf]
  %v71 = vld [vmem:[%s3 + $0x8] sm:$0xf]
  %v72 = vld [vmem:[%s3 + $0xc] sm:$0xf]
  %v73 = vld [vmem:[%s3 + $0x10] sm:$0xf]
  %v74 = vld [vmem:[%s3 + $0x14] sm:$0xf]
  %v75 = vld [vmem:[%s3 + $0x18] sm:$0xf]
  %v76 = vld [vmem:[%s3 + $0x1c] sm:$0xf]
  %v77 = vld [vmem:[%s3 + $0x20] sm:$0xf]
  %v78 = vld [vmem:[%s3 + $0x24] sm:$0xf]
  %v79 = vld [vmem:[%s3 + $0x28] sm:$0xf]
  %v80 = vld [vmem:[%s3 + $0x2c] sm:$0xf]
  %v81 = vld [vmem:[%s3 + $0x30] sm:$0xf]
  %v82 = vld [vmem:[%s3 + $0x34] sm:$0xf]
  %v83 = vld [vmem:[%s3 + $0x38] sm:$0xf]
  %v84 = vld [vmem:[%s3 + $0x3c] sm:$0xf]
  %v85 = vld [vmem:[%s3 + $0x40] sm:$0xf]
  %v86 = vld [vmem:[%s3 + $0x44] sm:$0xf]
  %v87 = vld [vmem:[%s3 + $0x48] sm:$0xf]
  %v88 = vld [vmem:[%s3 + $0x4c] sm:$0xf]
  %v89 = vld [vmem:[%s3 + $0x50] sm:$0xf]
  %v90 = vld [vmem:[%s3 + $0x54] sm:$0xf]
  %v91 = vld [vmem:[%s3 + $0x58] sm:$0xf]
  %v92 = vld [vmem:[%s3 + $0x5c] sm:$0xf]
  %v93 = vld [vmem:[%s3 + $0x60] sm:$0xf]
  %v94 = vld [vmem:[%s3 + $0x64] sm:$0xf]
  %v95 = vld [vmem:[%s3 + $0x68] sm:$0xf]
  %v96 = vld [vmem:[%s3 + $0x6c] sm:$0xf]
  %v97 = vld [vmem:[%s3 + $0x70] sm:$0xf]
  %v98 = vld [vmem:[%s3 + $0x74] sm:$0xf]
  %v99 = vld [vmem:[%s3 + $0x78] sm:$0xf]
  %v100 = vld [vmem:[%s3 + $0x7c] sm:$0xf]
  %v133 = vunpack.c.l.b16 %v69
  %v134 = vunpack.c.l.b16 %v70
  %v135 = vunpack.c.l.b16 %v71
  %v136 = vunpack.c.l.b16 %v72
  %v137 = vunpack.c.l.b16 %v73
  %v138 = vunpack.c.l.b16 %v74
  %v139 = vunpack.c.l.b16 %v75
  %v140 = vunpack.c.l.b16 %v76
  %v141 = vunpack.c.l.b16 %v77
  %v142 = vunpack.c.l.b16 %v78
  %v143 = vunpack.c.l.b16 %v79
  %v144 = vunpack.c.l.b16 %v80
  %v145 = vunpack.c.l.b16 %v81
  %v146 = vunpack.c.l.b16 %v82
  %v147 = vunpack.c.l.b16 %v83
  %v148 = vunpack.c.l.b16 %v84
  %v149 = vunpack.c.l.b16 %v85
  %v150 = vunpack.c.l.b16 %v86
  %v151 = vunpack.c.l.b16 %v87
  %v152 = vunpack.c.l.b16 %v88
  %v153 = vunpack.c.l.b16 %v89
  %v154 = vunpack.c.l.b16 %v90
  %v155 = vunpack.c.l.b16 %v91
  %v156 = vunpack.c.l.b16 %v92
  %v157 = vunpack.c.l.b16 %v93
  %v158 = vunpack.c.l.b16 %v94
  %v159 = vunpack.c.l.b16 %v95
  %v160 = vunpack.c.l.b16 %v96
  %v161 = vunpack.c.l.b16 %v97
  %v162 = vunpack.c.l.b16 %v98
  %v163 = vunpack.c.l.b16 %v99
  %v164 = vunpack.c.l.b16 %v100
  %v165 = vpack.c.b16 %v134, %v133
  %v166 = vpack.c.b16 %v136, %v135
  %v167 = vpack.c.b16 %v138, %v137
  %v168 = vpack.c.b16 %v140, %v139
  %v169 = vpack.c.b16 %v142, %v141
  %v170 = vpack.c.b16 %v144, %v143
  %v171 = vpack.c.b16 %v146, %v145
  %v172 = vpack.c.b16 %v148, %v147
  %v173 = vpack.c.b16 %v150, %v149
  %v174 = vpack.c.b16 %v152, %v151
  %v175 = vpack.c.b16 %v154, %v153
  %v176 = vpack.c.b16 %v156, %v155
  %v177 = vpack.c.b16 %v158, %v157
  %v178 = vpack.c.b16 %v160, %v159
  %v179 = vpack.c.b16 %v162, %v161
  %v180 = vpack.c.b16 %v164, %v163
  %197 = vmatpush.bf16.msra.mxu0 %v172
  %198 = vmatpush.bf16.msra.mxu0 %v171
  %199 = vmatpush.bf16.msra.mxu0 %v170
  %200 = vmatpush.bf16.msra.mxu0 %v169
  %201 = vmatpush.bf16.msra.mxu0 %v168
  %202 = vmatpush.bf16.msra.mxu0 %v167
  %203 = vmatpush.bf16.msra.mxu0 %v166
  %204 = vmatpush.bf16.msra.mxu0 %v165
  %205 = vmatmul.bf16.gmra.mxu0 %v67
  %v206 = vpop.f32.mrf.mxu0
  %v207 = vadd.f32 0.0, %v206
  %v208 = vpop.f32.mrf.mxu0
  %209 = vdwg.mxu0
  %210 = vmatpush.bf16.msra.mxu0 %v180
  %211 = vmatpush.bf16.msra.mxu0 %v179
  %212 = vmatpush.bf16.msra.mxu0 %v178
  %213 = vmatpush.bf16.msra.mxu0 %v177
  %214 = vmatpush.bf16.msra.mxu0 %v176
  %215 = vmatpush.bf16.msra.mxu0 %v175
  %216 = vmatpush.bf16.msra.mxu0 %v174
  %217 = vmatpush.bf16.msra.mxu0 %v173
  %218 = vmatmul.bf16.gmra.mxu0 %v68
  %v219 = vpop.f32.mrf.mxu0
  %v220 = vadd.f32 %v207, %v219
  %v221 = vpop.f32.mrf.mxu0
  %222 = vdwg.mxu0
  %v255 = vunpack.c.l.b16 %v30
  %v256 = vunpack.c.l.b16 %v31
  %v257 = vunpack.c.l.b16 %v32
  %v258 = vunpack.c.l.b16 %v33
  %v259 = vunpack.c.l.b16 %v34
  %v260 = vunpack.c.l.b16 %v35
  %v261 = vunpack.c.l.b16 %v36
  %v262 = vunpack.c.l.b16 %v37
  %v263 = vunpack.c.l.b16 %v38
  %v264 = vunpack.c.l.b16 %v39
  %v265 = vunpack.c.l.b16 %v40
  %v266 = vunpack.c.l.b16 %v41
  %v267 = vunpack.c.l.b16 %v42
  %v268 = vunpack.c.l.b16 %v43
  %v269 = vunpack.c.l.b16 %v44
  %v270 = vunpack.c.l.b16 %v45
  %v271 = vunpack.c.l.b16 %v46
  %v272 = vunpack.c.l.b16 %v47
  %v273 = vunpack.c.l.b16 %v48
  %v274 = vunpack.c.l.b16 %v49
  %v275 = vunpack.c.l.b16 %v50
  %v276 = vunpack.c.l.b16 %v51
  %v277 = vunpack.c.l.b16 %v52
  %v278 = vunpack.c.l.b16 %v53
  %v279 = vunpack.c.l.b16 %v54
  %v280 = vunpack.c.l.b16 %v55
  %v281 = vunpack.c.l.b16 %v56
  %v282 = vunpack.c.l.b16 %v57
  %v283 = vunpack.c.l.b16 %v58
  %v284 = vunpack.c.l.b16 %v59
  %v285 = vunpack.c.l.b16 %v60
  %v286 = vunpack.c.l.b16 %v61
  %v287 = vpack.c.b16 %v256, %v255
  %v288 = vpack.c.b16 %v258, %v257
  %v289 = vpack.c.b16 %v260, %v259
  %v290 = vpack.c.b16 %v262, %v261
  %v291 = vpack.c.b16 %v264, %v263
  %v292 = vpack.c.b16 %v266, %v265
  %v293 = vpack.c.b16 %v268, %v267
  %v294 = vpack.c.b16 %v270, %v269
  %v295 = vpack.c.b16 %v272, %v271
  %v296 = vpack.c.b16 %v274, %v273
  %v297 = vpack.c.b16 %v276, %v275
  %v298 = vpack.c.b16 %v278, %v277
  %v299 = vpack.c.b16 %v280, %v279
  %v300 = vpack.c.b16 %v282, %v281
  %v301 = vpack.c.b16 %v284, %v283
  %v302 = vpack.c.b16 %v286, %v285
  %319 = vmatpush.bf16.msra.mxu0 %v294
  %320 = vmatpush.bf16.msra.mxu0 %v293
  %321 = vmatpush.bf16.msra.mxu0 %v292
  %322 = vmatpush.bf16.msra.mxu0 %v291
  %323 = vmatpush.bf16.msra.mxu0 %v290
  %324 = vmatpush.bf16.msra.mxu0 %v289
  %325 = vmatpush.bf16.msra.mxu0 %v288
  %326 = vmatpush.bf16.msra.mxu0 %v287
  %327 = vmatmul.bf16.gmra.mxu0 %v28
  %v328 = vpop.f32.mrf.mxu0
  %v329 = vadd.f32 %v220, %v328
  %v330 = vpop.f32.mrf.mxu0
  %331 = vdwg.mxu0
  %332 = vmatpush.bf16.msra.mxu0 %v302
  %333 = vmatpush.bf16.msra.mxu0 %v301
  %334 = vmatpush.bf16.msra.mxu0 %v300
  %335 = vmatpush.bf16.msra.mxu0 %v299
  %336 = vmatpush.bf16.msra.mxu0 %v298
  %337 = vmatpush.bf16.msra.mxu0 %v297
  %338 = vmatpush.bf16.msra.mxu0 %v296
  %339 = vmatpush.bf16.msra.mxu0 %v295
  %340 = vmatmul.bf16.gmra.mxu0 %v29
  %v341 = vpop.f32.mrf.mxu0
  %v342 = vadd.f32 %v329, %v341
  %v343 = vpop.f32.mrf.mxu0
  %344 = vdwg.mxu0
  %p345 = scmp.eq.s32.totalorder 0, 0
  // Predicated region
  $region22: #{_lambda_.45} parent=0 // pred_check
    %p346 = pneg %p345
  $region23: #{_lambda_.45} parent=0 // pred_check_branch
    %348 = sbr.rel (%p346) target = $region25
  $region24: #{_lambda_.45} parent=0 // pred_region
    %349 = vst [vmem:[%s6] sm:$0x1] 0.0
    %350 = vst [vmem:[%s7] sm:$0x1] 0.0
  $region25: #{_lambda_.45} parent=0 // pred_fallthru
    _
  %v351 = vlaneseq
  %v352 = vshrl.u32 %v351, 7
  %s353 = smul.u32 0, 8
  %v354 = vstv %s353
  %v355 = vadd.s32 %v352, %v354
  %vm356 = vcmp.lt.s32.totalorder %v355, 8
  %v357 = vsel %vm356, %v342, 0.0
  %v358 = vld [vmem:[%s6] sm:$0x1]
  %v359 = vrot.slane %v357, 4
  %v360 = vadd.f32 %v357, %v359
  %v361 = vrot.slane %v360, 2
  %v362 = vadd.f32 %v360, %v361
  %v363 = vrot.slane %v362, 1
  %v364 = vadd.f32 %v362, %v363
  %v365 = vadd.f32 %v358, %v364
  %366 = vst [vmem:[%s6] sm:$0x1] %v365
  %v367 = vld [vmem:[%s7] sm:$0x1]
  %v368 = vmul.f32 %v357, %v357
  %v369 = vrot.slane %v368, 4
  %v370 = vadd.f32 %v368, %v369
  %v371 = vrot.slane %v370, 2
  %v372 = vadd.f32 %v370, %v371
  %v373 = vrot.slane %v372, 1
  %v374 = vadd.f32 %v372, %v373
  %v375 = vadd.f32 %v367, %v374
  %376 = vst [vmem:[%s7] sm:$0x1] %v375
  %v377 = vpack.c.bf16 %v342, %v342
  %378 = vst [vmem:[%s5] sm:$0xf] %v377
  // Predicated region
  $region26: #{_lambda_.45} parent=0 // pred_check
    _
  $region27: #{_lambda_.45} parent=0 // pred_check_branch
    %380 = sbr.rel (0) target = $region29
  $region28: #{_lambda_.45} parent=0 // pred_region
    _
  $region29: #{_lambda_.45} parent=0 // pred_fallthru
    _
  // Predicated region
  $region30: #{_lambda_.45} parent=0 // pred_check
    _
  $region31: #{_lambda_.45} parent=0 // pred_check_branch
    %382 = sbr.rel (0) target = $region33
  $region32: #{_lambda_.45} parent=0 // pred_region
    _
  $region33: #{_lambda_.45} parent=0 // pred_fallthru
    _
  // Predicated region
  $region34: #{_lambda_.45} parent=0 // pred_check
    _
  $region35: #{_lambda_.45} parent=0 // pred_check_branch
    %384 = sbr.rel (0) target = $region37
  $region36: #{_lambda_.45} parent=0 // pred_region
    _
  $region37: #{_lambda_.45} parent=0 // pred_fallthru
    _
  // Predicated region
  $region38: #{_lambda_.45} parent=0 // pred_check
    _
  $region39: #{_lambda_.45} parent=0 // pred_check_branch
    %386 = sbr.rel (0) target = $region41
  $region40: #{_lambda_.45} parent=0 // pred_region
    _
  $region41: #{_lambda_.45} parent=0 // pred_fallthru
    _
  // Predicated region
  $region42: #{_lambda_.45} parent=0 // pred_check
    _
  $region43: #{_lambda_.45} parent=0 // pred_check_branch
    %388 = sbr.rel (0) target = $region45
  $region44: #{_lambda_.45} parent=0 // pred_region
    _
  $region45: #{_lambda_.45} parent=0 // pred_fallthru
    _
  // Predicated region
  $region46: #{_lambda_.45} parent=0 // pred_check
    _
  $region47: #{_lambda_.45} parent=0 // pred_check_branch
    %390 = sbr.rel (0) target = $region49
  $region48: #{_lambda_.45} parent=0 // pred_region
    _
  $region49: #{_lambda_.45} parent=0 // pred_fallthru
    _

// kernel: _lambda_.50
$region0: #{_lambda_.50}
  #allocation0 [shape = 'u32[]', space=smem, size = 0x4, offset = 0x4, fixed_abs, tag = 'smem constant byte address 0x4 - core index']
  #allocation1 [shape = 'u32[72,128]{1,0:T(1,128)}', space=vmem, size = 0x9000, scoped, tag = 'internal scratch']
  %s0 = inlined_call_operand.vmem [shape: bf16[32,128], index: 0, kind: input, shape index: {}]
  %s1 = inlined_call_operand.vmem [shape: bf16[32,128], index: 1, kind: input, shape index: {}]
  %s2 = inlined_call_operand.vmem [shape: bf16[128,128], index: 2, kind: input, shape index: {}]
  %s3 = inlined_call_operand.vmem [shape: bf16[128,128], index: 3, kind: input, shape index: {}]
  %s4 = inlined_call_operand.vmem [shape: f32[1,128], index: 4, kind: input, shape index: {}]
  %s5 = inlined_call_operand.vmem [shape: bf16[32,128], index: 5, kind: output, shape index: {0}]
  %s6 = inlined_call_operand.vmem [shape: f32[1,128], index: 6, kind: output, shape index: {1}]
  %s7 = inlined_call_operand.vmem [shape: f32[1,128], index: 7, kind: output, shape index: {2}]
  %8 = xla_tuple %s5, %s6, %s7
  %s9 = sld [smem:[#allocation0]]
  $region50: #{_lambda_.50} parent=0
    _
  %s11 = ssub.s32 1, %s9
  %s12 = scalar_select 0, %s11, %s9
  // Predicated region
  $region2: #{_lambda_.50} parent=0 // pred_check
    _
  $region3: #{_lambda_.50} parent=0 // pred_check_branch
    %14 = sbr.rel (0) target = $region5
  $region4: #{_lambda_.50} parent=0 // pred_region
    _
  $region5: #{_lambda_.50} parent=0 // pred_fallthru
    _
  // Predicated region
  $region6: #{_lambda_.50} parent=0 // pred_check
    _
  $region7: #{_lambda_.50} parent=0 // pred_check_branch
    %16 = sbr.rel (0) target = $region9
  $region8: #{_lambda_.50} parent=0 // pred_region
    _
  $region9: #{_lambda_.50} parent=0 // pred_fallthru
    _
  // Predicated region
  $region10: #{_lambda_.50} parent=0 // pred_check
    _
  $region11: #{_lambda_.50} parent=0 // pred_check_branch
    %18 = sbr.rel (0) target = $region13
  $region12: #{_lambda_.50} parent=0 // pred_region
    _
  $region13: #{_lambda_.50} parent=0 // pred_fallthru
    _
  // Predicated region
  $region14: #{_lambda_.50} parent=0 // pred_check
    _
  $region15: #{_lambda_.50} parent=0 // pred_check_branch
    %20 = sbr.rel (0) target = $region17
  $region16: #{_lambda_.50} parent=0 // pred_region
    _
  $region17: #{_lambda_.50} parent=0 // pred_fallthru
    _
  // Predicated region
  $region18: #{_lambda_.50} parent=0 // pred_check
    _
  $region19: #{_lambda_.50} parent=0 // pred_check_branch
    %22 = sbr.rel (0) target = $region21
  $region20: #{_lambda_.50} parent=0 // pred_region
    _
  $region21: #{_lambda_.50} parent=0 // pred_fallthru
    _
  %v23 = vld [vmem:[%s0] sm:$0xf]
  %v24 = vld [vmem:[%s0 + $0x4] sm:$0xf]
  %v25 = vld [vmem:[%s0 + $0x8] sm:$0xf]
  %v26 = vld [vmem:[%s0 + $0xc] sm:$0xf]
  %v27 = vunpack.c.l.bf16 %v23
  %v28 = vunpack.c.l.bf16 %v24
  %v29 = vunpack.c.l.bf16 %v25
  %v30 = vunpack.c.l.bf16 %v26
  %v31 = vmax.f32 %v27, 0.0
  %v32 = vmax.f32 %v28, 0.0
  %v33 = vmax.f32 %v29, 0.0
  %v34 = vmax.f32 %v30, 0.0
  %v35 = vpack.c.bf16 %v32, %v31
  %v36 = vpack.c.bf16 %v34, %v33
  %v37 = vld [vmem:[%s2] sm:$0xf]
  %v38 = vld [vmem:[%s2 + $0x4] sm:$0xf]
  %v39 = vld [vmem:[%s2 + $0x8] sm:$0xf]
  %v40 = vld [vmem:[%s2 + $0xc] sm:$0xf]
  %v41 = vld [vmem:[%s2 + $0x10] sm:$0xf]
  %v42 = vld [vmem:[%s2 + $0x14] sm:$0xf]
  %v43 = vld [vmem:[%s2 + $0x18] sm:$0xf]
  %v44 = vld [vmem:[%s2 + $0x1c] sm:$0xf]
  %v45 = vld [vmem:[%s2 + $0x20] sm:$0xf]
  %v46 = vld [vmem:[%s2 + $0x24] sm:$0xf]
  %v47 = vld [vmem:[%s2 + $0x28] sm:$0xf]
  %v48 = vld [vmem:[%s2 + $0x2c] sm:$0xf]
  %v49 = vld [vmem:[%s2 + $0x30] sm:$0xf]
  %v50 = vld [vmem:[%s2 + $0x34] sm:$0xf]
  %v51 = vld [vmem:[%s2 + $0x38] sm:$0xf]
  %v52 = vld [vmem:[%s2 + $0x3c] sm:$0xf]
  %v53 = vld [vmem:[%s1] sm:$0xf]
  %v54 = vld [vmem:[%s1 + $0x4] sm:$0xf]
  %v55 = vld [vmem:[%s1 + $0x8] sm:$0xf]
  %v56 = vld [vmem:[%s1 + $0xc] sm:$0xf]
  %v57 = vunpack.c.l.bf16 %v53
  %v58 = vunpack.c.l.bf16 %v54
  %v59 = vunpack.c.l.bf16 %v55
  %v60 = vunpack.c.l.bf16 %v56
  %v61 = vmax.f32 %v57, 0.0
  %v62 = vmax.f32 %v58, 0.0
  %v63 = vmax.f32 %v59, 0.0
  %v64 = vmax.f32 %v60, 0.0
  %v65 = vpack.c.bf16 %v62, %v61
  %v66 = vpack.c.bf16 %v64, %v63
  %v67 = vld [vmem:[%s3] sm:$0xf]
  %v68 = vld [vmem:[%s3 + $0x4] sm:$0xf]
  %v69 = vld [vmem:[%s3 + $0x8] sm:$0xf]
  %v70 = vld [vmem:[%s3 + $0xc] sm:$0xf]
  %v71 = vld [vmem:[%s3 + $0x10] sm:$0xf]
  %v72 = vld [vmem:[%s3 + $0x14] sm:$0xf]
  %v73 = vld [vmem:[%s3 + $0x18] sm:$0xf]
  %v74 = vld [vmem:[%s3 + $0x1c] sm:$0xf]
  %v75 = vld [vmem:[%s3 + $0x20] sm:$0xf]
  %v76 = vld [vmem:[%s3 + $0x24] sm:$0xf]
  %v77 = vld [vmem:[%s3 + $0x28] sm:$0xf]
  %v78 = vld [vmem:[%s3 + $0x2c] sm:$0xf]
  %v79 = vld [vmem:[%s3 + $0x30] sm:$0xf]
  %v80 = vld [vmem:[%s3 + $0x34] sm:$0xf]
  %v81 = vld [vmem:[%s3 + $0x38] sm:$0xf]
  %v82 = vld [vmem:[%s3 + $0x3c] sm:$0xf]
  %v99 = vunpack.c.l.b16 %v67
  %v100 = vunpack.c.l.b16 %v68
  %v101 = vunpack.c.l.b16 %v69
  %v102 = vunpack.c.l.b16 %v70
  %v103 = vunpack.c.l.b16 %v71
  %v104 = vunpack.c.l.b16 %v72
  %v105 = vunpack.c.l.b16 %v73
  %v106 = vunpack.c.l.b16 %v74
  %v107 = vunpack.c.l.b16 %v75
  %v108 = vunpack.c.l.b16 %v76
  %v109 = vunpack.c.l.b16 %v77
  %v110 = vunpack.c.l.b16 %v78
  %v111 = vunpack.c.l.b16 %v79
  %v112 = vunpack.c.l.b16 %v80
  %v113 = vunpack.c.l.b16 %v81
  %v114 = vunpack.c.l.b16 %v82
  %v115 = vpack.c.b16 %v100, %v99
  %v116 = vpack.c.b16 %v102, %v101
  %v117 = vpack.c.b16 %v104, %v103
  %v118 = vpack.c.b16 %v106, %v105
  %v119 = vpack.c.b16 %v108, %v107
  %v120 = vpack.c.b16 %v110, %v109
  %v121 = vpack.c.b16 %v112, %v111
  %v122 = vpack.c.b16 %v114, %v113
  %131 = vmatpush.bf16.msra.mxu0 %v122
  %132 = vmatpush.bf16.msra.mxu0 %v121
  %133 = vmatpush.bf16.msra.mxu0 %v120
  %134 = vmatpush.bf16.msra.mxu0 %v119
  %135 = vmatpush.bf16.msra.mxu0 %v118
  %136 = vmatpush.bf16.msra.mxu0 %v117
  %137 = vmatpush.bf16.msra.mxu0 %v116
  %138 = vmatpush.bf16.msra.mxu0 %v115
  %139 = vmatmul.bf16.gmra.mxu0 %v65
  %v140 = vpop.f32.mrf.mxu0
  %v141 = vadd.f32 0.0, %v140
  %v142 = vpop.f32.mrf.mxu0
  %v143 = vadd.f32 0.0, %v142
  %144 = vmatmul.bf16.gmra.mxu0 %v66
  %v145 = vpop.f32.mrf.mxu0
  %v146 = vadd.f32 0.0, %v145
  %v147 = vpop.f32.mrf.mxu0
  %v148 = vadd.f32 0.0, %v147
  %149 = vdwg.mxu0
  %v166 = vunpack.c.l.b16 %v37
  %v167 = vunpack.c.l.b16 %v38
  %v168 = vunpack.c.l.b16 %v39
  %v169 = vunpack.c.l.b16 %v40
  %v170 = vunpack.c.l.b16 %v41
  %v171 = vunpack.c.l.b16 %v42
  %v172 = vunpack.c.l.b16 %v43
  %v173 = vunpack.c.l.b16 %v44
  %v174 = vunpack.c.l.b16 %v45
  %v175 = vunpack.c.l.b16 %v46
  %v176 = vunpack.c.l.b16 %v47
  %v177 = vunpack.c.l.b16 %v48
  %v178 = vunpack.c.l.b16 %v49
  %v179 = vunpack.c.l.b16 %v50
  %v180 = vunpack.c.l.b16 %v51
  %v181 = vunpack.c.l.b16 %v52
  %v182 = vpack.c.b16 %v167, %v166
  %v183 = vpack.c.b16 %v169, %v168
  %v184 = vpack.c.b16 %v171, %v170
  %v185 = vpack.c.b16 %v173, %v172
  %v186 = vpack.c.b16 %v175, %v174
  %v187 = vpack.c.b16 %v177, %v176
  %v188 = vpack.c.b16 %v179, %v178
  %v189 = vpack.c.b16 %v181, %v180
  %198 = vmatpush.bf16.msra.mxu0 %v189
  %199 = vmatpush.bf16.msra.mxu0 %v188
  %200 = vmatpush.bf16.msra.mxu0 %v187
  %201 = vmatpush.bf16.msra.mxu0 %v186
  %202 = vmatpush.bf16.msra.mxu0 %v185
  %203 = vmatpush.bf16.msra.mxu0 %v184
  %204 = vmatpush.bf16.msra.mxu0 %v183
  %205 = vmatpush.bf16.msra.mxu0 %v182
  %206 = vmatmul.bf16.gmra.mxu0 %v35
  %v207 = vpop.f32.mrf.mxu0
  %v208 = vadd.f32 %v141, %v207
  %v209 = vpop.f32.mrf.mxu0
  %v210 = vadd.f32 %v143, %v209
  %211 = vmatmul.bf16.gmra.mxu0 %v36
  %v212 = vpop.f32.mrf.mxu0
  %v213 = vadd.f32 %v146, %v212
  %v214 = vpop.f32.mrf.mxu0
  %v215 = vadd.f32 %v148, %v214
  %216 = vdwg.mxu0
  %p217 = scmp.eq.s32.totalorder 0, 0
  // Predicated region
  $region22: #{_lambda_.50} parent=0 // pred_check
    %p218 = pneg %p217
  $region23: #{_lambda_.50} parent=0 // pred_check_branch
    %220 = sbr.rel (%p218) target = $region25
  $region24: #{_lambda_.50} parent=0 // pred_region
    %221 = vst [vmem:[%s6] sm:$0x1] 0.0
    %222 = vst [vmem:[%s7] sm:$0x1] 0.0
  $region25: #{_lambda_.50} parent=0 // pred_fallthru
    _
  %v223 = vlaneseq
  %v224 = vshrl.u32 %v223, 7
  %v225 = vadd.s32 %v224, 8
  %v226 = vadd.s32 %v224, 16
  %v227 = vadd.s32 %v224, 24
  %s228 = smul.u32 0, 32
  %v229 = vstv %s228
  %v230 = vadd.s32 %v224, %v229
  %v231 = vadd.s32 %v225, %v229
  %v232 = vadd.s32 %v226, %v229
  %v233 = vadd.s32 %v227, %v229
  %vm234 = vcmp.lt.s32.totalorder %v230, 32
  %vm235 = vcmp.lt.s32.totalorder %v231, 32
  %vm236 = vcmp.lt.s32.totalorder %v232, 32
  %vm237 = vcmp.lt.s32.totalorder %v233, 32
  %v238 = vsel %vm234, %v208, 0.0
  %v239 = vsel %vm235, %v210, 0.0
  %v240 = vsel %vm236, %v213, 0.0
  %v241 = vsel %vm237, %v215, 0.0
  %v242 = vld [vmem:[%s6] sm:$0x1]
  %v243 = vadd.f32 %v238, %v239
  %v244 = vadd.f32 %v243, %v240
  %v245 = vadd.f32 %v244, %v241
  %v246 = vrot.slane %v245, 4
  %v247 = vadd.f32 %v245, %v246
  %v248 = vrot.slane %v247, 2
  %v249 = vadd.f32 %v247, %v248
  %v250 = vrot.slane %v249, 1
  %v251 = vadd.f32 %v249, %v250
  %v252 = vadd.f32 %v242, %v251
  %253 = vst [vmem:[%s6] sm:$0x1] %v252
  %v254 = vld [vmem:[%s7] sm:$0x1]
  %v255 = vmul.f32 %v238, %v238
  %v256 = vmul.f32 %v239, %v239
  %v257 = vmul.f32 %v240, %v240
  %v258 = vmul.f32 %v241, %v241
  %v259 = vadd.f32 %v255, %v256
  %v260 = vadd.f32 %v259, %v257
  %v261 = vadd.f32 %v260, %v258
  %v262 = vrot.slane %v261, 4
  %v263 = vadd.f32 %v261, %v262
  %v264 = vrot.slane %v263, 2
  %v265 = vadd.f32 %v263, %v264
  %v266 = vrot.slane %v265, 1
  %v267 = vadd.f32 %v265, %v266
  %v268 = vadd.f32 %v254, %v267
  %269 = vst [vmem:[%s7] sm:$0x1] %v268
  %v270 = vpack.c.bf16 %v208, %v208
  %v271 = vpack.c.bf16 %v210, %v210
  %v272 = vpack.c.bf16 %v213, %v213
  %v273 = vpack.c.bf16 %v215, %v215
  %274 = vst [vmem:[%s5] sm:$0xf] %v270
  %275 = vst [vmem:[%s5 + $0x4] sm:$0xf] %v271
  %276 = vst [vmem:[%s5 + $0x8] sm:$0xf] %v272
  %277 = vst [vmem:[%s5 + $0xc] sm:$0xf] %v273
  // Predicated region
  $region26: #{_lambda_.50} parent=0 // pred_check
    _
  $region27: #{_lambda_.50} parent=0 // pred_check_branch
    %279 = sbr.rel (0) target = $region29
  $region28: #{_lambda_.50} parent=0 // pred_region
    _
  $region29: #{_lambda_.50} parent=0 // pred_fallthru
    _
  // Predicated region
  $region30: #{_lambda_.50} parent=0 // pred_check
    _
  $region31: #{_lambda_.50} parent=0 // pred_check_branch
    %281 = sbr.rel (0) target = $region33
  $region32: #{_lambda_.50} parent=0 // pred_region
    _
  $region33: #{_lambda_.50} parent=0 // pred_fallthru
    _
  // Predicated region
  $region34: #{_lambda_.50} parent=0 // pred_check
    _
  $region35: #{_lambda_.50} parent=0 // pred_check_branch
    %283 = sbr.rel (0) target = $region37
  $region36: #{_lambda_.50} parent=0 // pred_region
    _
  $region37: #{_lambda_.50} parent=0 // pred_fallthru
    _
  // Predicated region
  $region38: #{_lambda_.50} parent=0 // pred_check
    _
  $region39: #{_lambda_.50} parent=0 // pred_check_branch
    %285 = sbr.rel (0) target = $region41
  $region40: #{_lambda_.50} parent=0 // pred_region
    _
  $region41: #{_lambda_.50} parent=0 // pred_fallthru
    _
  // Predicated region
  $region42: #{_lambda_.50} parent=0 // pred_check
    _
  $region43: #{_lambda_.50} parent=0 // pred_check_branch
    %287 = sbr.rel (0) target = $region45
  $region44: #{_lambda_.50} parent=0 // pred_region
    _
  $region45: #{_lambda_.50} parent=0 // pred_fallthru
    _
  // Predicated region
  $region46: #{_lambda_.50} parent=0 // pred_check
    _
  $region47: #{_lambda_.50} parent=0 // pred_check_branch
    %289 = sbr.rel (0) target = $region49
  $region48: #{_lambda_.50} parent=0 // pred_region
    _
  $region49: #{_lambda_.50} parent=0 // pred_fallthru
    _

// kernel: _lambda_.55
$region0: #{_lambda_.55}
  #allocation0 [shape = 'u32[]', space=smem, size = 0x4, offset = 0x4, fixed_abs, tag = 'smem constant byte address 0x4 - core index']
  #allocation1 [shape = 'u32[72,128]{1,0:T(1,128)}', space=vmem, size = 0x9000, scoped, tag = 'internal scratch']
  %s0 = inlined_call_operand.vmem [shape: bf16[128,64], index: 0, kind: input, shape index: {}]
  %s1 = inlined_call_operand.vmem [shape: bf16[128,64], index: 1, kind: input, shape index: {}]
  %s2 = inlined_call_operand.vmem [shape: bf16[64,128], index: 2, kind: input, shape index: {}]
  %s3 = inlined_call_operand.vmem [shape: bf16[64,128], index: 3, kind: input, shape index: {}]
  %s4 = inlined_call_operand.vmem [shape: f32[1,128], index: 4, kind: input, shape index: {}]
  %s5 = inlined_call_operand.vmem [shape: bf16[128,128], index: 5, kind: output, shape index: {0}]
  %s6 = inlined_call_operand.vmem [shape: f32[1,128], index: 6, kind: output, shape index: {1}]
  %s7 = inlined_call_operand.vmem [shape: f32[1,128], index: 7, kind: output, shape index: {2}]
  %8 = xla_tuple %s5, %s6, %s7
  %s9 = sld [smem:[#allocation0]]
  $region50: #{_lambda_.55} parent=0
    _
  %s11 = ssub.s32 1, %s9
  %s12 = scalar_select 0, %s11, %s9
  // Predicated region
  $region2: #{_lambda_.55} parent=0 // pred_check
    _
  $region3: #{_lambda_.55} parent=0 // pred_check_branch
    %14 = sbr.rel (0) target = $region5
  $region4: #{_lambda_.55} parent=0 // pred_region
    _
  $region5: #{_lambda_.55} parent=0 // pred_fallthru
    _
  // Predicated region
  $region6: #{_lambda_.55} parent=0 // pred_check
    _
  $region7: #{_lambda_.55} parent=0 // pred_check_branch
    %16 = sbr.rel (0) target = $region9
  $region8: #{_lambda_.55} parent=0 // pred_region
    _
  $region9: #{_lambda_.55} parent=0 // pred_fallthru
    _
  // Predicated region
  $region10: #{_lambda_.55} parent=0 // pred_check
    _
  $region11: #{_lambda_.55} parent=0 // pred_check_branch
    %18 = sbr.rel (0) target = $region13
  $region12: #{_lambda_.55} parent=0 // pred_region
    _
  $region13: #{_lambda_.55} parent=0 // pred_fallthru
    _
  // Predicated region
  $region14: #{_lambda_.55} parent=0 // pred_check
    _
  $region15: #{_lambda_.55} parent=0 // pred_check_branch
    %20 = sbr.rel (0) target = $region17
  $region16: #{_lambda_.55} parent=0 // pred_region
    _
  $region17: #{_lambda_.55} parent=0 // pred_fallthru
    _
  // Predicated region
  $region18: #{_lambda_.55} parent=0 // pred_check
    _
  $region19: #{_lambda_.55} parent=0 // pred_check_branch
    %22 = sbr.rel (0) target = $region21
  $region20: #{_lambda_.55} parent=0 // pred_region
    _
  $region21: #{_lambda_.55} parent=0 // pred_fallthru
    _
  %v24 = vld [vmem:[%s0] sm:$0xf]
  %v25 = vld [vmem:[%s0 + $0x4] sm:$0xf]
  %v26 = vld [vmem:[%s0 + $0x8] sm:$0xf]
  %v27 = vld [vmem:[%s0 + $0xc] sm:$0xf]
  %v28 = vld [vmem:[%s0 + $0x10] sm:$0xf]
  %v29 = vld [vmem:[%s0 + $0x14] sm:$0xf]
  %v30 = vld [vmem:[%s0 + $0x18] sm:$0xf]
  %v31 = vld [vmem:[%s0 + $0x1c] sm:$0xf]
  %v32 = vld [vmem:[%s0 + $0x20] sm:$0xf]
  %v33 = vld [vmem:[%s0 + $0x24] sm:$0xf]
  %v34 = vld [vmem:[%s0 + $0x28] sm:$0xf]
  %v35 = vld [vmem:[%s0 + $0x2c] sm:$0xf]
  %v36 = vld [vmem:[%s0 + $0x30] sm:$0xf]
  %v37 = vld [vmem:[%s0 + $0x34] sm:$0xf]
  %v38 = vld [vmem:[%s0 + $0x38] sm:$0xf]
  %v39 = vld [vmem:[%s0 + $0x3c] sm:$0xf]
  %v40 = vunpack.c.l.bf16 %v24
  %v41 = vunpack.c.l.bf16 %v25
  %v42 = vunpack.c.l.bf16 %v26
  %v43 = vunpack.c.l.bf16 %v27
  %v44 = vunpack.c.l.bf16 %v28
  %v45 = vunpack.c.l.bf16 %v29
  %v46 = vunpack.c.l.bf16 %v30
  %v47 = vunpack.c.l.bf16 %v31
  %v48 = vunpack.c.l.bf16 %v32
  %v49 = vunpack.c.l.bf16 %v33
  %v50 = vunpack.c.l.bf16 %v34
  %v51 = vunpack.c.l.bf16 %v35
  %v52 = vunpack.c.l.bf16 %v36
  %v53 = vunpack.c.l.bf16 %v37
  %v54 = vunpack.c.l.bf16 %v38
  %v55 = vunpack.c.l.bf16 %v39
  %v56 = vmax.f32 %v40, 0.0
  %v57 = vmax.f32 %v41, 0.0
  %v58 = vmax.f32 %v42, 0.0
  %v59 = vmax.f32 %v43, 0.0
  %v60 = vmax.f32 %v44, 0.0
  %v61 = vmax.f32 %v45, 0.0
  %v62 = vmax.f32 %v46, 0.0
  %v63 = vmax.f32 %v47, 0.0
  %v64 = vmax.f32 %v48, 0.0
  %v65 = vmax.f32 %v49, 0.0
  %v66 = vmax.f32 %v50, 0.0
  %v67 = vmax.f32 %v51, 0.0
  %v68 = vmax.f32 %v52, 0.0
  %v69 = vmax.f32 %v53, 0.0
  %v70 = vmax.f32 %v54, 0.0
  %v71 = vmax.f32 %v55, 0.0
  %v72 = vpack.c.bf16 %v57, %v56
  %v73 = vpack.c.bf16 %v59, %v58
  %v74 = vpack.c.bf16 %v61, %v60
  %v75 = vpack.c.bf16 %v63, %v62
  %v76 = vpack.c.bf16 %v65, %v64
  %v77 = vpack.c.bf16 %v67, %v66
  %v78 = vpack.c.bf16 %v69, %v68
  %v79 = vpack.c.bf16 %v71, %v70
  %v80 = vld [vmem:[%s2] sm:$0xf]
  %v81 = vld [vmem:[%s2 + $0x4] sm:$0xf]
  %v82 = vld [vmem:[%s2 + $0x8] sm:$0xf]
  %v83 = vld [vmem:[%s2 + $0xc] sm:$0xf]
  %v84 = vld [vmem:[%s2 + $0x10] sm:$0xf]
  %v85 = vld [vmem:[%s2 + $0x14] sm:$0xf]
  %v86 = vld [vmem:[%s2 + $0x18] sm:$0xf]
  %v87 = vld [vmem:[%s2 + $0x1c] sm:$0xf]
  %v88 = vld [vmem:[%s1] sm:$0xf]
  %v89 = vld [vmem:[%s1 + $0x4] sm:$0xf]
  %v90 = vld [vmem:[%s1 + $0x8] sm:$0xf]
  %v91 = vld [vmem:[%s1 + $0xc] sm:$0xf]
  %v92 = vld [vmem:[%s1 + $0x10] sm:$0xf]
  %v93 = vld [vmem:[%s1 + $0x14] sm:$0xf]
  %v94 = vld [vmem:[%s1 + $0x18] sm:$0xf]
  %v95 = vld [vmem:[%s1 + $0x1c] sm:$0xf]
  %v96 = vld [vmem:[%s1 + $0x20] sm:$0xf]
  %v97 = vld [vmem:[%s1 + $0x24] sm:$0xf]
  %v98 = vld [vmem:[%s1 + $0x28] sm:$0xf]
  %v99 = vld [vmem:[%s1 + $0x2c] sm:$0xf]
  %v100 = vld [vmem:[%s1 + $0x30] sm:$0xf]
  %v101 = vld [vmem:[%s1 + $0x34] sm:$0xf]
  %v102 = vld [vmem:[%s1 + $0x38] sm:$0xf]
  %v103 = vld [vmem:[%s1 + $0x3c] sm:$0xf]
  %v104 = vunpack.c.l.bf16 %v88
  %v105 = vunpack.c.l.bf16 %v89
  %v106 = vunpack.c.l.bf16 %v90
  %v107 = vunpack.c.l.bf16 %v91
  %v108 = vunpack.c.l.bf16 %v92
  %v109 = vunpack.c.l.bf16 %v93
  %v110 = vunpack.c.l.bf16 %v94
  %v111 = vunpack.c.l.bf16 %v95
  %v112 = vunpack.c.l.bf16 %v96
  %v113 = vunpack.c.l.bf16 %v97
  %v114 = vunpack.c.l.bf16 %v98
  %v115 = vunpack.c.l.bf16 %v99
  %v116 = vunpack.c.l.bf16 %v100
  %v117 = vunpack.c.l.bf16 %v101
  %v118 = vunpack.c.l.bf16 %v102
  %v119 = vunpack.c.l.bf16 %v103
  %v120 = vmax.f32 %v104, 0.0
  %v121 = vmax.f32 %v105, 0.0
  %v122 = vmax.f32 %v106, 0.0
  %v123 = vmax.f32 %v107, 0.0
  %v124 = vmax.f32 %v108, 0.0
  %v125 = vmax.f32 %v109, 0.0
  %v126 = vmax.f32 %v110, 0.0
  %v127 = vmax.f32 %v111, 0.0
  %v128 = vmax.f32 %v112, 0.0
  %v129 = vmax.f32 %v113, 0.0
  %v130 = vmax.f32 %v114, 0.0
  %v131 = vmax.f32 %v115, 0.0
  %v132 = vmax.f32 %v116, 0.0
  %v133 = vmax.f32 %v117, 0.0
  %v134 = vmax.f32 %v118, 0.0
  %v135 = vmax.f32 %v119, 0.0
  %v136 = vpack.c.bf16 %v121, %v120
  %v137 = vpack.c.bf16 %v123, %v122
  %v138 = vpack.c.bf16 %v125, %v124
  %v139 = vpack.c.bf16 %v127, %v126
  %v140 = vpack.c.bf16 %v129, %v128
  %v141 = vpack.c.bf16 %v131, %v130
  %v142 = vpack.c.bf16 %v133, %v132
  %v143 = vpack.c.bf16 %v135, %v134
  %v144 = vld [vmem:[%s3] sm:$0xf]
  %v145 = vld [vmem:[%s3 + $0x4] sm:$0xf]
  %v146 = vld [vmem:[%s3 + $0x8] sm:$0xf]
  %v147 = vld [vmem:[%s3 + $0xc] sm:$0xf]
  %v148 = vld [vmem:[%s3 + $0x10] sm:$0xf]
  %v149 = vld [vmem:[%s3 + $0x14] sm:$0xf]
  %v150 = vld [vmem:[%s3 + $0x18] sm:$0xf]
  %v151 = vld [vmem:[%s3 + $0x1c] sm:$0xf]
  %v160 = vunpack.c.l.b16 %v144
  %v161 = vunpack.c.l.b16 %v145
  %v162 = vunpack.c.l.b16 %v146
  %v163 = vunpack.c.l.b16 %v147
  %v164 = vunpack.c.l.b16 %v148
  %v165 = vunpack.c.l.b16 %v149
  %v166 = vunpack.c.l.b16 %v150
  %v167 = vunpack.c.l.b16 %v151
  %v168 = vpack.c.b16 %v161, %v160
  %v169 = vpack.c.b16 %v163, %v162
  %v170 = vpack.c.b16 %v165, %v164
  %v171 = vpack.c.b16 %v167, %v166
  %vm176 = vcmask 523264
  %v178 = vsel %vm176, %v136, 0
  %v181 = vsel %vm176, %v137, 0
  %v184 = vsel %vm176, %v138, 0
  %v187 = vsel %vm176, %v139, 0
  %v190 = vsel %vm176, %v140, 0
  %v193 = vsel %vm176, %v141, 0
  %v196 = vsel %vm176, %v142, 0
  %v199 = vsel %vm176, %v143, 0
  %201 = vmatpush.bf16.msra.mxu0 0
  %202 = vmatpush.bf16.msra.mxu0 0
  %203 = vmatpush.bf16.msra.mxu0 0
  %204 = vmatpush.bf16.msra.mxu0 0
  %205 = vmatpush.bf16.msra.mxu0 %v171
  %206 = vmatpush.bf16.msra.mxu0 %v170
  %207 = vmatpush.bf16.msra.mxu0 %v169
  %208 = vmatpush.bf16.msra.mxu0 %v168
  %209 = vmatmul.bf16.gmra.mxu0 %v178
  %v210 = vpop.f32.mrf.mxu0
  %v211 = vadd.f32 0.0, %v210
  %v212 = vpop.f32.mrf.mxu0
  %v213 = vadd.f32 0.0, %v212
  %214 = vmatmul.bf16.gmra.mxu0 %v181
  %v215 = vpop.f32.mrf.mxu0
  %v216 = vadd.f32 0.0, %v215
  %v217 = vpop.f32.mrf.mxu0
  %v218 = vadd.f32 0.0, %v217
  %219 = vmatmul.bf16.gmra.mxu0 %v184
  %v220 = vpop.f32.mrf.mxu0
  %v221 = vadd.f32 0.0, %v220
  %v222 = vpop.f32.mrf.mxu0
  %v223 = vadd.f32 0.0, %v222
  %224 = vmatmul.bf16.gmra.mxu0 %v187
  %v225 = vpop.f32.mrf.mxu0
  %v226 = vadd.f32 0.0, %v225
  %v227 = vpop.f32.mrf.mxu0
  %v228 = vadd.f32 0.0, %v227
  %229 = vmatmul.bf16.gmra.mxu0 %v190
  %v230 = vpop.f32.mrf.mxu0
  %v231 = vadd.f32 0.0, %v230
  %v232 = vpop.f32.mrf.mxu0
  %v233 = vadd.f32 0.0, %v232
  %234 = vmatmul.bf16.gmra.mxu0 %v193
  %v235 = vpop.f32.mrf.mxu0
  %v236 = vadd.f32 0.0, %v235
  %v237 = vpop.f32.mrf.mxu0
  %v238 = vadd.f32 0.0, %v237
  %239 = vmatmul.bf16.gmra.mxu0 %v196
  %v240 = vpop.f32.mrf.mxu0
  %v241 = vadd.f32 0.0, %v240
  %v242 = vpop.f32.mrf.mxu0
  %v243 = vadd.f32 0.0, %v242
  %244 = vmatmul.bf16.gmra.mxu0 %v199
  %v245 = vpop.f32.mrf.mxu0
  %v246 = vadd.f32 0.0, %v245
  %v247 = vpop.f32.mrf.mxu0
  %v248 = vadd.f32 0.0, %v247
  %249 = vdwg.mxu0
  %v258 = vunpack.c.l.b16 %v80
  %v259 = vunpack.c.l.b16 %v81
  %v260 = vunpack.c.l.b16 %v82
  %v261 = vunpack.c.l.b16 %v83
  %v262 = vunpack.c.l.b16 %v84
  %v263 = vunpack.c.l.b16 %v85
  %v264 = vunpack.c.l.b16 %v86
  %v265 = vunpack.c.l.b16 %v87
  %v266 = vpack.c.b16 %v259, %v258
  %v267 = vpack.c.b16 %v261, %v260
  %v268 = vpack.c.b16 %v263, %v262
  %v269 = vpack.c.b16 %v265, %v264
  %v275 = vsel %vm176, %v72, 0
  %v278 = vsel %vm176, %v73, 0
  %v281 = vsel %vm176, %v74, 0
  %v284 = vsel %vm176, %v75, 0
  %v287 = vsel %vm176, %v76, 0
  %v290 = vsel %vm176, %v77, 0
  %v293 = vsel %vm176, %v78, 0
  %v296 = vsel %vm176, %v79, 0
  %298 = vmatpush.bf16.msra.mxu0 0
  %299 = vmatpush.bf16.msra.mxu0 0
  %300 = vmatpush.bf16.msra.mxu0 0
  %301 = vmatpush.bf16.msra.mxu0 0
  %302 = vmatpush.bf16.msra.mxu0 %v269
  %303 = vmatpush.bf16.msra.mxu0 %v268
  %304 = vmatpush.bf16.msra.mxu0 %v267
  %305 = vmatpush.bf16.msra.mxu0 %v266
  %306 = vmatmul.bf16.gmra.mxu0 %v275
  %v307 = vpop.f32.mrf.mxu0
  %v308 = vadd.f32 %v211, %v307
  %v309 = vpop.f32.mrf.mxu0
  %v310 = vadd.f32 %v213, %v309
  %311 = vmatmul.bf16.gmra.mxu0 %v278
  %v312 = vpop.f32.mrf.mxu0
  %v313 = vadd.f32 %v216, %v312
  %v314 = vpop.f32.mrf.mxu0
  %v315 = vadd.f32 %v218, %v314
  %316 = vmatmul.bf16.gmra.mxu0 %v281
  %v317 = vpop.f32.mrf.mxu0
  %v318 = vadd.f32 %v221, %v317
  %v319 = vpop.f32.mrf.mxu0
  %v320 = vadd.f32 %v223, %v319
  %321 = vmatmul.bf16.gmra.mxu0 %v284
  %v322 = vpop.f32.mrf.mxu0
  %v323 = vadd.f32 %v226, %v322
  %v324 = vpop.f32.mrf.mxu0
  %v325 = vadd.f32 %v228, %v324
  %326 = vmatmul.bf16.gmra.mxu0 %v287
  %v327 = vpop.f32.mrf.mxu0
  %v328 = vadd.f32 %v231, %v327
  %v329 = vpop.f32.mrf.mxu0
  %v330 = vadd.f32 %v233, %v329
  %331 = vmatmul.bf16.gmra.mxu0 %v290
  %v332 = vpop.f32.mrf.mxu0
  %v333 = vadd.f32 %v236, %v332
  %v334 = vpop.f32.mrf.mxu0
  %v335 = vadd.f32 %v238, %v334
  %336 = vmatmul.bf16.gmra.mxu0 %v293
  %v337 = vpop.f32.mrf.mxu0
  %v338 = vadd.f32 %v241, %v337
  %v339 = vpop.f32.mrf.mxu0
  %v340 = vadd.f32 %v243, %v339
  %341 = vmatmul.bf16.gmra.mxu0 %v296
  %v342 = vpop.f32.mrf.mxu0
  %v343 = vadd.f32 %v246, %v342
  %v344 = vpop.f32.mrf.mxu0
  %v345 = vadd.f32 %v248, %v344
  %346 = vdwg.mxu0
  %p347 = scmp.eq.s32.totalorder 0, 0
  // Predicated region
  $region22: #{_lambda_.55} parent=0 // pred_check
    %p348 = pneg %p347
  $region23: #{_lambda_.55} parent=0 // pred_check_branch
    %350 = sbr.rel (%p348) target = $region25
  $region24: #{_lambda_.55} parent=0 // pred_region
    %351 = vst [vmem:[%s6] sm:$0x1] 0.0
    %352 = vst [vmem:[%s7] sm:$0x1] 0.0
  $region25: #{_lambda_.55} parent=0 // pred_fallthru
    _
  %v353 = vlaneseq
  %v354 = vshrl.u32 %v353, 7
  %v355 = vadd.s32 %v354, 8
  %v356 = vadd.s32 %v354, 16
  %v357 = vadd.s32 %v354, 24
  %v358 = vadd.s32 %v354, 32
  %v359 = vadd.s32 %v354, 40
  %v360 = vadd.s32 %v354, 48
  %v361 = vadd.s32 %v354, 56
  %v362 = vadd.s32 %v354, 64
  %v363 = vadd.s32 %v354, 72
  %v364 = vadd.s32 %v354, 80
  %v365 = vadd.s32 %v354, 88
  %v366 = vadd.s32 %v354, 96
  %v367 = vadd.s32 %v354, 104
  %v368 = vadd.s32 %v354, 112
  %v369 = vadd.s32 %v354, 120
  %s370 = smul.u32 0, 128
  %v371 = vstv %s370
  %v372 = vadd.s32 %v354, %v371
  %v373 = vadd.s32 %v355, %v371
  %v374 = vadd.s32 %v356, %v371
  %v375 = vadd.s32 %v357, %v371
  %v376 = vadd.s32 %v358, %v371
  %v377 = vadd.s32 %v359, %v371
  %v378 = vadd.s32 %v360, %v371
  %v379 = vadd.s32 %v361, %v371
  %v380 = vadd.s32 %v362, %v371
  %v381 = vadd.s32 %v363, %v371
  %v382 = vadd.s32 %v364, %v371
  %v383 = vadd.s32 %v365, %v371
  %v384 = vadd.s32 %v366, %v371
  %v385 = vadd.s32 %v367, %v371
  %v386 = vadd.s32 %v368, %v371
  %v387 = vadd.s32 %v369, %v371
  %vm388 = vcmp.lt.s32.totalorder %v372, 128
  %vm389 = vcmp.lt.s32.totalorder %v373, 128
  %vm390 = vcmp.lt.s32.totalorder %v374, 128
  %vm391 = vcmp.lt.s32.totalorder %v375, 128
  %vm392 = vcmp.lt.s32.totalorder %v376, 128
  %vm393 = vcmp.lt.s32.totalorder %v377, 128
  %vm394 = vcmp.lt.s32.totalorder %v378, 128
  %vm395 = vcmp.lt.s32.totalorder %v379, 128
  %vm396 = vcmp.lt.s32.totalorder %v380, 128
  %vm397 = vcmp.lt.s32.totalorder %v381, 128
  %vm398 = vcmp.lt.s32.totalorder %v382, 128
  %vm399 = vcmp.lt.s32.totalorder %v383, 128
  %vm400 = vcmp.lt.s32.totalorder %v384, 128
  %vm401 = vcmp.lt.s32.totalorder %v385, 128
  %vm402 = vcmp.lt.s32.totalorder %v386, 128
  %vm403 = vcmp.lt.s32.totalorder %v387, 128
  %v404 = vsel %vm388, %v308, 0.0
  %v405 = vsel %vm389, %v310, 0.0
  %v406 = vsel %vm390, %v313, 0.0
  %v407 = vsel %vm391, %v315, 0.0
  %v408 = vsel %vm392, %v318, 0.0
  %v409 = vsel %vm393, %v320, 0.0
  %v410 = vsel %vm394, %v323, 0.0
  %v411 = vsel %vm395, %v325, 0.0
  %v412 = vsel %vm396, %v328, 0.0
  %v413 = vsel %vm397, %v330, 0.0
  %v414 = vsel %vm398, %v333, 0.0
  %v415 = vsel %vm399, %v335, 0.0
  %v416 = vsel %vm400, %v338, 0.0
  %v417 = vsel %vm401, %v340, 0.0
  %v418 = vsel %vm402, %v343, 0.0
  %v419 = vsel %vm403, %v345, 0.0
  %v420 = vld [vmem:[%s6] sm:$0x1]
  %v421 = vadd.f32 %v404, %v405
  %v422 = vadd.f32 %v421, %v406
  %v423 = vadd.f32 %v422, %v407
  %v424 = vadd.f32 %v423, %v408
  %v425 = vadd.f32 %v424, %v409
  %v426 = vadd.f32 %v425, %v410
  %v427 = vadd.f32 %v426, %v411
  %v428 = vadd.f32 %v427, %v412
  %v429 = vadd.f32 %v428, %v413
  %v430 = vadd.f32 %v429, %v414
  %v431 = vadd.f32 %v430, %v415
  %v432 = vadd.f32 %v431, %v416
  %v433 = vadd.f32 %v432, %v417
  %v434 = vadd.f32 %v433, %v418
  %v435 = vadd.f32 %v434, %v419
  %v436 = vrot.slane %v435, 4
  %v437 = vadd.f32 %v435, %v436
  %v438 = vrot.slane %v437, 2
  %v439 = vadd.f32 %v437, %v438
  %v440 = vrot.slane %v439, 1
  %v441 = vadd.f32 %v439, %v440
  %v442 = vadd.f32 %v420, %v441
  %443 = vst [vmem:[%s6] sm:$0x1] %v442
  %v444 = vld [vmem:[%s7] sm:$0x1]
  %v445 = vmul.f32 %v404, %v404
  %v446 = vmul.f32 %v405, %v405
  %v447 = vmul.f32 %v406, %v406
  %v448 = vmul.f32 %v407, %v407
  %v449 = vmul.f32 %v408, %v408
  %v450 = vmul.f32 %v409, %v409
  %v451 = vmul.f32 %v410, %v410
  %v452 = vmul.f32 %v411, %v411
  %v453 = vmul.f32 %v412, %v412
  %v454 = vmul.f32 %v413, %v413
  %v455 = vmul.f32 %v414, %v414
  %v456 = vmul.f32 %v415, %v415
  %v457 = vmul.f32 %v416, %v416
  %v458 = vmul.f32 %v417, %v417
  %v459 = vmul.f32 %v418, %v418
  %v460 = vmul.f32 %v419, %v419
  %v461 = vadd.f32 %v445, %v446
  %v462 = vadd.f32 %v461, %v447
  %v463 = vadd.f32 %v462, %v448
  %v464 = vadd.f32 %v463, %v449
  %v465 = vadd.f32 %v464, %v450
  %v466 = vadd.f32 %v465, %v451
  %v467 = vadd.f32 %v466, %v452
  %v468 = vadd.f32 %v467, %v453
  %v469 = vadd.f32 %v468, %v454
  %v470 = vadd.f32 %v469, %v455
  %v471 = vadd.f32 %v470, %v456
  %v472 = vadd.f32 %v471, %v457
  %v473 = vadd.f32 %v472, %v458
  %v474 = vadd.f32 %v473, %v459
  %v475 = vadd.f32 %v474, %v460
  %v476 = vrot.slane %v475, 4
  %v477 = vadd.f32 %v475, %v476
  %v478 = vrot.slane %v477, 2
  %v479 = vadd.f32 %v477, %v478
  %v480 = vrot.slane %v479, 1
  %v481 = vadd.f32 %v479, %v480
  %v482 = vadd.f32 %v444, %v481
  %483 = vst [vmem:[%s7] sm:$0x1] %v482
  %v484 = vpack.c.bf16 %v308, %v308
  %v485 = vpack.c.bf16 %v310, %v310
  %v486 = vpack.c.bf16 %v313, %v313
  %v487 = vpack.c.bf16 %v315, %v315
  %v488 = vpack.c.bf16 %v318, %v318
  %v489 = vpack.c.bf16 %v320, %v320
  %v490 = vpack.c.bf16 %v323, %v323
  %v491 = vpack.c.bf16 %v325, %v325
  %v492 = vpack.c.bf16 %v328, %v328
  %v493 = vpack.c.bf16 %v330, %v330
  %v494 = vpack.c.bf16 %v333, %v333
  %v495 = vpack.c.bf16 %v335, %v335
  %v496 = vpack.c.bf16 %v338, %v338
  %v497 = vpack.c.bf16 %v340, %v340
  %v498 = vpack.c.bf16 %v343, %v343
  %v499 = vpack.c.bf16 %v345, %v345
  %500 = vst [vmem:[%s5] sm:$0xf] %v484
  %501 = vst [vmem:[%s5 + $0x4] sm:$0xf] %v485
  %502 = vst [vmem:[%s5 + $0x8] sm:$0xf] %v486
  %503 = vst [vmem:[%s5 + $0xc] sm:$0xf] %v487
  %504 = vst [vmem:[%s5 + $0x10] sm:$0xf] %v488
  %505 = vst [vmem:[%s5 + $0x14] sm:$0xf] %v489
  %506 = vst [vmem:[%s5 + $0x18] sm:$0xf] %v490
  %507 = vst [vmem:[%s5 + $0x1c] sm:$0xf] %v491
  %508 = vst [vmem:[%s5 + $0x20] sm:$0xf] %v492
  %509 = vst [vmem:[%s5 + $0x24] sm:$0xf] %v493
  %510 = vst [vmem:[%s5 + $0x28] sm:$0xf] %v494
  %511 = vst [vmem:[%s5 + $0x2c] sm:$0xf] %v495
  %512 = vst [vmem:[%s5 + $0x30] sm:$0xf] %v496
  %513 = vst [vmem:[%s5 + $0x34] sm:$0xf] %v497
  %514 = vst [vmem:[%s5 + $0x38] sm:$0xf] %v498
  %515 = vst [vmem:[%s5 + $0x3c] sm:$0xf] %v499
  // Predicated region
  $region26: #{_lambda_.55} parent=0 // pred_check
    _
  $region27: #{_lambda_.55} parent=0 // pred_check_branch
    %517 = sbr.rel (0) target = $region29
  $region28: #{_lambda_.55} parent=0 // pred_region
    _
  $region29: #{_lambda_.55} parent=0 // pred_fallthru
    _
  // Predicated region
  $region30: #{_lambda_.55} parent=0 // pred_check
    _
  $region31: #{_lambda_.55} parent=0 // pred_check_branch
    %519 = sbr.rel (0) target = $region33
  $region32: #{_lambda_.55} parent=0 // pred_region
    _
  $region33: #{_lambda_.55} parent=0 // pred_fallthru
    _
  // Predicated region
  $region34: #{_lambda_.55} parent=0 // pred_check
    _
  $region35: #{_lambda_.55} parent=0 // pred_check_branch
    %521 = sbr.rel (0) target = $region37
  $region36: #{_lambda_.55} parent=0 // pred_region
    _
  $region37: #{_lambda_.55} parent=0 // pred_fallthru
    _
  // Predicated region
  $region38: #{_lambda_.55} parent=0 // pred_check
    _
  $region39: #{_lambda_.55} parent=0 // pred_check_branch
    %523 = sbr.rel (0) target = $region41
  $region40: #{_lambda_.55} parent=0 // pred_region
    _
  $region41: #{_lambda_.55} parent=0 // pred_fallthru
    _
  // Predicated region
  $region42: #{_lambda_.55} parent=0 // pred_check
    _
  $region43: #{_lambda_.55} parent=0 // pred_check_branch
    %525 = sbr.rel (0) target = $region45
  $region44: #{_lambda_.55} parent=0 // pred_region
    _
  $region45: #{_lambda_.55} parent=0 // pred_fallthru
    _
  // Predicated region
  $region46: #{_lambda_.55} parent=0 // pred_check
    _
  $region47: #{_lambda_.55} parent=0 // pred_check_branch
    %527 = sbr.rel (0) target = $region49
  $region48: #{_lambda_.55} parent=0 // pred_region
    _
  $region49: #{_lambda_.55} parent=0 // pred_fallthru
    _

// kernel: _lambda_.59
$region0: #{_lambda_.59}
  #allocation0 [shape = 'u32[]', space=smem, size = 0x4, offset = 0x4, fixed_abs, tag = 'smem constant byte address 0x4 - core index']
  #allocation1 [shape = 'u32[72,128]{1,0:T(1,128)}', space=vmem, size = 0x9000, scoped, tag = 'internal scratch']
  %s0 = inlined_call_operand.vmem [shape: bf16[512,128], index: 0, kind: input, shape index: {}]
  %s1 = inlined_call_operand.vmem [shape: f32[1,128], index: 1, kind: input, shape index: {}]
  %s2 = inlined_call_operand.vmem [shape: f32[1,128], index: 2, kind: input, shape index: {}]
  %s3 = inlined_call_operand.vmem [shape: bf16[512,128], index: 3, kind: output, shape index: {}]
  %s4 = sld [smem:[#allocation0]]
  $region22: #{_lambda_.59} parent=0
    _
  %s6 = ssub.s32 1, %s4
  %s7 = scalar_select 0, %s6, %s4
  // Predicated region
  $region2: #{_lambda_.59} parent=0 // pred_check
    _
  $region3: #{_lambda_.59} parent=0 // pred_check_branch
    %9 = sbr.rel (0) target = $region5
  $region4: #{_lambda_.59} parent=0 // pred_region
    _
  $region5: #{_lambda_.59} parent=0 // pred_fallthru
    _
  // Predicated region
  $region6: #{_lambda_.59} parent=0 // pred_check
    _
  $region7: #{_lambda_.59} parent=0 // pred_check_branch
    %11 = sbr.rel (0) target = $region9
  $region8: #{_lambda_.59} parent=0 // pred_region
    _
  $region9: #{_lambda_.59} parent=0 // pred_fallthru
    _
  // Predicated region
  $region10: #{_lambda_.59} parent=0 // pred_check
    _
  $region11: #{_lambda_.59} parent=0 // pred_check_branch
    %13 = sbr.rel (0) target = $region13
  $region12: #{_lambda_.59} parent=0 // pred_region
    _
  $region13: #{_lambda_.59} parent=0 // pred_fallthru
    _
  %v14 = vld [vmem:[%s0] sm:$0xf]
  %v15 = vld [vmem:[%s0 + $0x4] sm:$0xf]
  %v16 = vld [vmem:[%s0 + $0x8] sm:$0xf]
  %v17 = vld [vmem:[%s0 + $0xc] sm:$0xf]
  %v18 = vld [vmem:[%s0 + $0x10] sm:$0xf]
  %v19 = vld [vmem:[%s0 + $0x14] sm:$0xf]
  %v20 = vld [vmem:[%s0 + $0x18] sm:$0xf]
  %v21 = vld [vmem:[%s0 + $0x1c] sm:$0xf]
  %v22 = vld [vmem:[%s0 + $0x20] sm:$0xf]
  %v23 = vld [vmem:[%s0 + $0x24] sm:$0xf]
  %v24 = vld [vmem:[%s0 + $0x28] sm:$0xf]
  %v25 = vld [vmem:[%s0 + $0x2c] sm:$0xf]
  %v26 = vld [vmem:[%s0 + $0x30] sm:$0xf]
  %v27 = vld [vmem:[%s0 + $0x34] sm:$0xf]
  %v28 = vld [vmem:[%s0 + $0x38] sm:$0xf]
  %v29 = vld [vmem:[%s0 + $0x3c] sm:$0xf]
  %v30 = vld [vmem:[%s0 + $0x40] sm:$0xf]
  %v31 = vld [vmem:[%s0 + $0x44] sm:$0xf]
  %v32 = vld [vmem:[%s0 + $0x48] sm:$0xf]
  %v33 = vld [vmem:[%s0 + $0x4c] sm:$0xf]
  %v34 = vld [vmem:[%s0 + $0x50] sm:$0xf]
  %v35 = vld [vmem:[%s0 + $0x54] sm:$0xf]
  %v36 = vld [vmem:[%s0 + $0x58] sm:$0xf]
  %v37 = vld [vmem:[%s0 + $0x5c] sm:$0xf]
  %v38 = vld [vmem:[%s0 + $0x60] sm:$0xf]
  %v39 = vld [vmem:[%s0 + $0x64] sm:$0xf]
  %v40 = vld [vmem:[%s0 + $0x68] sm:$0xf]
  %v41 = vld [vmem:[%s0 + $0x6c] sm:$0xf]
  %v42 = vld [vmem:[%s0 + $0x70] sm:$0xf]
  %v43 = vld [vmem:[%s0 + $0x74] sm:$0xf]
  %v44 = vld [vmem:[%s0 + $0x78] sm:$0xf]
  %v45 = vld [vmem:[%s0 + $0x7c] sm:$0xf]
  %v46 = vld [vmem:[%s0 + $0x80] sm:$0xf]
  %v47 = vld [vmem:[%s0 + $0x84] sm:$0xf]
  %v48 = vld [vmem:[%s0 + $0x88] sm:$0xf]
  %v49 = vld [vmem:[%s0 + $0x8c] sm:$0xf]
  %v50 = vld [vmem:[%s0 + $0x90] sm:$0xf]
  %v51 = vld [vmem:[%s0 + $0x94] sm:$0xf]
  %v52 = vld [vmem:[%s0 + $0x98] sm:$0xf]
  %v53 = vld [vmem:[%s0 + $0x9c] sm:$0xf]
  %v54 = vld [vmem:[%s0 + $0xa0] sm:$0xf]
  %v55 = vld [vmem:[%s0 + $0xa4] sm:$0xf]
  %v56 = vld [vmem:[%s0 + $0xa8] sm:$0xf]
  %v57 = vld [vmem:[%s0 + $0xac] sm:$0xf]
  %v58 = vld [vmem:[%s0 + $0xb0] sm:$0xf]
  %v59 = vld [vmem:[%s0 + $0xb4] sm:$0xf]
  %v60 = vld [vmem:[%s0 + $0xb8] sm:$0xf]
  %v61 = vld [vmem:[%s0 + $0xbc] sm:$0xf]
  %v62 = vld [vmem:[%s0 + $0xc0] sm:$0xf]
  %v63 = vld [vmem:[%s0 + $0xc4] sm:$0xf]
  %v64 = vld [vmem:[%s0 + $0xc8] sm:$0xf]
  %v65 = vld [vmem:[%s0 + $0xcc] sm:$0xf]
  %v66 = vld [vmem:[%s0 + $0xd0] sm:$0xf]
  %v67 = vld [vmem:[%s0 + $0xd4] sm:$0xf]
  %v68 = vld [vmem:[%s0 + $0xd8] sm:$0xf]
  %v69 = vld [vmem:[%s0 + $0xdc] sm:$0xf]
  %v70 = vld [vmem:[%s0 + $0xe0] sm:$0xf]
  %v71 = vld [vmem:[%s0 + $0xe4] sm:$0xf]
  %v72 = vld [vmem:[%s0 + $0xe8] sm:$0xf]
  %v73 = vld [vmem:[%s0 + $0xec] sm:$0xf]
  %v74 = vld [vmem:[%s0 + $0xf0] sm:$0xf]
  %v75 = vld [vmem:[%s0 + $0xf4] sm:$0xf]
  %v76 = vld [vmem:[%s0 + $0xf8] sm:$0xf]
  %v77 = vld [vmem:[%s0 + $0xfc] sm:$0xf]
  %v78 = vunpack.c.l.bf16 %v14
  %v79 = vunpack.c.l.bf16 %v15
  %v80 = vunpack.c.l.bf16 %v16
  %v81 = vunpack.c.l.bf16 %v17
  %v82 = vunpack.c.l.bf16 %v18
  %v83 = vunpack.c.l.bf16 %v19
  %v84 = vunpack.c.l.bf16 %v20
  %v85 = vunpack.c.l.bf16 %v21
  %v86 = vunpack.c.l.bf16 %v22
  %v87 = vunpack.c.l.bf16 %v23
  %v88 = vunpack.c.l.bf16 %v24
  %v89 = vunpack.c.l.bf16 %v25
  %v90 = vunpack.c.l.bf16 %v26
  %v91 = vunpack.c.l.bf16 %v27
  %v92 = vunpack.c.l.bf16 %v28
  %v93 = vunpack.c.l.bf16 %v29
  %v94 = vunpack.c.l.bf16 %v30
  %v95 = vunpack.c.l.bf16 %v31
  %v96 = vunpack.c.l.bf16 %v32
  %v97 = vunpack.c.l.bf16 %v33
  %v98 = vunpack.c.l.bf16 %v34
  %v99 = vunpack.c.l.bf16 %v35
  %v100 = vunpack.c.l.bf16 %v36
  %v101 = vunpack.c.l.bf16 %v37
  %v102 = vunpack.c.l.bf16 %v38
  %v103 = vunpack.c.l.bf16 %v39
  %v104 = vunpack.c.l.bf16 %v40
  %v105 = vunpack.c.l.bf16 %v41
  %v106 = vunpack.c.l.bf16 %v42
  %v107 = vunpack.c.l.bf16 %v43
  %v108 = vunpack.c.l.bf16 %v44
  %v109 = vunpack.c.l.bf16 %v45
  %v110 = vunpack.c.l.bf16 %v46
  %v111 = vunpack.c.l.bf16 %v47
  %v112 = vunpack.c.l.bf16 %v48
  %v113 = vunpack.c.l.bf16 %v49
  %v114 = vunpack.c.l.bf16 %v50
  %v115 = vunpack.c.l.bf16 %v51
  %v116 = vunpack.c.l.bf16 %v52
  %v117 = vunpack.c.l.bf16 %v53
  %v118 = vunpack.c.l.bf16 %v54
  %v119 = vunpack.c.l.bf16 %v55
  %v120 = vunpack.c.l.bf16 %v56
  %v121 = vunpack.c.l.bf16 %v57
  %v122 = vunpack.c.l.bf16 %v58
  %v123 = vunpack.c.l.bf16 %v59
  %v124 = vunpack.c.l.bf16 %v60
  %v125 = vunpack.c.l.bf16 %v61
  %v126 = vunpack.c.l.bf16 %v62
  %v127 = vunpack.c.l.bf16 %v63
  %v128 = vunpack.c.l.bf16 %v64
  %v129 = vunpack.c.l.bf16 %v65
  %v130 = vunpack.c.l.bf16 %v66
  %v131 = vunpack.c.l.bf16 %v67
  %v132 = vunpack.c.l.bf16 %v68
  %v133 = vunpack.c.l.bf16 %v69
  %v134 = vunpack.c.l.bf16 %v70
  %v135 = vunpack.c.l.bf16 %v71
  %v136 = vunpack.c.l.bf16 %v72
  %v137 = vunpack.c.l.bf16 %v73
  %v138 = vunpack.c.l.bf16 %v74
  %v139 = vunpack.c.l.bf16 %v75
  %v140 = vunpack.c.l.bf16 %v76
  %v141 = vunpack.c.l.bf16 %v77
  %v142 = vld [vmem:[%s1] sm:$0x1]
  %v144 = vperm.slane %v142, 0
  %v146 = vmul.f32 %v78, %v144
  %v147 = vmul.f32 %v79, %v144
  %v148 = vmul.f32 %v80, %v144
  %v149 = vmul.f32 %v81, %v144
  %v150 = vmul.f32 %v82, %v144
  %v151 = vmul.f32 %v83, %v144
  %v152 = vmul.f32 %v84, %v144
  %v153 = vmul.f32 %v85, %v144
  %v154 = vmul.f32 %v86, %v144
  %v155 = vmul.f32 %v87, %v144
  %v156 = vmul.f32 %v88, %v144
  %v157 = vmul.f32 %v89, %v144
  %v158 = vmul.f32 %v90, %v144
  %v159 = vmul.f32 %v91, %v144
  %v160 = vmul.f32 %v92, %v144
  %v161 = vmul.f32 %v93, %v144
  %v162 = vmul.f32 %v94, %v144
  %v163 = vmul.f32 %v95, %v144
  %v164 = vmul.f32 %v96, %v144
  %v165 = vmul.f32 %v97, %v144
  %v166 = vmul.f32 %v98, %v144
  %v167 = vmul.f32 %v99, %v144
  %v168 = vmul.f32 %v100, %v144
  %v169 = vmul.f32 %v101, %v144
  %v170 = vmul.f32 %v102, %v144
  %v171 = vmul.f32 %v103, %v144
  %v172 = vmul.f32 %v104, %v144
  %v173 = vmul.f32 %v105, %v144
  %v174 = vmul.f32 %v106, %v144
  %v175 = vmul.f32 %v107, %v144
  %v176 = vmul.f32 %v108, %v144
  %v177 = vmul.f32 %v109, %v144
  %v178 = vmul.f32 %v110, %v144
  %v179 = vmul.f32 %v111, %v144
  %v180 = vmul.f32 %v112, %v144
  %v181 = vmul.f32 %v113, %v144
  %v182 = vmul.f32 %v114, %v144
  %v183 = vmul.f32 %v115, %v144
  %v184 = vmul.f32 %v116, %v144
  %v185 = vmul.f32 %v117, %v144
  %v186 = vmul.f32 %v118, %v144
  %v187 = vmul.f32 %v119, %v144
  %v188 = vmul.f32 %v120, %v144
  %v189 = vmul.f32 %v121, %v144
  %v190 = vmul.f32 %v122, %v144
  %v191 = vmul.f32 %v123, %v144
  %v192 = vmul.f32 %v124, %v144
  %v193 = vmul.f32 %v125, %v144
  %v194 = vmul.f32 %v126, %v144
  %v195 = vmul.f32 %v127, %v144
  %v196 = vmul.f32 %v128, %v144
  %v197 = vmul.f32 %v129, %v144
  %v198 = vmul.f32 %v130, %v144
  %v199 = vmul.f32 %v131, %v144
  %v200 = vmul.f32 %v132, %v144
  %v201 = vmul.f32 %v133, %v144
  %v202 = vmul.f32 %v134, %v144
  %v203 = vmul.f32 %v135, %v144
  %v204 = vmul.f32 %v136, %v144
  %v205 = vmul.f32 %v137, %v144
  %v206 = vmul.f32 %v138, %v144
  %v207 = vmul.f32 %v139, %v144
  %v208 = vmul.f32 %v140, %v144
  %v209 = vmul.f32 %v141, %v144
  %v210 = vld [vmem:[%s2] sm:$0x1]
  %v212 = vperm.slane %v210, 0
  %v214 = vadd.f32 %v146, %v212
  %v215 = vadd.f32 %v147, %v212
  %v216 = vadd.f32 %v148, %v212
  %v217 = vadd.f32 %v149, %v212
  %v218 = vadd.f32 %v150, %v212
  %v219 = vadd.f32 %v151, %v212
  %v220 = vadd.f32 %v152, %v212
  %v221 = vadd.f32 %v153, %v212
  %v222 = vadd.f32 %v154, %v212
  %v223 = vadd.f32 %v155, %v212
  %v224 = vadd.f32 %v156, %v212
  %v225 = vadd.f32 %v157, %v212
  %v226 = vadd.f32 %v158, %v212
  %v227 = vadd.f32 %v159, %v212
  %v228 = vadd.f32 %v160, %v212
  %v229 = vadd.f32 %v161, %v212
  %v230 = vadd.f32 %v162, %v212
  %v231 = vadd.f32 %v163, %v212
  %v232 = vadd.f32 %v164, %v212
  %v233 = vadd.f32 %v165, %v212
  %v234 = vadd.f32 %v166, %v212
  %v235 = vadd.f32 %v167, %v212
  %v236 = vadd.f32 %v168, %v212
  %v237 = vadd.f32 %v169, %v212
  %v238 = vadd.f32 %v170, %v212
  %v239 = vadd.f32 %v171, %v212
  %v240 = vadd.f32 %v172, %v212
  %v241 = vadd.f32 %v173, %v212
  %v242 = vadd.f32 %v174, %v212
  %v243 = vadd.f32 %v175, %v212
  %v244 = vadd.f32 %v176, %v212
  %v245 = vadd.f32 %v177, %v212
  %v246 = vadd.f32 %v178, %v212
  %v247 = vadd.f32 %v179, %v212
  %v248 = vadd.f32 %v180, %v212
  %v249 = vadd.f32 %v181, %v212
  %v250 = vadd.f32 %v182, %v212
  %v251 = vadd.f32 %v183, %v212
  %v252 = vadd.f32 %v184, %v212
  %v253 = vadd.f32 %v185, %v212
  %v254 = vadd.f32 %v186, %v212
  %v255 = vadd.f32 %v187, %v212
  %v256 = vadd.f32 %v188, %v212
  %v257 = vadd.f32 %v189, %v212
  %v258 = vadd.f32 %v190, %v212
  %v259 = vadd.f32 %v191, %v212
  %v260 = vadd.f32 %v192, %v212
  %v261 = vadd.f32 %v193, %v212
  %v262 = vadd.f32 %v194, %v212
  %v263 = vadd.f32 %v195, %v212
  %v264 = vadd.f32 %v196, %v212
  %v265 = vadd.f32 %v197, %v212
  %v266 = vadd.f32 %v198, %v212
  %v267 = vadd.f32 %v199, %v212
  %v268 = vadd.f32 %v200, %v212
  %v269 = vadd.f32 %v201, %v212
  %v270 = vadd.f32 %v202, %v212
  %v271 = vadd.f32 %v203, %v212
  %v272 = vadd.f32 %v204, %v212
  %v273 = vadd.f32 %v205, %v212
  %v274 = vadd.f32 %v206, %v212
  %v275 = vadd.f32 %v207, %v212
  %v276 = vadd.f32 %v208, %v212
  %v277 = vadd.f32 %v209, %v212
  %v278 = vpack.c.bf16 %v214, %v214
  %v279 = vpack.c.bf16 %v215, %v215
  %v280 = vpack.c.bf16 %v216, %v216
  %v281 = vpack.c.bf16 %v217, %v217
  %v282 = vpack.c.bf16 %v218, %v218
  %v283 = vpack.c.bf16 %v219, %v219
  %v284 = vpack.c.bf16 %v220, %v220
  %v285 = vpack.c.bf16 %v221, %v221
  %v286 = vpack.c.bf16 %v222, %v222
  %v287 = vpack.c.bf16 %v223, %v223
  %v288 = vpack.c.bf16 %v224, %v224
  %v289 = vpack.c.bf16 %v225, %v225
  %v290 = vpack.c.bf16 %v226, %v226
  %v291 = vpack.c.bf16 %v227, %v227
  %v292 = vpack.c.bf16 %v228, %v228
  %v293 = vpack.c.bf16 %v229, %v229
  %v294 = vpack.c.bf16 %v230, %v230
  %v295 = vpack.c.bf16 %v231, %v231
  %v296 = vpack.c.bf16 %v232, %v232
  %v297 = vpack.c.bf16 %v233, %v233
  %v298 = vpack.c.bf16 %v234, %v234
  %v299 = vpack.c.bf16 %v235, %v235
  %v300 = vpack.c.bf16 %v236, %v236
  %v301 = vpack.c.bf16 %v237, %v237
  %v302 = vpack.c.bf16 %v238, %v238
  %v303 = vpack.c.bf16 %v239, %v239
  %v304 = vpack.c.bf16 %v240, %v240
  %v305 = vpack.c.bf16 %v241, %v241
  %v306 = vpack.c.bf16 %v242, %v242
  %v307 = vpack.c.bf16 %v243, %v243
  %v308 = vpack.c.bf16 %v244, %v244
  %v309 = vpack.c.bf16 %v245, %v245
  %v310 = vpack.c.bf16 %v246, %v246
  %v311 = vpack.c.bf16 %v247, %v247
  %v312 = vpack.c.bf16 %v248, %v248
  %v313 = vpack.c.bf16 %v249, %v249
  %v314 = vpack.c.bf16 %v250, %v250
  %v315 = vpack.c.bf16 %v251, %v251
  %v316 = vpack.c.bf16 %v252, %v252
  %v317 = vpack.c.bf16 %v253, %v253
  %v318 = vpack.c.bf16 %v254, %v254
  %v319 = vpack.c.bf16 %v255, %v255
  %v320 = vpack.c.bf16 %v256, %v256
  %v321 = vpack.c.bf16 %v257, %v257
  %v322 = vpack.c.bf16 %v258, %v258
  %v323 = vpack.c.bf16 %v259, %v259
  %v324 = vpack.c.bf16 %v260, %v260
  %v325 = vpack.c.bf16 %v261, %v261
  %v326 = vpack.c.bf16 %v262, %v262
  %v327 = vpack.c.bf16 %v263, %v263
  %v328 = vpack.c.bf16 %v264, %v264
  %v329 = vpack.c.bf16 %v265, %v265
  %v330 = vpack.c.bf16 %v266, %v266
  %v331 = vpack.c.bf16 %v267, %v267
  %v332 = vpack.c.bf16 %v268, %v268
  %v333 = vpack.c.bf16 %v269, %v269
  %v334 = vpack.c.bf16 %v270, %v270
  %v335 = vpack.c.bf16 %v271, %v271
  %v336 = vpack.c.bf16 %v272, %v272
  %v337 = vpack.c.bf16 %v273, %v273
  %v338 = vpack.c.bf16 %v274, %v274
  %v339 = vpack.c.bf16 %v275, %v275
  %v340 = vpack.c.bf16 %v276, %v276
  %v341 = vpack.c.bf16 %v277, %v277
  %342 = vst [vmem:[%s3] sm:$0xf] %v278
  %343 = vst [vmem:[%s3 + $0x4] sm:$0xf] %v279
  %344 = vst [vmem:[%s3 + $0x8] sm:$0xf] %v280
  %345 = vst [vmem:[%s3 + $0xc] sm:$0xf] %v281
  %346 = vst [vmem:[%s3 + $0x10] sm:$0xf] %v282
  %347 = vst [vmem:[%s3 + $0x14] sm:$0xf] %v283
  %348 = vst [vmem:[%s3 + $0x18] sm:$0xf] %v284
  %349 = vst [vmem:[%s3 + $0x1c] sm:$0xf] %v285
  %350 = vst [vmem:[%s3 + $0x20] sm:$0xf] %v286
  %351 = vst [vmem:[%s3 + $0x24] sm:$0xf] %v287
  %352 = vst [vmem:[%s3 + $0x28] sm:$0xf] %v288
  %353 = vst [vmem:[%s3 + $0x2c] sm:$0xf] %v289
  %354 = vst [vmem:[%s3 + $0x30] sm:$0xf] %v290
  %355 = vst [vmem:[%s3 + $0x34] sm:$0xf] %v291
  %356 = vst [vmem:[%s3 + $0x38] sm:$0xf] %v292
  %357 = vst [vmem:[%s3 + $0x3c] sm:$0xf] %v293
  %358 = vst [vmem:[%s3 + $0x40] sm:$0xf] %v294
  %359 = vst [vmem:[%s3 + $0x44] sm:$0xf] %v295
  %360 = vst [vmem:[%s3 + $0x48] sm:$0xf] %v296
  %361 = vst [vmem:[%s3 + $0x4c] sm:$0xf] %v297
  %362 = vst [vmem:[%s3 + $0x50] sm:$0xf] %v298
  %363 = vst [vmem:[%s3 + $0x54] sm:$0xf] %v299
  %364 = vst [vmem:[%s3 + $0x58] sm:$0xf] %v300
  %365 = vst [vmem:[%s3 + $0x5c] sm:$0xf] %v301
  %366 = vst [vmem:[%s3 + $0x60] sm:$0xf] %v302
  %367 = vst [vmem:[%s3 + $0x64] sm:$0xf] %v303
  %368 = vst [vmem:[%s3 + $0x68] sm:$0xf] %v304
  %369 = vst [vmem:[%s3 + $0x6c] sm:$0xf] %v305
  %370 = vst [vmem:[%s3 + $0x70] sm:$0xf] %v306
  %371 = vst [vmem:[%s3 + $0x74] sm:$0xf] %v307
  %372 = vst [vmem:[%s3 + $0x78] sm:$0xf] %v308
  %373 = vst [vmem:[%s3 + $0x7c] sm:$0xf] %v309
  %374 = vst [vmem:[%s3 + $0x80] sm:$0xf] %v310
  %375 = vst [vmem:[%s3 + $0x84] sm:$0xf] %v311
  %376 = vst [vmem:[%s3 + $0x88] sm:$0xf] %v312
  %377 = vst [vmem:[%s3 + $0x8c] sm:$0xf] %v313
  %378 = vst [vmem:[%s3 + $0x90] sm:$0xf] %v314
  %379 = vst [vmem:[%s3 + $0x94] sm:$0xf] %v315
  %380 = vst [vmem:[%s3 + $0x98] sm:$0xf] %v316
  %381 = vst [vmem:[%s3 + $0x9c] sm:$0xf] %v317
  %382 = vst [vmem:[%s3 + $0xa0] sm:$0xf] %v318
  %383 = vst [vmem:[%s3 + $0xa4] sm:$0xf] %v319
  %384 = vst [vmem:[%s3 + $0xa8] sm:$0xf] %v320
  %385 = vst [vmem:[%s3 + $0xac] sm:$0xf] %v321
  %386 = vst [vmem:[%s3 + $0xb0] sm:$0xf] %v322
  %387 = vst [vmem:[%s3 + $0xb4] sm:$0xf] %v323
  %388 = vst [vmem:[%s3 + $0xb8] sm:$0xf] %v324
  %389 = vst [vmem:[%s3 + $0xbc] sm:$0xf] %v325
  %390 = vst [vmem:[%s3 + $0xc0] sm:$0xf] %v326
  %391 = vst [vmem:[%s3 + $0xc4] sm:$0xf] %v327
  %392 = vst [vmem:[%s3 + $0xc8] sm:$0xf] %v328
  %393 = vst [vmem:[%s3 + $0xcc] sm:$0xf] %v329
  %394 = vst [vmem:[%s3 + $0xd0] sm:$0xf] %v330
  %395 = vst [vmem:[%s3 + $0xd4] sm:$0xf] %v331
  %396 = vst [vmem:[%s3 + $0xd8] sm:$0xf] %v332
  %397 = vst [vmem:[%s3 + $0xdc] sm:$0xf] %v333
  %398 = vst [vmem:[%s3 + $0xe0] sm:$0xf] %v334
  %399 = vst [vmem:[%s3 + $0xe4] sm:$0xf] %v335
  %400 = vst [vmem:[%s3 + $0xe8] sm:$0xf] %v336
  %401 = vst [vmem:[%s3 + $0xec] sm:$0xf] %v337
  %402 = vst [vmem:[%s3 + $0xf0] sm:$0xf] %v338
  %403 = vst [vmem:[%s3 + $0xf4] sm:$0xf] %v339
  %404 = vst [vmem:[%s3 + $0xf8] sm:$0xf] %v340
  %405 = vst [vmem:[%s3 + $0xfc] sm:$0xf] %v341
  // Predicated region
  $region14: #{_lambda_.59} parent=0 // pred_check
    _
  $region15: #{_lambda_.59} parent=0 // pred_check_branch
    %407 = sbr.rel (0) target = $region17
  $region16: #{_lambda_.59} parent=0 // pred_region
    _
  $region17: #{_lambda_.59} parent=0 // pred_fallthru
    _
  // Predicated region
  $region18: #{_lambda_.59} parent=0 // pred_check
    _
  $region19: #{_lambda_.59} parent=0 // pred_check_branch
    %409 = sbr.rel (0) target = $region21
  $region20: #{_lambda_.59} parent=0 // pred_region
    _
  $region21: #{_lambda_.59} parent=0 // pred_fallthru
    _

// kernel: _lambda_.60
$region0: #{_lambda_.60}
  #allocation0 [shape = 'u32[]', space=smem, size = 0x4, offset = 0x4, fixed_abs, tag = 'smem constant byte address 0x4 - core index']
  #allocation1 [shape = 'u32[72,128]{1,0:T(1,128)}', space=vmem, size = 0x9000, scoped, tag = 'internal scratch']
  %s0 = inlined_call_operand.vmem [shape: bf16[512,32], index: 0, kind: input, shape index: {}]
  %s1 = inlined_call_operand.vmem [shape: bf16[512,32], index: 1, kind: input, shape index: {}]
  %s2 = inlined_call_operand.vmem [shape: bf16[32,128], index: 2, kind: input, shape index: {}]
  %s3 = inlined_call_operand.vmem [shape: bf16[32,128], index: 3, kind: input, shape index: {}]
  %s4 = inlined_call_operand.vmem [shape: f32[1,128], index: 4, kind: input, shape index: {}]
  %s5 = inlined_call_operand.vmem [shape: bf16[512,128], index: 5, kind: output, shape index: {}]
  %s6 = sld [smem:[#allocation0]]
  $region30: #{_lambda_.60} parent=0
    _
  %s8 = ssub.s32 1, %s6
  %s9 = scalar_select 0, %s8, %s6
  // Predicated region
  $region2: #{_lambda_.60} parent=0 // pred_check
    _
  $region3: #{_lambda_.60} parent=0 // pred_check_branch
    %11 = sbr.rel (0) target = $region5
  $region4: #{_lambda_.60} parent=0 // pred_region
    _
  $region5: #{_lambda_.60} parent=0 // pred_fallthru
    _
  // Predicated region
  $region6: #{_lambda_.60} parent=0 // pred_check
    _
  $region7: #{_lambda_.60} parent=0 // pred_check_branch
    %13 = sbr.rel (0) target = $region9
  $region8: #{_lambda_.60} parent=0 // pred_region
    _
  $region9: #{_lambda_.60} parent=0 // pred_fallthru
    _
  // Predicated region
  $region10: #{_lambda_.60} parent=0 // pred_check
    _
  $region11: #{_lambda_.60} parent=0 // pred_check_branch
    %15 = sbr.rel (0) target = $region13
  $region12: #{_lambda_.60} parent=0 // pred_region
    _
  $region13: #{_lambda_.60} parent=0 // pred_fallthru
    _
  // Predicated region
  $region14: #{_lambda_.60} parent=0 // pred_check
    _
  $region15: #{_lambda_.60} parent=0 // pred_check_branch
    %17 = sbr.rel (0) target = $region17
  $region16: #{_lambda_.60} parent=0 // pred_region
    _
  $region17: #{_lambda_.60} parent=0 // pred_fallthru
    _
  // Predicated region
  $region18: #{_lambda_.60} parent=0 // pred_check
    _
  $region19: #{_lambda_.60} parent=0 // pred_check_branch
    %19 = sbr.rel (0) target = $region21
  $region20: #{_lambda_.60} parent=0 // pred_region
    _
  $region21: #{_lambda_.60} parent=0 // pred_fallthru
    _
  %v21 = vld [vmem:[%s0] sm:$0xf]
  %v22 = vld [vmem:[%s0 + $0x4] sm:$0xf]
  %v23 = vld [vmem:[%s0 + $0x8] sm:$0xf]
  %v24 = vld [vmem:[%s0 + $0xc] sm:$0xf]
  %v25 = vld [vmem:[%s0 + $0x10] sm:$0xf]
  %v26 = vld [vmem:[%s0 + $0x14] sm:$0xf]
  %v27 = vld [vmem:[%s0 + $0x18] sm:$0xf]
  %v28 = vld [vmem:[%s0 + $0x1c] sm:$0xf]
  %v29 = vld [vmem:[%s0 + $0x20] sm:$0xf]
  %v30 = vld [vmem:[%s0 + $0x24] sm:$0xf]
  %v31 = vld [vmem:[%s0 + $0x28] sm:$0xf]
  %v32 = vld [vmem:[%s0 + $0x2c] sm:$0xf]
  %v33 = vld [vmem:[%s0 + $0x30] sm:$0xf]
  %v34 = vld [vmem:[%s0 + $0x34] sm:$0xf]
  %v35 = vld [vmem:[%s0 + $0x38] sm:$0xf]
  %v36 = vld [vmem:[%s0 + $0x3c] sm:$0xf]
  %v37 = vld [vmem:[%s0 + $0x40] sm:$0xf]
  %v38 = vld [vmem:[%s0 + $0x44] sm:$0xf]
  %v39 = vld [vmem:[%s0 + $0x48] sm:$0xf]
  %v40 = vld [vmem:[%s0 + $0x4c] sm:$0xf]
  %v41 = vld [vmem:[%s0 + $0x50] sm:$0xf]
  %v42 = vld [vmem:[%s0 + $0x54] sm:$0xf]
  %v43 = vld [vmem:[%s0 + $0x58] sm:$0xf]
  %v44 = vld [vmem:[%s0 + $0x5c] sm:$0xf]
  %v45 = vld [vmem:[%s0 + $0x60] sm:$0xf]
  %v46 = vld [vmem:[%s0 + $0x64] sm:$0xf]
  %v47 = vld [vmem:[%s0 + $0x68] sm:$0xf]
  %v48 = vld [vmem:[%s0 + $0x6c] sm:$0xf]
  %v49 = vld [vmem:[%s0 + $0x70] sm:$0xf]
  %v50 = vld [vmem:[%s0 + $0x74] sm:$0xf]
  %v51 = vld [vmem:[%s0 + $0x78] sm:$0xf]
  %v52 = vld [vmem:[%s0 + $0x7c] sm:$0xf]
  %v53 = vld [vmem:[%s0 + $0x80] sm:$0xf]
  %v54 = vld [vmem:[%s0 + $0x84] sm:$0xf]
  %v55 = vld [vmem:[%s0 + $0x88] sm:$0xf]
  %v56 = vld [vmem:[%s0 + $0x8c] sm:$0xf]
  %v57 = vld [vmem:[%s0 + $0x90] sm:$0xf]
  %v58 = vld [vmem:[%s0 + $0x94] sm:$0xf]
  %v59 = vld [vmem:[%s0 + $0x98] sm:$0xf]
  %v60 = vld [vmem:[%s0 + $0x9c] sm:$0xf]
  %v61 = vld [vmem:[%s0 + $0xa0] sm:$0xf]
  %v62 = vld [vmem:[%s0 + $0xa4] sm:$0xf]
  %v63 = vld [vmem:[%s0 + $0xa8] sm:$0xf]
  %v64 = vld [vmem:[%s0 + $0xac] sm:$0xf]
  %v65 = vld [vmem:[%s0 + $0xb0] sm:$0xf]
  %v66 = vld [vmem:[%s0 + $0xb4] sm:$0xf]
  %v67 = vld [vmem:[%s0 + $0xb8] sm:$0xf]
  %v68 = vld [vmem:[%s0 + $0xbc] sm:$0xf]
  %v69 = vld [vmem:[%s0 + $0xc0] sm:$0xf]
  %v70 = vld [vmem:[%s0 + $0xc4] sm:$0xf]
  %v71 = vld [vmem:[%s0 + $0xc8] sm:$0xf]
  %v72 = vld [vmem:[%s0 + $0xcc] sm:$0xf]
  %v73 = vld [vmem:[%s0 + $0xd0] sm:$0xf]
  %v74 = vld [vmem:[%s0 + $0xd4] sm:$0xf]
  %v75 = vld [vmem:[%s0 + $0xd8] sm:$0xf]
  %v76 = vld [vmem:[%s0 + $0xdc] sm:$0xf]
  %v77 = vld [vmem:[%s0 + $0xe0] sm:$0xf]
  %v78 = vld [vmem:[%s0 + $0xe4] sm:$0xf]
  %v79 = vld [vmem:[%s0 + $0xe8] sm:$0xf]
  %v80 = vld [vmem:[%s0 + $0xec] sm:$0xf]
  %v81 = vld [vmem:[%s0 + $0xf0] sm:$0xf]
  %v82 = vld [vmem:[%s0 + $0xf4] sm:$0xf]
  %v83 = vld [vmem:[%s0 + $0xf8] sm:$0xf]
  %v84 = vld [vmem:[%s0 + $0xfc] sm:$0xf]
  %v85 = vunpack.c.l.bf16 %v21
  %v86 = vunpack.c.l.bf16 %v22
  %v87 = vunpack.c.l.bf16 %v23
  %v88 = vunpack.c.l.bf16 %v24
  %v89 = vunpack.c.l.bf16 %v25
  %v90 = vunpack.c.l.bf16 %v26
  %v91 = vunpack.c.l.bf16 %v27
  %v92 = vunpack.c.l.bf16 %v28
  %v93 = vunpack.c.l.bf16 %v29
  %v94 = vunpack.c.l.bf16 %v30
  %v95 = vunpack.c.l.bf16 %v31
  %v96 = vunpack.c.l.bf16 %v32
  %v97 = vunpack.c.l.bf16 %v33
  %v98 = vunpack.c.l.bf16 %v34
  %v99 = vunpack.c.l.bf16 %v35
  %v100 = vunpack.c.l.bf16 %v36
  %v101 = vunpack.c.l.bf16 %v37
  %v102 = vunpack.c.l.bf16 %v38
  %v103 = vunpack.c.l.bf16 %v39
  %v104 = vunpack.c.l.bf16 %v40
  %v105 = vunpack.c.l.bf16 %v41
  %v106 = vunpack.c.l.bf16 %v42
  %v107 = vunpack.c.l.bf16 %v43
  %v108 = vunpack.c.l.bf16 %v44
  %v109 = vunpack.c.l.bf16 %v45
  %v110 = vunpack.c.l.bf16 %v46
  %v111 = vunpack.c.l.bf16 %v47
  %v112 = vunpack.c.l.bf16 %v48
  %v113 = vunpack.c.l.bf16 %v49
  %v114 = vunpack.c.l.bf16 %v50
  %v115 = vunpack.c.l.bf16 %v51
  %v116 = vunpack.c.l.bf16 %v52
  %v117 = vunpack.c.l.bf16 %v53
  %v118 = vunpack.c.l.bf16 %v54
  %v119 = vunpack.c.l.bf16 %v55
  %v120 = vunpack.c.l.bf16 %v56
  %v121 = vunpack.c.l.bf16 %v57
  %v122 = vunpack.c.l.bf16 %v58
  %v123 = vunpack.c.l.bf16 %v59
  %v124 = vunpack.c.l.bf16 %v60
  %v125 = vunpack.c.l.bf16 %v61
  %v126 = vunpack.c.l.bf16 %v62
  %v127 = vunpack.c.l.bf16 %v63
  %v128 = vunpack.c.l.bf16 %v64
  %v129 = vunpack.c.l.bf16 %v65
  %v130 = vunpack.c.l.bf16 %v66
  %v131 = vunpack.c.l.bf16 %v67
  %v132 = vunpack.c.l.bf16 %v68
  %v133 = vunpack.c.l.bf16 %v69
  %v134 = vunpack.c.l.bf16 %v70
  %v135 = vunpack.c.l.bf16 %v71
  %v136 = vunpack.c.l.bf16 %v72
  %v137 = vunpack.c.l.bf16 %v73
  %v138 = vunpack.c.l.bf16 %v74
  %v139 = vunpack.c.l.bf16 %v75
  %v140 = vunpack.c.l.bf16 %v76
  %v141 = vunpack.c.l.bf16 %v77
  %v142 = vunpack.c.l.bf16 %v78
  %v143 = vunpack.c.l.bf16 %v79
  %v144 = vunpack.c.l.bf16 %v80
  %v145 = vunpack.c.l.bf16 %v81
  %v146 = vunpack.c.l.bf16 %v82
  %v147 = vunpack.c.l.bf16 %v83
  %v148 = vunpack.c.l.bf16 %v84
  %v149 = vmax.f32 %v85, 0.0
  %v150 = vmax.f32 %v86, 0.0
  %v151 = vmax.f32 %v87, 0.0
  %v152 = vmax.f32 %v88, 0.0
  %v153 = vmax.f32 %v89, 0.0
  %v154 = vmax.f32 %v90, 0.0
  %v155 = vmax.f32 %v91, 0.0
  %v156 = vmax.f32 %v92, 0.0
  %v157 = vmax.f32 %v93, 0.0
  %v158 = vmax.f32 %v94, 0.0
  %v159 = vmax.f32 %v95, 0.0
  %v160 = vmax.f32 %v96, 0.0
  %v161 = vmax.f32 %v97, 0.0
  %v162 = vmax.f32 %v98, 0.0
  %v163 = vmax.f32 %v99, 0.0
  %v164 = vmax.f32 %v100, 0.0
  %v165 = vmax.f32 %v101, 0.0
  %v166 = vmax.f32 %v102, 0.0
  %v167 = vmax.f32 %v103, 0.0
  %v168 = vmax.f32 %v104, 0.0
  %v169 = vmax.f32 %v105, 0.0
  %v170 = vmax.f32 %v106, 0.0
  %v171 = vmax.f32 %v107, 0.0
  %v172 = vmax.f32 %v108, 0.0
  %v173 = vmax.f32 %v109, 0.0
  %v174 = vmax.f32 %v110, 0.0
  %v175 = vmax.f32 %v111, 0.0
  %v176 = vmax.f32 %v112, 0.0
  %v177 = vmax.f32 %v113, 0.0
  %v178 = vmax.f32 %v114, 0.0
  %v179 = vmax.f32 %v115, 0.0
  %v180 = vmax.f32 %v116, 0.0
  %v181 = vmax.f32 %v117, 0.0
  %v182 = vmax.f32 %v118, 0.0
  %v183 = vmax.f32 %v119, 0.0
  %v184 = vmax.f32 %v120, 0.0
  %v185 = vmax.f32 %v121, 0.0
  %v186 = vmax.f32 %v122, 0.0
  %v187 = vmax.f32 %v123, 0.0
  %v188 = vmax.f32 %v124, 0.0
  %v189 = vmax.f32 %v125, 0.0
  %v190 = vmax.f32 %v126, 0.0
  %v191 = vmax.f32 %v127, 0.0
  %v192 = vmax.f32 %v128, 0.0
  %v193 = vmax.f32 %v129, 0.0
  %v194 = vmax.f32 %v130, 0.0
  %v195 = vmax.f32 %v131, 0.0
  %v196 = vmax.f32 %v132, 0.0
  %v197 = vmax.f32 %v133, 0.0
  %v198 = vmax.f32 %v134, 0.0
  %v199 = vmax.f32 %v135, 0.0
  %v200 = vmax.f32 %v136, 0.0
  %v201 = vmax.f32 %v137, 0.0
  %v202 = vmax.f32 %v138, 0.0
  %v203 = vmax.f32 %v139, 0.0
  %v204 = vmax.f32 %v140, 0.0
  %v205 = vmax.f32 %v141, 0.0
  %v206 = vmax.f32 %v142, 0.0
  %v207 = vmax.f32 %v143, 0.0
  %v208 = vmax.f32 %v144, 0.0
  %v209 = vmax.f32 %v145, 0.0
  %v210 = vmax.f32 %v146, 0.0
  %v211 = vmax.f32 %v147, 0.0
  %v212 = vmax.f32 %v148, 0.0
  %v213 = vpack.c.bf16 %v150, %v149
  %v214 = vpack.c.bf16 %v152, %v151
  %v215 = vpack.c.bf16 %v154, %v153
  %v216 = vpack.c.bf16 %v156, %v155
  %v217 = vpack.c.bf16 %v158, %v157
  %v218 = vpack.c.bf16 %v160, %v159
  %v219 = vpack.c.bf16 %v162, %v161
  %v220 = vpack.c.bf16 %v164, %v163
  %v221 = vpack.c.bf16 %v166, %v165
  %v222 = vpack.c.bf16 %v168, %v167
  %v223 = vpack.c.bf16 %v170, %v169
  %v224 = vpack.c.bf16 %v172, %v171
  %v225 = vpack.c.bf16 %v174, %v173
  %v226 = vpack.c.bf16 %v176, %v175
  %v227 = vpack.c.bf16 %v178, %v177
  %v228 = vpack.c.bf16 %v180, %v179
  %v229 = vpack.c.bf16 %v182, %v181
  %v230 = vpack.c.bf16 %v184, %v183
  %v231 = vpack.c.bf16 %v186, %v185
  %v232 = vpack.c.bf16 %v188, %v187
  %v233 = vpack.c.bf16 %v190, %v189
  %v234 = vpack.c.bf16 %v192, %v191
  %v235 = vpack.c.bf16 %v194, %v193
  %v236 = vpack.c.bf16 %v196, %v195
  %v237 = vpack.c.bf16 %v198, %v197
  %v238 = vpack.c.bf16 %v200, %v199
  %v239 = vpack.c.bf16 %v202, %v201
  %v240 = vpack.c.bf16 %v204, %v203
  %v241 = vpack.c.bf16 %v206, %v205
  %v242 = vpack.c.bf16 %v208, %v207
  %v243 = vpack.c.bf16 %v210, %v209
  %v244 = vpack.c.bf16 %v212, %v211
  %v245 = vld [vmem:[%s2] sm:$0xf]
  %v246 = vld [vmem:[%s2 + $0x4] sm:$0xf]
  %v247 = vld [vmem:[%s2 + $0x8] sm:$0xf]
  %v248 = vld [vmem:[%s2 + $0xc] sm:$0xf]
  %v249 = vld [vmem:[%s1] sm:$0xf]
  %v250 = vld [vmem:[%s1 + $0x4] sm:$0xf]
  %v251 = vld [vmem:[%s1 + $0x8] sm:$0xf]
  %v252 = vld [vmem:[%s1 + $0xc] sm:$0xf]
  %v253 = vld [vmem:[%s1 + $0x10] sm:$0xf]
  %v254 = vld [vmem:[%s1 + $0x14] sm:$0xf]
  %v255 = vld [vmem:[%s1 + $0x18] sm:$0xf]
  %v256 = vld [vmem:[%s1 + $0x1c] sm:$0xf]
  %v257 = vld [vmem:[%s1 + $0x20] sm:$0xf]
  %v258 = vld [vmem:[%s1 + $0x24] sm:$0xf]
  %v259 = vld [vmem:[%s1 + $0x28] sm:$0xf]
  %v260 = vld [vmem:[%s1 + $0x2c] sm:$0xf]
  %v261 = vld [vmem:[%s1 + $0x30] sm:$0xf]
  %v262 = vld [vmem:[%s1 + $0x34] sm:$0xf]
  %v263 = vld [vmem:[%s1 + $0x38] sm:$0xf]
  %v264 = vld [vmem:[%s1 + $0x3c] sm:$0xf]
  %v265 = vld [vmem:[%s1 + $0x40] sm:$0xf]
  %v266 = vld [vmem:[%s1 + $0x44] sm:$0xf]
  %v267 = vld [vmem:[%s1 + $0x48] sm:$0xf]
  %v268 = vld [vmem:[%s1 + $0x4c] sm:$0xf]
  %v269 = vld [vmem:[%s1 + $0x50] sm:$0xf]
  %v270 = vld [vmem:[%s1 + $0x54] sm:$0xf]
  %v271 = vld [vmem:[%s1 + $0x58] sm:$0xf]
  %v272 = vld [vmem:[%s1 + $0x5c] sm:$0xf]
  %v273 = vld [vmem:[%s1 + $0x60] sm:$0xf]
  %v274 = vld [vmem:[%s1 + $0x64] sm:$0xf]
  %v275 = vld [vmem:[%s1 + $0x68] sm:$0xf]
  %v276 = vld [vmem:[%s1 + $0x6c] sm:$0xf]
  %v277 = vld [vmem:[%s1 + $0x70] sm:$0xf]
  %v278 = vld [vmem:[%s1 + $0x74] sm:$0xf]
  %v279 = vld [vmem:[%s1 + $0x78] sm:$0xf]
  %v280 = vld [vmem:[%s1 + $0x7c] sm:$0xf]
  %v281 = vld [vmem:[%s1 + $0x80] sm:$0xf]
  %v282 = vld [vmem:[%s1 + $0x84] sm:$0xf]
  %v283 = vld [vmem:[%s1 + $0x88] sm:$0xf]
  %v284 = vld [vmem:[%s1 + $0x8c] sm:$0xf]
  %v285 = vld [vmem:[%s1 + $0x90] sm:$0xf]
  %v286 = vld [vmem:[%s1 + $0x94] sm:$0xf]
  %v287 = vld [vmem:[%s1 + $0x98] sm:$0xf]
  %v288 = vld [vmem:[%s1 + $0x9c] sm:$0xf]
  %v289 = vld [vmem:[%s1 + $0xa0] sm:$0xf]
  %v290 = vld [vmem:[%s1 + $0xa4] sm:$0xf]
  %v291 = vld [vmem:[%s1 + $0xa8] sm:$0xf]
  %v292 = vld [vmem:[%s1 + $0xac] sm:$0xf]
  %v293 = vld [vmem:[%s1 + $0xb0] sm:$0xf]
  %v294 = vld [vmem:[%s1 + $0xb4] sm:$0xf]
  %v295 = vld [vmem:[%s1 + $0xb8] sm:$0xf]
  %v296 = vld [vmem:[%s1 + $0xbc] sm:$0xf]
  %v297 = vld [vmem:[%s1 + $0xc0] sm:$0xf]
  %v298 = vld [vmem:[%s1 + $0xc4] sm:$0xf]
  %v299 = vld [vmem:[%s1 + $0xc8] sm:$0xf]
  %v300 = vld [vmem:[%s1 + $0xcc] sm:$0xf]
  %v301 = vld [vmem:[%s1 + $0xd0] sm:$0xf]
  %v302 = vld [vmem:[%s1 + $0xd4] sm:$0xf]
  %v303 = vld [vmem:[%s1 + $0xd8] sm:$0xf]
  %v304 = vld [vmem:[%s1 + $0xdc] sm:$0xf]
  %v305 = vld [vmem:[%s1 + $0xe0] sm:$0xf]
  %v306 = vld [vmem:[%s1 + $0xe4] sm:$0xf]
  %v307 = vld [vmem:[%s1 + $0xe8] sm:$0xf]
  %v308 = vld [vmem:[%s1 + $0xec] sm:$0xf]
  %v309 = vld [vmem:[%s1 + $0xf0] sm:$0xf]
  %v310 = vld [vmem:[%s1 + $0xf4] sm:$0xf]
  %v311 = vld [vmem:[%s1 + $0xf8] sm:$0xf]
  %v312 = vld [vmem:[%s1 + $0xfc] sm:$0xf]
  %v313 = vunpack.c.l.bf16 %v249
  %v314 = vunpack.c.l.bf16 %v250
  %v315 = vunpack.c.l.bf16 %v251
  %v316 = vunpack.c.l.bf16 %v252
  %v317 = vunpack.c.l.bf16 %v253
  %v318 = vunpack.c.l.bf16 %v254
  %v319 = vunpack.c.l.bf16 %v255
  %v320 = vunpack.c.l.bf16 %v256
  %v321 = vunpack.c.l.bf16 %v257
  %v322 = vunpack.c.l.bf16 %v258
  %v323 = vunpack.c.l.bf16 %v259
  %v324 = vunpack.c.l.bf16 %v260
  %v325 = vunpack.c.l.bf16 %v261
  %v326 = vunpack.c.l.bf16 %v262
  %v327 = vunpack.c.l.bf16 %v263
  %v328 = vunpack.c.l.bf16 %v264
  %v329 = vunpack.c.l.bf16 %v265
  %v330 = vunpack.c.l.bf16 %v266
  %v331 = vunpack.c.l.bf16 %v267
  %v332 = vunpack.c.l.bf16 %v268
  %v333 = vunpack.c.l.bf16 %v269
  %v334 = vunpack.c.l.bf16 %v270
  %v335 = vunpack.c.l.bf16 %v271
  %v336 = vunpack.c.l.bf16 %v272
  %v337 = vunpack.c.l.bf16 %v273
  %v338 = vunpack.c.l.bf16 %v274
  %v339 = vunpack.c.l.bf16 %v275
  %v340 = vunpack.c.l.bf16 %v276
  %v341 = vunpack.c.l.bf16 %v277
  %v342 = vunpack.c.l.bf16 %v278
  %v343 = vunpack.c.l.bf16 %v279
  %v344 = vunpack.c.l.bf16 %v280
  %v345 = vunpack.c.l.bf16 %v281
  %v346 = vunpack.c.l.bf16 %v282
  %v347 = vunpack.c.l.bf16 %v283
  %v348 = vunpack.c.l.bf16 %v284
  %v349 = vunpack.c.l.bf16 %v285
  %v350 = vunpack.c.l.bf16 %v286
  %v351 = vunpack.c.l.bf16 %v287
  %v352 = vunpack.c.l.bf16 %v288
  %v353 = vunpack.c.l.bf16 %v289
  %v354 = vunpack.c.l.bf16 %v290
  %v355 = vunpack.c.l.bf16 %v291
  %v356 = vunpack.c.l.bf16 %v292
  %v357 = vunpack.c.l.bf16 %v293
  %v358 = vunpack.c.l.bf16 %v294
  %v359 = vunpack.c.l.bf16 %v295
  %v360 = vunpack.c.l.bf16 %v296
  %v361 = vunpack.c.l.bf16 %v297
  %v362 = vunpack.c.l.bf16 %v298
  %v363 = vunpack.c.l.bf16 %v299
  %v364 = vunpack.c.l.bf16 %v300
  %v365 = vunpack.c.l.bf16 %v301
  %v366 = vunpack.c.l.bf16 %v302
  %v367 = vunpack.c.l.bf16 %v303
  %v368 = vunpack.c.l.bf16 %v304
  %v369 = vunpack.c.l.bf16 %v305
  %v370 = vunpack.c.l.bf16 %v306
  %v371 = vunpack.c.l.bf16 %v307
  %v372 = vunpack.c.l.bf16 %v308
  %v373 = vunpack.c.l.bf16 %v309
  %v374 = vunpack.c.l.bf16 %v310
  %v375 = vunpack.c.l.bf16 %v311
  %v376 = vunpack.c.l.bf16 %v312
  %v377 = vmax.f32 %v313, 0.0
  %v378 = vmax.f32 %v314, 0.0
  %v379 = vmax.f32 %v315, 0.0
  %v380 = vmax.f32 %v316, 0.0
  %v381 = vmax.f32 %v317, 0.0
  %v382 = vmax.f32 %v318, 0.0
  %v383 = vmax.f32 %v319, 0.0
  %v384 = vmax.f32 %v320, 0.0
  %v385 = vmax.f32 %v321, 0.0
  %v386 = vmax.f32 %v322, 0.0
  %v387 = vmax.f32 %v323, 0.0
  %v388 = vmax.f32 %v324, 0.0
  %v389 = vmax.f32 %v325, 0.0
  %v390 = vmax.f32 %v326, 0.0
  %v391 = vmax.f32 %v327, 0.0
  %v392 = vmax.f32 %v328, 0.0
  %v393 = vmax.f32 %v329, 0.0
  %v394 = vmax.f32 %v330, 0.0
  %v395 = vmax.f32 %v331, 0.0
  %v396 = vmax.f32 %v332, 0.0
  %v397 = vmax.f32 %v333, 0.0
  %v398 = vmax.f32 %v334, 0.0
  %v399 = vmax.f32 %v335, 0.0
  %v400 = vmax.f32 %v336, 0.0
  %v401 = vmax.f32 %v337, 0.0
  %v402 = vmax.f32 %v338, 0.0
  %v403 = vmax.f32 %v339, 0.0
  %v404 = vmax.f32 %v340, 0.0
  %v405 = vmax.f32 %v341, 0.0
  %v406 = vmax.f32 %v342, 0.0
  %v407 = vmax.f32 %v343, 0.0
  %v408 = vmax.f32 %v344, 0.0
  %v409 = vmax.f32 %v345, 0.0
  %v410 = vmax.f32 %v346, 0.0
  %v411 = vmax.f32 %v347, 0.0
  %v412 = vmax.f32 %v348, 0.0
  %v413 = vmax.f32 %v349, 0.0
  %v414 = vmax.f32 %v350, 0.0
  %v415 = vmax.f32 %v351, 0.0
  %v416 = vmax.f32 %v352, 0.0
  %v417 = vmax.f32 %v353, 0.0
  %v418 = vmax.f32 %v354, 0.0
  %v419 = vmax.f32 %v355, 0.0
  %v420 = vmax.f32 %v356, 0.0
  %v421 = vmax.f32 %v357, 0.0
  %v422 = vmax.f32 %v358, 0.0
  %v423 = vmax.f32 %v359, 0.0
  %v424 = vmax.f32 %v360, 0.0
  %v425 = vmax.f32 %v361, 0.0
  %v426 = vmax.f32 %v362, 0.0
  %v427 = vmax.f32 %v363, 0.0
  %v428 = vmax.f32 %v364, 0.0
  %v429 = vmax.f32 %v365, 0.0
  %v430 = vmax.f32 %v366, 0.0
  %v431 = vmax.f32 %v367, 0.0
  %v432 = vmax.f32 %v368, 0.0
  %v433 = vmax.f32 %v369, 0.0
  %v434 = vmax.f32 %v370, 0.0
  %v435 = vmax.f32 %v371, 0.0
  %v436 = vmax.f32 %v372, 0.0
  %v437 = vmax.f32 %v373, 0.0
  %v438 = vmax.f32 %v374, 0.0
  %v439 = vmax.f32 %v375, 0.0
  %v440 = vmax.f32 %v376, 0.0
  %v441 = vpack.c.bf16 %v378, %v377
  %v442 = vpack.c.bf16 %v380, %v379
  %v443 = vpack.c.bf16 %v382, %v381
  %v444 = vpack.c.bf16 %v384, %v383
  %v445 = vpack.c.bf16 %v386, %v385
  %v446 = vpack.c.bf16 %v388, %v387
  %v447 = vpack.c.bf16 %v390, %v389
  %v448 = vpack.c.bf16 %v392, %v391
  %v449 = vpack.c.bf16 %v394, %v393
  %v450 = vpack.c.bf16 %v396, %v395
  %v451 = vpack.c.bf16 %v398, %v397
  %v452 = vpack.c.bf16 %v400, %v399
  %v453 = vpack.c.bf16 %v402, %v401
  %v454 = vpack.c.bf16 %v404, %v403
  %v455 = vpack.c.bf16 %v406, %v405
  %v456 = vpack.c.bf16 %v408, %v407
  %v457 = vpack.c.bf16 %v410, %v409
  %v458 = vpack.c.bf16 %v412, %v411
  %v459 = vpack.c.bf16 %v414, %v413
  %v460 = vpack.c.bf16 %v416, %v415
  %v461 = vpack.c.bf16 %v418, %v417
  %v462 = vpack.c.bf16 %v420, %v419
  %v463 = vpack.c.bf16 %v422, %v421
  %v464 = vpack.c.bf16 %v424, %v423
  %v465 = vpack.c.bf16 %v426, %v425
  %v466 = vpack.c.bf16 %v428, %v427
  %v467 = vpack.c.bf16 %v430, %v429
  %v468 = vpack.c.bf16 %v432, %v431
  %v469 = vpack.c.bf16 %v434, %v433
  %v470 = vpack.c.bf16 %v436, %v435
  %v471 = vpack.c.bf16 %v438, %v437
  %v472 = vpack.c.bf16 %v440, %v439
  %v473 = vld [vmem:[%s3] sm:$0xf]
  %v474 = vld [vmem:[%s3 + $0x4] sm:$0xf]
  %v475 = vld [vmem:[%s3 + $0x8] sm:$0xf]
  %v476 = vld [vmem:[%s3 + $0xc] sm:$0xf]
  %v481 = vunpack.c.l.b16 %v473
  %v482 = vunpack.c.l.b16 %v474
  %v483 = vunpack.c.l.b16 %v475
  %v484 = vunpack.c.l.b16 %v476
  %v485 = vpack.c.b16 %v482, %v481
  %v486 = vpack.c.b16 %v484, %v483
  %vm489 = vcmask 261120
  %v491 = vsel %vm489, %v441, 0
  %v494 = vsel %vm489, %v442, 0
  %v497 = vsel %vm489, %v443, 0
  %v500 = vsel %vm489, %v444, 0
  %v503 = vsel %vm489, %v445, 0
  %v506 = vsel %vm489, %v446, 0
  %v509 = vsel %vm489, %v447, 0
  %v512 = vsel %vm489, %v448, 0
  %v515 = vsel %vm489, %v449, 0
  %v518 = vsel %vm489, %v450, 0
  %v521 = vsel %vm489, %v451, 0
  %v524 = vsel %vm489, %v452, 0
  %v527 = vsel %vm489, %v453, 0
  %v530 = vsel %vm489, %v454, 0
  %v533 = vsel %vm489, %v455, 0
  %v536 = vsel %vm489, %v456, 0
  %v539 = vsel %vm489, %v457, 0
  %v542 = vsel %vm489, %v458, 0
  %v545 = vsel %vm489, %v459, 0
  %v548 = vsel %vm489, %v460, 0
  %v551 = vsel %vm489, %v461, 0
  %v554 = vsel %vm489, %v462, 0
  %v557 = vsel %vm489, %v463, 0
  %v560 = vsel %vm489, %v464, 0
  %v563 = vsel %vm489, %v465, 0
  %v566 = vsel %vm489, %v466, 0
  %v569 = vsel %vm489, %v467, 0
  %v572 = vsel %vm489, %v468, 0
  %v575 = vsel %vm489, %v469, 0
  %v578 = vsel %vm489, %v470, 0
  %v581 = vsel %vm489, %v471, 0
  %v584 = vsel %vm489, %v472, 0
  %586 = vmatpush.bf16.msra.mxu0 0
  %587 = vmatpush.bf16.msra.mxu0 0
  %588 = vmatpush.bf16.msra.mxu0 0
  %589 = vmatpush.bf16.msra.mxu0 0
  %590 = vmatpush.bf16.msra.mxu0 0
  %591 = vmatpush.bf16.msra.mxu0 0
  %592 = vmatpush.bf16.msra.mxu0 %v486
  %593 = vmatpush.bf16.msra.mxu0 %v485
  %594 = vmatmul.bf16.gmra.mxu0 %v491
  %v595 = vpop.f32.mrf.mxu0
  %v596 = vadd.f32 0.0, %v595
  %v597 = vpop.f32.mrf.mxu0
  %v598 = vadd.f32 0.0, %v597
  %599 = vmatmul.bf16.gmra.mxu0 %v494
  %v600 = vpop.f32.mrf.mxu0
  %v601 = vadd.f32 0.0, %v600
  %v602 = vpop.f32.mrf.mxu0
  %v603 = vadd.f32 0.0, %v602
  %604 = vmatmul.bf16.gmra.mxu0 %v497
  %v605 = vpop.f32.mrf.mxu0
  %v606 = vadd.f32 0.0, %v605
  %v607 = vpop.f32.mrf.mxu0
  %v608 = vadd.f32 0.0, %v607
  %609 = vmatmul.bf16.gmra.mxu0 %v500
  %v610 = vpop.f32.mrf.mxu0
  %v611 = vadd.f32 0.0, %v610
  %v612 = vpop.f32.mrf.mxu0
  %v613 = vadd.f32 0.0, %v612
  %614 = vmatmul.bf16.gmra.mxu0 %v503
  %v615 = vpop.f32.mrf.mxu0
  %v616 = vadd.f32 0.0, %v615
  %v617 = vpop.f32.mrf.mxu0
  %v618 = vadd.f32 0.0, %v617
  %619 = vmatmul.bf16.gmra.mxu0 %v506
  %v620 = vpop.f32.mrf.mxu0
  %v621 = vadd.f32 0.0, %v620
  %v622 = vpop.f32.mrf.mxu0
  %v623 = vadd.f32 0.0, %v622
  %624 = vmatmul.bf16.gmra.mxu0 %v509
  %v625 = vpop.f32.mrf.mxu0
  %v626 = vadd.f32 0.0, %v625
  %v627 = vpop.f32.mrf.mxu0
  %v628 = vadd.f32 0.0, %v627
  %629 = vmatmul.bf16.gmra.mxu0 %v512
  %v630 = vpop.f32.mrf.mxu0
  %v631 = vadd.f32 0.0, %v630
  %v632 = vpop.f32.mrf.mxu0
  %v633 = vadd.f32 0.0, %v632
  %634 = vmatmul.bf16.gmra.mxu0 %v515
  %v635 = vpop.f32.mrf.mxu0
  %v636 = vadd.f32 0.0, %v635
  %v637 = vpop.f32.mrf.mxu0
  %v638 = vadd.f32 0.0, %v637
  %639 = vmatmul.bf16.gmra.mxu0 %v518
  %v640 = vpop.f32.mrf.mxu0
  %v641 = vadd.f32 0.0, %v640
  %v642 = vpop.f32.mrf.mxu0
  %v643 = vadd.f32 0.0, %v642
  %644 = vmatmul.bf16.gmra.mxu0 %v521
  %v645 = vpop.f32.mrf.mxu0
  %v646 = vadd.f32 0.0, %v645
  %v647 = vpop.f32.mrf.mxu0
  %v648 = vadd.f32 0.0, %v647
  %649 = vmatmul.bf16.gmra.mxu0 %v524
  %v650 = vpop.f32.mrf.mxu0
  %v651 = vadd.f32 0.0, %v650
  %v652 = vpop.f32.mrf.mxu0
  %v653 = vadd.f32 0.0, %v652
  %654 = vmatmul.bf16.gmra.mxu0 %v527
  %v655 = vpop.f32.mrf.mxu0
  %v656 = vadd.f32 0.0, %v655
  %v657 = vpop.f32.mrf.mxu0
  %v658 = vadd.f32 0.0, %v657
  %659 = vmatmul.bf16.gmra.mxu0 %v530
  %v660 = vpop.f32.mrf.mxu0
  %v661 = vadd.f32 0.0, %v660
  %v662 = vpop.f32.mrf.mxu0
  %v663 = vadd.f32 0.0, %v662
  %664 = vmatmul.bf16.gmra.mxu0 %v533
  %v665 = vpop.f32.mrf.mxu0
  %v666 = vadd.f32 0.0, %v665
  %v667 = vpop.f32.mrf.mxu0
  %v668 = vadd.f32 0.0, %v667
  %669 = vmatmul.bf16.gmra.mxu0 %v536
  %v670 = vpop.f32.mrf.mxu0
  %v671 = vadd.f32 0.0, %v670
  %v672 = vpop.f32.mrf.mxu0
  %v673 = vadd.f32 0.0, %v672
  %674 = vmatmul.bf16.gmra.mxu0 %v539
  %v675 = vpop.f32.mrf.mxu0
  %v676 = vadd.f32 0.0, %v675
  %v677 = vpop.f32.mrf.mxu0
  %v678 = vadd.f32 0.0, %v677
  %679 = vmatmul.bf16.gmra.mxu0 %v542
  %v680 = vpop.f32.mrf.mxu0
  %v681 = vadd.f32 0.0, %v680
  %v682 = vpop.f32.mrf.mxu0
  %v683 = vadd.f32 0.0, %v682
  %684 = vmatmul.bf16.gmra.mxu0 %v545
  %v685 = vpop.f32.mrf.mxu0
  %v686 = vadd.f32 0.0, %v685
  %v687 = vpop.f32.mrf.mxu0
  %v688 = vadd.f32 0.0, %v687
  %689 = vmatmul.bf16.gmra.mxu0 %v548
  %v690 = vpop.f32.mrf.mxu0
  %v691 = vadd.f32 0.0, %v690
  %v692 = vpop.f32.mrf.mxu0
  %v693 = vadd.f32 0.0, %v692
  %694 = vmatmul.bf16.gmra.mxu0 %v551
  %v695 = vpop.f32.mrf.mxu0
  %v696 = vadd.f32 0.0, %v695
  %v697 = vpop.f32.mrf.mxu0
  %v698 = vadd.f32 0.0, %v697
  %699 = vmatmul.bf16.gmra.mxu0 %v554
  %v700 = vpop.f32.mrf.mxu0
  %v701 = vadd.f32 0.0, %v700
  %v702 = vpop.f32.mrf.mxu0
  %v703 = vadd.f32 0.0, %v702
  %704 = vmatmul.bf16.gmra.mxu0 %v557
  %v705 = vpop.f32.mrf.mxu0
  %v706 = vadd.f32 0.0, %v705
  %v707 = vpop.f32.mrf.mxu0
  %v708 = vadd.f32 0.0, %v707
  %709 = vmatmul.bf16.gmra.mxu0 %v560
  %v710 = vpop.f32.mrf.mxu0
  %v711 = vadd.f32 0.0, %v710
  %v712 = vpop.f32.mrf.mxu0
  %v713 = vadd.f32 0.0, %v712
  %714 = vmatmul.bf16.gmra.mxu0 %v563
  %v715 = vpop.f32.mrf.mxu0
  %v716 = vadd.f32 0.0, %v715
  %v717 = vpop.f32.mrf.mxu0
  %v718 = vadd.f32 0.0, %v717
  %719 = vmatmul.bf16.gmra.mxu0 %v566
  %v720 = vpop.f32.mrf.mxu0
  %v721 = vadd.f32 0.0, %v720
  %v722 = vpop.f32.mrf.mxu0
  %v723 = vadd.f32 0.0, %v722
  %724 = vmatmul.bf16.gmra.mxu0 %v569
  %v725 = vpop.f32.mrf.mxu0
  %v726 = vadd.f32 0.0, %v725
  %v727 = vpop.f32.mrf.mxu0
  %v728 = vadd.f32 0.0, %v727
  %729 = vmatmul.bf16.gmra.mxu0 %v572
  %v730 = vpop.f32.mrf.mxu0
  %v731 = vadd.f32 0.0, %v730
  %v732 = vpop.f32.mrf.mxu0
  %v733 = vadd.f32 0.0, %v732
  %734 = vmatmul.bf16.gmra.mxu0 %v575
  %v735 = vpop.f32.mrf.mxu0
  %v736 = vadd.f32 0.0, %v735
  %v737 = vpop.f32.mrf.mxu0
  %v738 = vadd.f32 0.0, %v737
  %739 = vmatmul.bf16.gmra.mxu0 %v578
  %v740 = vpop.f32.mrf.mxu0
  %v741 = vadd.f32 0.0, %v740
  %v742 = vpop.f32.mrf.mxu0
  %v743 = vadd.f32 0.0, %v742
  %744 = vmatmul.bf16.gmra.mxu0 %v581
  %v745 = vpop.f32.mrf.mxu0
  %v746 = vadd.f32 0.0, %v745
  %v747 = vpop.f32.mrf.mxu0
  %v748 = vadd.f32 0.0, %v747
  %749 = vmatmul.bf16.gmra.mxu0 %v584
  %v750 = vpop.f32.mrf.mxu0
  %v751 = vadd.f32 0.0, %v750
  %v752 = vpop.f32.mrf.mxu0
  %v753 = vadd.f32 0.0, %v752
  %754 = vdwg.mxu0
  %v759 = vunpack.c.l.b16 %v245
  %v760 = vunpack.c.l.b16 %v246
  %v761 = vunpack.c.l.b16 %v247
  %v762 = vunpack.c.l.b16 %v248
  %v763 = vpack.c.b16 %v760, %v759
  %v764 = vpack.c.b16 %v762, %v761
  %v768 = vsel %vm489, %v213, 0
  %v771 = vsel %vm489, %v214, 0
  %v774 = vsel %vm489, %v215, 0
  %v777 = vsel %vm489, %v216, 0
  %v780 = vsel %vm489, %v217, 0
  %v783 = vsel %vm489, %v218, 0
  %v786 = vsel %vm489, %v219, 0
  %v789 = vsel %vm489, %v220, 0
  %v792 = vsel %vm489, %v221, 0
  %v795 = vsel %vm489, %v222, 0
  %v798 = vsel %vm489, %v223, 0
  %v801 = vsel %vm489, %v224, 0
  %v804 = vsel %vm489, %v225, 0
  %v807 = vsel %vm489, %v226, 0
  %v810 = vsel %vm489, %v227, 0
  %v813 = vsel %vm489, %v228, 0
  %v816 = vsel %vm489, %v229, 0
  %v819 = vsel %vm489, %v230, 0
  %v822 = vsel %vm489, %v231, 0
  %v825 = vsel %vm489, %v232, 0
  %v828 = vsel %vm489, %v233, 0
  %v831 = vsel %vm489, %v234, 0
  %v834 = vsel %vm489, %v235, 0
  %v837 = vsel %vm489, %v236, 0
  %v840 = vsel %vm489, %v237, 0
  %v843 = vsel %vm489, %v238, 0
  %v846 = vsel %vm489, %v239, 0
  %v849 = vsel %vm489, %v240, 0
  %v852 = vsel %vm489, %v241, 0
  %v855 = vsel %vm489, %v242, 0
  %v858 = vsel %vm489, %v243, 0
  %v861 = vsel %vm489, %v244, 0
  %863 = vmatpush.bf16.msra.mxu0 0
  %864 = vmatpush.bf16.msra.mxu0 0
  %865 = vmatpush.bf16.msra.mxu0 0
  %866 = vmatpush.bf16.msra.mxu0 0
  %867 = vmatpush.bf16.msra.mxu0 0
  %868 = vmatpush.bf16.msra.mxu0 0
  %869 = vmatpush.bf16.msra.mxu0 %v764
  %870 = vmatpush.bf16.msra.mxu0 %v763
  %871 = vmatmul.bf16.gmra.mxu0 %v768
  %v872 = vpop.f32.mrf.mxu0
  %v873 = vadd.f32 %v596, %v872
  %v874 = vpop.f32.mrf.mxu0
  %v875 = vadd.f32 %v598, %v874
  %876 = vmatmul.bf16.gmra.mxu0 %v771
  %v877 = vpop.f32.mrf.mxu0
  %v878 = vadd.f32 %v601, %v877
  %v879 = vpop.f32.mrf.mxu0
  %v880 = vadd.f32 %v603, %v879
  %881 = vmatmul.bf16.gmra.mxu0 %v774
  %v882 = vpop.f32.mrf.mxu0
  %v883 = vadd.f32 %v606, %v882
  %v884 = vpop.f32.mrf.mxu0
  %v885 = vadd.f32 %v608, %v884
  %886 = vmatmul.bf16.gmra.mxu0 %v777
  %v887 = vpop.f32.mrf.mxu0
  %v888 = vadd.f32 %v611, %v887
  %v889 = vpop.f32.mrf.mxu0
  %v890 = vadd.f32 %v613, %v889
  %891 = vmatmul.bf16.gmra.mxu0 %v780
  %v892 = vpop.f32.mrf.mxu0
  %v893 = vadd.f32 %v616, %v892
  %v894 = vpop.f32.mrf.mxu0
  %v895 = vadd.f32 %v618, %v894
  %896 = vmatmul.bf16.gmra.mxu0 %v783
  %v897 = vpop.f32.mrf.mxu0
  %v898 = vadd.f32 %v621, %v897
  %v899 = vpop.f32.mrf.mxu0
  %v900 = vadd.f32 %v623, %v899
  %901 = vmatmul.bf16.gmra.mxu0 %v786
  %v902 = vpop.f32.mrf.mxu0
  %v903 = vadd.f32 %v626, %v902
  %v904 = vpop.f32.mrf.mxu0
  %v905 = vadd.f32 %v628, %v904
  %906 = vmatmul.bf16.gmra.mxu0 %v789
  %v907 = vpop.f32.mrf.mxu0
  %v908 = vadd.f32 %v631, %v907
  %v909 = vpop.f32.mrf.mxu0
  %v910 = vadd.f32 %v633, %v909
  %911 = vmatmul.bf16.gmra.mxu0 %v792
  %v912 = vpop.f32.mrf.mxu0
  %v913 = vadd.f32 %v636, %v912
  %v914 = vpop.f32.mrf.mxu0
  %v915 = vadd.f32 %v638, %v914
  %916 = vmatmul.bf16.gmra.mxu0 %v795
  %v917 = vpop.f32.mrf.mxu0
  %v918 = vadd.f32 %v641, %v917
  %v919 = vpop.f32.mrf.mxu0
  %v920 = vadd.f32 %v643, %v919
  %921 = vmatmul.bf16.gmra.mxu0 %v798
  %v922 = vpop.f32.mrf.mxu0
  %v923 = vadd.f32 %v646, %v922
  %v924 = vpop.f32.mrf.mxu0
  %v925 = vadd.f32 %v648, %v924
  %926 = vmatmul.bf16.gmra.mxu0 %v801
  %v927 = vpop.f32.mrf.mxu0
  %v928 = vadd.f32 %v651, %v927
  %v929 = vpop.f32.mrf.mxu0
  %v930 = vadd.f32 %v653, %v929
  %931 = vmatmul.bf16.gmra.mxu0 %v804
  %v932 = vpop.f32.mrf.mxu0
  %v933 = vadd.f32 %v656, %v932
  %v934 = vpop.f32.mrf.mxu0
  %v935 = vadd.f32 %v658, %v934
  %936 = vmatmul.bf16.gmra.mxu0 %v807
  %v937 = vpop.f32.mrf.mxu0
  %v938 = vadd.f32 %v661, %v937
  %v939 = vpop.f32.mrf.mxu0
  %v940 = vadd.f32 %v663, %v939
  %941 = vmatmul.bf16.gmra.mxu0 %v810
  %v942 = vpop.f32.mrf.mxu0
  %v943 = vadd.f32 %v666, %v942
  %v944 = vpop.f32.mrf.mxu0
  %v945 = vadd.f32 %v668, %v944
  %946 = vmatmul.bf16.gmra.mxu0 %v813
  %v947 = vpop.f32.mrf.mxu0
  %v948 = vadd.f32 %v671, %v947
  %v949 = vpop.f32.mrf.mxu0
  %v950 = vadd.f32 %v673, %v949
  %951 = vmatmul.bf16.gmra.mxu0 %v816
  %v952 = vpop.f32.mrf.mxu0
  %v953 = vadd.f32 %v676, %v952
  %v954 = vpop.f32.mrf.mxu0
  %v955 = vadd.f32 %v678, %v954
  %956 = vmatmul.bf16.gmra.mxu0 %v819
  %v957 = vpop.f32.mrf.mxu0
  %v958 = vadd.f32 %v681, %v957
  %v959 = vpop.f32.mrf.mxu0
  %v960 = vadd.f32 %v683, %v959
  %961 = vmatmul.bf16.gmra.mxu0 %v822
  %v962 = vpop.f32.mrf.mxu0
  %v963 = vadd.f32 %v686, %v962
  %v964 = vpop.f32.mrf.mxu0
  %v965 = vadd.f32 %v688, %v964
  %966 = vmatmul.bf16.gmra.mxu0 %v825
  %v967 = vpop.f32.mrf.mxu0
  %v968 = vadd.f32 %v691, %v967
  %v969 = vpop.f32.mrf.mxu0
  %v970 = vadd.f32 %v693, %v969
  %971 = vmatmul.bf16.gmra.mxu0 %v828
  %v972 = vpop.f32.mrf.mxu0
  %v973 = vadd.f32 %v696, %v972
  %v974 = vpop.f32.mrf.mxu0
  %v975 = vadd.f32 %v698, %v974
  %976 = vmatmul.bf16.gmra.mxu0 %v831
  %v977 = vpop.f32.mrf.mxu0
  %v978 = vadd.f32 %v701, %v977
  %v979 = vpop.f32.mrf.mxu0
  %v980 = vadd.f32 %v703, %v979
  %981 = vmatmul.bf16.gmra.mxu0 %v834
  %v982 = vpop.f32.mrf.mxu0
  %v983 = vadd.f32 %v706, %v982
  %v984 = vpop.f32.mrf.mxu0
  %v985 = vadd.f32 %v708, %v984
  %986 = vmatmul.bf16.gmra.mxu0 %v837
  %v987 = vpop.f32.mrf.mxu0
  %v988 = vadd.f32 %v711, %v987
  %v989 = vpop.f32.mrf.mxu0
  %v990 = vadd.f32 %v713, %v989
  %991 = vmatmul.bf16.gmra.mxu0 %v840
  %v992 = vpop.f32.mrf.mxu0
  %v993 = vadd.f32 %v716, %v992
  %v994 = vpop.f32.mrf.mxu0
  %v995 = vadd.f32 %v718, %v994
  %996 = vmatmul.bf16.gmra.mxu0 %v843
  %v997 = vpop.f32.mrf.mxu0
  %v998 = vadd.f32 %v721, %v997
  %v999 = vpop.f32.mrf.mxu0
  %v1000 = vadd.f32 %v723, %v999
  %1001 = vmatmul.bf16.gmra.mxu0 %v846
  %v1002 = vpop.f32.mrf.mxu0
  %v1003 = vadd.f32 %v726, %v1002
  %v1004 = vpop.f32.mrf.mxu0
  %v1005 = vadd.f32 %v728, %v1004
  %1006 = vmatmul.bf16.gmra.mxu0 %v849
  %v1007 = vpop.f32.mrf.mxu0
  %v1008 = vadd.f32 %v731, %v1007
  %v1009 = vpop.f32.mrf.mxu0
  %v1010 = vadd.f32 %v733, %v1009
  %1011 = vmatmul.bf16.gmra.mxu0 %v852
  %v1012 = vpop.f32.mrf.mxu0
  %v1013 = vadd.f32 %v736, %v1012
  %v1014 = vpop.f32.mrf.mxu0
  %v1015 = vadd.f32 %v738, %v1014
  %1016 = vmatmul.bf16.gmra.mxu0 %v855
  %v1017 = vpop.f32.mrf.mxu0
  %v1018 = vadd.f32 %v741, %v1017
  %v1019 = vpop.f32.mrf.mxu0
  %v1020 = vadd.f32 %v743, %v1019
  %1021 = vmatmul.bf16.gmra.mxu0 %v858
  %v1022 = vpop.f32.mrf.mxu0
  %v1023 = vadd.f32 %v746, %v1022
  %v1024 = vpop.f32.mrf.mxu0
  %v1025 = vadd.f32 %v748, %v1024
  %1026 = vmatmul.bf16.gmra.mxu0 %v861
  %v1027 = vpop.f32.mrf.mxu0
  %v1028 = vadd.f32 %v751, %v1027
  %v1029 = vpop.f32.mrf.mxu0
  %v1030 = vadd.f32 %v753, %v1029
  %1031 = vdwg.mxu0
  %v1032 = vld [vmem:[%s4] sm:$0x1]
  %v1034 = vperm.slane %v1032, 0
  %v1036 = vadd.f32 %v873, %v1034
  %v1037 = vadd.f32 %v875, %v1034
  %v1038 = vadd.f32 %v878, %v1034
  %v1039 = vadd.f32 %v880, %v1034
  %v1040 = vadd.f32 %v883, %v1034
  %v1041 = vadd.f32 %v885, %v1034
  %v1042 = vadd.f32 %v888, %v1034
  %v1043 = vadd.f32 %v890, %v1034
  %v1044 = vadd.f32 %v893, %v1034
  %v1045 = vadd.f32 %v895, %v1034
  %v1046 = vadd.f32 %v898, %v1034
  %v1047 = vadd.f32 %v900, %v1034
  %v1048 = vadd.f32 %v903, %v1034
  %v1049 = vadd.f32 %v905, %v1034
  %v1050 = vadd.f32 %v908, %v1034
  %v1051 = vadd.f32 %v910, %v1034
  %v1052 = vadd.f32 %v913, %v1034
  %v1053 = vadd.f32 %v915, %v1034
  %v1054 = vadd.f32 %v918, %v1034
  %v1055 = vadd.f32 %v920, %v1034
  %v1056 = vadd.f32 %v923, %v1034
  %v1057 = vadd.f32 %v925, %v1034
  %v1058 = vadd.f32 %v928, %v1034
  %v1059 = vadd.f32 %v930, %v1034
  %v1060 = vadd.f32 %v933, %v1034
  %v1061 = vadd.f32 %v935, %v1034
  %v1062 = vadd.f32 %v938, %v1034
  %v1063 = vadd.f32 %v940, %v1034
  %v1064 = vadd.f32 %v943, %v1034
  %v1065 = vadd.f32 %v945, %v1034
  %v1066 = vadd.f32 %v948, %v1034
  %v1067 = vadd.f32 %v950, %v1034
  %v1068 = vadd.f32 %v953, %v1034
  %v1069 = vadd.f32 %v955, %v1034
  %v1070 = vadd.f32 %v958, %v1034
  %v1071 = vadd.f32 %v960, %v1034
  %v1072 = vadd.f32 %v963, %v1034
  %v1073 = vadd.f32 %v965, %v1034
  %v1074 = vadd.f32 %v968, %v1034
  %v1075 = vadd.f32 %v970, %v1034
  %v1076 = vadd.f32 %v973, %v1034
  %v1077 = vadd.f32 %v975, %v1034
  %v1078 = vadd.f32 %v978, %v1034
  %v1079 = vadd.f32 %v980, %v1034
  %v1080 = vadd.f32 %v983, %v1034
  %v1081 = vadd.f32 %v985, %v1034
  %v1082 = vadd.f32 %v988, %v1034
  %v1083 = vadd.f32 %v990, %v1034
  %v1084 = vadd.f32 %v993, %v1034
  %v1085 = vadd.f32 %v995, %v1034
  %v1086 = vadd.f32 %v998, %v1034
  %v1087 = vadd.f32 %v1000, %v1034
  %v1088 = vadd.f32 %v1003, %v1034
  %v1089 = vadd.f32 %v1005, %v1034
  %v1090 = vadd.f32 %v1008, %v1034
  %v1091 = vadd.f32 %v1010, %v1034
  %v1092 = vadd.f32 %v1013, %v1034
  %v1093 = vadd.f32 %v1015, %v1034
  %v1094 = vadd.f32 %v1018, %v1034
  %v1095 = vadd.f32 %v1020, %v1034
  %v1096 = vadd.f32 %v1023, %v1034
  %v1097 = vadd.f32 %v1025, %v1034
  %v1098 = vadd.f32 %v1028, %v1034
  %v1099 = vadd.f32 %v1030, %v1034
  %v1100 = vtanh.pop %v1036
  %v1101 = vtanh.pop %v1037
  %v1102 = vtanh.pop %v1038
  %v1103 = vtanh.pop %v1039
  %v1104 = vtanh.pop %v1040
  %v1105 = vtanh.pop %v1041
  %v1106 = vtanh.pop %v1042
  %v1107 = vtanh.pop %v1043
  %v1108 = vtanh.pop %v1044
  %v1109 = vtanh.pop %v1045
  %v1110 = vtanh.pop %v1046
  %v1111 = vtanh.pop %v1047
  %v1112 = vtanh.pop %v1048
  %v1113 = vtanh.pop %v1049
  %v1114 = vtanh.pop %v1050
  %v1115 = vtanh.pop %v1051
  %v1116 = vtanh.pop %v1052
  %v1117 = vtanh.pop %v1053
  %v1118 = vtanh.pop %v1054
  %v1119 = vtanh.pop %v1055
  %v1120 = vtanh.pop %v1056
  %v1121 = vtanh.pop %v1057
  %v1122 = vtanh.pop %v1058
  %v1123 = vtanh.pop %v1059
  %v1124 = vtanh.pop %v1060
  %v1125 = vtanh.pop %v1061
  %v1126 = vtanh.pop %v1062
  %v1127 = vtanh.pop %v1063
  %v1128 = vtanh.pop %v1064
  %v1129 = vtanh.pop %v1065
  %v1130 = vtanh.pop %v1066
  %v1131 = vtanh.pop %v1067
  %v1132 = vtanh.pop %v1068
  %v1133 = vtanh.pop %v1069
  %v1134 = vtanh.pop %v1070
  %v1135 = vtanh.pop %v1071
  %v1136 = vtanh.pop %v1072
  %v1137 = vtanh.pop %v1073
  %v1138 = vtanh.pop %v1074
  %v1139 = vtanh.pop %v1075
  %v1140 = vtanh.pop %v1076
  %v1141 = vtanh.pop %v1077
  %v1142 = vtanh.pop %v1078
  %v1143 = vtanh.pop %v1079
  %v1144 = vtanh.pop %v1080
  %v1145 = vtanh.pop %v1081
  %v1146 = vtanh.pop %v1082
  %v1147 = vtanh.pop %v1083
  %v1148 = vtanh.pop %v1084
  %v1149 = vtanh.pop %v1085
  %v1150 = vtanh.pop %v1086
  %v1151 = vtanh.pop %v1087
  %v1152 = vtanh.pop %v1088
  %v1153 = vtanh.pop %v1089
  %v1154 = vtanh.pop %v1090
  %v1155 = vtanh.pop %v1091
  %v1156 = vtanh.pop %v1092
  %v1157 = vtanh.pop %v1093
  %v1158 = vtanh.pop %v1094
  %v1159 = vtanh.pop %v1095
  %v1160 = vtanh.pop %v1096
  %v1161 = vtanh.pop %v1097
  %v1162 = vtanh.pop %v1098
  %v1163 = vtanh.pop %v1099
  %v1164 = vpack.c.bf16 %v1100, %v1100
  %v1165 = vpack.c.bf16 %v1101, %v1101
  %v1166 = vpack.c.bf16 %v1102, %v1102
  %v1167 = vpack.c.bf16 %v1103, %v1103
  %v1168 = vpack.c.bf16 %v1104, %v1104
  %v1169 = vpack.c.bf16 %v1105, %v1105
  %v1170 = vpack.c.bf16 %v1106, %v1106
  %v1171 = vpack.c.bf16 %v1107, %v1107
  %v1172 = vpack.c.bf16 %v1108, %v1108
  %v1173 = vpack.c.bf16 %v1109, %v1109
  %v1174 = vpack.c.bf16 %v1110, %v1110
  %v1175 = vpack.c.bf16 %v1111, %v1111
  %v1176 = vpack.c.bf16 %v1112, %v1112
  %v1177 = vpack.c.bf16 %v1113, %v1113
  %v1178 = vpack.c.bf16 %v1114, %v1114
  %v1179 = vpack.c.bf16 %v1115, %v1115
  %v1180 = vpack.c.bf16 %v1116, %v1116
  %v1181 = vpack.c.bf16 %v1117, %v1117
  %v1182 = vpack.c.bf16 %v1118, %v1118
  %v1183 = vpack.c.bf16 %v1119, %v1119
  %v1184 = vpack.c.bf16 %v1120, %v1120
  %v1185 = vpack.c.bf16 %v1121, %v1121
  %v1186 = vpack.c.bf16 %v1122, %v1122
  %v1187 = vpack.c.bf16 %v1123, %v1123
  %v1188 = vpack.c.bf16 %v1124, %v1124
  %v1189 = vpack.c.bf16 %v1125, %v1125
  %v1190 = vpack.c.bf16 %v1126, %v1126
  %v1191 = vpack.c.bf16 %v1127, %v1127
  %v1192 = vpack.c.bf16 %v1128, %v1128
  %v1193 = vpack.c.bf16 %v1129, %v1129
  %v1194 = vpack.c.bf16 %v1130, %v1130
  %v1195 = vpack.c.bf16 %v1131, %v1131
  %v1196 = vpack.c.bf16 %v1132, %v1132
  %v1197 = vpack.c.bf16 %v1133, %v1133
  %v1198 = vpack.c.bf16 %v1134, %v1134
  %v1199 = vpack.c.bf16 %v1135, %v1135
  %v1200 = vpack.c.bf16 %v1136, %v1136
  %v1201 = vpack.c.bf16 %v1137, %v1137
  %v1202 = vpack.c.bf16 %v1138, %v1138
  %v1203 = vpack.c.bf16 %v1139, %v1139
  %v1204 = vpack.c.bf16 %v1140, %v1140
  %v1205 = vpack.c.bf16 %v1141, %v1141
  %v1206 = vpack.c.bf16 %v1142, %v1142
  %v1207 = vpack.c.bf16 %v1143, %v1143
  %v1208 = vpack.c.bf16 %v1144, %v1144
  %v1209 = vpack.c.bf16 %v1145, %v1145
  %v1210 = vpack.c.bf16 %v1146, %v1146
  %v1211 = vpack.c.bf16 %v1147, %v1147
  %v1212 = vpack.c.bf16 %v1148, %v1148
  %v1213 = vpack.c.bf16 %v1149, %v1149
  %v1214 = vpack.c.bf16 %v1150, %v1150
  %v1215 = vpack.c.bf16 %v1151, %v1151
  %v1216 = vpack.c.bf16 %v1152, %v1152
  %v1217 = vpack.c.bf16 %v1153, %v1153
  %v1218 = vpack.c.bf16 %v1154, %v1154
  %v1219 = vpack.c.bf16 %v1155, %v1155
  %v1220 = vpack.c.bf16 %v1156, %v1156
  %v1221 = vpack.c.bf16 %v1157, %v1157
  %v1222 = vpack.c.bf16 %v1158, %v1158
  %v1223 = vpack.c.bf16 %v1159, %v1159
  %v1224 = vpack.c.bf16 %v1160, %v1160
  %v1225 = vpack.c.bf16 %v1161, %v1161
  %v1226 = vpack.c.bf16 %v1162, %v1162
  %v1227 = vpack.c.bf16 %v1163, %v1163
  %1228 = vst [vmem:[%s5] sm:$0xf] %v1164
  %1229 = vst [vmem:[%s5 + $0x4] sm:$0xf] %v1165
  %1230 = vst [vmem:[%s5 + $0x8] sm:$0xf] %v1166
  %1231 = vst [vmem:[%s5 + $0xc] sm:$0xf] %v1167
  %1232 = vst [vmem:[%s5 + $0x10] sm:$0xf] %v1168
  %1233 = vst [vmem:[%s5 + $0x14] sm:$0xf] %v1169
  %1234 = vst [vmem:[%s5 + $0x18] sm:$0xf] %v1170
  %1235 = vst [vmem:[%s5 + $0x1c] sm:$0xf] %v1171
  %1236 = vst [vmem:[%s5 + $0x20] sm:$0xf] %v1172
  %1237 = vst [vmem:[%s5 + $0x24] sm:$0xf] %v1173
  %1238 = vst [vmem:[%s5 + $0x28] sm:$0xf] %v1174
  %1239 = vst [vmem:[%s5 + $0x2c] sm:$0xf] %v1175
  %1240 = vst [vmem:[%s5 + $0x30] sm:$0xf] %v1176
  %1241 = vst [vmem:[%s5 + $0x34] sm:$0xf] %v1177
  %1242 = vst [vmem:[%s5 + $0x38] sm:$0xf] %v1178
  %1243 = vst [vmem:[%s5 + $0x3c] sm:$0xf] %v1179
  %1244 = vst [vmem:[%s5 + $0x40] sm:$0xf] %v1180
  %1245 = vst [vmem:[%s5 + $0x44] sm:$0xf] %v1181
  %1246 = vst [vmem:[%s5 + $0x48] sm:$0xf] %v1182
  %1247 = vst [vmem:[%s5 + $0x4c] sm:$0xf] %v1183
  %1248 = vst [vmem:[%s5 + $0x50] sm:$0xf] %v1184
  %1249 = vst [vmem:[%s5 + $0x54] sm:$0xf] %v1185
  %1250 = vst [vmem:[%s5 + $0x58] sm:$0xf] %v1186
  %1251 = vst [vmem:[%s5 + $0x5c] sm:$0xf] %v1187
  %1252 = vst [vmem:[%s5 + $0x60] sm:$0xf] %v1188
  %1253 = vst [vmem:[%s5 + $0x64] sm:$0xf] %v1189
  %1254 = vst [vmem:[%s5 + $0x68] sm:$0xf] %v1190
  %1255 = vst [vmem:[%s5 + $0x6c] sm:$0xf] %v1191
  %1256 = vst [vmem:[%s5 + $0x70] sm:$0xf] %v1192
  %1257 = vst [vmem:[%s5 + $0x74] sm:$0xf] %v1193
  %1258 = vst [vmem:[%s5 + $0x78] sm:$0xf] %v1194
  %1259 = vst [vmem:[%s5 + $0x7c] sm:$0xf] %v1195
  %1260 = vst [vmem:[%s5 + $0x80] sm:$0xf] %v1196
  %1261 = vst [vmem:[%s5 + $0x84] sm:$0xf] %v1197
  %1262 = vst [vmem:[%s5 + $0x88] sm:$0xf] %v1198
  %1263 = vst [vmem:[%s5 + $0x8c] sm:$0xf] %v1199
  %1264 = vst [vmem:[%s5 + $0x90] sm:$0xf] %v1200
  %1265 = vst [vmem:[%s5 + $0x94] sm:$0xf] %v1201
  %1266 = vst [vmem:[%s5 + $0x98] sm:$0xf] %v1202
  %1267 = vst [vmem:[%s5 + $0x9c] sm:$0xf] %v1203
  %1268 = vst [vmem:[%s5 + $0xa0] sm:$0xf] %v1204
  %1269 = vst [vmem:[%s5 + $0xa4] sm:$0xf] %v1205
  %1270 = vst [vmem:[%s5 + $0xa8] sm:$0xf] %v1206
  %1271 = vst [vmem:[%s5 + $0xac] sm:$0xf] %v1207
  %1272 = vst [vmem:[%s5 + $0xb0] sm:$0xf] %v1208
  %1273 = vst [vmem:[%s5 + $0xb4] sm:$0xf] %v1209
  %1274 = vst [vmem:[%s5 + $0xb8] sm:$0xf] %v1210
  %1275 = vst [vmem:[%s5 + $0xbc] sm:$0xf] %v1211
  %1276 = vst [vmem:[%s5 + $0xc0] sm:$0xf] %v1212
  %1277 = vst [vmem:[%s5 + $0xc4] sm:$0xf] %v1213
  %1278 = vst [vmem:[%s5 + $0xc8] sm:$0xf] %v1214
  %1279 = vst [vmem:[%s5 + $0xcc] sm:$0xf] %v1215
  %1280 = vst [vmem:[%s5 + $0xd0] sm:$0xf] %v1216
  %1281 = vst [vmem:[%s5 + $0xd4] sm:$0xf] %v1217
  %1282 = vst [vmem:[%s5 + $0xd8] sm:$0xf] %v1218
  %1283 = vst [vmem:[%s5 + $0xdc] sm:$0xf] %v1219
  %1284 = vst [vmem:[%s5 + $0xe0] sm:$0xf] %v1220
  %1285 = vst [vmem:[%s5 + $0xe4] sm:$0xf] %v1221
  %1286 = vst [vmem:[%s5 + $0xe8] sm:$0xf] %v1222
  %1287 = vst [vmem:[%s5 + $0xec] sm:$0xf] %v1223
  %1288 = vst [vmem:[%s5 + $0xf0] sm:$0xf] %v1224
  %1289 = vst [vmem:[%s5 + $0xf4] sm:$0xf] %v1225
  %1290 = vst [vmem:[%s5 + $0xf8] sm:$0xf] %v1226
  %1291 = vst [vmem:[%s5 + $0xfc] sm:$0xf] %v1227
  // Predicated region
  $region22: #{_lambda_.60} parent=0 // pred_check
    _
  $region23: #{_lambda_.60} parent=0 // pred_check_branch
    %1293 = sbr.rel (0) target = $region25
  $region24: #{_lambda_.60} parent=0 // pred_region
    _
  $region25: #{_lambda_.60} parent=0 // pred_fallthru
    _
  // Predicated region
  $region26: #{_lambda_.60} parent=0 // pred_check
    _
  $region27: #{_lambda_.60} parent=0 // pred_check_branch
    %1295 = sbr.rel (0) target = $region29
  $region28: #{_lambda_.60} parent=0 // pred_region
    _
  $region29: #{_lambda_.60} parent=0 // pred_fallthru
    _

</llo_original>
